<compile_context>
chip_gen: v7x
topology: tpu7x:2x2x1
jax: 0.10.0
libtpu: 0.0.40
codegen_flags: <defaults>
</compile_context>

<pallas_src>
import functools

import jax
import jax.numpy as jnp
from jax.experimental import pallas as pl
from jax.experimental.pallas import tpu as pltpu


_LEAKY_SLOPE = 0.2
_SELU_ALPHA = 1.6732632423543772
_SELU_SCALE = 1.0507009873554805

_C_LANE = 128          # lane-dense channel padding for all layer outputs
_PARALLEL_MIN_M = 512  # only shard big-M layers across TensorCores (v7x)


def _round_up(x, m):
    return -(-x // m) * m


def _num_parallel_tiles():
    """2 on v7x (2 TensorCores per chip), else 1 (v5e/v6e are single-TC)."""
    try:
        kind = jax.devices()[0].device_kind.lower()
    except Exception:
        return 1
    return 2 if ("v7" in kind or "tpu7" in kind) else 1


# ----------------------------- Pallas kernel --------------------------------

def _apply_act(y, act):
    # f32 epilogue on the VPU/EUP (kept f32: v5e has no bf16 vector/EUP path).
    if act == "leaky_relu":
        return jnp.where(y >= 0.0, y, _LEAKY_SLOPE * y)
    if act == "selu":
        neg = _SELU_ALPHA * (jnp.exp(jnp.minimum(y, 0.0)) - 1.0)
        return _SELU_SCALE * jnp.where(y > 0.0, y, neg)
    return y


def _gemm_act_kernel(a_ref, w_ref, o_ref, *, act):
    # Fused conv-as-GEMM (bf16 MXU operands, f32 accumulate) + activation.
    y = jnp.dot(a_ref[...], w_ref[...], preferred_element_type=jnp.float32)
    o_ref[...] = _apply_act(y, act).astype(o_ref.dtype)


def pallas_gemm_act(a, w, act, out_dtype, n_parallel):
    """act(a @ w).  a: (M, K) bf16, w: (K, N) bf16 with N a multiple of 128."""
    M, K = a.shape
    Kw, N = w.shape
    assert K == Kw and N % 128 == 0

    m_pad = _round_up(M, 8)
    if m_pad != M:                      # never triggers for the shapes below
        a = jnp.pad(a, ((0, m_pad - M), (0, 0)))

    # Largest possible tile: grid=1 on single-TC chips; split the big layers
    # into two "parallel" tiles on v7x so both TensorCores get work.
    grid_m = 1
    if (n_parallel > 1 and m_pad >= _PARALLEL_MIN_M
            and m_pad % (8 * n_parallel) == 0):
        grid_m = n_parallel
    tm = m_pad // grid_m

    cost = pl.CostEstimate(
        flops=2 * m_pad * K * N,
        transcendentals=(m_pad * N if act == "selu" else 0),
        bytes_accessed=(m_pad * K + K * N) * a.dtype.itemsize
        + m_pad * N * jnp.dtype(out_dtype).itemsize,
    )

    out = pl.pallas_call(
        functools.partial(_gemm_act_kernel, act=act),
        out_shape=jax.ShapeDtypeStruct((m_pad, N), out_dtype),
        grid=(grid_m,),
        in_specs=[pl.BlockSpec((tm, K), lambda i: (i, 0)),
                  pl.BlockSpec((K, N), lambda i: (0, 0))],
        out_specs=pl.BlockSpec((tm, N), lambda i: (i, 0)),
        compiler_params=pltpu.CompilerParams(
            dimension_semantics=("parallel",)),
        cost_estimate=cost,
    )(a, w)
    return out[:M] if m_pad != M else out


# ---------------------- Conv2d (stride 2, pad 1) layer -----------------------

def _pack_weight(w, cin_pad, cout_pad=_C_LANE):
    """PyTorch (Cout, Cin, K, K) -> (K*K*cin_pad, cout_pad) bf16 GEMM weight.

    Row ordering is (kh, kw, cin) to match the im2col matrix; extra rows /
    columns are zero so padded channels contribute nothing.
    """
    cout, cin, K, _ = w.shape
    assert cout <= cout_pad and cin <= cin_pad
    w_kkco = jnp.transpose(w, (2, 3, 1, 0))                 # (K, K, Cin, Cout)
    w_kkco = jnp.pad(w_kkco, ((0, 0), (0, 0),
                              (0, cin_pad - cin), (0, cout_pad - cout)))
    return w_kkco.reshape(K * K * cin_pad, cout_pad).astype(jnp.bfloat16)


def conv_layer(x_nhwc, w_mat, cin_pad, act, out_dtype, n_parallel,
               ksize=4, stride=2, pad=1):
    """x_nhwc: (N, H, W, C) -> (N, H_out, W_out, 128)."""
    N, H, W, C = x_nhwc.shape
    if C < cin_pad:
        x = jnp.pad(x_nhwc, ((0, 0), (0, 0), (0, 0), (0, cin_pad - C)))
    elif C > cin_pad:
        # Channel sub-select of the lane-padded previous output; fused by XLA
        # into the im2col gather below under jit (no standalone copy).
        x = x_nhwc[..., :cin_pad]
    else:
        x = x_nhwc
    x = x.astype(jnp.bfloat16)          # bf16 MXU operand, half the DMA bytes

    H_out = (H + 2 * pad - ksize) // stride + 1
    W_out = (W + 2 * pad - ksize) // stride + 1
    x_p = jnp.pad(x, ((0, 0), (pad, pad), (pad, pad), (0, 0)))

    # Host-side im2col (fused XLA gather under jit); (kh, kw) outer, cin inner.
    # TODO(synk): do this im2col inside the kernel (VMEM-resident input tile +
    # strided pl.ds reads) and fuse layers 3-5 into a single pallas_call with
    # intermediates kept in VMEM scratch, to avoid the A-matrix HBM round trip.
    patches = []
    for kh in range(ksize):
        for kw in range(ksize):
            patches.append(jax.lax.slice(
                x_p, (0, kh, kw, 0),
                (N, kh + stride * (H_out - 1) + 1,
                 kw + stride * (W_out - 1) + 1, cin_pad),
                (1, stride, stride, 1)))
    a = jnp.stack(patches, axis=3).reshape(
        N * H_out * W_out, ksize * ksize * cin_pad)

    out = pallas_gemm_act(a, w_mat, act, out_dtype, n_parallel)
    return out.reshape(N, H_out, W_out, _C_LANE)


# ------------------------------ Model params ---------------------------------

def init_params(key, nc=3, ndf=8):
    cfg = [(nc, ndf, "leaky_relu"),
           (ndf, 2 * ndf, "selu"),
           (2 * ndf, 4 * ndf, "selu"),
           (4 * ndf, 8 * ndf, "selu"),
           (8 * ndf, 1, "selu")]
    layers = []
    for k, (cin, cout, act) in zip(jax.random.split(key, len(cfg)), cfg):
        std = 1.0 / (cin * 16) ** 0.5
        w = std * jax.random.normal(k, (cout, cin, 4, 4), jnp.float32)
        cin_pad = _round_up(cin, 8)
        layers.append(dict(w=w, w_mat=_pack_weight(w, cin_pad),
                           cin=cin, cin_pad=cin_pad, cout=cout, act=act))
    return layers


# ------------------------------- Forward (jit) --------------------------------

@functools.partial(jax.jit, static_argnames=("cfg", "n_parallel"))
def d_stage2_forward(x_nchw, w_mats, cfg, n_parallel=1):
    """x_nchw: (N, nc, H, W) f32 -> squeezed (N, H/32, W/32) f32 output."""
    x = jnp.transpose(x_nchw, (0, 2, 3, 1))          # NHWC
    n_layers = len(cfg)
    for idx, (cin_pad, cout, act) in enumerate(cfg):
        out_dtype = jnp.float32 if idx == n_layers - 1 else jnp.bfloat16
        x = conv_layer(x, w_mats[idx], cin_pad, act, out_dtype, n_parallel)
    y = x[..., :cfg[-1][1]]                           # drop lane padding
    y = jnp.transpose(y, (0, 3, 1, 2))                # back to NCHW
    return jnp.squeeze(y)


# ----------------------------- Pure-JAX reference ----------------------------

def ref_forward(x, layers):
    for lyr in layers:
        x = jax.lax.conv_general_dilated(
            x, lyr["w"], window_strides=(2, 2), padding=[(1, 1), (1, 1)],
            dimension_numbers=("NCHW", "OIHW", "NCHW"),
            precision=jax.lax.Precision.HIGHEST)
        if lyr["act"] == "leaky_relu":
            x = jnp.where(x >= 0.0, x, _LEAKY_SLOPE * x)
        else:
            x = _SELU_SCALE * jnp.where(
                x > 0.0, x,
                _SELU_ALPHA * (jnp.exp(jnp.minimum(x, 0.0)) - 1.0))
    return jnp.squeeze(x)


# ----------------------------------- main ------------------------------------

if __name__ == "__main__":
    nc, ndf = 3, 8
    batch, hw = 2, 64                 # 64 -> 32 -> 16 -> 8 -> 4 -> 2

    key = jax.random.PRNGKey(0)
    k_w, k_x = jax.random.split(key)
    layers = init_params(k_w, nc=nc, ndf=ndf)
    x = jax.random.normal(k_x, (batch, nc, hw, hw), jnp.float32)

    w_mats = tuple(l["w_mat"] for l in layers)
    cfg = tuple((l["cin_pad"], l["cout"], l["act"]) for l in layers)
    n_par = _num_parallel_tiles()

    out = jax.block_until_ready(
        d_stage2_forward(x, w_mats, cfg=cfg, n_parallel=n_par))
    assert out.shape == (batch, hw // 32, hw // 32), out.shape
    assert bool(jnp.all(jnp.isfinite(out)))

    ref = jax.block_until_ready(ref_forward(x, layers))
    # bf16 MXU operands + bf16 inter-layer activations vs f32 HIGHEST reference.
    err = float(jnp.max(jnp.abs(out - ref)))
    assert bool(jnp.allclose(out, ref, rtol=5e-2, atol=5e-2)), err

    print("KERNEL_OK")
</pallas_src>

<mosaic_0001>
module attributes {stable_mosaic.version = 11 : i64} {
  func.func @_gemm_act_kernel(%arg0: i32, %arg1: memref<2048x128xbf16, #tpu.memory_space<vmem>>, %arg2: memref<128x128xbf16, #tpu.memory_space<vmem>>, %arg3: memref<2048x128xbf16, #tpu.memory_space<vmem>>) attributes {dimension_semantics = [#tpu.dimension_semantics<parallel>], iteration_bounds = array<i64: 1>, scalar_prefetch = 0 : i64, scratch_operands = 0 : i64, tpu.core_type = #tpu.core_type<tc>, window_params = [{transform_indices = @transform_0, window_bounds = array<i64: 2048, 128>}, {pipeline_mode = #tpu.pipeline_mode<synchronous>, transform_indices = @transform_1, window_bounds = array<i64: 128, 128>}, {transform_indices = @transform_2, window_bounds = array<i64: 2048, 128>}]} {
    %c0 = arith.constant 0 : index
    %c0_0 = arith.constant 0 : index
    %0 = vector.load %arg1[%c0, %c0_0] : memref<2048x128xbf16, #tpu.memory_space<vmem>>, vector<2048x128xbf16>
    %c0_1 = arith.constant 0 : index
    %c0_2 = arith.constant 0 : index
    %1 = vector.load %arg2[%c0_1, %c0_2] : memref<128x128xbf16, #tpu.memory_space<vmem>>, vector<128x128xbf16>
    %cst = arith.constant dense<0.000000e+00> : vector<2048x128xf32>
    %2 = tpu.matmul %0, %1, %cst {dimension_numbers = #tpu.dot_dimension_numbers<[1], [0], [0], [1], [0, 0, 1, 1], [], []>} : vector<2048x128xbf16>, vector<128x128xbf16>, vector<2048x128xf32> -> vector<2048x128xf32>
    %cst_3 = arith.constant 0.000000e+00 : f32
    %3 = vector.broadcast %cst_3 : f32 to vector<2048x128xf32>
    %4 = arith.cmpf oge, %2, %3 : vector<2048x128xf32>
    %cst_4 = arith.constant 2.000000e-01 : f32
    %5 = vector.broadcast %cst_4 : f32 to vector<2048x128xf32>
    %6 = arith.mulf %5, %2 : vector<2048x128xf32>
    %7 = arith.select %4, %2, %6 : vector<2048x128xi1>, vector<2048x128xf32>
    %8 = arith.truncf %7 : vector<2048x128xf32> to vector<2048x128xbf16>
    %c0_5 = arith.constant 0 : index
    %c0_6 = arith.constant 0 : index
    %9 = vector.load %arg3[%c0_5, %c0_6] : memref<2048x128xbf16, #tpu.memory_space<vmem>>, vector<2048x128xbf16>
    tpu.vector_store %arg3[%c0_5, %c0_6], %8 {strides = array<i32>} : memref<2048x128xbf16, #tpu.memory_space<vmem>>, vector<2048x128xbf16>,
    return
  }
  func.func @transform_0(%arg0: i32) -> (i32, i32) {
    %c0_i32 = arith.constant 0 : i32
    %c0_i32_0 = arith.constant 0 : i32
    return %arg0, %c0_i32 : i32, i32
  }
  func.func @transform_1(%arg0: i32) -> (i32, i32) {
    %c0_i32 = arith.constant 0 : i32
    %c0_i32_0 = arith.constant 0 : i32
    %c0_i32_1 = arith.constant 0 : i32
    return %c0_i32, %c0_i32_0 : i32, i32
  }
  func.func @transform_2(%arg0: i32) -> (i32, i32) {
    %c0_i32 = arith.constant 0 : i32
    %c0_i32_0 = arith.constant 0 : i32
    return %arg0, %c0_i32 : i32, i32
  }
}

module attributes {stable_mosaic.version = 11 : i64} {
  func.func @_gemm_act_kernel(%arg0: i32, %arg1: memref<512x128xbf16, #tpu.memory_space<vmem>>, %arg2: memref<128x128xbf16, #tpu.memory_space<vmem>>, %arg3: memref<512x128xbf16, #tpu.memory_space<vmem>>) attributes {dimension_semantics = [#tpu.dimension_semantics<parallel>], iteration_bounds = array<i64: 1>, scalar_prefetch = 0 : i64, scratch_operands = 0 : i64, tpu.core_type = #tpu.core_type<tc>, window_params = [{transform_indices = @transform_0, window_bounds = array<i64: 512, 128>}, {pipeline_mode = #tpu.pipeline_mode<synchronous>, transform_indices = @transform_1, window_bounds = array<i64: 128, 128>}, {transform_indices = @transform_2, window_bounds = array<i64: 512, 128>}]} {
    %c0 = arith.constant 0 : index
    %c0_0 = arith.constant 0 : index
    %0 = vector.load %arg1[%c0, %c0_0] : memref<512x128xbf16, #tpu.memory_space<vmem>>, vector<512x128xbf16>
    %c0_1 = arith.constant 0 : index
    %c0_2 = arith.constant 0 : index
    %1 = vector.load %arg2[%c0_1, %c0_2] : memref<128x128xbf16, #tpu.memory_space<vmem>>, vector<128x128xbf16>
    %cst = arith.constant dense<0.000000e+00> : vector<512x128xf32>
    %2 = tpu.matmul %0, %1, %cst {dimension_numbers = #tpu.dot_dimension_numbers<[1], [0], [0], [1], [0, 0, 1, 1], [], []>} : vector<512x128xbf16>, vector<128x128xbf16>, vector<512x128xf32> -> vector<512x128xf32>
    %cst_3 = arith.constant 0.000000e+00 : f32
    %3 = vector.broadcast %cst_3 : f32 to vector<512x128xf32>
    %4 = arith.minimumf %2, %3 : vector<512x128xf32>
    %5 = math.exp %4 : vector<512x128xf32>
    %cst_4 = arith.constant 1.000000e+00 : f32
    %6 = vector.broadcast %cst_4 : f32 to vector<512x128xf32>
    %7 = arith.subf %5, %6 : vector<512x128xf32>
    %cst_5 = arith.constant 1.67326319 : f32
    %8 = vector.broadcast %cst_5 : f32 to vector<512x128xf32>
    %9 = arith.mulf %8, %7 : vector<512x128xf32>
    %cst_6 = arith.constant 0.000000e+00 : f32
    %10 = vector.broadcast %cst_6 : f32 to vector<512x128xf32>
    %11 = arith.cmpf ogt, %2, %10 : vector<512x128xf32>
    %12 = arith.select %11, %2, %9 : vector<512x128xi1>, vector<512x128xf32>
    %cst_7 = arith.constant 1.05070102 : f32
    %13 = vector.broadcast %cst_7 : f32 to vector<512x128xf32>
    %14 = arith.mulf %13, %12 : vector<512x128xf32>
    %15 = arith.truncf %14 : vector<512x128xf32> to vector<512x128xbf16>
    %c0_8 = arith.constant 0 : index
    %c0_9 = arith.constant 0 : index
    %16 = vector.load %arg3[%c0_8, %c0_9] : memref<512x128xbf16, #tpu.memory_space<vmem>>, vector<512x128xbf16>
    tpu.vector_store %arg3[%c0_8, %c0_9], %15 {strides = array<i32>} : memref<512x128xbf16, #tpu.memory_space<vmem>>, vector<512x128xbf16>,
    return
  }
  func.func @transform_0(%arg0: i32) -> (i32, i32) {
    %c0_i32 = arith.constant 0 : i32
    %c0_i32_0 = arith.constant 0 : i32
    return %arg0, %c0_i32 : i32, i32
  }
  func.func @transform_1(%arg0: i32) -> (i32, i32) {
    %c0_i32 = arith.constant 0 : i32
    %c0_i32_0 = arith.constant 0 : i32
    %c0_i32_1 = arith.constant 0 : i32
    return %c0_i32, %c0_i32_0 : i32, i32
  }
  func.func @transform_2(%arg0: i32) -> (i32, i32) {
    %c0_i32 = arith.constant 0 : i32
    %c0_i32_0 = arith.constant 0 : i32
    return %arg0, %c0_i32 : i32, i32
  }
}

module attributes {stable_mosaic.version = 11 : i64} {
  func.func @_gemm_act_kernel(%arg0: i32, %arg1: memref<128x256xbf16, #tpu.memory_space<vmem>>, %arg2: memref<256x128xbf16, #tpu.memory_space<vmem>>, %arg3: memref<128x128xbf16, #tpu.memory_space<vmem>>) attributes {dimension_semantics = [#tpu.dimension_semantics<parallel>], iteration_bounds = array<i64: 1>, scalar_prefetch = 0 : i64, scratch_operands = 0 : i64, tpu.core_type = #tpu.core_type<tc>, window_params = [{transform_indices = @transform_0, window_bounds = array<i64: 128, 256>}, {pipeline_mode = #tpu.pipeline_mode<synchronous>, transform_indices = @transform_1, window_bounds = array<i64: 256, 128>}, {transform_indices = @transform_2, window_bounds = array<i64: 128, 128>}]} {
    %c0 = arith.constant 0 : index
    %c0_0 = arith.constant 0 : index
    %0 = vector.load %arg1[%c0, %c0_0] : memref<128x256xbf16, #tpu.memory_space<vmem>>, vector<128x256xbf16>
    %c0_1 = arith.constant 0 : index
    %c0_2 = arith.constant 0 : index
    %1 = vector.load %arg2[%c0_1, %c0_2] : memref<256x128xbf16, #tpu.memory_space<vmem>>, vector<256x128xbf16>
    %cst = arith.constant dense<0.000000e+00> : vector<128x128xf32>
    %2 = tpu.matmul %0, %1, %cst {dimension_numbers = #tpu.dot_dimension_numbers<[1], [0], [0], [1], [0, 0, 1, 1], [], []>} : vector<128x256xbf16>, vector<256x128xbf16>, vector<128x128xf32> -> vector<128x128xf32>
    %cst_3 = arith.constant 0.000000e+00 : f32
    %3 = vector.broadcast %cst_3 : f32 to vector<128x128xf32>
    %4 = arith.minimumf %2, %3 : vector<128x128xf32>
    %5 = math.exp %4 : vector<128x128xf32>
    %cst_4 = arith.constant 1.000000e+00 : f32
    %6 = vector.broadcast %cst_4 : f32 to vector<128x128xf32>
    %7 = arith.subf %5, %6 : vector<128x128xf32>
    %cst_5 = arith.constant 1.67326319 : f32
    %8 = vector.broadcast %cst_5 : f32 to vector<128x128xf32>
    %9 = arith.mulf %8, %7 : vector<128x128xf32>
    %cst_6 = arith.constant 0.000000e+00 : f32
    %10 = vector.broadcast %cst_6 : f32 to vector<128x128xf32>
    %11 = arith.cmpf ogt, %2, %10 : vector<128x128xf32>
    %12 = arith.select %11, %2, %9 : vector<128x128xi1>, vector<128x128xf32>
    %cst_7 = arith.constant 1.05070102 : f32
    %13 = vector.broadcast %cst_7 : f32 to vector<128x128xf32>
    %14 = arith.mulf %13, %12 : vector<128x128xf32>
    %15 = arith.truncf %14 : vector<128x128xf32> to vector<128x128xbf16>
    %c0_8 = arith.constant 0 : index
    %c0_9 = arith.constant 0 : index
    %16 = vector.load %arg3[%c0_8, %c0_9] : memref<128x128xbf16, #tpu.memory_space<vmem>>, vector<128x128xbf16>
    tpu.vector_store %arg3[%c0_8, %c0_9], %15 {strides = array<i32>} : memref<128x128xbf16, #tpu.memory_space<vmem>>, vector<128x128xbf16>,
    return
  }
  func.func @transform_0(%arg0: i32) -> (i32, i32) {
    %c0_i32 = arith.constant 0 : i32
    %c0_i32_0 = arith.constant 0 : i32
    return %arg0, %c0_i32 : i32, i32
  }
  func.func @transform_1(%arg0: i32) -> (i32, i32) {
    %c0_i32 = arith.constant 0 : i32
    %c0_i32_0 = arith.constant 0 : i32
    %c0_i32_1 = arith.constant 0 : i32
    return %c0_i32, %c0_i32_0 : i32, i32
  }
  func.func @transform_2(%arg0: i32) -> (i32, i32) {
    %c0_i32 = arith.constant 0 : i32
    %c0_i32_0 = arith.constant 0 : i32
    return %arg0, %c0_i32 : i32, i32
  }
}

module attributes {stable_mosaic.version = 11 : i64} {
  func.func @_gemm_act_kernel(%arg0: i32, %arg1: memref<32x512xbf16, #tpu.memory_space<vmem>>, %arg2: memref<512x128xbf16, #tpu.memory_space<vmem>>, %arg3: memref<32x128xbf16, #tpu.memory_space<vmem>>) attributes {dimension_semantics = [#tpu.dimension_semantics<parallel>], iteration_bounds = array<i64: 1>, scalar_prefetch = 0 : i64, scratch_operands = 0 : i64, tpu.core_type = #tpu.core_type<tc>, window_params = [{transform_indices = @transform_0, window_bounds = array<i64: 32, 512>}, {pipeline_mode = #tpu.pipeline_mode<synchronous>, transform_indices = @transform_1, window_bounds = array<i64: 512, 128>}, {transform_indices = @transform_2, window_bounds = array<i64: 32, 128>}]} {
    %c0 = arith.constant 0 : index
    %c0_0 = arith.constant 0 : index
    %0 = vector.load %arg1[%c0, %c0_0] : memref<32x512xbf16, #tpu.memory_space<vmem>>, vector<32x512xbf16>
    %c0_1 = arith.constant 0 : index
    %c0_2 = arith.constant 0 : index
    %1 = vector.load %arg2[%c0_1, %c0_2] : memref<512x128xbf16, #tpu.memory_space<vmem>>, vector<512x128xbf16>
    %cst = arith.constant dense<0.000000e+00> : vector<32x128xf32>
    %2 = tpu.matmul %0, %1, %cst {dimension_numbers = #tpu.dot_dimension_numbers<[1], [0], [0], [1], [0, 0, 1, 1], [], []>} : vector<32x512xbf16>, vector<512x128xbf16>, vector<32x128xf32> -> vector<32x128xf32>
    %cst_3 = arith.constant 0.000000e+00 : f32
    %3 = vector.broadcast %cst_3 : f32 to vector<32x128xf32>
    %4 = arith.minimumf %2, %3 : vector<32x128xf32>
    %5 = math.exp %4 : vector<32x128xf32>
    %cst_4 = arith.constant 1.000000e+00 : f32
    %6 = vector.broadcast %cst_4 : f32 to vector<32x128xf32>
    %7 = arith.subf %5, %6 : vector<32x128xf32>
    %cst_5 = arith.constant 1.67326319 : f32
    %8 = vector.broadcast %cst_5 : f32 to vector<32x128xf32>
    %9 = arith.mulf %8, %7 : vector<32x128xf32>
    %cst_6 = arith.constant 0.000000e+00 : f32
    %10 = vector.broadcast %cst_6 : f32 to vector<32x128xf32>
    %11 = arith.cmpf ogt, %2, %10 : vector<32x128xf32>
    %12 = arith.select %11, %2, %9 : vector<32x128xi1>, vector<32x128xf32>
    %cst_7 = arith.constant 1.05070102 : f32
    %13 = vector.broadcast %cst_7 : f32 to vector<32x128xf32>
    %14 = arith.mulf %13, %12 : vector<32x128xf32>
    %15 = arith.truncf %14 : vector<32x128xf32> to vector<32x128xbf16>
    %c0_8 = arith.constant 0 : index
    %c0_9 = arith.constant 0 : index
    %16 = vector.load %arg3[%c0_8, %c0_9] : memref<32x128xbf16, #tpu.memory_space<vmem>>, vector<32x128xbf16>
    tpu.vector_store %arg3[%c0_8, %c0_9], %15 {strides = array<i32>} : memref<32x128xbf16, #tpu.memory_space<vmem>>, vector<32x128xbf16>,
    return
  }
  func.func @transform_0(%arg0: i32) -> (i32, i32) {
    %c0_i32 = arith.constant 0 : i32
    %c0_i32_0 = arith.constant 0 : i32
    return %arg0, %c0_i32 : i32, i32
  }
  func.func @transform_1(%arg0: i32) -> (i32, i32) {
    %c0_i32 = arith.constant 0 : i32
    %c0_i32_0 = arith.constant 0 : i32
    %c0_i32_1 = arith.constant 0 : i32
    return %c0_i32, %c0_i32_0 : i32, i32
  }
  func.func @transform_2(%arg0: i32) -> (i32, i32) {
    %c0_i32 = arith.constant 0 : i32
    %c0_i32_0 = arith.constant 0 : i32
    return %arg0, %c0_i32 : i32, i32
  }
}

module attributes {stable_mosaic.version = 11 : i64} {
  func.func @_gemm_act_kernel(%arg0: i32, %arg1: memref<8x1024xbf16, #tpu.memory_space<vmem>>, %arg2: memref<1024x128xbf16, #tpu.memory_space<vmem>>, %arg3: memref<8x128xf32, #tpu.memory_space<vmem>>) attributes {dimension_semantics = [#tpu.dimension_semantics<parallel>], iteration_bounds = array<i64: 1>, scalar_prefetch = 0 : i64, scratch_operands = 0 : i64, tpu.core_type = #tpu.core_type<tc>, window_params = [{transform_indices = @transform_0, window_bounds = array<i64: 8, 1024>}, {pipeline_mode = #tpu.pipeline_mode<synchronous>, transform_indices = @transform_1, window_bounds = array<i64: 1024, 128>}, {transform_indices = @transform_2, window_bounds = array<i64: 8, 128>}]} {
    %c0 = arith.constant 0 : index
    %c0_0 = arith.constant 0 : index
    %0 = vector.load %arg1[%c0, %c0_0] : memref<8x1024xbf16, #tpu.memory_space<vmem>>, vector<8x1024xbf16>
    %c0_1 = arith.constant 0 : index
    %c0_2 = arith.constant 0 : index
    %1 = vector.load %arg2[%c0_1, %c0_2] : memref<1024x128xbf16, #tpu.memory_space<vmem>>, vector<1024x128xbf16>
    %cst = arith.constant dense<0.000000e+00> : vector<8x128xf32>
    %2 = tpu.matmul %0, %1, %cst {dimension_numbers = #tpu.dot_dimension_numbers<[1], [0], [0], [1], [0, 0, 1, 1], [], []>} : vector<8x1024xbf16>, vector<1024x128xbf16>, vector<8x128xf32> -> vector<8x128xf32>
    %cst_3 = arith.constant 0.000000e+00 : f32
    %3 = vector.broadcast %cst_3 : f32 to vector<8x128xf32>
    %4 = arith.minimumf %2, %3 : vector<8x128xf32>
    %5 = math.exp %4 : vector<8x128xf32>
    %cst_4 = arith.constant 1.000000e+00 : f32
    %6 = vector.broadcast %cst_4 : f32 to vector<8x128xf32>
    %7 = arith.subf %5, %6 : vector<8x128xf32>
    %cst_5 = arith.constant 1.67326319 : f32
    %8 = vector.broadcast %cst_5 : f32 to vector<8x128xf32>
    %9 = arith.mulf %8, %7 : vector<8x128xf32>
    %cst_6 = arith.constant 0.000000e+00 : f32
    %10 = vector.broadcast %cst_6 : f32 to vector<8x128xf32>
    %11 = arith.cmpf ogt, %2, %10 : vector<8x128xf32>
    %12 = arith.select %11, %2, %9 : vector<8x128xi1>, vector<8x128xf32>
    %cst_7 = arith.constant 1.05070102 : f32
    %13 = vector.broadcast %cst_7 : f32 to vector<8x128xf32>
    %14 = arith.mulf %13, %12 : vector<8x128xf32>
    %c0_8 = arith.constant 0 : index
    %c0_9 = arith.constant 0 : index
    %15 = vector.load %arg3[%c0_8, %c0_9] : memref<8x128xf32, #tpu.memory_space<vmem>>, vector<8x128xf32>
    tpu.vector_store %arg3[%c0_8, %c0_9], %14 {strides = array<i32>} : memref<8x128xf32, #tpu.memory_space<vmem>>, vector<8x128xf32>,
    return
  }
  func.func @transform_0(%arg0: i32) -> (i32, i32) {
    %c0_i32 = arith.constant 0 : i32
    %c0_i32_0 = arith.constant 0 : i32
    return %arg0, %c0_i32 : i32, i32
  }
  func.func @transform_1(%arg0: i32) -> (i32, i32) {
    %c0_i32 = arith.constant 0 : i32
    %c0_i32_0 = arith.constant 0 : i32
    %c0_i32_1 = arith.constant 0 : i32
    return %c0_i32, %c0_i32_0 : i32, i32
  }
  func.func @transform_2(%arg0: i32) -> (i32, i32) {
    %c0_i32 = arith.constant 0 : i32
    %c0_i32_0 = arith.constant 0 : i32
    return %arg0, %c0_i32 : i32, i32
  }
}

</mosaic_0001>

<llo_original>
// kernel: d_stage2_forward.5
$region0: #{d_stage2_forward.5}
  #allocation0 [shape = 'u32[]', space=smem, size = 0x4, offset = 0x4, fixed_abs, tag = 'smem constant byte address 0x4 - core index']
  #allocation1 [shape = 'u32[144,128]{1,0:T(1,128)}', space=vmem, size = 0x12000, scoped, tag = 'internal scratch']
  %s0 = inlined_call_operand.vmem [shape: bf16[2048,128], index: 0, kind: input, shape index: {}]
  %s1 = inlined_call_operand.vmem [shape: bf16[128,128], index: 1, kind: input, shape index: {}]
  %s2 = inlined_call_operand.vmem [shape: bf16[2048,128], index: 2, kind: output, shape index: {}]
  %s3 = sld [smem:[#allocation0]]
  $region18: #{d_stage2_forward.5} parent=0
    _
  %s5 = ssub.s32 1, %s3
  %s6 = scalar_select 0, %s5, %s3
  // Predicated region
  $region2: #{d_stage2_forward.5} parent=0 // pred_check
    _
  $region3: #{d_stage2_forward.5} parent=0 // pred_check_branch
    %8 = sbr.rel (0) target = $region5
  $region4: #{d_stage2_forward.5} parent=0 // pred_region
    _
  $region5: #{d_stage2_forward.5} parent=0 // pred_fallthru
    _
  // Predicated region
  $region6: #{d_stage2_forward.5} parent=0 // pred_check
    _
  $region7: #{d_stage2_forward.5} parent=0 // pred_check_branch
    %10 = sbr.rel (0) target = $region9
  $region8: #{d_stage2_forward.5} parent=0 // pred_region
    _
  $region9: #{d_stage2_forward.5} parent=0 // pred_fallthru
    _
  %v12 = vld [vmem:[%s0] sm:$0xf]
  %v13 = vld [vmem:[%s0 + $0x4] sm:$0xf]
  %v14 = vld [vmem:[%s0 + $0x8] sm:$0xf]
  %v15 = vld [vmem:[%s0 + $0xc] sm:$0xf]
  %v16 = vld [vmem:[%s0 + $0x10] sm:$0xf]
  %v17 = vld [vmem:[%s0 + $0x14] sm:$0xf]
  %v18 = vld [vmem:[%s0 + $0x18] sm:$0xf]
  %v19 = vld [vmem:[%s0 + $0x1c] sm:$0xf]
  %v20 = vld [vmem:[%s0 + $0x20] sm:$0xf]
  %v21 = vld [vmem:[%s0 + $0x24] sm:$0xf]
  %v22 = vld [vmem:[%s0 + $0x28] sm:$0xf]
  %v23 = vld [vmem:[%s0 + $0x2c] sm:$0xf]
  %v24 = vld [vmem:[%s0 + $0x30] sm:$0xf]
  %v25 = vld [vmem:[%s0 + $0x34] sm:$0xf]
  %v26 = vld [vmem:[%s0 + $0x38] sm:$0xf]
  %v27 = vld [vmem:[%s0 + $0x3c] sm:$0xf]
  %v28 = vld [vmem:[%s0 + $0x40] sm:$0xf]
  %v29 = vld [vmem:[%s0 + $0x44] sm:$0xf]
  %v30 = vld [vmem:[%s0 + $0x48] sm:$0xf]
  %v31 = vld [vmem:[%s0 + $0x4c] sm:$0xf]
  %v32 = vld [vmem:[%s0 + $0x50] sm:$0xf]
  %v33 = vld [vmem:[%s0 + $0x54] sm:$0xf]
  %v34 = vld [vmem:[%s0 + $0x58] sm:$0xf]
  %v35 = vld [vmem:[%s0 + $0x5c] sm:$0xf]
  %v36 = vld [vmem:[%s0 + $0x60] sm:$0xf]
  %v37 = vld [vmem:[%s0 + $0x64] sm:$0xf]
  %v38 = vld [vmem:[%s0 + $0x68] sm:$0xf]
  %v39 = vld [vmem:[%s0 + $0x6c] sm:$0xf]
  %v40 = vld [vmem:[%s0 + $0x70] sm:$0xf]
  %v41 = vld [vmem:[%s0 + $0x74] sm:$0xf]
  %v42 = vld [vmem:[%s0 + $0x78] sm:$0xf]
  %v43 = vld [vmem:[%s0 + $0x7c] sm:$0xf]
  %v44 = vld [vmem:[%s0 + $0x80] sm:$0xf]
  %v45 = vld [vmem:[%s0 + $0x84] sm:$0xf]
  %v46 = vld [vmem:[%s0 + $0x88] sm:$0xf]
  %v47 = vld [vmem:[%s0 + $0x8c] sm:$0xf]
  %v48 = vld [vmem:[%s0 + $0x90] sm:$0xf]
  %v49 = vld [vmem:[%s0 + $0x94] sm:$0xf]
  %v50 = vld [vmem:[%s0 + $0x98] sm:$0xf]
  %v51 = vld [vmem:[%s0 + $0x9c] sm:$0xf]
  %v52 = vld [vmem:[%s0 + $0xa0] sm:$0xf]
  %v53 = vld [vmem:[%s0 + $0xa4] sm:$0xf]
  %v54 = vld [vmem:[%s0 + $0xa8] sm:$0xf]
  %v55 = vld [vmem:[%s0 + $0xac] sm:$0xf]
  %v56 = vld [vmem:[%s0 + $0xb0] sm:$0xf]
  %v57 = vld [vmem:[%s0 + $0xb4] sm:$0xf]
  %v58 = vld [vmem:[%s0 + $0xb8] sm:$0xf]
  %v59 = vld [vmem:[%s0 + $0xbc] sm:$0xf]
  %v60 = vld [vmem:[%s0 + $0xc0] sm:$0xf]
  %v61 = vld [vmem:[%s0 + $0xc4] sm:$0xf]
  %v62 = vld [vmem:[%s0 + $0xc8] sm:$0xf]
  %v63 = vld [vmem:[%s0 + $0xcc] sm:$0xf]
  %v64 = vld [vmem:[%s0 + $0xd0] sm:$0xf]
  %v65 = vld [vmem:[%s0 + $0xd4] sm:$0xf]
  %v66 = vld [vmem:[%s0 + $0xd8] sm:$0xf]
  %v67 = vld [vmem:[%s0 + $0xdc] sm:$0xf]
  %v68 = vld [vmem:[%s0 + $0xe0] sm:$0xf]
  %v69 = vld [vmem:[%s0 + $0xe4] sm:$0xf]
  %v70 = vld [vmem:[%s0 + $0xe8] sm:$0xf]
  %v71 = vld [vmem:[%s0 + $0xec] sm:$0xf]
  %v72 = vld [vmem:[%s0 + $0xf0] sm:$0xf]
  %v73 = vld [vmem:[%s0 + $0xf4] sm:$0xf]
  %v74 = vld [vmem:[%s0 + $0xf8] sm:$0xf]
  %v75 = vld [vmem:[%s0 + $0xfc] sm:$0xf]
  %v76 = vld [vmem:[%s0 + $0x100] sm:$0xf]
  %v77 = vld [vmem:[%s0 + $0x104] sm:$0xf]
  %v78 = vld [vmem:[%s0 + $0x108] sm:$0xf]
  %v79 = vld [vmem:[%s0 + $0x10c] sm:$0xf]
  %v80 = vld [vmem:[%s0 + $0x110] sm:$0xf]
  %v81 = vld [vmem:[%s0 + $0x114] sm:$0xf]
  %v82 = vld [vmem:[%s0 + $0x118] sm:$0xf]
  %v83 = vld [vmem:[%s0 + $0x11c] sm:$0xf]
  %v84 = vld [vmem:[%s0 + $0x120] sm:$0xf]
  %v85 = vld [vmem:[%s0 + $0x124] sm:$0xf]
  %v86 = vld [vmem:[%s0 + $0x128] sm:$0xf]
  %v87 = vld [vmem:[%s0 + $0x12c] sm:$0xf]
  %v88 = vld [vmem:[%s0 + $0x130] sm:$0xf]
  %v89 = vld [vmem:[%s0 + $0x134] sm:$0xf]
  %v90 = vld [vmem:[%s0 + $0x138] sm:$0xf]
  %v91 = vld [vmem:[%s0 + $0x13c] sm:$0xf]
  %v92 = vld [vmem:[%s0 + $0x140] sm:$0xf]
  %v93 = vld [vmem:[%s0 + $0x144] sm:$0xf]
  %v94 = vld [vmem:[%s0 + $0x148] sm:$0xf]
  %v95 = vld [vmem:[%s0 + $0x14c] sm:$0xf]
  %v96 = vld [vmem:[%s0 + $0x150] sm:$0xf]
  %v97 = vld [vmem:[%s0 + $0x154] sm:$0xf]
  %v98 = vld [vmem:[%s0 + $0x158] sm:$0xf]
  %v99 = vld [vmem:[%s0 + $0x15c] sm:$0xf]
  %v100 = vld [vmem:[%s0 + $0x160] sm:$0xf]
  %v101 = vld [vmem:[%s0 + $0x164] sm:$0xf]
  %v102 = vld [vmem:[%s0 + $0x168] sm:$0xf]
  %v103 = vld [vmem:[%s0 + $0x16c] sm:$0xf]
  %v104 = vld [vmem:[%s0 + $0x170] sm:$0xf]
  %v105 = vld [vmem:[%s0 + $0x174] sm:$0xf]
  %v106 = vld [vmem:[%s0 + $0x178] sm:$0xf]
  %v107 = vld [vmem:[%s0 + $0x17c] sm:$0xf]
  %v108 = vld [vmem:[%s0 + $0x180] sm:$0xf]
  %v109 = vld [vmem:[%s0 + $0x184] sm:$0xf]
  %v110 = vld [vmem:[%s0 + $0x188] sm:$0xf]
  %v111 = vld [vmem:[%s0 + $0x18c] sm:$0xf]
  %v112 = vld [vmem:[%s0 + $0x190] sm:$0xf]
  %v113 = vld [vmem:[%s0 + $0x194] sm:$0xf]
  %v114 = vld [vmem:[%s0 + $0x198] sm:$0xf]
  %v115 = vld [vmem:[%s0 + $0x19c] sm:$0xf]
  %v116 = vld [vmem:[%s0 + $0x1a0] sm:$0xf]
  %v117 = vld [vmem:[%s0 + $0x1a4] sm:$0xf]
  %v118 = vld [vmem:[%s0 + $0x1a8] sm:$0xf]
  %v119 = vld [vmem:[%s0 + $0x1ac] sm:$0xf]
  %v120 = vld [vmem:[%s0 + $0x1b0] sm:$0xf]
  %v121 = vld [vmem:[%s0 + $0x1b4] sm:$0xf]
  %v122 = vld [vmem:[%s0 + $0x1b8] sm:$0xf]
  %v123 = vld [vmem:[%s0 + $0x1bc] sm:$0xf]
  %v124 = vld [vmem:[%s0 + $0x1c0] sm:$0xf]
  %v125 = vld [vmem:[%s0 + $0x1c4] sm:$0xf]
  %v126 = vld [vmem:[%s0 + $0x1c8] sm:$0xf]
  %v127 = vld [vmem:[%s0 + $0x1cc] sm:$0xf]
  %v128 = vld [vmem:[%s0 + $0x1d0] sm:$0xf]
  %v129 = vld [vmem:[%s0 + $0x1d4] sm:$0xf]
  %v130 = vld [vmem:[%s0 + $0x1d8] sm:$0xf]
  %v131 = vld [vmem:[%s0 + $0x1dc] sm:$0xf]
  %v132 = vld [vmem:[%s0 + $0x1e0] sm:$0xf]
  %v133 = vld [vmem:[%s0 + $0x1e4] sm:$0xf]
  %v134 = vld [vmem:[%s0 + $0x1e8] sm:$0xf]
  %v135 = vld [vmem:[%s0 + $0x1ec] sm:$0xf]
  %v136 = vld [vmem:[%s0 + $0x1f0] sm:$0xf]
  %v137 = vld [vmem:[%s0 + $0x1f4] sm:$0xf]
  %v138 = vld [vmem:[%s0 + $0x1f8] sm:$0xf]
  %v139 = vld [vmem:[%s0 + $0x1fc] sm:$0xf]
  %v140 = vld [vmem:[%s0 + $0x200] sm:$0xf]
  %v141 = vld [vmem:[%s0 + $0x204] sm:$0xf]
  %v142 = vld [vmem:[%s0 + $0x208] sm:$0xf]
  %v143 = vld [vmem:[%s0 + $0x20c] sm:$0xf]
  %v144 = vld [vmem:[%s0 + $0x210] sm:$0xf]
  %v145 = vld [vmem:[%s0 + $0x214] sm:$0xf]
  %v146 = vld [vmem:[%s0 + $0x218] sm:$0xf]
  %v147 = vld [vmem:[%s0 + $0x21c] sm:$0xf]
  %v148 = vld [vmem:[%s0 + $0x220] sm:$0xf]
  %v149 = vld [vmem:[%s0 + $0x224] sm:$0xf]
  %v150 = vld [vmem:[%s0 + $0x228] sm:$0xf]
  %v151 = vld [vmem:[%s0 + $0x22c] sm:$0xf]
  %v152 = vld [vmem:[%s0 + $0x230] sm:$0xf]
  %v153 = vld [vmem:[%s0 + $0x234] sm:$0xf]
  %v154 = vld [vmem:[%s0 + $0x238] sm:$0xf]
  %v155 = vld [vmem:[%s0 + $0x23c] sm:$0xf]
  %v156 = vld [vmem:[%s0 + $0x240] sm:$0xf]
  %v157 = vld [vmem:[%s0 + $0x244] sm:$0xf]
  %v158 = vld [vmem:[%s0 + $0x248] sm:$0xf]
  %v159 = vld [vmem:[%s0 + $0x24c] sm:$0xf]
  %v160 = vld [vmem:[%s0 + $0x250] sm:$0xf]
  %v161 = vld [vmem:[%s0 + $0x254] sm:$0xf]
  %v162 = vld [vmem:[%s0 + $0x258] sm:$0xf]
  %v163 = vld [vmem:[%s0 + $0x25c] sm:$0xf]
  %v164 = vld [vmem:[%s0 + $0x260] sm:$0xf]
  %v165 = vld [vmem:[%s0 + $0x264] sm:$0xf]
  %v166 = vld [vmem:[%s0 + $0x268] sm:$0xf]
  %v167 = vld [vmem:[%s0 + $0x26c] sm:$0xf]
  %v168 = vld [vmem:[%s0 + $0x270] sm:$0xf]
  %v169 = vld [vmem:[%s0 + $0x274] sm:$0xf]
  %v170 = vld [vmem:[%s0 + $0x278] sm:$0xf]
  %v171 = vld [vmem:[%s0 + $0x27c] sm:$0xf]
  %v172 = vld [vmem:[%s0 + $0x280] sm:$0xf]
  %v173 = vld [vmem:[%s0 + $0x284] sm:$0xf]
  %v174 = vld [vmem:[%s0 + $0x288] sm:$0xf]
  %v175 = vld [vmem:[%s0 + $0x28c] sm:$0xf]
  %v176 = vld [vmem:[%s0 + $0x290] sm:$0xf]
  %v177 = vld [vmem:[%s0 + $0x294] sm:$0xf]
  %v178 = vld [vmem:[%s0 + $0x298] sm:$0xf]
  %v179 = vld [vmem:[%s0 + $0x29c] sm:$0xf]
  %v180 = vld [vmem:[%s0 + $0x2a0] sm:$0xf]
  %v181 = vld [vmem:[%s0 + $0x2a4] sm:$0xf]
  %v182 = vld [vmem:[%s0 + $0x2a8] sm:$0xf]
  %v183 = vld [vmem:[%s0 + $0x2ac] sm:$0xf]
  %v184 = vld [vmem:[%s0 + $0x2b0] sm:$0xf]
  %v185 = vld [vmem:[%s0 + $0x2b4] sm:$0xf]
  %v186 = vld [vmem:[%s0 + $0x2b8] sm:$0xf]
  %v187 = vld [vmem:[%s0 + $0x2bc] sm:$0xf]
  %v188 = vld [vmem:[%s0 + $0x2c0] sm:$0xf]
  %v189 = vld [vmem:[%s0 + $0x2c4] sm:$0xf]
  %v190 = vld [vmem:[%s0 + $0x2c8] sm:$0xf]
  %v191 = vld [vmem:[%s0 + $0x2cc] sm:$0xf]
  %v192 = vld [vmem:[%s0 + $0x2d0] sm:$0xf]
  %v193 = vld [vmem:[%s0 + $0x2d4] sm:$0xf]
  %v194 = vld [vmem:[%s0 + $0x2d8] sm:$0xf]
  %v195 = vld [vmem:[%s0 + $0x2dc] sm:$0xf]
  %v196 = vld [vmem:[%s0 + $0x2e0] sm:$0xf]
  %v197 = vld [vmem:[%s0 + $0x2e4] sm:$0xf]
  %v198 = vld [vmem:[%s0 + $0x2e8] sm:$0xf]
  %v199 = vld [vmem:[%s0 + $0x2ec] sm:$0xf]
  %v200 = vld [vmem:[%s0 + $0x2f0] sm:$0xf]
  %v201 = vld [vmem:[%s0 + $0x2f4] sm:$0xf]
  %v202 = vld [vmem:[%s0 + $0x2f8] sm:$0xf]
  %v203 = vld [vmem:[%s0 + $0x2fc] sm:$0xf]
  %v204 = vld [vmem:[%s0 + $0x300] sm:$0xf]
  %v205 = vld [vmem:[%s0 + $0x304] sm:$0xf]
  %v206 = vld [vmem:[%s0 + $0x308] sm:$0xf]
  %v207 = vld [vmem:[%s0 + $0x30c] sm:$0xf]
  %v208 = vld [vmem:[%s0 + $0x310] sm:$0xf]
  %v209 = vld [vmem:[%s0 + $0x314] sm:$0xf]
  %v210 = vld [vmem:[%s0 + $0x318] sm:$0xf]
  %v211 = vld [vmem:[%s0 + $0x31c] sm:$0xf]
  %v212 = vld [vmem:[%s0 + $0x320] sm:$0xf]
  %v213 = vld [vmem:[%s0 + $0x324] sm:$0xf]
  %v214 = vld [vmem:[%s0 + $0x328] sm:$0xf]
  %v215 = vld [vmem:[%s0 + $0x32c] sm:$0xf]
  %v216 = vld [vmem:[%s0 + $0x330] sm:$0xf]
  %v217 = vld [vmem:[%s0 + $0x334] sm:$0xf]
  %v218 = vld [vmem:[%s0 + $0x338] sm:$0xf]
  %v219 = vld [vmem:[%s0 + $0x33c] sm:$0xf]
  %v220 = vld [vmem:[%s0 + $0x340] sm:$0xf]
  %v221 = vld [vmem:[%s0 + $0x344] sm:$0xf]
  %v222 = vld [vmem:[%s0 + $0x348] sm:$0xf]
  %v223 = vld [vmem:[%s0 + $0x34c] sm:$0xf]
  %v224 = vld [vmem:[%s0 + $0x350] sm:$0xf]
  %v225 = vld [vmem:[%s0 + $0x354] sm:$0xf]
  %v226 = vld [vmem:[%s0 + $0x358] sm:$0xf]
  %v227 = vld [vmem:[%s0 + $0x35c] sm:$0xf]
  %v228 = vld [vmem:[%s0 + $0x360] sm:$0xf]
  %v229 = vld [vmem:[%s0 + $0x364] sm:$0xf]
  %v230 = vld [vmem:[%s0 + $0x368] sm:$0xf]
  %v231 = vld [vmem:[%s0 + $0x36c] sm:$0xf]
  %v232 = vld [vmem:[%s0 + $0x370] sm:$0xf]
  %v233 = vld [vmem:[%s0 + $0x374] sm:$0xf]
  %v234 = vld [vmem:[%s0 + $0x378] sm:$0xf]
  %v235 = vld [vmem:[%s0 + $0x37c] sm:$0xf]
  %v236 = vld [vmem:[%s0 + $0x380] sm:$0xf]
  %v237 = vld [vmem:[%s0 + $0x384] sm:$0xf]
  %v238 = vld [vmem:[%s0 + $0x388] sm:$0xf]
  %v239 = vld [vmem:[%s0 + $0x38c] sm:$0xf]
  %v240 = vld [vmem:[%s0 + $0x390] sm:$0xf]
  %v241 = vld [vmem:[%s0 + $0x394] sm:$0xf]
  %v242 = vld [vmem:[%s0 + $0x398] sm:$0xf]
  %v243 = vld [vmem:[%s0 + $0x39c] sm:$0xf]
  %v244 = vld [vmem:[%s0 + $0x3a0] sm:$0xf]
  %v245 = vld [vmem:[%s0 + $0x3a4] sm:$0xf]
  %v246 = vld [vmem:[%s0 + $0x3a8] sm:$0xf]
  %v247 = vld [vmem:[%s0 + $0x3ac] sm:$0xf]
  %v248 = vld [vmem:[%s0 + $0x3b0] sm:$0xf]
  %v249 = vld [vmem:[%s0 + $0x3b4] sm:$0xf]
  %v250 = vld [vmem:[%s0 + $0x3b8] sm:$0xf]
  %v251 = vld [vmem:[%s0 + $0x3bc] sm:$0xf]
  %v252 = vld [vmem:[%s0 + $0x3c0] sm:$0xf]
  %v253 = vld [vmem:[%s0 + $0x3c4] sm:$0xf]
  %v254 = vld [vmem:[%s0 + $0x3c8] sm:$0xf]
  %v255 = vld [vmem:[%s0 + $0x3cc] sm:$0xf]
  %v256 = vld [vmem:[%s0 + $0x3d0] sm:$0xf]
  %v257 = vld [vmem:[%s0 + $0x3d4] sm:$0xf]
  %v258 = vld [vmem:[%s0 + $0x3d8] sm:$0xf]
  %v259 = vld [vmem:[%s0 + $0x3dc] sm:$0xf]
  %v260 = vld [vmem:[%s0 + $0x3e0] sm:$0xf]
  %v261 = vld [vmem:[%s0 + $0x3e4] sm:$0xf]
  %v262 = vld [vmem:[%s0 + $0x3e8] sm:$0xf]
  %v263 = vld [vmem:[%s0 + $0x3ec] sm:$0xf]
  %v264 = vld [vmem:[%s0 + $0x3f0] sm:$0xf]
  %v265 = vld [vmem:[%s0 + $0x3f4] sm:$0xf]
  %v266 = vld [vmem:[%s0 + $0x3f8] sm:$0xf]
  %v267 = vld [vmem:[%s0 + $0x3fc] sm:$0xf]
  %v268 = vld [vmem:[%s1] sm:$0xf]
  %v269 = vld [vmem:[%s1 + $0x4] sm:$0xf]
  %v270 = vld [vmem:[%s1 + $0x8] sm:$0xf]
  %v271 = vld [vmem:[%s1 + $0xc] sm:$0xf]
  %v272 = vld [vmem:[%s1 + $0x10] sm:$0xf]
  %v273 = vld [vmem:[%s1 + $0x14] sm:$0xf]
  %v274 = vld [vmem:[%s1 + $0x18] sm:$0xf]
  %v275 = vld [vmem:[%s1 + $0x1c] sm:$0xf]
  %v276 = vld [vmem:[%s1 + $0x20] sm:$0xf]
  %v277 = vld [vmem:[%s1 + $0x24] sm:$0xf]
  %v278 = vld [vmem:[%s1 + $0x28] sm:$0xf]
  %v279 = vld [vmem:[%s1 + $0x2c] sm:$0xf]
  %v280 = vld [vmem:[%s1 + $0x30] sm:$0xf]
  %v281 = vld [vmem:[%s1 + $0x34] sm:$0xf]
  %v282 = vld [vmem:[%s1 + $0x38] sm:$0xf]
  %v283 = vld [vmem:[%s1 + $0x3c] sm:$0xf]
  %v540 = vunpack.c.l.b16 %v12
  %v541 = vunpack.c.l.b16 %v13
  %v542 = vunpack.c.l.b16 %v14
  %v543 = vunpack.c.l.b16 %v15
  %v544 = vunpack.c.l.b16 %v16
  %v545 = vunpack.c.l.b16 %v17
  %v546 = vunpack.c.l.b16 %v18
  %v547 = vunpack.c.l.b16 %v19
  %v548 = vunpack.c.l.b16 %v20
  %v549 = vunpack.c.l.b16 %v21
  %v550 = vunpack.c.l.b16 %v22
  %v551 = vunpack.c.l.b16 %v23
  %v552 = vunpack.c.l.b16 %v24
  %v553 = vunpack.c.l.b16 %v25
  %v554 = vunpack.c.l.b16 %v26
  %v555 = vunpack.c.l.b16 %v27
  %v556 = vunpack.c.l.b16 %v28
  %v557 = vunpack.c.l.b16 %v29
  %v558 = vunpack.c.l.b16 %v30
  %v559 = vunpack.c.l.b16 %v31
  %v560 = vunpack.c.l.b16 %v32
  %v561 = vunpack.c.l.b16 %v33
  %v562 = vunpack.c.l.b16 %v34
  %v563 = vunpack.c.l.b16 %v35
  %v564 = vunpack.c.l.b16 %v36
  %v565 = vunpack.c.l.b16 %v37
  %v566 = vunpack.c.l.b16 %v38
  %v567 = vunpack.c.l.b16 %v39
  %v568 = vunpack.c.l.b16 %v40
  %v569 = vunpack.c.l.b16 %v41
  %v570 = vunpack.c.l.b16 %v42
  %v571 = vunpack.c.l.b16 %v43
  %v572 = vunpack.c.l.b16 %v44
  %v573 = vunpack.c.l.b16 %v45
  %v574 = vunpack.c.l.b16 %v46
  %v575 = vunpack.c.l.b16 %v47
  %v576 = vunpack.c.l.b16 %v48
  %v577 = vunpack.c.l.b16 %v49
  %v578 = vunpack.c.l.b16 %v50
  %v579 = vunpack.c.l.b16 %v51
  %v580 = vunpack.c.l.b16 %v52
  %v581 = vunpack.c.l.b16 %v53
  %v582 = vunpack.c.l.b16 %v54
  %v583 = vunpack.c.l.b16 %v55
  %v584 = vunpack.c.l.b16 %v56
  %v585 = vunpack.c.l.b16 %v57
  %v586 = vunpack.c.l.b16 %v58
  %v587 = vunpack.c.l.b16 %v59
  %v588 = vunpack.c.l.b16 %v60
  %v589 = vunpack.c.l.b16 %v61
  %v590 = vunpack.c.l.b16 %v62
  %v591 = vunpack.c.l.b16 %v63
  %v592 = vunpack.c.l.b16 %v64
  %v593 = vunpack.c.l.b16 %v65
  %v594 = vunpack.c.l.b16 %v66
  %v595 = vunpack.c.l.b16 %v67
  %v596 = vunpack.c.l.b16 %v68
  %v597 = vunpack.c.l.b16 %v69
  %v598 = vunpack.c.l.b16 %v70
  %v599 = vunpack.c.l.b16 %v71
  %v600 = vunpack.c.l.b16 %v72
  %v601 = vunpack.c.l.b16 %v73
  %v602 = vunpack.c.l.b16 %v74
  %v603 = vunpack.c.l.b16 %v75
  %v604 = vunpack.c.l.b16 %v76
  %v605 = vunpack.c.l.b16 %v77
  %v606 = vunpack.c.l.b16 %v78
  %v607 = vunpack.c.l.b16 %v79
  %v608 = vunpack.c.l.b16 %v80
  %v609 = vunpack.c.l.b16 %v81
  %v610 = vunpack.c.l.b16 %v82
  %v611 = vunpack.c.l.b16 %v83
  %v612 = vunpack.c.l.b16 %v84
  %v613 = vunpack.c.l.b16 %v85
  %v614 = vunpack.c.l.b16 %v86
  %v615 = vunpack.c.l.b16 %v87
  %v616 = vunpack.c.l.b16 %v88
  %v617 = vunpack.c.l.b16 %v89
  %v618 = vunpack.c.l.b16 %v90
  %v619 = vunpack.c.l.b16 %v91
  %v620 = vunpack.c.l.b16 %v92
  %v621 = vunpack.c.l.b16 %v93
  %v622 = vunpack.c.l.b16 %v94
  %v623 = vunpack.c.l.b16 %v95
  %v624 = vunpack.c.l.b16 %v96
  %v625 = vunpack.c.l.b16 %v97
  %v626 = vunpack.c.l.b16 %v98
  %v627 = vunpack.c.l.b16 %v99
  %v628 = vunpack.c.l.b16 %v100
  %v629 = vunpack.c.l.b16 %v101
  %v630 = vunpack.c.l.b16 %v102
  %v631 = vunpack.c.l.b16 %v103
  %v632 = vunpack.c.l.b16 %v104
  %v633 = vunpack.c.l.b16 %v105
  %v634 = vunpack.c.l.b16 %v106
  %v635 = vunpack.c.l.b16 %v107
  %v636 = vunpack.c.l.b16 %v108
  %v637 = vunpack.c.l.b16 %v109
  %v638 = vunpack.c.l.b16 %v110
  %v639 = vunpack.c.l.b16 %v111
  %v640 = vunpack.c.l.b16 %v112
  %v641 = vunpack.c.l.b16 %v113
  %v642 = vunpack.c.l.b16 %v114
  %v643 = vunpack.c.l.b16 %v115
  %v644 = vunpack.c.l.b16 %v116
  %v645 = vunpack.c.l.b16 %v117
  %v646 = vunpack.c.l.b16 %v118
  %v647 = vunpack.c.l.b16 %v119
  %v648 = vunpack.c.l.b16 %v120
  %v649 = vunpack.c.l.b16 %v121
  %v650 = vunpack.c.l.b16 %v122
  %v651 = vunpack.c.l.b16 %v123
  %v652 = vunpack.c.l.b16 %v124
  %v653 = vunpack.c.l.b16 %v125
  %v654 = vunpack.c.l.b16 %v126
  %v655 = vunpack.c.l.b16 %v127
  %v656 = vunpack.c.l.b16 %v128
  %v657 = vunpack.c.l.b16 %v129
  %v658 = vunpack.c.l.b16 %v130
  %v659 = vunpack.c.l.b16 %v131
  %v660 = vunpack.c.l.b16 %v132
  %v661 = vunpack.c.l.b16 %v133
  %v662 = vunpack.c.l.b16 %v134
  %v663 = vunpack.c.l.b16 %v135
  %v664 = vunpack.c.l.b16 %v136
  %v665 = vunpack.c.l.b16 %v137
  %v666 = vunpack.c.l.b16 %v138
  %v667 = vunpack.c.l.b16 %v139
  %v668 = vunpack.c.l.b16 %v140
  %v669 = vunpack.c.l.b16 %v141
  %v670 = vunpack.c.l.b16 %v142
  %v671 = vunpack.c.l.b16 %v143
  %v672 = vunpack.c.l.b16 %v144
  %v673 = vunpack.c.l.b16 %v145
  %v674 = vunpack.c.l.b16 %v146
  %v675 = vunpack.c.l.b16 %v147
  %v676 = vunpack.c.l.b16 %v148
  %v677 = vunpack.c.l.b16 %v149
  %v678 = vunpack.c.l.b16 %v150
  %v679 = vunpack.c.l.b16 %v151
  %v680 = vunpack.c.l.b16 %v152
  %v681 = vunpack.c.l.b16 %v153
  %v682 = vunpack.c.l.b16 %v154
  %v683 = vunpack.c.l.b16 %v155
  %v684 = vunpack.c.l.b16 %v156
  %v685 = vunpack.c.l.b16 %v157
  %v686 = vunpack.c.l.b16 %v158
  %v687 = vunpack.c.l.b16 %v159
  %v688 = vunpack.c.l.b16 %v160
  %v689 = vunpack.c.l.b16 %v161
  %v690 = vunpack.c.l.b16 %v162
  %v691 = vunpack.c.l.b16 %v163
  %v692 = vunpack.c.l.b16 %v164
  %v693 = vunpack.c.l.b16 %v165
  %v694 = vunpack.c.l.b16 %v166
  %v695 = vunpack.c.l.b16 %v167
  %v696 = vunpack.c.l.b16 %v168
  %v697 = vunpack.c.l.b16 %v169
  %v698 = vunpack.c.l.b16 %v170
  %v699 = vunpack.c.l.b16 %v171
  %v700 = vunpack.c.l.b16 %v172
  %v701 = vunpack.c.l.b16 %v173
  %v702 = vunpack.c.l.b16 %v174
  %v703 = vunpack.c.l.b16 %v175
  %v704 = vunpack.c.l.b16 %v176
  %v705 = vunpack.c.l.b16 %v177
  %v706 = vunpack.c.l.b16 %v178
  %v707 = vunpack.c.l.b16 %v179
  %v708 = vunpack.c.l.b16 %v180
  %v709 = vunpack.c.l.b16 %v181
  %v710 = vunpack.c.l.b16 %v182
  %v711 = vunpack.c.l.b16 %v183
  %v712 = vunpack.c.l.b16 %v184
  %v713 = vunpack.c.l.b16 %v185
  %v714 = vunpack.c.l.b16 %v186
  %v715 = vunpack.c.l.b16 %v187
  %v716 = vunpack.c.l.b16 %v188
  %v717 = vunpack.c.l.b16 %v189
  %v718 = vunpack.c.l.b16 %v190
  %v719 = vunpack.c.l.b16 %v191
  %v720 = vunpack.c.l.b16 %v192
  %v721 = vunpack.c.l.b16 %v193
  %v722 = vunpack.c.l.b16 %v194
  %v723 = vunpack.c.l.b16 %v195
  %v724 = vunpack.c.l.b16 %v196
  %v725 = vunpack.c.l.b16 %v197
  %v726 = vunpack.c.l.b16 %v198
  %v727 = vunpack.c.l.b16 %v199
  %v728 = vunpack.c.l.b16 %v200
  %v729 = vunpack.c.l.b16 %v201
  %v730 = vunpack.c.l.b16 %v202
  %v731 = vunpack.c.l.b16 %v203
  %v732 = vunpack.c.l.b16 %v204
  %v733 = vunpack.c.l.b16 %v205
  %v734 = vunpack.c.l.b16 %v206
  %v735 = vunpack.c.l.b16 %v207
  %v736 = vunpack.c.l.b16 %v208
  %v737 = vunpack.c.l.b16 %v209
  %v738 = vunpack.c.l.b16 %v210
  %v739 = vunpack.c.l.b16 %v211
  %v740 = vunpack.c.l.b16 %v212
  %v741 = vunpack.c.l.b16 %v213
  %v742 = vunpack.c.l.b16 %v214
  %v743 = vunpack.c.l.b16 %v215
  %v744 = vunpack.c.l.b16 %v216
  %v745 = vunpack.c.l.b16 %v217
  %v746 = vunpack.c.l.b16 %v218
  %v747 = vunpack.c.l.b16 %v219
  %v748 = vunpack.c.l.b16 %v220
  %v749 = vunpack.c.l.b16 %v221
  %v750 = vunpack.c.l.b16 %v222
  %v751 = vunpack.c.l.b16 %v223
  %v752 = vunpack.c.l.b16 %v224
  %v753 = vunpack.c.l.b16 %v225
  %v754 = vunpack.c.l.b16 %v226
  %v755 = vunpack.c.l.b16 %v227
  %v756 = vunpack.c.l.b16 %v228
  %v757 = vunpack.c.l.b16 %v229
  %v758 = vunpack.c.l.b16 %v230
  %v759 = vunpack.c.l.b16 %v231
  %v760 = vunpack.c.l.b16 %v232
  %v761 = vunpack.c.l.b16 %v233
  %v762 = vunpack.c.l.b16 %v234
  %v763 = vunpack.c.l.b16 %v235
  %v764 = vunpack.c.l.b16 %v236
  %v765 = vunpack.c.l.b16 %v237
  %v766 = vunpack.c.l.b16 %v238
  %v767 = vunpack.c.l.b16 %v239
  %v768 = vunpack.c.l.b16 %v240
  %v769 = vunpack.c.l.b16 %v241
  %v770 = vunpack.c.l.b16 %v242
  %v771 = vunpack.c.l.b16 %v243
  %v772 = vunpack.c.l.b16 %v244
  %v773 = vunpack.c.l.b16 %v245
  %v774 = vunpack.c.l.b16 %v246
  %v775 = vunpack.c.l.b16 %v247
  %v776 = vunpack.c.l.b16 %v248
  %v777 = vunpack.c.l.b16 %v249
  %v778 = vunpack.c.l.b16 %v250
  %v779 = vunpack.c.l.b16 %v251
  %v780 = vunpack.c.l.b16 %v252
  %v781 = vunpack.c.l.b16 %v253
  %v782 = vunpack.c.l.b16 %v254
  %v783 = vunpack.c.l.b16 %v255
  %v784 = vunpack.c.l.b16 %v256
  %v785 = vunpack.c.l.b16 %v257
  %v786 = vunpack.c.l.b16 %v258
  %v787 = vunpack.c.l.b16 %v259
  %v788 = vunpack.c.l.b16 %v260
  %v789 = vunpack.c.l.b16 %v261
  %v790 = vunpack.c.l.b16 %v262
  %v791 = vunpack.c.l.b16 %v263
  %v792 = vunpack.c.l.b16 %v264
  %v793 = vunpack.c.l.b16 %v265
  %v794 = vunpack.c.l.b16 %v266
  %v795 = vunpack.c.l.b16 %v267
  %v796 = vpack.c.b16 %v541, %v540
  %v797 = vpack.c.b16 %v543, %v542
  %v798 = vpack.c.b16 %v545, %v544
  %v799 = vpack.c.b16 %v547, %v546
  %v800 = vpack.c.b16 %v549, %v548
  %v801 = vpack.c.b16 %v551, %v550
  %v802 = vpack.c.b16 %v553, %v552
  %v803 = vpack.c.b16 %v555, %v554
  %v804 = vpack.c.b16 %v557, %v556
  %v805 = vpack.c.b16 %v559, %v558
  %v806 = vpack.c.b16 %v561, %v560
  %v807 = vpack.c.b16 %v563, %v562
  %v808 = vpack.c.b16 %v565, %v564
  %v809 = vpack.c.b16 %v567, %v566
  %v810 = vpack.c.b16 %v569, %v568
  %v811 = vpack.c.b16 %v571, %v570
  %v812 = vpack.c.b16 %v573, %v572
  %v813 = vpack.c.b16 %v575, %v574
  %v814 = vpack.c.b16 %v577, %v576
  %v815 = vpack.c.b16 %v579, %v578
  %v816 = vpack.c.b16 %v581, %v580
  %v817 = vpack.c.b16 %v583, %v582
  %v818 = vpack.c.b16 %v585, %v584
  %v819 = vpack.c.b16 %v587, %v586
  %v820 = vpack.c.b16 %v589, %v588
  %v821 = vpack.c.b16 %v591, %v590
  %v822 = vpack.c.b16 %v593, %v592
  %v823 = vpack.c.b16 %v595, %v594
  %v824 = vpack.c.b16 %v597, %v596
  %v825 = vpack.c.b16 %v599, %v598
  %v826 = vpack.c.b16 %v601, %v600
  %v827 = vpack.c.b16 %v603, %v602
  %v828 = vpack.c.b16 %v605, %v604
  %v829 = vpack.c.b16 %v607, %v606
  %v830 = vpack.c.b16 %v609, %v608
  %v831 = vpack.c.b16 %v611, %v610
  %v832 = vpack.c.b16 %v613, %v612
  %v833 = vpack.c.b16 %v615, %v614
  %v834 = vpack.c.b16 %v617, %v616
  %v835 = vpack.c.b16 %v619, %v618
  %v836 = vpack.c.b16 %v621, %v620
  %v837 = vpack.c.b16 %v623, %v622
  %v838 = vpack.c.b16 %v625, %v624
  %v839 = vpack.c.b16 %v627, %v626
  %v840 = vpack.c.b16 %v629, %v628
  %v841 = vpack.c.b16 %v631, %v630
  %v842 = vpack.c.b16 %v633, %v632
  %v843 = vpack.c.b16 %v635, %v634
  %v844 = vpack.c.b16 %v637, %v636
  %v845 = vpack.c.b16 %v639, %v638
  %v846 = vpack.c.b16 %v641, %v640
  %v847 = vpack.c.b16 %v643, %v642
  %v848 = vpack.c.b16 %v645, %v644
  %v849 = vpack.c.b16 %v647, %v646
  %v850 = vpack.c.b16 %v649, %v648
  %v851 = vpack.c.b16 %v651, %v650
  %v852 = vpack.c.b16 %v653, %v652
  %v853 = vpack.c.b16 %v655, %v654
  %v854 = vpack.c.b16 %v657, %v656
  %v855 = vpack.c.b16 %v659, %v658
  %v856 = vpack.c.b16 %v661, %v660
  %v857 = vpack.c.b16 %v663, %v662
  %v858 = vpack.c.b16 %v665, %v664
  %v859 = vpack.c.b16 %v667, %v666
  %v860 = vpack.c.b16 %v669, %v668
  %v861 = vpack.c.b16 %v671, %v670
  %v862 = vpack.c.b16 %v673, %v672
  %v863 = vpack.c.b16 %v675, %v674
  %v864 = vpack.c.b16 %v677, %v676
  %v865 = vpack.c.b16 %v679, %v678
  %v866 = vpack.c.b16 %v681, %v680
  %v867 = vpack.c.b16 %v683, %v682
  %v868 = vpack.c.b16 %v685, %v684
  %v869 = vpack.c.b16 %v687, %v686
  %v870 = vpack.c.b16 %v689, %v688
  %v871 = vpack.c.b16 %v691, %v690
  %v872 = vpack.c.b16 %v693, %v692
  %v873 = vpack.c.b16 %v695, %v694
  %v874 = vpack.c.b16 %v697, %v696
  %v875 = vpack.c.b16 %v699, %v698
  %v876 = vpack.c.b16 %v701, %v700
  %v877 = vpack.c.b16 %v703, %v702
  %v878 = vpack.c.b16 %v705, %v704
  %v879 = vpack.c.b16 %v707, %v706
  %v880 = vpack.c.b16 %v709, %v708
  %v881 = vpack.c.b16 %v711, %v710
  %v882 = vpack.c.b16 %v713, %v712
  %v883 = vpack.c.b16 %v715, %v714
  %v884 = vpack.c.b16 %v717, %v716
  %v885 = vpack.c.b16 %v719, %v718
  %v886 = vpack.c.b16 %v721, %v720
  %v887 = vpack.c.b16 %v723, %v722
  %v888 = vpack.c.b16 %v725, %v724
  %v889 = vpack.c.b16 %v727, %v726
  %v890 = vpack.c.b16 %v729, %v728
  %v891 = vpack.c.b16 %v731, %v730
  %v892 = vpack.c.b16 %v733, %v732
  %v893 = vpack.c.b16 %v735, %v734
  %v894 = vpack.c.b16 %v737, %v736
  %v895 = vpack.c.b16 %v739, %v738
  %v896 = vpack.c.b16 %v741, %v740
  %v897 = vpack.c.b16 %v743, %v742
  %v898 = vpack.c.b16 %v745, %v744
  %v899 = vpack.c.b16 %v747, %v746
  %v900 = vpack.c.b16 %v749, %v748
  %v901 = vpack.c.b16 %v751, %v750
  %v902 = vpack.c.b16 %v753, %v752
  %v903 = vpack.c.b16 %v755, %v754
  %v904 = vpack.c.b16 %v757, %v756
  %v905 = vpack.c.b16 %v759, %v758
  %v906 = vpack.c.b16 %v761, %v760
  %v907 = vpack.c.b16 %v763, %v762
  %v908 = vpack.c.b16 %v765, %v764
  %v909 = vpack.c.b16 %v767, %v766
  %v910 = vpack.c.b16 %v769, %v768
  %v911 = vpack.c.b16 %v771, %v770
  %v912 = vpack.c.b16 %v773, %v772
  %v913 = vpack.c.b16 %v775, %v774
  %v914 = vpack.c.b16 %v777, %v776
  %v915 = vpack.c.b16 %v779, %v778
  %v916 = vpack.c.b16 %v781, %v780
  %v917 = vpack.c.b16 %v783, %v782
  %v918 = vpack.c.b16 %v785, %v784
  %v919 = vpack.c.b16 %v787, %v786
  %v920 = vpack.c.b16 %v789, %v788
  %v921 = vpack.c.b16 %v791, %v790
  %v922 = vpack.c.b16 %v793, %v792
  %v923 = vpack.c.b16 %v795, %v794
  %v1068 = vunpack.c.l.b16 %v268
  %v1069 = vunpack.c.l.b16 %v269
  %v1070 = vunpack.c.l.b16 %v270
  %v1071 = vunpack.c.l.b16 %v271
  %v1072 = vunpack.c.l.b16 %v272
  %v1073 = vunpack.c.l.b16 %v273
  %v1074 = vunpack.c.l.b16 %v274
  %v1075 = vunpack.c.l.b16 %v275
  %v1076 = vunpack.c.l.b16 %v276
  %v1077 = vunpack.c.l.b16 %v277
  %v1078 = vunpack.c.l.b16 %v278
  %v1079 = vunpack.c.l.b16 %v279
  %v1080 = vunpack.c.l.b16 %v280
  %v1081 = vunpack.c.l.b16 %v281
  %v1082 = vunpack.c.l.b16 %v282
  %v1083 = vunpack.c.l.b16 %v283
  %v1084 = vpack.c.b16 %v1069, %v1068
  %v1085 = vpack.c.b16 %v1071, %v1070
  %v1086 = vpack.c.b16 %v1073, %v1072
  %v1087 = vpack.c.b16 %v1075, %v1074
  %v1088 = vpack.c.b16 %v1077, %v1076
  %v1089 = vpack.c.b16 %v1079, %v1078
  %v1090 = vpack.c.b16 %v1081, %v1080
  %v1091 = vpack.c.b16 %v1083, %v1082
  %1100 = vmatprep.subr.bf16.mxu0 0
  %1101 = vmatpush1.bf16.msra.mxu0 %v1084
  %1102 = vmatprep.subr.bf16.mxu0 0
  %1103 = vmatpush1.bf16.msra.mxu0 %v1085
  %1104 = vmatprep.subr.bf16.mxu0 0
  %1105 = vmatpush1.bf16.msra.mxu0 %v1086
  %1106 = vmatprep.subr.bf16.mxu0 0
  %1107 = vmatpush1.bf16.msra.mxu0 %v1087
  %1108 = vmatprep.subr.bf16.mxu0 0
  %1109 = vmatpush1.bf16.msra.mxu0 %v1088
  %1110 = vmatprep.subr.bf16.mxu0 0
  %1111 = vmatpush1.bf16.msra.mxu0 %v1089
  %1112 = vmatprep.subr.bf16.mxu0 0
  %1113 = vmatpush1.bf16.msra.mxu0 %v1090
  %1114 = vmatprep.subr.bf16.mxu0 0
  %1115 = vmatpush1.bf16.msra.mxu0 %v1091
  %1116 = vmatprep.subr.bf16.mxu0 0
  %1117 = vmatpush1.bf16.msra.mxu0 0
  %1118 = vmatprep.subr.bf16.mxu0 0
  %1119 = vmatpush1.bf16.msra.mxu0 0
  %1120 = vmatprep.subr.bf16.mxu0 0
  %1121 = vmatpush1.bf16.msra.mxu0 0
  %1122 = vmatprep.subr.bf16.mxu0 0
  %1123 = vmatpush1.bf16.msra.mxu0 0
  %1124 = vmatprep.subr.bf16.mxu0 0
  %1125 = vmatpush1.bf16.msra.mxu0 0
  %1126 = vmatprep.subr.bf16.mxu0 0
  %1127 = vmatpush1.bf16.msra.mxu0 0
  %1128 = vmatprep.subr.bf16.mxu0 0
  %1129 = vmatpush1.bf16.msra.mxu0 0
  %1130 = vmatprep.subr.bf16.mxu0 0
  %1131 = vmatpush1.bf16.msra.mxu0 0
  %1132 = vmatprep.mubr.bf16.mxu0 0
  %1133 = vmatmul.mubr.bf16.gmra.mrb[0].mxu0 %v796
  %v1134 = vpop.f32.mrb[0].mxu0
  %v1135 = vadd.f32 0.0, %v1134
  %v1136 = vpop.f32.mrb[0].mxu0
  %v1137 = vpop.f32.mrb[0].mxu0
  %v1138 = vadd.f32 0.0, %v1137
  %v1139 = vpop.f32.mrb[0].mxu0
  %1140 = vmatprep.mubr.bf16.mxu0 0
  %1141 = vmatmul.mubr.bf16.gmra.mrb[0].mxu0 %v797
  %v1142 = vpop.f32.mrb[0].mxu0
  %v1143 = vadd.f32 0.0, %v1142
  %v1144 = vpop.f32.mrb[0].mxu0
  %v1145 = vpop.f32.mrb[0].mxu0
  %v1146 = vadd.f32 0.0, %v1145
  %v1147 = vpop.f32.mrb[0].mxu0
  %1148 = vmatprep.mubr.bf16.mxu0 0
  %1149 = vmatmul.mubr.bf16.gmra.mrb[0].mxu0 %v798
  %v1150 = vpop.f32.mrb[0].mxu0
  %v1151 = vadd.f32 0.0, %v1150
  %v1152 = vpop.f32.mrb[0].mxu0
  %v1153 = vpop.f32.mrb[0].mxu0
  %v1154 = vadd.f32 0.0, %v1153
  %v1155 = vpop.f32.mrb[0].mxu0
  %1156 = vmatprep.mubr.bf16.mxu0 0
  %1157 = vmatmul.mubr.bf16.gmra.mrb[0].mxu0 %v799
  %v1158 = vpop.f32.mrb[0].mxu0
  %v1159 = vadd.f32 0.0, %v1158
  %v1160 = vpop.f32.mrb[0].mxu0
  %v1161 = vpop.f32.mrb[0].mxu0
  %v1162 = vadd.f32 0.0, %v1161
  %v1163 = vpop.f32.mrb[0].mxu0
  %1164 = vmatprep.mubr.bf16.mxu0 0
  %1165 = vmatmul.mubr.bf16.gmra.mrb[0].mxu0 %v800
  %v1166 = vpop.f32.mrb[0].mxu0
  %v1167 = vadd.f32 0.0, %v1166
  %v1168 = vpop.f32.mrb[0].mxu0
  %v1169 = vpop.f32.mrb[0].mxu0
  %v1170 = vadd.f32 0.0, %v1169
  %v1171 = vpop.f32.mrb[0].mxu0
  %1172 = vmatprep.mubr.bf16.mxu0 0
  %1173 = vmatmul.mubr.bf16.gmra.mrb[0].mxu0 %v801
  %v1174 = vpop.f32.mrb[0].mxu0
  %v1175 = vadd.f32 0.0, %v1174
  %v1176 = vpop.f32.mrb[0].mxu0
  %v1177 = vpop.f32.mrb[0].mxu0
  %v1178 = vadd.f32 0.0, %v1177
  %v1179 = vpop.f32.mrb[0].mxu0
  %1180 = vmatprep.mubr.bf16.mxu0 0
  %1181 = vmatmul.mubr.bf16.gmra.mrb[0].mxu0 %v802
  %v1182 = vpop.f32.mrb[0].mxu0
  %v1183 = vadd.f32 0.0, %v1182
  %v1184 = vpop.f32.mrb[0].mxu0
  %v1185 = vpop.f32.mrb[0].mxu0
  %v1186 = vadd.f32 0.0, %v1185
  %v1187 = vpop.f32.mrb[0].mxu0
  %1188 = vmatprep.mubr.bf16.mxu0 0
  %1189 = vmatmul.mubr.bf16.gmra.mrb[0].mxu0 %v803
  %v1190 = vpop.f32.mrb[0].mxu0
  %v1191 = vadd.f32 0.0, %v1190
  %v1192 = vpop.f32.mrb[0].mxu0
  %v1193 = vpop.f32.mrb[0].mxu0
  %v1194 = vadd.f32 0.0, %v1193
  %v1195 = vpop.f32.mrb[0].mxu0
  %1196 = vmatprep.mubr.bf16.mxu0 0
  %1197 = vmatmul.mubr.bf16.gmra.mrb[0].mxu0 %v804
  %v1198 = vpop.f32.mrb[0].mxu0
  %v1199 = vadd.f32 0.0, %v1198
  %v1200 = vpop.f32.mrb[0].mxu0
  %v1201 = vpop.f32.mrb[0].mxu0
  %v1202 = vadd.f32 0.0, %v1201
  %v1203 = vpop.f32.mrb[0].mxu0
  %1204 = vmatprep.mubr.bf16.mxu0 0
  %1205 = vmatmul.mubr.bf16.gmra.mrb[0].mxu0 %v805
  %v1206 = vpop.f32.mrb[0].mxu0
  %v1207 = vadd.f32 0.0, %v1206
  %v1208 = vpop.f32.mrb[0].mxu0
  %v1209 = vpop.f32.mrb[0].mxu0
  %v1210 = vadd.f32 0.0, %v1209
  %v1211 = vpop.f32.mrb[0].mxu0
  %1212 = vmatprep.mubr.bf16.mxu0 0
  %1213 = vmatmul.mubr.bf16.gmra.mrb[0].mxu0 %v806
  %v1214 = vpop.f32.mrb[0].mxu0
  %v1215 = vadd.f32 0.0, %v1214
  %v1216 = vpop.f32.mrb[0].mxu0
  %v1217 = vpop.f32.mrb[0].mxu0
  %v1218 = vadd.f32 0.0, %v1217
  %v1219 = vpop.f32.mrb[0].mxu0
  %1220 = vmatprep.mubr.bf16.mxu0 0
  %1221 = vmatmul.mubr.bf16.gmra.mrb[0].mxu0 %v807
  %v1222 = vpop.f32.mrb[0].mxu0
  %v1223 = vadd.f32 0.0, %v1222
  %v1224 = vpop.f32.mrb[0].mxu0
  %v1225 = vpop.f32.mrb[0].mxu0
  %v1226 = vadd.f32 0.0, %v1225
  %v1227 = vpop.f32.mrb[0].mxu0
  %1228 = vmatprep.mubr.bf16.mxu0 0
  %1229 = vmatmul.mubr.bf16.gmra.mrb[0].mxu0 %v808
  %v1230 = vpop.f32.mrb[0].mxu0
  %v1231 = vadd.f32 0.0, %v1230
  %v1232 = vpop.f32.mrb[0].mxu0
  %v1233 = vpop.f32.mrb[0].mxu0
  %v1234 = vadd.f32 0.0, %v1233
  %v1235 = vpop.f32.mrb[0].mxu0
  %1236 = vmatprep.mubr.bf16.mxu0 0
  %1237 = vmatmul.mubr.bf16.gmra.mrb[0].mxu0 %v809
  %v1238 = vpop.f32.mrb[0].mxu0
  %v1239 = vadd.f32 0.0, %v1238
  %v1240 = vpop.f32.mrb[0].mxu0
  %v1241 = vpop.f32.mrb[0].mxu0
  %v1242 = vadd.f32 0.0, %v1241
  %v1243 = vpop.f32.mrb[0].mxu0
  %1244 = vmatprep.mubr.bf16.mxu0 0
  %1245 = vmatmul.mubr.bf16.gmra.mrb[0].mxu0 %v810
  %v1246 = vpop.f32.mrb[0].mxu0
  %v1247 = vadd.f32 0.0, %v1246
  %v1248 = vpop.f32.mrb[0].mxu0
  %v1249 = vpop.f32.mrb[0].mxu0
  %v1250 = vadd.f32 0.0, %v1249
  %v1251 = vpop.f32.mrb[0].mxu0
  %1252 = vmatprep.mubr.bf16.mxu0 0
  %1253 = vmatmul.mubr.bf16.gmra.mrb[0].mxu0 %v811
  %v1254 = vpop.f32.mrb[0].mxu0
  %v1255 = vadd.f32 0.0, %v1254
  %v1256 = vpop.f32.mrb[0].mxu0
  %v1257 = vpop.f32.mrb[0].mxu0
  %v1258 = vadd.f32 0.0, %v1257
  %v1259 = vpop.f32.mrb[0].mxu0
  %1260 = vmatprep.mubr.bf16.mxu0 0
  %1261 = vmatmul.mubr.bf16.gmra.mrb[0].mxu0 %v812
  %v1262 = vpop.f32.mrb[0].mxu0
  %v1263 = vadd.f32 0.0, %v1262
  %v1264 = vpop.f32.mrb[0].mxu0
  %v1265 = vpop.f32.mrb[0].mxu0
  %v1266 = vadd.f32 0.0, %v1265
  %v1267 = vpop.f32.mrb[0].mxu0
  %1268 = vmatprep.mubr.bf16.mxu0 0
  %1269 = vmatmul.mubr.bf16.gmra.mrb[0].mxu0 %v813
  %v1270 = vpop.f32.mrb[0].mxu0
  %v1271 = vadd.f32 0.0, %v1270
  %v1272 = vpop.f32.mrb[0].mxu0
  %v1273 = vpop.f32.mrb[0].mxu0
  %v1274 = vadd.f32 0.0, %v1273
  %v1275 = vpop.f32.mrb[0].mxu0
  %1276 = vmatprep.mubr.bf16.mxu0 0
  %1277 = vmatmul.mubr.bf16.gmra.mrb[0].mxu0 %v814
  %v1278 = vpop.f32.mrb[0].mxu0
  %v1279 = vadd.f32 0.0, %v1278
  %v1280 = vpop.f32.mrb[0].mxu0
  %v1281 = vpop.f32.mrb[0].mxu0
  %v1282 = vadd.f32 0.0, %v1281
  %v1283 = vpop.f32.mrb[0].mxu0
  %1284 = vmatprep.mubr.bf16.mxu0 0
  %1285 = vmatmul.mubr.bf16.gmra.mrb[0].mxu0 %v815
  %v1286 = vpop.f32.mrb[0].mxu0
  %v1287 = vadd.f32 0.0, %v1286
  %v1288 = vpop.f32.mrb[0].mxu0
  %v1289 = vpop.f32.mrb[0].mxu0
  %v1290 = vadd.f32 0.0, %v1289
  %v1291 = vpop.f32.mrb[0].mxu0
  %1292 = vmatprep.mubr.bf16.mxu0 0
  %1293 = vmatmul.mubr.bf16.gmra.mrb[0].mxu0 %v816
  %v1294 = vpop.f32.mrb[0].mxu0
  %v1295 = vadd.f32 0.0, %v1294
  %v1296 = vpop.f32.mrb[0].mxu0
  %v1297 = vpop.f32.mrb[0].mxu0
  %v1298 = vadd.f32 0.0, %v1297
  %v1299 = vpop.f32.mrb[0].mxu0
  %1300 = vmatprep.mubr.bf16.mxu0 0
  %1301 = vmatmul.mubr.bf16.gmra.mrb[0].mxu0 %v817
  %v1302 = vpop.f32.mrb[0].mxu0
  %v1303 = vadd.f32 0.0, %v1302
  %v1304 = vpop.f32.mrb[0].mxu0
  %v1305 = vpop.f32.mrb[0].mxu0
  %v1306 = vadd.f32 0.0, %v1305
  %v1307 = vpop.f32.mrb[0].mxu0
  %1308 = vmatprep.mubr.bf16.mxu0 0
  %1309 = vmatmul.mubr.bf16.gmra.mrb[0].mxu0 %v818
  %v1310 = vpop.f32.mrb[0].mxu0
  %v1311 = vadd.f32 0.0, %v1310
  %v1312 = vpop.f32.mrb[0].mxu0
  %v1313 = vpop.f32.mrb[0].mxu0
  %v1314 = vadd.f32 0.0, %v1313
  %v1315 = vpop.f32.mrb[0].mxu0
  %1316 = vmatprep.mubr.bf16.mxu0 0
  %1317 = vmatmul.mubr.bf16.gmra.mrb[0].mxu0 %v819
  %v1318 = vpop.f32.mrb[0].mxu0
  %v1319 = vadd.f32 0.0, %v1318
  %v1320 = vpop.f32.mrb[0].mxu0
  %v1321 = vpop.f32.mrb[0].mxu0
  %v1322 = vadd.f32 0.0, %v1321
  %v1323 = vpop.f32.mrb[0].mxu0
  %1324 = vmatprep.mubr.bf16.mxu0 0
  %1325 = vmatmul.mubr.bf16.gmra.mrb[0].mxu0 %v820
  %v1326 = vpop.f32.mrb[0].mxu0
  %v1327 = vadd.f32 0.0, %v1326
  %v1328 = vpop.f32.mrb[0].mxu0
  %v1329 = vpop.f32.mrb[0].mxu0
  %v1330 = vadd.f32 0.0, %v1329
  %v1331 = vpop.f32.mrb[0].mxu0
  %1332 = vmatprep.mubr.bf16.mxu0 0
  %1333 = vmatmul.mubr.bf16.gmra.mrb[0].mxu0 %v821
  %v1334 = vpop.f32.mrb[0].mxu0
  %v1335 = vadd.f32 0.0, %v1334
  %v1336 = vpop.f32.mrb[0].mxu0
  %v1337 = vpop.f32.mrb[0].mxu0
  %v1338 = vadd.f32 0.0, %v1337
  %v1339 = vpop.f32.mrb[0].mxu0
  %1340 = vmatprep.mubr.bf16.mxu0 0
  %1341 = vmatmul.mubr.bf16.gmra.mrb[0].mxu0 %v822
  %v1342 = vpop.f32.mrb[0].mxu0
  %v1343 = vadd.f32 0.0, %v1342
  %v1344 = vpop.f32.mrb[0].mxu0
  %v1345 = vpop.f32.mrb[0].mxu0
  %v1346 = vadd.f32 0.0, %v1345
  %v1347 = vpop.f32.mrb[0].mxu0
  %1348 = vmatprep.mubr.bf16.mxu0 0
  %1349 = vmatmul.mubr.bf16.gmra.mrb[0].mxu0 %v823
  %v1350 = vpop.f32.mrb[0].mxu0
  %v1351 = vadd.f32 0.0, %v1350
  %v1352 = vpop.f32.mrb[0].mxu0
  %v1353 = vpop.f32.mrb[0].mxu0
  %v1354 = vadd.f32 0.0, %v1353
  %v1355 = vpop.f32.mrb[0].mxu0
  %1356 = vmatprep.mubr.bf16.mxu0 0
  %1357 = vmatmul.mubr.bf16.gmra.mrb[0].mxu0 %v824
  %v1358 = vpop.f32.mrb[0].mxu0
  %v1359 = vadd.f32 0.0, %v1358
  %v1360 = vpop.f32.mrb[0].mxu0
  %v1361 = vpop.f32.mrb[0].mxu0
  %v1362 = vadd.f32 0.0, %v1361
  %v1363 = vpop.f32.mrb[0].mxu0
  %1364 = vmatprep.mubr.bf16.mxu0 0
  %1365 = vmatmul.mubr.bf16.gmra.mrb[0].mxu0 %v825
  %v1366 = vpop.f32.mrb[0].mxu0
  %v1367 = vadd.f32 0.0, %v1366
  %v1368 = vpop.f32.mrb[0].mxu0
  %v1369 = vpop.f32.mrb[0].mxu0
  %v1370 = vadd.f32 0.0, %v1369
  %v1371 = vpop.f32.mrb[0].mxu0
  %1372 = vmatprep.mubr.bf16.mxu0 0
  %1373 = vmatmul.mubr.bf16.gmra.mrb[0].mxu0 %v826
  %v1374 = vpop.f32.mrb[0].mxu0
  %v1375 = vadd.f32 0.0, %v1374
  %v1376 = vpop.f32.mrb[0].mxu0
  %v1377 = vpop.f32.mrb[0].mxu0
  %v1378 = vadd.f32 0.0, %v1377
  %v1379 = vpop.f32.mrb[0].mxu0
  %1380 = vmatprep.mubr.bf16.mxu0 0
  %1381 = vmatmul.mubr.bf16.gmra.mrb[0].mxu0 %v827
  %v1382 = vpop.f32.mrb[0].mxu0
  %v1383 = vadd.f32 0.0, %v1382
  %v1384 = vpop.f32.mrb[0].mxu0
  %v1385 = vpop.f32.mrb[0].mxu0
  %v1386 = vadd.f32 0.0, %v1385
  %v1387 = vpop.f32.mrb[0].mxu0
  %1388 = vmatprep.mubr.bf16.mxu0 0
  %1389 = vmatmul.mubr.bf16.gmra.mrb[0].mxu0 %v828
  %v1390 = vpop.f32.mrb[0].mxu0
  %v1391 = vadd.f32 0.0, %v1390
  %v1392 = vpop.f32.mrb[0].mxu0
  %v1393 = vpop.f32.mrb[0].mxu0
  %v1394 = vadd.f32 0.0, %v1393
  %v1395 = vpop.f32.mrb[0].mxu0
  %1396 = vmatprep.mubr.bf16.mxu0 0
  %1397 = vmatmul.mubr.bf16.gmra.mrb[0].mxu0 %v829
  %v1398 = vpop.f32.mrb[0].mxu0
  %v1399 = vadd.f32 0.0, %v1398
  %v1400 = vpop.f32.mrb[0].mxu0
  %v1401 = vpop.f32.mrb[0].mxu0
  %v1402 = vadd.f32 0.0, %v1401
  %v1403 = vpop.f32.mrb[0].mxu0
  %1404 = vmatprep.mubr.bf16.mxu0 0
  %1405 = vmatmul.mubr.bf16.gmra.mrb[0].mxu0 %v830
  %v1406 = vpop.f32.mrb[0].mxu0
  %v1407 = vadd.f32 0.0, %v1406
  %v1408 = vpop.f32.mrb[0].mxu0
  %v1409 = vpop.f32.mrb[0].mxu0
  %v1410 = vadd.f32 0.0, %v1409
  %v1411 = vpop.f32.mrb[0].mxu0
  %1412 = vmatprep.mubr.bf16.mxu0 0
  %1413 = vmatmul.mubr.bf16.gmra.mrb[0].mxu0 %v831
  %v1414 = vpop.f32.mrb[0].mxu0
  %v1415 = vadd.f32 0.0, %v1414
  %v1416 = vpop.f32.mrb[0].mxu0
  %v1417 = vpop.f32.mrb[0].mxu0
  %v1418 = vadd.f32 0.0, %v1417
  %v1419 = vpop.f32.mrb[0].mxu0
  %1420 = vmatprep.mubr.bf16.mxu0 0
  %1421 = vmatmul.mubr.bf16.gmra.mrb[0].mxu0 %v832
  %v1422 = vpop.f32.mrb[0].mxu0
  %v1423 = vadd.f32 0.0, %v1422
  %v1424 = vpop.f32.mrb[0].mxu0
  %v1425 = vpop.f32.mrb[0].mxu0
  %v1426 = vadd.f32 0.0, %v1425
  %v1427 = vpop.f32.mrb[0].mxu0
  %1428 = vmatprep.mubr.bf16.mxu0 0
  %1429 = vmatmul.mubr.bf16.gmra.mrb[0].mxu0 %v833
  %v1430 = vpop.f32.mrb[0].mxu0
  %v1431 = vadd.f32 0.0, %v1430
  %v1432 = vpop.f32.mrb[0].mxu0
  %v1433 = vpop.f32.mrb[0].mxu0
  %v1434 = vadd.f32 0.0, %v1433
  %v1435 = vpop.f32.mrb[0].mxu0
  %1436 = vmatprep.mubr.bf16.mxu0 0
  %1437 = vmatmul.mubr.bf16.gmra.mrb[0].mxu0 %v834
  %v1438 = vpop.f32.mrb[0].mxu0
  %v1439 = vadd.f32 0.0, %v1438
  %v1440 = vpop.f32.mrb[0].mxu0
  %v1441 = vpop.f32.mrb[0].mxu0
  %v1442 = vadd.f32 0.0, %v1441
  %v1443 = vpop.f32.mrb[0].mxu0
  %1444 = vmatprep.mubr.bf16.mxu0 0
  %1445 = vmatmul.mubr.bf16.gmra.mrb[0].mxu0 %v835
  %v1446 = vpop.f32.mrb[0].mxu0
  %v1447 = vadd.f32 0.0, %v1446
  %v1448 = vpop.f32.mrb[0].mxu0
  %v1449 = vpop.f32.mrb[0].mxu0
  %v1450 = vadd.f32 0.0, %v1449
  %v1451 = vpop.f32.mrb[0].mxu0
  %1452 = vmatprep.mubr.bf16.mxu0 0
  %1453 = vmatmul.mubr.bf16.gmra.mrb[0].mxu0 %v836
  %v1454 = vpop.f32.mrb[0].mxu0
  %v1455 = vadd.f32 0.0, %v1454
  %v1456 = vpop.f32.mrb[0].mxu0
  %v1457 = vpop.f32.mrb[0].mxu0
  %v1458 = vadd.f32 0.0, %v1457
  %v1459 = vpop.f32.mrb[0].mxu0
  %1460 = vmatprep.mubr.bf16.mxu0 0
  %1461 = vmatmul.mubr.bf16.gmra.mrb[0].mxu0 %v837
  %v1462 = vpop.f32.mrb[0].mxu0
  %v1463 = vadd.f32 0.0, %v1462
  %v1464 = vpop.f32.mrb[0].mxu0
  %v1465 = vpop.f32.mrb[0].mxu0
  %v1466 = vadd.f32 0.0, %v1465
  %v1467 = vpop.f32.mrb[0].mxu0
  %1468 = vmatprep.mubr.bf16.mxu0 0
  %1469 = vmatmul.mubr.bf16.gmra.mrb[0].mxu0 %v838
  %v1470 = vpop.f32.mrb[0].mxu0
  %v1471 = vadd.f32 0.0, %v1470
  %v1472 = vpop.f32.mrb[0].mxu0
  %v1473 = vpop.f32.mrb[0].mxu0
  %v1474 = vadd.f32 0.0, %v1473
  %v1475 = vpop.f32.mrb[0].mxu0
  %1476 = vmatprep.mubr.bf16.mxu0 0
  %1477 = vmatmul.mubr.bf16.gmra.mrb[0].mxu0 %v839
  %v1478 = vpop.f32.mrb[0].mxu0
  %v1479 = vadd.f32 0.0, %v1478
  %v1480 = vpop.f32.mrb[0].mxu0
  %v1481 = vpop.f32.mrb[0].mxu0
  %v1482 = vadd.f32 0.0, %v1481
  %v1483 = vpop.f32.mrb[0].mxu0
  %1484 = vmatprep.mubr.bf16.mxu0 0
  %1485 = vmatmul.mubr.bf16.gmra.mrb[0].mxu0 %v840
  %v1486 = vpop.f32.mrb[0].mxu0
  %v1487 = vadd.f32 0.0, %v1486
  %v1488 = vpop.f32.mrb[0].mxu0
  %v1489 = vpop.f32.mrb[0].mxu0
  %v1490 = vadd.f32 0.0, %v1489
  %v1491 = vpop.f32.mrb[0].mxu0
  %1492 = vmatprep.mubr.bf16.mxu0 0
  %1493 = vmatmul.mubr.bf16.gmra.mrb[0].mxu0 %v841
  %v1494 = vpop.f32.mrb[0].mxu0
  %v1495 = vadd.f32 0.0, %v1494
  %v1496 = vpop.f32.mrb[0].mxu0
  %v1497 = vpop.f32.mrb[0].mxu0
  %v1498 = vadd.f32 0.0, %v1497
  %v1499 = vpop.f32.mrb[0].mxu0
  %1500 = vmatprep.mubr.bf16.mxu0 0
  %1501 = vmatmul.mubr.bf16.gmra.mrb[0].mxu0 %v842
  %v1502 = vpop.f32.mrb[0].mxu0
  %v1503 = vadd.f32 0.0, %v1502
  %v1504 = vpop.f32.mrb[0].mxu0
  %v1505 = vpop.f32.mrb[0].mxu0
  %v1506 = vadd.f32 0.0, %v1505
  %v1507 = vpop.f32.mrb[0].mxu0
  %1508 = vmatprep.mubr.bf16.mxu0 0
  %1509 = vmatmul.mubr.bf16.gmra.mrb[0].mxu0 %v843
  %v1510 = vpop.f32.mrb[0].mxu0
  %v1511 = vadd.f32 0.0, %v1510
  %v1512 = vpop.f32.mrb[0].mxu0
  %v1513 = vpop.f32.mrb[0].mxu0
  %v1514 = vadd.f32 0.0, %v1513
  %v1515 = vpop.f32.mrb[0].mxu0
  %1516 = vmatprep.mubr.bf16.mxu0 0
  %1517 = vmatmul.mubr.bf16.gmra.mrb[0].mxu0 %v844
  %v1518 = vpop.f32.mrb[0].mxu0
  %v1519 = vadd.f32 0.0, %v1518
  %v1520 = vpop.f32.mrb[0].mxu0
  %v1521 = vpop.f32.mrb[0].mxu0
  %v1522 = vadd.f32 0.0, %v1521
  %v1523 = vpop.f32.mrb[0].mxu0
  %1524 = vmatprep.mubr.bf16.mxu0 0
  %1525 = vmatmul.mubr.bf16.gmra.mrb[0].mxu0 %v845
  %v1526 = vpop.f32.mrb[0].mxu0
  %v1527 = vadd.f32 0.0, %v1526
  %v1528 = vpop.f32.mrb[0].mxu0
  %v1529 = vpop.f32.mrb[0].mxu0
  %v1530 = vadd.f32 0.0, %v1529
  %v1531 = vpop.f32.mrb[0].mxu0
  %1532 = vmatprep.mubr.bf16.mxu0 0
  %1533 = vmatmul.mubr.bf16.gmra.mrb[0].mxu0 %v846
  %v1534 = vpop.f32.mrb[0].mxu0
  %v1535 = vadd.f32 0.0, %v1534
  %v1536 = vpop.f32.mrb[0].mxu0
  %v1537 = vpop.f32.mrb[0].mxu0
  %v1538 = vadd.f32 0.0, %v1537
  %v1539 = vpop.f32.mrb[0].mxu0
  %1540 = vmatprep.mubr.bf16.mxu0 0
  %1541 = vmatmul.mubr.bf16.gmra.mrb[0].mxu0 %v847
  %v1542 = vpop.f32.mrb[0].mxu0
  %v1543 = vadd.f32 0.0, %v1542
  %v1544 = vpop.f32.mrb[0].mxu0
  %v1545 = vpop.f32.mrb[0].mxu0
  %v1546 = vadd.f32 0.0, %v1545
  %v1547 = vpop.f32.mrb[0].mxu0
  %1548 = vmatprep.mubr.bf16.mxu0 0
  %1549 = vmatmul.mubr.bf16.gmra.mrb[0].mxu0 %v848
  %v1550 = vpop.f32.mrb[0].mxu0
  %v1551 = vadd.f32 0.0, %v1550
  %v1552 = vpop.f32.mrb[0].mxu0
  %v1553 = vpop.f32.mrb[0].mxu0
  %v1554 = vadd.f32 0.0, %v1553
  %v1555 = vpop.f32.mrb[0].mxu0
  %1556 = vmatprep.mubr.bf16.mxu0 0
  %1557 = vmatmul.mubr.bf16.gmra.mrb[0].mxu0 %v849
  %v1558 = vpop.f32.mrb[0].mxu0
  %v1559 = vadd.f32 0.0, %v1558
  %v1560 = vpop.f32.mrb[0].mxu0
  %v1561 = vpop.f32.mrb[0].mxu0
  %v1562 = vadd.f32 0.0, %v1561
  %v1563 = vpop.f32.mrb[0].mxu0
  %1564 = vmatprep.mubr.bf16.mxu0 0
  %1565 = vmatmul.mubr.bf16.gmra.mrb[0].mxu0 %v850
  %v1566 = vpop.f32.mrb[0].mxu0
  %v1567 = vadd.f32 0.0, %v1566
  %v1568 = vpop.f32.mrb[0].mxu0
  %v1569 = vpop.f32.mrb[0].mxu0
  %v1570 = vadd.f32 0.0, %v1569
  %v1571 = vpop.f32.mrb[0].mxu0
  %1572 = vmatprep.mubr.bf16.mxu0 0
  %1573 = vmatmul.mubr.bf16.gmra.mrb[0].mxu0 %v851
  %v1574 = vpop.f32.mrb[0].mxu0
  %v1575 = vadd.f32 0.0, %v1574
  %v1576 = vpop.f32.mrb[0].mxu0
  %v1577 = vpop.f32.mrb[0].mxu0
  %v1578 = vadd.f32 0.0, %v1577
  %v1579 = vpop.f32.mrb[0].mxu0
  %1580 = vmatprep.mubr.bf16.mxu0 0
  %1581 = vmatmul.mubr.bf16.gmra.mrb[0].mxu0 %v852
  %v1582 = vpop.f32.mrb[0].mxu0
  %v1583 = vadd.f32 0.0, %v1582
  %v1584 = vpop.f32.mrb[0].mxu0
  %v1585 = vpop.f32.mrb[0].mxu0
  %v1586 = vadd.f32 0.0, %v1585
  %v1587 = vpop.f32.mrb[0].mxu0
  %1588 = vmatprep.mubr.bf16.mxu0 0
  %1589 = vmatmul.mubr.bf16.gmra.mrb[0].mxu0 %v853
  %v1590 = vpop.f32.mrb[0].mxu0
  %v1591 = vadd.f32 0.0, %v1590
  %v1592 = vpop.f32.mrb[0].mxu0
  %v1593 = vpop.f32.mrb[0].mxu0
  %v1594 = vadd.f32 0.0, %v1593
  %v1595 = vpop.f32.mrb[0].mxu0
  %1596 = vmatprep.mubr.bf16.mxu0 0
  %1597 = vmatmul.mubr.bf16.gmra.mrb[0].mxu0 %v854
  %v1598 = vpop.f32.mrb[0].mxu0
  %v1599 = vadd.f32 0.0, %v1598
  %v1600 = vpop.f32.mrb[0].mxu0
  %v1601 = vpop.f32.mrb[0].mxu0
  %v1602 = vadd.f32 0.0, %v1601
  %v1603 = vpop.f32.mrb[0].mxu0
  %1604 = vmatprep.mubr.bf16.mxu0 0
  %1605 = vmatmul.mubr.bf16.gmra.mrb[0].mxu0 %v855
  %v1606 = vpop.f32.mrb[0].mxu0
  %v1607 = vadd.f32 0.0, %v1606
  %v1608 = vpop.f32.mrb[0].mxu0
  %v1609 = vpop.f32.mrb[0].mxu0
  %v1610 = vadd.f32 0.0, %v1609
  %v1611 = vpop.f32.mrb[0].mxu0
  %1612 = vmatprep.mubr.bf16.mxu0 0
  %1613 = vmatmul.mubr.bf16.gmra.mrb[0].mxu0 %v856
  %v1614 = vpop.f32.mrb[0].mxu0
  %v1615 = vadd.f32 0.0, %v1614
  %v1616 = vpop.f32.mrb[0].mxu0
  %v1617 = vpop.f32.mrb[0].mxu0
  %v1618 = vadd.f32 0.0, %v1617
  %v1619 = vpop.f32.mrb[0].mxu0
  %1620 = vmatprep.mubr.bf16.mxu0 0
  %1621 = vmatmul.mubr.bf16.gmra.mrb[0].mxu0 %v857
  %v1622 = vpop.f32.mrb[0].mxu0
  %v1623 = vadd.f32 0.0, %v1622
  %v1624 = vpop.f32.mrb[0].mxu0
  %v1625 = vpop.f32.mrb[0].mxu0
  %v1626 = vadd.f32 0.0, %v1625
  %v1627 = vpop.f32.mrb[0].mxu0
  %1628 = vmatprep.mubr.bf16.mxu0 0
  %1629 = vmatmul.mubr.bf16.gmra.mrb[0].mxu0 %v858
  %v1630 = vpop.f32.mrb[0].mxu0
  %v1631 = vadd.f32 0.0, %v1630
  %v1632 = vpop.f32.mrb[0].mxu0
  %v1633 = vpop.f32.mrb[0].mxu0
  %v1634 = vadd.f32 0.0, %v1633
  %v1635 = vpop.f32.mrb[0].mxu0
  %1636 = vmatprep.mubr.bf16.mxu0 0
  %1637 = vmatmul.mubr.bf16.gmra.mrb[0].mxu0 %v859
  %v1638 = vpop.f32.mrb[0].mxu0
  %v1639 = vadd.f32 0.0, %v1638
  %v1640 = vpop.f32.mrb[0].mxu0
  %v1641 = vpop.f32.mrb[0].mxu0
  %v1642 = vadd.f32 0.0, %v1641
  %v1643 = vpop.f32.mrb[0].mxu0
  %1644 = vmatprep.mubr.bf16.mxu0 0
  %1645 = vmatmul.mubr.bf16.gmra.mrb[0].mxu0 %v860
  %v1646 = vpop.f32.mrb[0].mxu0
  %v1647 = vadd.f32 0.0, %v1646
  %v1648 = vpop.f32.mrb[0].mxu0
  %v1649 = vpop.f32.mrb[0].mxu0
  %v1650 = vadd.f32 0.0, %v1649
  %v1651 = vpop.f32.mrb[0].mxu0
  %1652 = vmatprep.mubr.bf16.mxu0 0
  %1653 = vmatmul.mubr.bf16.gmra.mrb[0].mxu0 %v861
  %v1654 = vpop.f32.mrb[0].mxu0
  %v1655 = vadd.f32 0.0, %v1654
  %v1656 = vpop.f32.mrb[0].mxu0
  %v1657 = vpop.f32.mrb[0].mxu0
  %v1658 = vadd.f32 0.0, %v1657
  %v1659 = vpop.f32.mrb[0].mxu0
  %1660 = vmatprep.mubr.bf16.mxu0 0
  %1661 = vmatmul.mubr.bf16.gmra.mrb[0].mxu0 %v862
  %v1662 = vpop.f32.mrb[0].mxu0
  %v1663 = vadd.f32 0.0, %v1662
  %v1664 = vpop.f32.mrb[0].mxu0
  %v1665 = vpop.f32.mrb[0].mxu0
  %v1666 = vadd.f32 0.0, %v1665
  %v1667 = vpop.f32.mrb[0].mxu0
  %1668 = vmatprep.mubr.bf16.mxu0 0
  %1669 = vmatmul.mubr.bf16.gmra.mrb[0].mxu0 %v863
  %v1670 = vpop.f32.mrb[0].mxu0
  %v1671 = vadd.f32 0.0, %v1670
  %v1672 = vpop.f32.mrb[0].mxu0
  %v1673 = vpop.f32.mrb[0].mxu0
  %v1674 = vadd.f32 0.0, %v1673
  %v1675 = vpop.f32.mrb[0].mxu0
  %1676 = vmatprep.mubr.bf16.mxu0 0
  %1677 = vmatmul.mubr.bf16.gmra.mrb[0].mxu0 %v864
  %v1678 = vpop.f32.mrb[0].mxu0
  %v1679 = vadd.f32 0.0, %v1678
  %v1680 = vpop.f32.mrb[0].mxu0
  %v1681 = vpop.f32.mrb[0].mxu0
  %v1682 = vadd.f32 0.0, %v1681
  %v1683 = vpop.f32.mrb[0].mxu0
  %1684 = vmatprep.mubr.bf16.mxu0 0
  %1685 = vmatmul.mubr.bf16.gmra.mrb[0].mxu0 %v865
  %v1686 = vpop.f32.mrb[0].mxu0
  %v1687 = vadd.f32 0.0, %v1686
  %v1688 = vpop.f32.mrb[0].mxu0
  %v1689 = vpop.f32.mrb[0].mxu0
  %v1690 = vadd.f32 0.0, %v1689
  %v1691 = vpop.f32.mrb[0].mxu0
  %1692 = vmatprep.mubr.bf16.mxu0 0
  %1693 = vmatmul.mubr.bf16.gmra.mrb[0].mxu0 %v866
  %v1694 = vpop.f32.mrb[0].mxu0
  %v1695 = vadd.f32 0.0, %v1694
  %v1696 = vpop.f32.mrb[0].mxu0
  %v1697 = vpop.f32.mrb[0].mxu0
  %v1698 = vadd.f32 0.0, %v1697
  %v1699 = vpop.f32.mrb[0].mxu0
  %1700 = vmatprep.mubr.bf16.mxu0 0
  %1701 = vmatmul.mubr.bf16.gmra.mrb[0].mxu0 %v867
  %v1702 = vpop.f32.mrb[0].mxu0
  %v1703 = vadd.f32 0.0, %v1702
  %v1704 = vpop.f32.mrb[0].mxu0
  %v1705 = vpop.f32.mrb[0].mxu0
  %v1706 = vadd.f32 0.0, %v1705
  %v1707 = vpop.f32.mrb[0].mxu0
  %1708 = vmatprep.mubr.bf16.mxu0 0
  %1709 = vmatmul.mubr.bf16.gmra.mrb[0].mxu0 %v868
  %v1710 = vpop.f32.mrb[0].mxu0
  %v1711 = vadd.f32 0.0, %v1710
  %v1712 = vpop.f32.mrb[0].mxu0
  %v1713 = vpop.f32.mrb[0].mxu0
  %v1714 = vadd.f32 0.0, %v1713
  %v1715 = vpop.f32.mrb[0].mxu0
  %1716 = vmatprep.mubr.bf16.mxu0 0
  %1717 = vmatmul.mubr.bf16.gmra.mrb[0].mxu0 %v869
  %v1718 = vpop.f32.mrb[0].mxu0
  %v1719 = vadd.f32 0.0, %v1718
  %v1720 = vpop.f32.mrb[0].mxu0
  %v1721 = vpop.f32.mrb[0].mxu0
  %v1722 = vadd.f32 0.0, %v1721
  %v1723 = vpop.f32.mrb[0].mxu0
  %1724 = vmatprep.mubr.bf16.mxu0 0
  %1725 = vmatmul.mubr.bf16.gmra.mrb[0].mxu0 %v870
  %v1726 = vpop.f32.mrb[0].mxu0
  %v1727 = vadd.f32 0.0, %v1726
  %v1728 = vpop.f32.mrb[0].mxu0
  %v1729 = vpop.f32.mrb[0].mxu0
  %v1730 = vadd.f32 0.0, %v1729
  %v1731 = vpop.f32.mrb[0].mxu0
  %1732 = vmatprep.mubr.bf16.mxu0 0
  %1733 = vmatmul.mubr.bf16.gmra.mrb[0].mxu0 %v871
  %v1734 = vpop.f32.mrb[0].mxu0
  %v1735 = vadd.f32 0.0, %v1734
  %v1736 = vpop.f32.mrb[0].mxu0
  %v1737 = vpop.f32.mrb[0].mxu0
  %v1738 = vadd.f32 0.0, %v1737
  %v1739 = vpop.f32.mrb[0].mxu0
  %1740 = vmatprep.mubr.bf16.mxu0 0
  %1741 = vmatmul.mubr.bf16.gmra.mrb[0].mxu0 %v872
  %v1742 = vpop.f32.mrb[0].mxu0
  %v1743 = vadd.f32 0.0, %v1742
  %v1744 = vpop.f32.mrb[0].mxu0
  %v1745 = vpop.f32.mrb[0].mxu0
  %v1746 = vadd.f32 0.0, %v1745
  %v1747 = vpop.f32.mrb[0].mxu0
  %1748 = vmatprep.mubr.bf16.mxu0 0
  %1749 = vmatmul.mubr.bf16.gmra.mrb[0].mxu0 %v873
  %v1750 = vpop.f32.mrb[0].mxu0
  %v1751 = vadd.f32 0.0, %v1750
  %v1752 = vpop.f32.mrb[0].mxu0
  %v1753 = vpop.f32.mrb[0].mxu0
  %v1754 = vadd.f32 0.0, %v1753
  %v1755 = vpop.f32.mrb[0].mxu0
  %1756 = vmatprep.mubr.bf16.mxu0 0
  %1757 = vmatmul.mubr.bf16.gmra.mrb[0].mxu0 %v874
  %v1758 = vpop.f32.mrb[0].mxu0
  %v1759 = vadd.f32 0.0, %v1758
  %v1760 = vpop.f32.mrb[0].mxu0
  %v1761 = vpop.f32.mrb[0].mxu0
  %v1762 = vadd.f32 0.0, %v1761
  %v1763 = vpop.f32.mrb[0].mxu0
  %1764 = vmatprep.mubr.bf16.mxu0 0
  %1765 = vmatmul.mubr.bf16.gmra.mrb[0].mxu0 %v875
  %v1766 = vpop.f32.mrb[0].mxu0
  %v1767 = vadd.f32 0.0, %v1766
  %v1768 = vpop.f32.mrb[0].mxu0
  %v1769 = vpop.f32.mrb[0].mxu0
  %v1770 = vadd.f32 0.0, %v1769
  %v1771 = vpop.f32.mrb[0].mxu0
  %1772 = vmatprep.mubr.bf16.mxu0 0
  %1773 = vmatmul.mubr.bf16.gmra.mrb[0].mxu0 %v876
  %v1774 = vpop.f32.mrb[0].mxu0
  %v1775 = vadd.f32 0.0, %v1774
  %v1776 = vpop.f32.mrb[0].mxu0
  %v1777 = vpop.f32.mrb[0].mxu0
  %v1778 = vadd.f32 0.0, %v1777
  %v1779 = vpop.f32.mrb[0].mxu0
  %1780 = vmatprep.mubr.bf16.mxu0 0
  %1781 = vmatmul.mubr.bf16.gmra.mrb[0].mxu0 %v877
  %v1782 = vpop.f32.mrb[0].mxu0
  %v1783 = vadd.f32 0.0, %v1782
  %v1784 = vpop.f32.mrb[0].mxu0
  %v1785 = vpop.f32.mrb[0].mxu0
  %v1786 = vadd.f32 0.0, %v1785
  %v1787 = vpop.f32.mrb[0].mxu0
  %1788 = vmatprep.mubr.bf16.mxu0 0
  %1789 = vmatmul.mubr.bf16.gmra.mrb[0].mxu0 %v878
  %v1790 = vpop.f32.mrb[0].mxu0
  %v1791 = vadd.f32 0.0, %v1790
  %v1792 = vpop.f32.mrb[0].mxu0
  %v1793 = vpop.f32.mrb[0].mxu0
  %v1794 = vadd.f32 0.0, %v1793
  %v1795 = vpop.f32.mrb[0].mxu0
  %1796 = vmatprep.mubr.bf16.mxu0 0
  %1797 = vmatmul.mubr.bf16.gmra.mrb[0].mxu0 %v879
  %v1798 = vpop.f32.mrb[0].mxu0
  %v1799 = vadd.f32 0.0, %v1798
  %v1800 = vpop.f32.mrb[0].mxu0
  %v1801 = vpop.f32.mrb[0].mxu0
  %v1802 = vadd.f32 0.0, %v1801
  %v1803 = vpop.f32.mrb[0].mxu0
  %1804 = vmatprep.mubr.bf16.mxu0 0
  %1805 = vmatmul.mubr.bf16.gmra.mrb[0].mxu0 %v880
  %v1806 = vpop.f32.mrb[0].mxu0
  %v1807 = vadd.f32 0.0, %v1806
  %v1808 = vpop.f32.mrb[0].mxu0
  %v1809 = vpop.f32.mrb[0].mxu0
  %v1810 = vadd.f32 0.0, %v1809
  %v1811 = vpop.f32.mrb[0].mxu0
  %1812 = vmatprep.mubr.bf16.mxu0 0
  %1813 = vmatmul.mubr.bf16.gmra.mrb[0].mxu0 %v881
  %v1814 = vpop.f32.mrb[0].mxu0
  %v1815 = vadd.f32 0.0, %v1814
  %v1816 = vpop.f32.mrb[0].mxu0
  %v1817 = vpop.f32.mrb[0].mxu0
  %v1818 = vadd.f32 0.0, %v1817
  %v1819 = vpop.f32.mrb[0].mxu0
  %1820 = vmatprep.mubr.bf16.mxu0 0
  %1821 = vmatmul.mubr.bf16.gmra.mrb[0].mxu0 %v882
  %v1822 = vpop.f32.mrb[0].mxu0
  %v1823 = vadd.f32 0.0, %v1822
  %v1824 = vpop.f32.mrb[0].mxu0
  %v1825 = vpop.f32.mrb[0].mxu0
  %v1826 = vadd.f32 0.0, %v1825
  %v1827 = vpop.f32.mrb[0].mxu0
  %1828 = vmatprep.mubr.bf16.mxu0 0
  %1829 = vmatmul.mubr.bf16.gmra.mrb[0].mxu0 %v883
  %v1830 = vpop.f32.mrb[0].mxu0
  %v1831 = vadd.f32 0.0, %v1830
  %v1832 = vpop.f32.mrb[0].mxu0
  %v1833 = vpop.f32.mrb[0].mxu0
  %v1834 = vadd.f32 0.0, %v1833
  %v1835 = vpop.f32.mrb[0].mxu0
  %1836 = vmatprep.mubr.bf16.mxu0 0
  %1837 = vmatmul.mubr.bf16.gmra.mrb[0].mxu0 %v884
  %v1838 = vpop.f32.mrb[0].mxu0
  %v1839 = vadd.f32 0.0, %v1838
  %v1840 = vpop.f32.mrb[0].mxu0
  %v1841 = vpop.f32.mrb[0].mxu0
  %v1842 = vadd.f32 0.0, %v1841
  %v1843 = vpop.f32.mrb[0].mxu0
  %1844 = vmatprep.mubr.bf16.mxu0 0
  %1845 = vmatmul.mubr.bf16.gmra.mrb[0].mxu0 %v885
  %v1846 = vpop.f32.mrb[0].mxu0
  %v1847 = vadd.f32 0.0, %v1846
  %v1848 = vpop.f32.mrb[0].mxu0
  %v1849 = vpop.f32.mrb[0].mxu0
  %v1850 = vadd.f32 0.0, %v1849
  %v1851 = vpop.f32.mrb[0].mxu0
  %1852 = vmatprep.mubr.bf16.mxu0 0
  %1853 = vmatmul.mubr.bf16.gmra.mrb[0].mxu0 %v886
  %v1854 = vpop.f32.mrb[0].mxu0
  %v1855 = vadd.f32 0.0, %v1854
  %v1856 = vpop.f32.mrb[0].mxu0
  %v1857 = vpop.f32.mrb[0].mxu0
  %v1858 = vadd.f32 0.0, %v1857
  %v1859 = vpop.f32.mrb[0].mxu0
  %1860 = vmatprep.mubr.bf16.mxu0 0
  %1861 = vmatmul.mubr.bf16.gmra.mrb[0].mxu0 %v887
  %v1862 = vpop.f32.mrb[0].mxu0
  %v1863 = vadd.f32 0.0, %v1862
  %v1864 = vpop.f32.mrb[0].mxu0
  %v1865 = vpop.f32.mrb[0].mxu0
  %v1866 = vadd.f32 0.0, %v1865
  %v1867 = vpop.f32.mrb[0].mxu0
  %1868 = vmatprep.mubr.bf16.mxu0 0
  %1869 = vmatmul.mubr.bf16.gmra.mrb[0].mxu0 %v888
  %v1870 = vpop.f32.mrb[0].mxu0
  %v1871 = vadd.f32 0.0, %v1870
  %v1872 = vpop.f32.mrb[0].mxu0
  %v1873 = vpop.f32.mrb[0].mxu0
  %v1874 = vadd.f32 0.0, %v1873
  %v1875 = vpop.f32.mrb[0].mxu0
  %1876 = vmatprep.mubr.bf16.mxu0 0
  %1877 = vmatmul.mubr.bf16.gmra.mrb[0].mxu0 %v889
  %v1878 = vpop.f32.mrb[0].mxu0
  %v1879 = vadd.f32 0.0, %v1878
  %v1880 = vpop.f32.mrb[0].mxu0
  %v1881 = vpop.f32.mrb[0].mxu0
  %v1882 = vadd.f32 0.0, %v1881
  %v1883 = vpop.f32.mrb[0].mxu0
  %1884 = vmatprep.mubr.bf16.mxu0 0
  %1885 = vmatmul.mubr.bf16.gmra.mrb[0].mxu0 %v890
  %v1886 = vpop.f32.mrb[0].mxu0
  %v1887 = vadd.f32 0.0, %v1886
  %v1888 = vpop.f32.mrb[0].mxu0
  %v1889 = vpop.f32.mrb[0].mxu0
  %v1890 = vadd.f32 0.0, %v1889
  %v1891 = vpop.f32.mrb[0].mxu0
  %1892 = vmatprep.mubr.bf16.mxu0 0
  %1893 = vmatmul.mubr.bf16.gmra.mrb[0].mxu0 %v891
  %v1894 = vpop.f32.mrb[0].mxu0
  %v1895 = vadd.f32 0.0, %v1894
  %v1896 = vpop.f32.mrb[0].mxu0
  %v1897 = vpop.f32.mrb[0].mxu0
  %v1898 = vadd.f32 0.0, %v1897
  %v1899 = vpop.f32.mrb[0].mxu0
  %1900 = vmatprep.mubr.bf16.mxu0 0
  %1901 = vmatmul.mubr.bf16.gmra.mrb[0].mxu0 %v892
  %v1902 = vpop.f32.mrb[0].mxu0
  %v1903 = vadd.f32 0.0, %v1902
  %v1904 = vpop.f32.mrb[0].mxu0
  %v1905 = vpop.f32.mrb[0].mxu0
  %v1906 = vadd.f32 0.0, %v1905
  %v1907 = vpop.f32.mrb[0].mxu0
  %1908 = vmatprep.mubr.bf16.mxu0 0
  %1909 = vmatmul.mubr.bf16.gmra.mrb[0].mxu0 %v893
  %v1910 = vpop.f32.mrb[0].mxu0
  %v1911 = vadd.f32 0.0, %v1910
  %v1912 = vpop.f32.mrb[0].mxu0
  %v1913 = vpop.f32.mrb[0].mxu0
  %v1914 = vadd.f32 0.0, %v1913
  %v1915 = vpop.f32.mrb[0].mxu0
  %1916 = vmatprep.mubr.bf16.mxu0 0
  %1917 = vmatmul.mubr.bf16.gmra.mrb[0].mxu0 %v894
  %v1918 = vpop.f32.mrb[0].mxu0
  %v1919 = vadd.f32 0.0, %v1918
  %v1920 = vpop.f32.mrb[0].mxu0
  %v1921 = vpop.f32.mrb[0].mxu0
  %v1922 = vadd.f32 0.0, %v1921
  %v1923 = vpop.f32.mrb[0].mxu0
  %1924 = vmatprep.mubr.bf16.mxu0 0
  %1925 = vmatmul.mubr.bf16.gmra.mrb[0].mxu0 %v895
  %v1926 = vpop.f32.mrb[0].mxu0
  %v1927 = vadd.f32 0.0, %v1926
  %v1928 = vpop.f32.mrb[0].mxu0
  %v1929 = vpop.f32.mrb[0].mxu0
  %v1930 = vadd.f32 0.0, %v1929
  %v1931 = vpop.f32.mrb[0].mxu0
  %1932 = vmatprep.mubr.bf16.mxu0 0
  %1933 = vmatmul.mubr.bf16.gmra.mrb[0].mxu0 %v896
  %v1934 = vpop.f32.mrb[0].mxu0
  %v1935 = vadd.f32 0.0, %v1934
  %v1936 = vpop.f32.mrb[0].mxu0
  %v1937 = vpop.f32.mrb[0].mxu0
  %v1938 = vadd.f32 0.0, %v1937
  %v1939 = vpop.f32.mrb[0].mxu0
  %1940 = vmatprep.mubr.bf16.mxu0 0
  %1941 = vmatmul.mubr.bf16.gmra.mrb[0].mxu0 %v897
  %v1942 = vpop.f32.mrb[0].mxu0
  %v1943 = vadd.f32 0.0, %v1942
  %v1944 = vpop.f32.mrb[0].mxu0
  %v1945 = vpop.f32.mrb[0].mxu0
  %v1946 = vadd.f32 0.0, %v1945
  %v1947 = vpop.f32.mrb[0].mxu0
  %1948 = vmatprep.mubr.bf16.mxu0 0
  %1949 = vmatmul.mubr.bf16.gmra.mrb[0].mxu0 %v898
  %v1950 = vpop.f32.mrb[0].mxu0
  %v1951 = vadd.f32 0.0, %v1950
  %v1952 = vpop.f32.mrb[0].mxu0
  %v1953 = vpop.f32.mrb[0].mxu0
  %v1954 = vadd.f32 0.0, %v1953
  %v1955 = vpop.f32.mrb[0].mxu0
  %1956 = vmatprep.mubr.bf16.mxu0 0
  %1957 = vmatmul.mubr.bf16.gmra.mrb[0].mxu0 %v899
  %v1958 = vpop.f32.mrb[0].mxu0
  %v1959 = vadd.f32 0.0, %v1958
  %v1960 = vpop.f32.mrb[0].mxu0
  %v1961 = vpop.f32.mrb[0].mxu0
  %v1962 = vadd.f32 0.0, %v1961
  %v1963 = vpop.f32.mrb[0].mxu0
  %1964 = vmatprep.mubr.bf16.mxu0 0
  %1965 = vmatmul.mubr.bf16.gmra.mrb[0].mxu0 %v900
  %v1966 = vpop.f32.mrb[0].mxu0
  %v1967 = vadd.f32 0.0, %v1966
  %v1968 = vpop.f32.mrb[0].mxu0
  %v1969 = vpop.f32.mrb[0].mxu0
  %v1970 = vadd.f32 0.0, %v1969
  %v1971 = vpop.f32.mrb[0].mxu0
  %1972 = vmatprep.mubr.bf16.mxu0 0
  %1973 = vmatmul.mubr.bf16.gmra.mrb[0].mxu0 %v901
  %v1974 = vpop.f32.mrb[0].mxu0
  %v1975 = vadd.f32 0.0, %v1974
  %v1976 = vpop.f32.mrb[0].mxu0
  %v1977 = vpop.f32.mrb[0].mxu0
  %v1978 = vadd.f32 0.0, %v1977
  %v1979 = vpop.f32.mrb[0].mxu0
  %1980 = vmatprep.mubr.bf16.mxu0 0
  %1981 = vmatmul.mubr.bf16.gmra.mrb[0].mxu0 %v902
  %v1982 = vpop.f32.mrb[0].mxu0
  %v1983 = vadd.f32 0.0, %v1982
  %v1984 = vpop.f32.mrb[0].mxu0
  %v1985 = vpop.f32.mrb[0].mxu0
  %v1986 = vadd.f32 0.0, %v1985
  %v1987 = vpop.f32.mrb[0].mxu0
  %1988 = vmatprep.mubr.bf16.mxu0 0
  %1989 = vmatmul.mubr.bf16.gmra.mrb[0].mxu0 %v903
  %v1990 = vpop.f32.mrb[0].mxu0
  %v1991 = vadd.f32 0.0, %v1990
  %v1992 = vpop.f32.mrb[0].mxu0
  %v1993 = vpop.f32.mrb[0].mxu0
  %v1994 = vadd.f32 0.0, %v1993
  %v1995 = vpop.f32.mrb[0].mxu0
  %1996 = vmatprep.mubr.bf16.mxu0 0
  %1997 = vmatmul.mubr.bf16.gmra.mrb[0].mxu0 %v904
  %v1998 = vpop.f32.mrb[0].mxu0
  %v1999 = vadd.f32 0.0, %v1998
  %v2000 = vpop.f32.mrb[0].mxu0
  %v2001 = vpop.f32.mrb[0].mxu0
  %v2002 = vadd.f32 0.0, %v2001
  %v2003 = vpop.f32.mrb[0].mxu0
  %2004 = vmatprep.mubr.bf16.mxu0 0
  %2005 = vmatmul.mubr.bf16.gmra.mrb[0].mxu0 %v905
  %v2006 = vpop.f32.mrb[0].mxu0
  %v2007 = vadd.f32 0.0, %v2006
  %v2008 = vpop.f32.mrb[0].mxu0
  %v2009 = vpop.f32.mrb[0].mxu0
  %v2010 = vadd.f32 0.0, %v2009
  %v2011 = vpop.f32.mrb[0].mxu0
  %2012 = vmatprep.mubr.bf16.mxu0 0
  %2013 = vmatmul.mubr.bf16.gmra.mrb[0].mxu0 %v906
  %v2014 = vpop.f32.mrb[0].mxu0
  %v2015 = vadd.f32 0.0, %v2014
  %v2016 = vpop.f32.mrb[0].mxu0
  %v2017 = vpop.f32.mrb[0].mxu0
  %v2018 = vadd.f32 0.0, %v2017
  %v2019 = vpop.f32.mrb[0].mxu0
  %2020 = vmatprep.mubr.bf16.mxu0 0
  %2021 = vmatmul.mubr.bf16.gmra.mrb[0].mxu0 %v907
  %v2022 = vpop.f32.mrb[0].mxu0
  %v2023 = vadd.f32 0.0, %v2022
  %v2024 = vpop.f32.mrb[0].mxu0
  %v2025 = vpop.f32.mrb[0].mxu0
  %v2026 = vadd.f32 0.0, %v2025
  %v2027 = vpop.f32.mrb[0].mxu0
  %2028 = vmatprep.mubr.bf16.mxu0 0
  %2029 = vmatmul.mubr.bf16.gmra.mrb[0].mxu0 %v908
  %v2030 = vpop.f32.mrb[0].mxu0
  %v2031 = vadd.f32 0.0, %v2030
  %v2032 = vpop.f32.mrb[0].mxu0
  %v2033 = vpop.f32.mrb[0].mxu0
  %v2034 = vadd.f32 0.0, %v2033
  %v2035 = vpop.f32.mrb[0].mxu0
  %2036 = vmatprep.mubr.bf16.mxu0 0
  %2037 = vmatmul.mubr.bf16.gmra.mrb[0].mxu0 %v909
  %v2038 = vpop.f32.mrb[0].mxu0
  %v2039 = vadd.f32 0.0, %v2038
  %v2040 = vpop.f32.mrb[0].mxu0
  %v2041 = vpop.f32.mrb[0].mxu0
  %v2042 = vadd.f32 0.0, %v2041
  %v2043 = vpop.f32.mrb[0].mxu0
  %2044 = vmatprep.mubr.bf16.mxu0 0
  %2045 = vmatmul.mubr.bf16.gmra.mrb[0].mxu0 %v910
  %v2046 = vpop.f32.mrb[0].mxu0
  %v2047 = vadd.f32 0.0, %v2046
  %v2048 = vpop.f32.mrb[0].mxu0
  %v2049 = vpop.f32.mrb[0].mxu0
  %v2050 = vadd.f32 0.0, %v2049
  %v2051 = vpop.f32.mrb[0].mxu0
  %2052 = vmatprep.mubr.bf16.mxu0 0
  %2053 = vmatmul.mubr.bf16.gmra.mrb[0].mxu0 %v911
  %v2054 = vpop.f32.mrb[0].mxu0
  %v2055 = vadd.f32 0.0, %v2054
  %v2056 = vpop.f32.mrb[0].mxu0
  %v2057 = vpop.f32.mrb[0].mxu0
  %v2058 = vadd.f32 0.0, %v2057
  %v2059 = vpop.f32.mrb[0].mxu0
  %2060 = vmatprep.mubr.bf16.mxu0 0
  %2061 = vmatmul.mubr.bf16.gmra.mrb[0].mxu0 %v912
  %v2062 = vpop.f32.mrb[0].mxu0
  %v2063 = vadd.f32 0.0, %v2062
  %v2064 = vpop.f32.mrb[0].mxu0
  %v2065 = vpop.f32.mrb[0].mxu0
  %v2066 = vadd.f32 0.0, %v2065
  %v2067 = vpop.f32.mrb[0].mxu0
  %2068 = vmatprep.mubr.bf16.mxu0 0
  %2069 = vmatmul.mubr.bf16.gmra.mrb[0].mxu0 %v913
  %v2070 = vpop.f32.mrb[0].mxu0
  %v2071 = vadd.f32 0.0, %v2070
  %v2072 = vpop.f32.mrb[0].mxu0
  %v2073 = vpop.f32.mrb[0].mxu0
  %v2074 = vadd.f32 0.0, %v2073
  %v2075 = vpop.f32.mrb[0].mxu0
  %2076 = vmatprep.mubr.bf16.mxu0 0
  %2077 = vmatmul.mubr.bf16.gmra.mrb[0].mxu0 %v914
  %v2078 = vpop.f32.mrb[0].mxu0
  %v2079 = vadd.f32 0.0, %v2078
  %v2080 = vpop.f32.mrb[0].mxu0
  %v2081 = vpop.f32.mrb[0].mxu0
  %v2082 = vadd.f32 0.0, %v2081
  %v2083 = vpop.f32.mrb[0].mxu0
  %2084 = vmatprep.mubr.bf16.mxu0 0
  %2085 = vmatmul.mubr.bf16.gmra.mrb[0].mxu0 %v915
  %v2086 = vpop.f32.mrb[0].mxu0
  %v2087 = vadd.f32 0.0, %v2086
  %v2088 = vpop.f32.mrb[0].mxu0
  %v2089 = vpop.f32.mrb[0].mxu0
  %v2090 = vadd.f32 0.0, %v2089
  %v2091 = vpop.f32.mrb[0].mxu0
  %2092 = vmatprep.mubr.bf16.mxu0 0
  %2093 = vmatmul.mubr.bf16.gmra.mrb[0].mxu0 %v916
  %v2094 = vpop.f32.mrb[0].mxu0
  %v2095 = vadd.f32 0.0, %v2094
  %v2096 = vpop.f32.mrb[0].mxu0
  %v2097 = vpop.f32.mrb[0].mxu0
  %v2098 = vadd.f32 0.0, %v2097
  %v2099 = vpop.f32.mrb[0].mxu0
  %2100 = vmatprep.mubr.bf16.mxu0 0
  %2101 = vmatmul.mubr.bf16.gmra.mrb[0].mxu0 %v917
  %v2102 = vpop.f32.mrb[0].mxu0
  %v2103 = vadd.f32 0.0, %v2102
  %v2104 = vpop.f32.mrb[0].mxu0
  %v2105 = vpop.f32.mrb[0].mxu0
  %v2106 = vadd.f32 0.0, %v2105
  %v2107 = vpop.f32.mrb[0].mxu0
  %2108 = vmatprep.mubr.bf16.mxu0 0
  %2109 = vmatmul.mubr.bf16.gmra.mrb[0].mxu0 %v918
  %v2110 = vpop.f32.mrb[0].mxu0
  %v2111 = vadd.f32 0.0, %v2110
  %v2112 = vpop.f32.mrb[0].mxu0
  %v2113 = vpop.f32.mrb[0].mxu0
  %v2114 = vadd.f32 0.0, %v2113
  %v2115 = vpop.f32.mrb[0].mxu0
  %2116 = vmatprep.mubr.bf16.mxu0 0
  %2117 = vmatmul.mubr.bf16.gmra.mrb[0].mxu0 %v919
  %v2118 = vpop.f32.mrb[0].mxu0
  %v2119 = vadd.f32 0.0, %v2118
  %v2120 = vpop.f32.mrb[0].mxu0
  %v2121 = vpop.f32.mrb[0].mxu0
  %v2122 = vadd.f32 0.0, %v2121
  %v2123 = vpop.f32.mrb[0].mxu0
  %2124 = vmatprep.mubr.bf16.mxu0 0
  %2125 = vmatmul.mubr.bf16.gmra.mrb[0].mxu0 %v920
  %v2126 = vpop.f32.mrb[0].mxu0
  %v2127 = vadd.f32 0.0, %v2126
  %v2128 = vpop.f32.mrb[0].mxu0
  %v2129 = vpop.f32.mrb[0].mxu0
  %v2130 = vadd.f32 0.0, %v2129
  %v2131 = vpop.f32.mrb[0].mxu0
  %2132 = vmatprep.mubr.bf16.mxu0 0
  %2133 = vmatmul.mubr.bf16.gmra.mrb[0].mxu0 %v921
  %v2134 = vpop.f32.mrb[0].mxu0
  %v2135 = vadd.f32 0.0, %v2134
  %v2136 = vpop.f32.mrb[0].mxu0
  %v2137 = vpop.f32.mrb[0].mxu0
  %v2138 = vadd.f32 0.0, %v2137
  %v2139 = vpop.f32.mrb[0].mxu0
  %2140 = vmatprep.mubr.bf16.mxu0 0
  %2141 = vmatmul.mubr.bf16.gmra.mrb[0].mxu0 %v922
  %v2142 = vpop.f32.mrb[0].mxu0
  %v2143 = vadd.f32 0.0, %v2142
  %v2144 = vpop.f32.mrb[0].mxu0
  %v2145 = vpop.f32.mrb[0].mxu0
  %v2146 = vadd.f32 0.0, %v2145
  %v2147 = vpop.f32.mrb[0].mxu0
  %2148 = vmatprep.mubr.bf16.mxu0 0
  %2149 = vmatmul.mubr.bf16.gmra.mrb[0].mxu0 %v923
  %v2150 = vpop.f32.mrb[0].mxu0
  %v2151 = vadd.f32 0.0, %v2150
  %v2152 = vpop.f32.mrb[0].mxu0
  %v2153 = vpop.f32.mrb[0].mxu0
  %v2154 = vadd.f32 0.0, %v2153
  %v2155 = vpop.f32.mrb[0].mxu0
  %2156 = vdwg.mxu0
  %vm2157 = vcmp.ge.f32.partialorder %v1135, 0.0
  %vm2158 = vcmp.ge.f32.partialorder %v1138, 0.0
  %vm2159 = vcmp.ge.f32.partialorder %v1143, 0.0
  %vm2160 = vcmp.ge.f32.partialorder %v1146, 0.0
  %vm2161 = vcmp.ge.f32.partialorder %v1151, 0.0
  %vm2162 = vcmp.ge.f32.partialorder %v1154, 0.0
  %vm2163 = vcmp.ge.f32.partialorder %v1159, 0.0
  %vm2164 = vcmp.ge.f32.partialorder %v1162, 0.0
  %vm2165 = vcmp.ge.f32.partialorder %v1167, 0.0
  %vm2166 = vcmp.ge.f32.partialorder %v1170, 0.0
  %vm2167 = vcmp.ge.f32.partialorder %v1175, 0.0
  %vm2168 = vcmp.ge.f32.partialorder %v1178, 0.0
  %vm2169 = vcmp.ge.f32.partialorder %v1183, 0.0
  %vm2170 = vcmp.ge.f32.partialorder %v1186, 0.0
  %vm2171 = vcmp.ge.f32.partialorder %v1191, 0.0
  %vm2172 = vcmp.ge.f32.partialorder %v1194, 0.0
  %vm2173 = vcmp.ge.f32.partialorder %v1199, 0.0
  %vm2174 = vcmp.ge.f32.partialorder %v1202, 0.0
  %vm2175 = vcmp.ge.f32.partialorder %v1207, 0.0
  %vm2176 = vcmp.ge.f32.partialorder %v1210, 0.0
  %vm2177 = vcmp.ge.f32.partialorder %v1215, 0.0
  %vm2178 = vcmp.ge.f32.partialorder %v1218, 0.0
  %vm2179 = vcmp.ge.f32.partialorder %v1223, 0.0
  %vm2180 = vcmp.ge.f32.partialorder %v1226, 0.0
  %vm2181 = vcmp.ge.f32.partialorder %v1231, 0.0
  %vm2182 = vcmp.ge.f32.partialorder %v1234, 0.0
  %vm2183 = vcmp.ge.f32.partialorder %v1239, 0.0
  %vm2184 = vcmp.ge.f32.partialorder %v1242, 0.0
  %vm2185 = vcmp.ge.f32.partialorder %v1247, 0.0
  %vm2186 = vcmp.ge.f32.partialorder %v1250, 0.0
  %vm2187 = vcmp.ge.f32.partialorder %v1255, 0.0
  %vm2188 = vcmp.ge.f32.partialorder %v1258, 0.0
  %vm2189 = vcmp.ge.f32.partialorder %v1263, 0.0
  %vm2190 = vcmp.ge.f32.partialorder %v1266, 0.0
  %vm2191 = vcmp.ge.f32.partialorder %v1271, 0.0
  %vm2192 = vcmp.ge.f32.partialorder %v1274, 0.0
  %vm2193 = vcmp.ge.f32.partialorder %v1279, 0.0
  %vm2194 = vcmp.ge.f32.partialorder %v1282, 0.0
  %vm2195 = vcmp.ge.f32.partialorder %v1287, 0.0
  %vm2196 = vcmp.ge.f32.partialorder %v1290, 0.0
  %vm2197 = vcmp.ge.f32.partialorder %v1295, 0.0
  %vm2198 = vcmp.ge.f32.partialorder %v1298, 0.0
  %vm2199 = vcmp.ge.f32.partialorder %v1303, 0.0
  %vm2200 = vcmp.ge.f32.partialorder %v1306, 0.0
  %vm2201 = vcmp.ge.f32.partialorder %v1311, 0.0
  %vm2202 = vcmp.ge.f32.partialorder %v1314, 0.0
  %vm2203 = vcmp.ge.f32.partialorder %v1319, 0.0
  %vm2204 = vcmp.ge.f32.partialorder %v1322, 0.0
  %vm2205 = vcmp.ge.f32.partialorder %v1327, 0.0
  %vm2206 = vcmp.ge.f32.partialorder %v1330, 0.0
  %vm2207 = vcmp.ge.f32.partialorder %v1335, 0.0
  %vm2208 = vcmp.ge.f32.partialorder %v1338, 0.0
  %vm2209 = vcmp.ge.f32.partialorder %v1343, 0.0
  %vm2210 = vcmp.ge.f32.partialorder %v1346, 0.0
  %vm2211 = vcmp.ge.f32.partialorder %v1351, 0.0
  %vm2212 = vcmp.ge.f32.partialorder %v1354, 0.0
  %vm2213 = vcmp.ge.f32.partialorder %v1359, 0.0
  %vm2214 = vcmp.ge.f32.partialorder %v1362, 0.0
  %vm2215 = vcmp.ge.f32.partialorder %v1367, 0.0
  %vm2216 = vcmp.ge.f32.partialorder %v1370, 0.0
  %vm2217 = vcmp.ge.f32.partialorder %v1375, 0.0
  %vm2218 = vcmp.ge.f32.partialorder %v1378, 0.0
  %vm2219 = vcmp.ge.f32.partialorder %v1383, 0.0
  %vm2220 = vcmp.ge.f32.partialorder %v1386, 0.0
  %vm2221 = vcmp.ge.f32.partialorder %v1391, 0.0
  %vm2222 = vcmp.ge.f32.partialorder %v1394, 0.0
  %vm2223 = vcmp.ge.f32.partialorder %v1399, 0.0
  %vm2224 = vcmp.ge.f32.partialorder %v1402, 0.0
  %vm2225 = vcmp.ge.f32.partialorder %v1407, 0.0
  %vm2226 = vcmp.ge.f32.partialorder %v1410, 0.0
  %vm2227 = vcmp.ge.f32.partialorder %v1415, 0.0
  %vm2228 = vcmp.ge.f32.partialorder %v1418, 0.0
  %vm2229 = vcmp.ge.f32.partialorder %v1423, 0.0
  %vm2230 = vcmp.ge.f32.partialorder %v1426, 0.0
  %vm2231 = vcmp.ge.f32.partialorder %v1431, 0.0
  %vm2232 = vcmp.ge.f32.partialorder %v1434, 0.0
  %vm2233 = vcmp.ge.f32.partialorder %v1439, 0.0
  %vm2234 = vcmp.ge.f32.partialorder %v1442, 0.0
  %vm2235 = vcmp.ge.f32.partialorder %v1447, 0.0
  %vm2236 = vcmp.ge.f32.partialorder %v1450, 0.0
  %vm2237 = vcmp.ge.f32.partialorder %v1455, 0.0
  %vm2238 = vcmp.ge.f32.partialorder %v1458, 0.0
  %vm2239 = vcmp.ge.f32.partialorder %v1463, 0.0
  %vm2240 = vcmp.ge.f32.partialorder %v1466, 0.0
  %vm2241 = vcmp.ge.f32.partialorder %v1471, 0.0
  %vm2242 = vcmp.ge.f32.partialorder %v1474, 0.0
  %vm2243 = vcmp.ge.f32.partialorder %v1479, 0.0
  %vm2244 = vcmp.ge.f32.partialorder %v1482, 0.0
  %vm2245 = vcmp.ge.f32.partialorder %v1487, 0.0
  %vm2246 = vcmp.ge.f32.partialorder %v1490, 0.0
  %vm2247 = vcmp.ge.f32.partialorder %v1495, 0.0
  %vm2248 = vcmp.ge.f32.partialorder %v1498, 0.0
  %vm2249 = vcmp.ge.f32.partialorder %v1503, 0.0
  %vm2250 = vcmp.ge.f32.partialorder %v1506, 0.0
  %vm2251 = vcmp.ge.f32.partialorder %v1511, 0.0
  %vm2252 = vcmp.ge.f32.partialorder %v1514, 0.0
  %vm2253 = vcmp.ge.f32.partialorder %v1519, 0.0
  %vm2254 = vcmp.ge.f32.partialorder %v1522, 0.0
  %vm2255 = vcmp.ge.f32.partialorder %v1527, 0.0
  %vm2256 = vcmp.ge.f32.partialorder %v1530, 0.0
  %vm2257 = vcmp.ge.f32.partialorder %v1535, 0.0
  %vm2258 = vcmp.ge.f32.partialorder %v1538, 0.0
  %vm2259 = vcmp.ge.f32.partialorder %v1543, 0.0
  %vm2260 = vcmp.ge.f32.partialorder %v1546, 0.0
  %vm2261 = vcmp.ge.f32.partialorder %v1551, 0.0
  %vm2262 = vcmp.ge.f32.partialorder %v1554, 0.0
  %vm2263 = vcmp.ge.f32.partialorder %v1559, 0.0
  %vm2264 = vcmp.ge.f32.partialorder %v1562, 0.0
  %vm2265 = vcmp.ge.f32.partialorder %v1567, 0.0
  %vm2266 = vcmp.ge.f32.partialorder %v1570, 0.0
  %vm2267 = vcmp.ge.f32.partialorder %v1575, 0.0
  %vm2268 = vcmp.ge.f32.partialorder %v1578, 0.0
  %vm2269 = vcmp.ge.f32.partialorder %v1583, 0.0
  %vm2270 = vcmp.ge.f32.partialorder %v1586, 0.0
  %vm2271 = vcmp.ge.f32.partialorder %v1591, 0.0
  %vm2272 = vcmp.ge.f32.partialorder %v1594, 0.0
  %vm2273 = vcmp.ge.f32.partialorder %v1599, 0.0
  %vm2274 = vcmp.ge.f32.partialorder %v1602, 0.0
  %vm2275 = vcmp.ge.f32.partialorder %v1607, 0.0
  %vm2276 = vcmp.ge.f32.partialorder %v1610, 0.0
  %vm2277 = vcmp.ge.f32.partialorder %v1615, 0.0
  %vm2278 = vcmp.ge.f32.partialorder %v1618, 0.0
  %vm2279 = vcmp.ge.f32.partialorder %v1623, 0.0
  %vm2280 = vcmp.ge.f32.partialorder %v1626, 0.0
  %vm2281 = vcmp.ge.f32.partialorder %v1631, 0.0
  %vm2282 = vcmp.ge.f32.partialorder %v1634, 0.0
  %vm2283 = vcmp.ge.f32.partialorder %v1639, 0.0
  %vm2284 = vcmp.ge.f32.partialorder %v1642, 0.0
  %vm2285 = vcmp.ge.f32.partialorder %v1647, 0.0
  %vm2286 = vcmp.ge.f32.partialorder %v1650, 0.0
  %vm2287 = vcmp.ge.f32.partialorder %v1655, 0.0
  %vm2288 = vcmp.ge.f32.partialorder %v1658, 0.0
  %vm2289 = vcmp.ge.f32.partialorder %v1663, 0.0
  %vm2290 = vcmp.ge.f32.partialorder %v1666, 0.0
  %vm2291 = vcmp.ge.f32.partialorder %v1671, 0.0
  %vm2292 = vcmp.ge.f32.partialorder %v1674, 0.0
  %vm2293 = vcmp.ge.f32.partialorder %v1679, 0.0
  %vm2294 = vcmp.ge.f32.partialorder %v1682, 0.0
  %vm2295 = vcmp.ge.f32.partialorder %v1687, 0.0
  %vm2296 = vcmp.ge.f32.partialorder %v1690, 0.0
  %vm2297 = vcmp.ge.f32.partialorder %v1695, 0.0
  %vm2298 = vcmp.ge.f32.partialorder %v1698, 0.0
  %vm2299 = vcmp.ge.f32.partialorder %v1703, 0.0
  %vm2300 = vcmp.ge.f32.partialorder %v1706, 0.0
  %vm2301 = vcmp.ge.f32.partialorder %v1711, 0.0
  %vm2302 = vcmp.ge.f32.partialorder %v1714, 0.0
  %vm2303 = vcmp.ge.f32.partialorder %v1719, 0.0
  %vm2304 = vcmp.ge.f32.partialorder %v1722, 0.0
  %vm2305 = vcmp.ge.f32.partialorder %v1727, 0.0
  %vm2306 = vcmp.ge.f32.partialorder %v1730, 0.0
  %vm2307 = vcmp.ge.f32.partialorder %v1735, 0.0
  %vm2308 = vcmp.ge.f32.partialorder %v1738, 0.0
  %vm2309 = vcmp.ge.f32.partialorder %v1743, 0.0
  %vm2310 = vcmp.ge.f32.partialorder %v1746, 0.0
  %vm2311 = vcmp.ge.f32.partialorder %v1751, 0.0
  %vm2312 = vcmp.ge.f32.partialorder %v1754, 0.0
  %vm2313 = vcmp.ge.f32.partialorder %v1759, 0.0
  %vm2314 = vcmp.ge.f32.partialorder %v1762, 0.0
  %vm2315 = vcmp.ge.f32.partialorder %v1767, 0.0
  %vm2316 = vcmp.ge.f32.partialorder %v1770, 0.0
  %vm2317 = vcmp.ge.f32.partialorder %v1775, 0.0
  %vm2318 = vcmp.ge.f32.partialorder %v1778, 0.0
  %vm2319 = vcmp.ge.f32.partialorder %v1783, 0.0
  %vm2320 = vcmp.ge.f32.partialorder %v1786, 0.0
  %vm2321 = vcmp.ge.f32.partialorder %v1791, 0.0
  %vm2322 = vcmp.ge.f32.partialorder %v1794, 0.0
  %vm2323 = vcmp.ge.f32.partialorder %v1799, 0.0
  %vm2324 = vcmp.ge.f32.partialorder %v1802, 0.0
  %vm2325 = vcmp.ge.f32.partialorder %v1807, 0.0
  %vm2326 = vcmp.ge.f32.partialorder %v1810, 0.0
  %vm2327 = vcmp.ge.f32.partialorder %v1815, 0.0
  %vm2328 = vcmp.ge.f32.partialorder %v1818, 0.0
  %vm2329 = vcmp.ge.f32.partialorder %v1823, 0.0
  %vm2330 = vcmp.ge.f32.partialorder %v1826, 0.0
  %vm2331 = vcmp.ge.f32.partialorder %v1831, 0.0
  %vm2332 = vcmp.ge.f32.partialorder %v1834, 0.0
  %vm2333 = vcmp.ge.f32.partialorder %v1839, 0.0
  %vm2334 = vcmp.ge.f32.partialorder %v1842, 0.0
  %vm2335 = vcmp.ge.f32.partialorder %v1847, 0.0
  %vm2336 = vcmp.ge.f32.partialorder %v1850, 0.0
  %vm2337 = vcmp.ge.f32.partialorder %v1855, 0.0
  %vm2338 = vcmp.ge.f32.partialorder %v1858, 0.0
  %vm2339 = vcmp.ge.f32.partialorder %v1863, 0.0
  %vm2340 = vcmp.ge.f32.partialorder %v1866, 0.0
  %vm2341 = vcmp.ge.f32.partialorder %v1871, 0.0
  %vm2342 = vcmp.ge.f32.partialorder %v1874, 0.0
  %vm2343 = vcmp.ge.f32.partialorder %v1879, 0.0
  %vm2344 = vcmp.ge.f32.partialorder %v1882, 0.0
  %vm2345 = vcmp.ge.f32.partialorder %v1887, 0.0
  %vm2346 = vcmp.ge.f32.partialorder %v1890, 0.0
  %vm2347 = vcmp.ge.f32.partialorder %v1895, 0.0
  %vm2348 = vcmp.ge.f32.partialorder %v1898, 0.0
  %vm2349 = vcmp.ge.f32.partialorder %v1903, 0.0
  %vm2350 = vcmp.ge.f32.partialorder %v1906, 0.0
  %vm2351 = vcmp.ge.f32.partialorder %v1911, 0.0
  %vm2352 = vcmp.ge.f32.partialorder %v1914, 0.0
  %vm2353 = vcmp.ge.f32.partialorder %v1919, 0.0
  %vm2354 = vcmp.ge.f32.partialorder %v1922, 0.0
  %vm2355 = vcmp.ge.f32.partialorder %v1927, 0.0
  %vm2356 = vcmp.ge.f32.partialorder %v1930, 0.0
  %vm2357 = vcmp.ge.f32.partialorder %v1935, 0.0
  %vm2358 = vcmp.ge.f32.partialorder %v1938, 0.0
  %vm2359 = vcmp.ge.f32.partialorder %v1943, 0.0
  %vm2360 = vcmp.ge.f32.partialorder %v1946, 0.0
  %vm2361 = vcmp.ge.f32.partialorder %v1951, 0.0
  %vm2362 = vcmp.ge.f32.partialorder %v1954, 0.0
  %vm2363 = vcmp.ge.f32.partialorder %v1959, 0.0
  %vm2364 = vcmp.ge.f32.partialorder %v1962, 0.0
  %vm2365 = vcmp.ge.f32.partialorder %v1967, 0.0
  %vm2366 = vcmp.ge.f32.partialorder %v1970, 0.0
  %vm2367 = vcmp.ge.f32.partialorder %v1975, 0.0
  %vm2368 = vcmp.ge.f32.partialorder %v1978, 0.0
  %vm2369 = vcmp.ge.f32.partialorder %v1983, 0.0
  %vm2370 = vcmp.ge.f32.partialorder %v1986, 0.0
  %vm2371 = vcmp.ge.f32.partialorder %v1991, 0.0
  %vm2372 = vcmp.ge.f32.partialorder %v1994, 0.0
  %vm2373 = vcmp.ge.f32.partialorder %v1999, 0.0
  %vm2374 = vcmp.ge.f32.partialorder %v2002, 0.0
  %vm2375 = vcmp.ge.f32.partialorder %v2007, 0.0
  %vm2376 = vcmp.ge.f32.partialorder %v2010, 0.0
  %vm2377 = vcmp.ge.f32.partialorder %v2015, 0.0
  %vm2378 = vcmp.ge.f32.partialorder %v2018, 0.0
  %vm2379 = vcmp.ge.f32.partialorder %v2023, 0.0
  %vm2380 = vcmp.ge.f32.partialorder %v2026, 0.0
  %vm2381 = vcmp.ge.f32.partialorder %v2031, 0.0
  %vm2382 = vcmp.ge.f32.partialorder %v2034, 0.0
  %vm2383 = vcmp.ge.f32.partialorder %v2039, 0.0
  %vm2384 = vcmp.ge.f32.partialorder %v2042, 0.0
  %vm2385 = vcmp.ge.f32.partialorder %v2047, 0.0
  %vm2386 = vcmp.ge.f32.partialorder %v2050, 0.0
  %vm2387 = vcmp.ge.f32.partialorder %v2055, 0.0
  %vm2388 = vcmp.ge.f32.partialorder %v2058, 0.0
  %vm2389 = vcmp.ge.f32.partialorder %v2063, 0.0
  %vm2390 = vcmp.ge.f32.partialorder %v2066, 0.0
  %vm2391 = vcmp.ge.f32.partialorder %v2071, 0.0
  %vm2392 = vcmp.ge.f32.partialorder %v2074, 0.0
  %vm2393 = vcmp.ge.f32.partialorder %v2079, 0.0
  %vm2394 = vcmp.ge.f32.partialorder %v2082, 0.0
  %vm2395 = vcmp.ge.f32.partialorder %v2087, 0.0
  %vm2396 = vcmp.ge.f32.partialorder %v2090, 0.0
  %vm2397 = vcmp.ge.f32.partialorder %v2095, 0.0
  %vm2398 = vcmp.ge.f32.partialorder %v2098, 0.0
  %vm2399 = vcmp.ge.f32.partialorder %v2103, 0.0
  %vm2400 = vcmp.ge.f32.partialorder %v2106, 0.0
  %vm2401 = vcmp.ge.f32.partialorder %v2111, 0.0
  %vm2402 = vcmp.ge.f32.partialorder %v2114, 0.0
  %vm2403 = vcmp.ge.f32.partialorder %v2119, 0.0
  %vm2404 = vcmp.ge.f32.partialorder %v2122, 0.0
  %vm2405 = vcmp.ge.f32.partialorder %v2127, 0.0
  %vm2406 = vcmp.ge.f32.partialorder %v2130, 0.0
  %vm2407 = vcmp.ge.f32.partialorder %v2135, 0.0
  %vm2408 = vcmp.ge.f32.partialorder %v2138, 0.0
  %vm2409 = vcmp.ge.f32.partialorder %v2143, 0.0
  %vm2410 = vcmp.ge.f32.partialorder %v2146, 0.0
  %vm2411 = vcmp.ge.f32.partialorder %v2151, 0.0
  %vm2412 = vcmp.ge.f32.partialorder %v2154, 0.0
  %v2413 = vmul.f32 %v1135, 0.2
  %v2414 = vmul.f32 %v1138, 0.2
  %v2415 = vmul.f32 %v1143, 0.2
  %v2416 = vmul.f32 %v1146, 0.2
  %v2417 = vmul.f32 %v1151, 0.2
  %v2418 = vmul.f32 %v1154, 0.2
  %v2419 = vmul.f32 %v1159, 0.2
  %v2420 = vmul.f32 %v1162, 0.2
  %v2421 = vmul.f32 %v1167, 0.2
  %v2422 = vmul.f32 %v1170, 0.2
  %v2423 = vmul.f32 %v1175, 0.2
  %v2424 = vmul.f32 %v1178, 0.2
  %v2425 = vmul.f32 %v1183, 0.2
  %v2426 = vmul.f32 %v1186, 0.2
  %v2427 = vmul.f32 %v1191, 0.2
  %v2428 = vmul.f32 %v1194, 0.2
  %v2429 = vmul.f32 %v1199, 0.2
  %v2430 = vmul.f32 %v1202, 0.2
  %v2431 = vmul.f32 %v1207, 0.2
  %v2432 = vmul.f32 %v1210, 0.2
  %v2433 = vmul.f32 %v1215, 0.2
  %v2434 = vmul.f32 %v1218, 0.2
  %v2435 = vmul.f32 %v1223, 0.2
  %v2436 = vmul.f32 %v1226, 0.2
  %v2437 = vmul.f32 %v1231, 0.2
  %v2438 = vmul.f32 %v1234, 0.2
  %v2439 = vmul.f32 %v1239, 0.2
  %v2440 = vmul.f32 %v1242, 0.2
  %v2441 = vmul.f32 %v1247, 0.2
  %v2442 = vmul.f32 %v1250, 0.2
  %v2443 = vmul.f32 %v1255, 0.2
  %v2444 = vmul.f32 %v1258, 0.2
  %v2445 = vmul.f32 %v1263, 0.2
  %v2446 = vmul.f32 %v1266, 0.2
  %v2447 = vmul.f32 %v1271, 0.2
  %v2448 = vmul.f32 %v1274, 0.2
  %v2449 = vmul.f32 %v1279, 0.2
  %v2450 = vmul.f32 %v1282, 0.2
  %v2451 = vmul.f32 %v1287, 0.2
  %v2452 = vmul.f32 %v1290, 0.2
  %v2453 = vmul.f32 %v1295, 0.2
  %v2454 = vmul.f32 %v1298, 0.2
  %v2455 = vmul.f32 %v1303, 0.2
  %v2456 = vmul.f32 %v1306, 0.2
  %v2457 = vmul.f32 %v1311, 0.2
  %v2458 = vmul.f32 %v1314, 0.2
  %v2459 = vmul.f32 %v1319, 0.2
  %v2460 = vmul.f32 %v1322, 0.2
  %v2461 = vmul.f32 %v1327, 0.2
  %v2462 = vmul.f32 %v1330, 0.2
  %v2463 = vmul.f32 %v1335, 0.2
  %v2464 = vmul.f32 %v1338, 0.2
  %v2465 = vmul.f32 %v1343, 0.2
  %v2466 = vmul.f32 %v1346, 0.2
  %v2467 = vmul.f32 %v1351, 0.2
  %v2468 = vmul.f32 %v1354, 0.2
  %v2469 = vmul.f32 %v1359, 0.2
  %v2470 = vmul.f32 %v1362, 0.2
  %v2471 = vmul.f32 %v1367, 0.2
  %v2472 = vmul.f32 %v1370, 0.2
  %v2473 = vmul.f32 %v1375, 0.2
  %v2474 = vmul.f32 %v1378, 0.2
  %v2475 = vmul.f32 %v1383, 0.2
  %v2476 = vmul.f32 %v1386, 0.2
  %v2477 = vmul.f32 %v1391, 0.2
  %v2478 = vmul.f32 %v1394, 0.2
  %v2479 = vmul.f32 %v1399, 0.2
  %v2480 = vmul.f32 %v1402, 0.2
  %v2481 = vmul.f32 %v1407, 0.2
  %v2482 = vmul.f32 %v1410, 0.2
  %v2483 = vmul.f32 %v1415, 0.2
  %v2484 = vmul.f32 %v1418, 0.2
  %v2485 = vmul.f32 %v1423, 0.2
  %v2486 = vmul.f32 %v1426, 0.2
  %v2487 = vmul.f32 %v1431, 0.2
  %v2488 = vmul.f32 %v1434, 0.2
  %v2489 = vmul.f32 %v1439, 0.2
  %v2490 = vmul.f32 %v1442, 0.2
  %v2491 = vmul.f32 %v1447, 0.2
  %v2492 = vmul.f32 %v1450, 0.2
  %v2493 = vmul.f32 %v1455, 0.2
  %v2494 = vmul.f32 %v1458, 0.2
  %v2495 = vmul.f32 %v1463, 0.2
  %v2496 = vmul.f32 %v1466, 0.2
  %v2497 = vmul.f32 %v1471, 0.2
  %v2498 = vmul.f32 %v1474, 0.2
  %v2499 = vmul.f32 %v1479, 0.2
  %v2500 = vmul.f32 %v1482, 0.2
  %v2501 = vmul.f32 %v1487, 0.2
  %v2502 = vmul.f32 %v1490, 0.2
  %v2503 = vmul.f32 %v1495, 0.2
  %v2504 = vmul.f32 %v1498, 0.2
  %v2505 = vmul.f32 %v1503, 0.2
  %v2506 = vmul.f32 %v1506, 0.2
  %v2507 = vmul.f32 %v1511, 0.2
  %v2508 = vmul.f32 %v1514, 0.2
  %v2509 = vmul.f32 %v1519, 0.2
  %v2510 = vmul.f32 %v1522, 0.2
  %v2511 = vmul.f32 %v1527, 0.2
  %v2512 = vmul.f32 %v1530, 0.2
  %v2513 = vmul.f32 %v1535, 0.2
  %v2514 = vmul.f32 %v1538, 0.2
  %v2515 = vmul.f32 %v1543, 0.2
  %v2516 = vmul.f32 %v1546, 0.2
  %v2517 = vmul.f32 %v1551, 0.2
  %v2518 = vmul.f32 %v1554, 0.2
  %v2519 = vmul.f32 %v1559, 0.2
  %v2520 = vmul.f32 %v1562, 0.2
  %v2521 = vmul.f32 %v1567, 0.2
  %v2522 = vmul.f32 %v1570, 0.2
  %v2523 = vmul.f32 %v1575, 0.2
  %v2524 = vmul.f32 %v1578, 0.2
  %v2525 = vmul.f32 %v1583, 0.2
  %v2526 = vmul.f32 %v1586, 0.2
  %v2527 = vmul.f32 %v1591, 0.2
  %v2528 = vmul.f32 %v1594, 0.2
  %v2529 = vmul.f32 %v1599, 0.2
  %v2530 = vmul.f32 %v1602, 0.2
  %v2531 = vmul.f32 %v1607, 0.2
  %v2532 = vmul.f32 %v1610, 0.2
  %v2533 = vmul.f32 %v1615, 0.2
  %v2534 = vmul.f32 %v1618, 0.2
  %v2535 = vmul.f32 %v1623, 0.2
  %v2536 = vmul.f32 %v1626, 0.2
  %v2537 = vmul.f32 %v1631, 0.2
  %v2538 = vmul.f32 %v1634, 0.2
  %v2539 = vmul.f32 %v1639, 0.2
  %v2540 = vmul.f32 %v1642, 0.2
  %v2541 = vmul.f32 %v1647, 0.2
  %v2542 = vmul.f32 %v1650, 0.2
  %v2543 = vmul.f32 %v1655, 0.2
  %v2544 = vmul.f32 %v1658, 0.2
  %v2545 = vmul.f32 %v1663, 0.2
  %v2546 = vmul.f32 %v1666, 0.2
  %v2547 = vmul.f32 %v1671, 0.2
  %v2548 = vmul.f32 %v1674, 0.2
  %v2549 = vmul.f32 %v1679, 0.2
  %v2550 = vmul.f32 %v1682, 0.2
  %v2551 = vmul.f32 %v1687, 0.2
  %v2552 = vmul.f32 %v1690, 0.2
  %v2553 = vmul.f32 %v1695, 0.2
  %v2554 = vmul.f32 %v1698, 0.2
  %v2555 = vmul.f32 %v1703, 0.2
  %v2556 = vmul.f32 %v1706, 0.2
  %v2557 = vmul.f32 %v1711, 0.2
  %v2558 = vmul.f32 %v1714, 0.2
  %v2559 = vmul.f32 %v1719, 0.2
  %v2560 = vmul.f32 %v1722, 0.2
  %v2561 = vmul.f32 %v1727, 0.2
  %v2562 = vmul.f32 %v1730, 0.2
  %v2563 = vmul.f32 %v1735, 0.2
  %v2564 = vmul.f32 %v1738, 0.2
  %v2565 = vmul.f32 %v1743, 0.2
  %v2566 = vmul.f32 %v1746, 0.2
  %v2567 = vmul.f32 %v1751, 0.2
  %v2568 = vmul.f32 %v1754, 0.2
  %v2569 = vmul.f32 %v1759, 0.2
  %v2570 = vmul.f32 %v1762, 0.2
  %v2571 = vmul.f32 %v1767, 0.2
  %v2572 = vmul.f32 %v1770, 0.2
  %v2573 = vmul.f32 %v1775, 0.2
  %v2574 = vmul.f32 %v1778, 0.2
  %v2575 = vmul.f32 %v1783, 0.2
  %v2576 = vmul.f32 %v1786, 0.2
  %v2577 = vmul.f32 %v1791, 0.2
  %v2578 = vmul.f32 %v1794, 0.2
  %v2579 = vmul.f32 %v1799, 0.2
  %v2580 = vmul.f32 %v1802, 0.2
  %v2581 = vmul.f32 %v1807, 0.2
  %v2582 = vmul.f32 %v1810, 0.2
  %v2583 = vmul.f32 %v1815, 0.2
  %v2584 = vmul.f32 %v1818, 0.2
  %v2585 = vmul.f32 %v1823, 0.2
  %v2586 = vmul.f32 %v1826, 0.2
  %v2587 = vmul.f32 %v1831, 0.2
  %v2588 = vmul.f32 %v1834, 0.2
  %v2589 = vmul.f32 %v1839, 0.2
  %v2590 = vmul.f32 %v1842, 0.2
  %v2591 = vmul.f32 %v1847, 0.2
  %v2592 = vmul.f32 %v1850, 0.2
  %v2593 = vmul.f32 %v1855, 0.2
  %v2594 = vmul.f32 %v1858, 0.2
  %v2595 = vmul.f32 %v1863, 0.2
  %v2596 = vmul.f32 %v1866, 0.2
  %v2597 = vmul.f32 %v1871, 0.2
  %v2598 = vmul.f32 %v1874, 0.2
  %v2599 = vmul.f32 %v1879, 0.2
  %v2600 = vmul.f32 %v1882, 0.2
  %v2601 = vmul.f32 %v1887, 0.2
  %v2602 = vmul.f32 %v1890, 0.2
  %v2603 = vmul.f32 %v1895, 0.2
  %v2604 = vmul.f32 %v1898, 0.2
  %v2605 = vmul.f32 %v1903, 0.2
  %v2606 = vmul.f32 %v1906, 0.2
  %v2607 = vmul.f32 %v1911, 0.2
  %v2608 = vmul.f32 %v1914, 0.2
  %v2609 = vmul.f32 %v1919, 0.2
  %v2610 = vmul.f32 %v1922, 0.2
  %v2611 = vmul.f32 %v1927, 0.2
  %v2612 = vmul.f32 %v1930, 0.2
  %v2613 = vmul.f32 %v1935, 0.2
  %v2614 = vmul.f32 %v1938, 0.2
  %v2615 = vmul.f32 %v1943, 0.2
  %v2616 = vmul.f32 %v1946, 0.2
  %v2617 = vmul.f32 %v1951, 0.2
  %v2618 = vmul.f32 %v1954, 0.2
  %v2619 = vmul.f32 %v1959, 0.2
  %v2620 = vmul.f32 %v1962, 0.2
  %v2621 = vmul.f32 %v1967, 0.2
  %v2622 = vmul.f32 %v1970, 0.2
  %v2623 = vmul.f32 %v1975, 0.2
  %v2624 = vmul.f32 %v1978, 0.2
  %v2625 = vmul.f32 %v1983, 0.2
  %v2626 = vmul.f32 %v1986, 0.2
  %v2627 = vmul.f32 %v1991, 0.2
  %v2628 = vmul.f32 %v1994, 0.2
  %v2629 = vmul.f32 %v1999, 0.2
  %v2630 = vmul.f32 %v2002, 0.2
  %v2631 = vmul.f32 %v2007, 0.2
  %v2632 = vmul.f32 %v2010, 0.2
  %v2633 = vmul.f32 %v2015, 0.2
  %v2634 = vmul.f32 %v2018, 0.2
  %v2635 = vmul.f32 %v2023, 0.2
  %v2636 = vmul.f32 %v2026, 0.2
  %v2637 = vmul.f32 %v2031, 0.2
  %v2638 = vmul.f32 %v2034, 0.2
  %v2639 = vmul.f32 %v2039, 0.2
  %v2640 = vmul.f32 %v2042, 0.2
  %v2641 = vmul.f32 %v2047, 0.2
  %v2642 = vmul.f32 %v2050, 0.2
  %v2643 = vmul.f32 %v2055, 0.2
  %v2644 = vmul.f32 %v2058, 0.2
  %v2645 = vmul.f32 %v2063, 0.2
  %v2646 = vmul.f32 %v2066, 0.2
  %v2647 = vmul.f32 %v2071, 0.2
  %v2648 = vmul.f32 %v2074, 0.2
  %v2649 = vmul.f32 %v2079, 0.2
  %v2650 = vmul.f32 %v2082, 0.2
  %v2651 = vmul.f32 %v2087, 0.2
  %v2652 = vmul.f32 %v2090, 0.2
  %v2653 = vmul.f32 %v2095, 0.2
  %v2654 = vmul.f32 %v2098, 0.2
  %v2655 = vmul.f32 %v2103, 0.2
  %v2656 = vmul.f32 %v2106, 0.2
  %v2657 = vmul.f32 %v2111, 0.2
  %v2658 = vmul.f32 %v2114, 0.2
  %v2659 = vmul.f32 %v2119, 0.2
  %v2660 = vmul.f32 %v2122, 0.2
  %v2661 = vmul.f32 %v2127, 0.2
  %v2662 = vmul.f32 %v2130, 0.2
  %v2663 = vmul.f32 %v2135, 0.2
  %v2664 = vmul.f32 %v2138, 0.2
  %v2665 = vmul.f32 %v2143, 0.2
  %v2666 = vmul.f32 %v2146, 0.2
  %v2667 = vmul.f32 %v2151, 0.2
  %v2668 = vmul.f32 %v2154, 0.2
  %v2669 = vsel %vm2157, %v1135, %v2413
  %v2670 = vsel %vm2158, %v1138, %v2414
  %v2671 = vsel %vm2159, %v1143, %v2415
  %v2672 = vsel %vm2160, %v1146, %v2416
  %v2673 = vsel %vm2161, %v1151, %v2417
  %v2674 = vsel %vm2162, %v1154, %v2418
  %v2675 = vsel %vm2163, %v1159, %v2419
  %v2676 = vsel %vm2164, %v1162, %v2420
  %v2677 = vsel %vm2165, %v1167, %v2421
  %v2678 = vsel %vm2166, %v1170, %v2422
  %v2679 = vsel %vm2167, %v1175, %v2423
  %v2680 = vsel %vm2168, %v1178, %v2424
  %v2681 = vsel %vm2169, %v1183, %v2425
  %v2682 = vsel %vm2170, %v1186, %v2426
  %v2683 = vsel %vm2171, %v1191, %v2427
  %v2684 = vsel %vm2172, %v1194, %v2428
  %v2685 = vsel %vm2173, %v1199, %v2429
  %v2686 = vsel %vm2174, %v1202, %v2430
  %v2687 = vsel %vm2175, %v1207, %v2431
  %v2688 = vsel %vm2176, %v1210, %v2432
  %v2689 = vsel %vm2177, %v1215, %v2433
  %v2690 = vsel %vm2178, %v1218, %v2434
  %v2691 = vsel %vm2179, %v1223, %v2435
  %v2692 = vsel %vm2180, %v1226, %v2436
  %v2693 = vsel %vm2181, %v1231, %v2437
  %v2694 = vsel %vm2182, %v1234, %v2438
  %v2695 = vsel %vm2183, %v1239, %v2439
  %v2696 = vsel %vm2184, %v1242, %v2440
  %v2697 = vsel %vm2185, %v1247, %v2441
  %v2698 = vsel %vm2186, %v1250, %v2442
  %v2699 = vsel %vm2187, %v1255, %v2443
  %v2700 = vsel %vm2188, %v1258, %v2444
  %v2701 = vsel %vm2189, %v1263, %v2445
  %v2702 = vsel %vm2190, %v1266, %v2446
  %v2703 = vsel %vm2191, %v1271, %v2447
  %v2704 = vsel %vm2192, %v1274, %v2448
  %v2705 = vsel %vm2193, %v1279, %v2449
  %v2706 = vsel %vm2194, %v1282, %v2450
  %v2707 = vsel %vm2195, %v1287, %v2451
  %v2708 = vsel %vm2196, %v1290, %v2452
  %v2709 = vsel %vm2197, %v1295, %v2453
  %v2710 = vsel %vm2198, %v1298, %v2454
  %v2711 = vsel %vm2199, %v1303, %v2455
  %v2712 = vsel %vm2200, %v1306, %v2456
  %v2713 = vsel %vm2201, %v1311, %v2457
  %v2714 = vsel %vm2202, %v1314, %v2458
  %v2715 = vsel %vm2203, %v1319, %v2459
  %v2716 = vsel %vm2204, %v1322, %v2460
  %v2717 = vsel %vm2205, %v1327, %v2461
  %v2718 = vsel %vm2206, %v1330, %v2462
  %v2719 = vsel %vm2207, %v1335, %v2463
  %v2720 = vsel %vm2208, %v1338, %v2464
  %v2721 = vsel %vm2209, %v1343, %v2465
  %v2722 = vsel %vm2210, %v1346, %v2466
  %v2723 = vsel %vm2211, %v1351, %v2467
  %v2724 = vsel %vm2212, %v1354, %v2468
  %v2725 = vsel %vm2213, %v1359, %v2469
  %v2726 = vsel %vm2214, %v1362, %v2470
  %v2727 = vsel %vm2215, %v1367, %v2471
  %v2728 = vsel %vm2216, %v1370, %v2472
  %v2729 = vsel %vm2217, %v1375, %v2473
  %v2730 = vsel %vm2218, %v1378, %v2474
  %v2731 = vsel %vm2219, %v1383, %v2475
  %v2732 = vsel %vm2220, %v1386, %v2476
  %v2733 = vsel %vm2221, %v1391, %v2477
  %v2734 = vsel %vm2222, %v1394, %v2478
  %v2735 = vsel %vm2223, %v1399, %v2479
  %v2736 = vsel %vm2224, %v1402, %v2480
  %v2737 = vsel %vm2225, %v1407, %v2481
  %v2738 = vsel %vm2226, %v1410, %v2482
  %v2739 = vsel %vm2227, %v1415, %v2483
  %v2740 = vsel %vm2228, %v1418, %v2484
  %v2741 = vsel %vm2229, %v1423, %v2485
  %v2742 = vsel %vm2230, %v1426, %v2486
  %v2743 = vsel %vm2231, %v1431, %v2487
  %v2744 = vsel %vm2232, %v1434, %v2488
  %v2745 = vsel %vm2233, %v1439, %v2489
  %v2746 = vsel %vm2234, %v1442, %v2490
  %v2747 = vsel %vm2235, %v1447, %v2491
  %v2748 = vsel %vm2236, %v1450, %v2492
  %v2749 = vsel %vm2237, %v1455, %v2493
  %v2750 = vsel %vm2238, %v1458, %v2494
  %v2751 = vsel %vm2239, %v1463, %v2495
  %v2752 = vsel %vm2240, %v1466, %v2496
  %v2753 = vsel %vm2241, %v1471, %v2497
  %v2754 = vsel %vm2242, %v1474, %v2498
  %v2755 = vsel %vm2243, %v1479, %v2499
  %v2756 = vsel %vm2244, %v1482, %v2500
  %v2757 = vsel %vm2245, %v1487, %v2501
  %v2758 = vsel %vm2246, %v1490, %v2502
  %v2759 = vsel %vm2247, %v1495, %v2503
  %v2760 = vsel %vm2248, %v1498, %v2504
  %v2761 = vsel %vm2249, %v1503, %v2505
  %v2762 = vsel %vm2250, %v1506, %v2506
  %v2763 = vsel %vm2251, %v1511, %v2507
  %v2764 = vsel %vm2252, %v1514, %v2508
  %v2765 = vsel %vm2253, %v1519, %v2509
  %v2766 = vsel %vm2254, %v1522, %v2510
  %v2767 = vsel %vm2255, %v1527, %v2511
  %v2768 = vsel %vm2256, %v1530, %v2512
  %v2769 = vsel %vm2257, %v1535, %v2513
  %v2770 = vsel %vm2258, %v1538, %v2514
  %v2771 = vsel %vm2259, %v1543, %v2515
  %v2772 = vsel %vm2260, %v1546, %v2516
  %v2773 = vsel %vm2261, %v1551, %v2517
  %v2774 = vsel %vm2262, %v1554, %v2518
  %v2775 = vsel %vm2263, %v1559, %v2519
  %v2776 = vsel %vm2264, %v1562, %v2520
  %v2777 = vsel %vm2265, %v1567, %v2521
  %v2778 = vsel %vm2266, %v1570, %v2522
  %v2779 = vsel %vm2267, %v1575, %v2523
  %v2780 = vsel %vm2268, %v1578, %v2524
  %v2781 = vsel %vm2269, %v1583, %v2525
  %v2782 = vsel %vm2270, %v1586, %v2526
  %v2783 = vsel %vm2271, %v1591, %v2527
  %v2784 = vsel %vm2272, %v1594, %v2528
  %v2785 = vsel %vm2273, %v1599, %v2529
  %v2786 = vsel %vm2274, %v1602, %v2530
  %v2787 = vsel %vm2275, %v1607, %v2531
  %v2788 = vsel %vm2276, %v1610, %v2532
  %v2789 = vsel %vm2277, %v1615, %v2533
  %v2790 = vsel %vm2278, %v1618, %v2534
  %v2791 = vsel %vm2279, %v1623, %v2535
  %v2792 = vsel %vm2280, %v1626, %v2536
  %v2793 = vsel %vm2281, %v1631, %v2537
  %v2794 = vsel %vm2282, %v1634, %v2538
  %v2795 = vsel %vm2283, %v1639, %v2539
  %v2796 = vsel %vm2284, %v1642, %v2540
  %v2797 = vsel %vm2285, %v1647, %v2541
  %v2798 = vsel %vm2286, %v1650, %v2542
  %v2799 = vsel %vm2287, %v1655, %v2543
  %v2800 = vsel %vm2288, %v1658, %v2544
  %v2801 = vsel %vm2289, %v1663, %v2545
  %v2802 = vsel %vm2290, %v1666, %v2546
  %v2803 = vsel %vm2291, %v1671, %v2547
  %v2804 = vsel %vm2292, %v1674, %v2548
  %v2805 = vsel %vm2293, %v1679, %v2549
  %v2806 = vsel %vm2294, %v1682, %v2550
  %v2807 = vsel %vm2295, %v1687, %v2551
  %v2808 = vsel %vm2296, %v1690, %v2552
  %v2809 = vsel %vm2297, %v1695, %v2553
  %v2810 = vsel %vm2298, %v1698, %v2554
  %v2811 = vsel %vm2299, %v1703, %v2555
  %v2812 = vsel %vm2300, %v1706, %v2556
  %v2813 = vsel %vm2301, %v1711, %v2557
  %v2814 = vsel %vm2302, %v1714, %v2558
  %v2815 = vsel %vm2303, %v1719, %v2559
  %v2816 = vsel %vm2304, %v1722, %v2560
  %v2817 = vsel %vm2305, %v1727, %v2561
  %v2818 = vsel %vm2306, %v1730, %v2562
  %v2819 = vsel %vm2307, %v1735, %v2563
  %v2820 = vsel %vm2308, %v1738, %v2564
  %v2821 = vsel %vm2309, %v1743, %v2565
  %v2822 = vsel %vm2310, %v1746, %v2566
  %v2823 = vsel %vm2311, %v1751, %v2567
  %v2824 = vsel %vm2312, %v1754, %v2568
  %v2825 = vsel %vm2313, %v1759, %v2569
  %v2826 = vsel %vm2314, %v1762, %v2570
  %v2827 = vsel %vm2315, %v1767, %v2571
  %v2828 = vsel %vm2316, %v1770, %v2572
  %v2829 = vsel %vm2317, %v1775, %v2573
  %v2830 = vsel %vm2318, %v1778, %v2574
  %v2831 = vsel %vm2319, %v1783, %v2575
  %v2832 = vsel %vm2320, %v1786, %v2576
  %v2833 = vsel %vm2321, %v1791, %v2577
  %v2834 = vsel %vm2322, %v1794, %v2578
  %v2835 = vsel %vm2323, %v1799, %v2579
  %v2836 = vsel %vm2324, %v1802, %v2580
  %v2837 = vsel %vm2325, %v1807, %v2581
  %v2838 = vsel %vm2326, %v1810, %v2582
  %v2839 = vsel %vm2327, %v1815, %v2583
  %v2840 = vsel %vm2328, %v1818, %v2584
  %v2841 = vsel %vm2329, %v1823, %v2585
  %v2842 = vsel %vm2330, %v1826, %v2586
  %v2843 = vsel %vm2331, %v1831, %v2587
  %v2844 = vsel %vm2332, %v1834, %v2588
  %v2845 = vsel %vm2333, %v1839, %v2589
  %v2846 = vsel %vm2334, %v1842, %v2590
  %v2847 = vsel %vm2335, %v1847, %v2591
  %v2848 = vsel %vm2336, %v1850, %v2592
  %v2849 = vsel %vm2337, %v1855, %v2593
  %v2850 = vsel %vm2338, %v1858, %v2594
  %v2851 = vsel %vm2339, %v1863, %v2595
  %v2852 = vsel %vm2340, %v1866, %v2596
  %v2853 = vsel %vm2341, %v1871, %v2597
  %v2854 = vsel %vm2342, %v1874, %v2598
  %v2855 = vsel %vm2343, %v1879, %v2599
  %v2856 = vsel %vm2344, %v1882, %v2600
  %v2857 = vsel %vm2345, %v1887, %v2601
  %v2858 = vsel %vm2346, %v1890, %v2602
  %v2859 = vsel %vm2347, %v1895, %v2603
  %v2860 = vsel %vm2348, %v1898, %v2604
  %v2861 = vsel %vm2349, %v1903, %v2605
  %v2862 = vsel %vm2350, %v1906, %v2606
  %v2863 = vsel %vm2351, %v1911, %v2607
  %v2864 = vsel %vm2352, %v1914, %v2608
  %v2865 = vsel %vm2353, %v1919, %v2609
  %v2866 = vsel %vm2354, %v1922, %v2610
  %v2867 = vsel %vm2355, %v1927, %v2611
  %v2868 = vsel %vm2356, %v1930, %v2612
  %v2869 = vsel %vm2357, %v1935, %v2613
  %v2870 = vsel %vm2358, %v1938, %v2614
  %v2871 = vsel %vm2359, %v1943, %v2615
  %v2872 = vsel %vm2360, %v1946, %v2616
  %v2873 = vsel %vm2361, %v1951, %v2617
  %v2874 = vsel %vm2362, %v1954, %v2618
  %v2875 = vsel %vm2363, %v1959, %v2619
  %v2876 = vsel %vm2364, %v1962, %v2620
  %v2877 = vsel %vm2365, %v1967, %v2621
  %v2878 = vsel %vm2366, %v1970, %v2622
  %v2879 = vsel %vm2367, %v1975, %v2623
  %v2880 = vsel %vm2368, %v1978, %v2624
  %v2881 = vsel %vm2369, %v1983, %v2625
  %v2882 = vsel %vm2370, %v1986, %v2626
  %v2883 = vsel %vm2371, %v1991, %v2627
  %v2884 = vsel %vm2372, %v1994, %v2628
  %v2885 = vsel %vm2373, %v1999, %v2629
  %v2886 = vsel %vm2374, %v2002, %v2630
  %v2887 = vsel %vm2375, %v2007, %v2631
  %v2888 = vsel %vm2376, %v2010, %v2632
  %v2889 = vsel %vm2377, %v2015, %v2633
  %v2890 = vsel %vm2378, %v2018, %v2634
  %v2891 = vsel %vm2379, %v2023, %v2635
  %v2892 = vsel %vm2380, %v2026, %v2636
  %v2893 = vsel %vm2381, %v2031, %v2637
  %v2894 = vsel %vm2382, %v2034, %v2638
  %v2895 = vsel %vm2383, %v2039, %v2639
  %v2896 = vsel %vm2384, %v2042, %v2640
  %v2897 = vsel %vm2385, %v2047, %v2641
  %v2898 = vsel %vm2386, %v2050, %v2642
  %v2899 = vsel %vm2387, %v2055, %v2643
  %v2900 = vsel %vm2388, %v2058, %v2644
  %v2901 = vsel %vm2389, %v2063, %v2645
  %v2902 = vsel %vm2390, %v2066, %v2646
  %v2903 = vsel %vm2391, %v2071, %v2647
  %v2904 = vsel %vm2392, %v2074, %v2648
  %v2905 = vsel %vm2393, %v2079, %v2649
  %v2906 = vsel %vm2394, %v2082, %v2650
  %v2907 = vsel %vm2395, %v2087, %v2651
  %v2908 = vsel %vm2396, %v2090, %v2652
  %v2909 = vsel %vm2397, %v2095, %v2653
  %v2910 = vsel %vm2398, %v2098, %v2654
  %v2911 = vsel %vm2399, %v2103, %v2655
  %v2912 = vsel %vm2400, %v2106, %v2656
  %v2913 = vsel %vm2401, %v2111, %v2657
  %v2914 = vsel %vm2402, %v2114, %v2658
  %v2915 = vsel %vm2403, %v2119, %v2659
  %v2916 = vsel %vm2404, %v2122, %v2660
  %v2917 = vsel %vm2405, %v2127, %v2661
  %v2918 = vsel %vm2406, %v2130, %v2662
  %v2919 = vsel %vm2407, %v2135, %v2663
  %v2920 = vsel %vm2408, %v2138, %v2664
  %v2921 = vsel %vm2409, %v2143, %v2665
  %v2922 = vsel %vm2410, %v2146, %v2666
  %v2923 = vsel %vm2411, %v2151, %v2667
  %v2924 = vsel %vm2412, %v2154, %v2668
  %v2925 = vpack.c.bf16 %v2670, %v2669
  %v2926 = vpack.c.bf16 %v2672, %v2671
  %v2927 = vpack.c.bf16 %v2674, %v2673
  %v2928 = vpack.c.bf16 %v2676, %v2675
  %v2929 = vpack.c.bf16 %v2678, %v2677
  %v2930 = vpack.c.bf16 %v2680, %v2679
  %v2931 = vpack.c.bf16 %v2682, %v2681
  %v2932 = vpack.c.bf16 %v2684, %v2683
  %v2933 = vpack.c.bf16 %v2686, %v2685
  %v2934 = vpack.c.bf16 %v2688, %v2687
  %v2935 = vpack.c.bf16 %v2690, %v2689
  %v2936 = vpack.c.bf16 %v2692, %v2691
  %v2937 = vpack.c.bf16 %v2694, %v2693
  %v2938 = vpack.c.bf16 %v2696, %v2695
  %v2939 = vpack.c.bf16 %v2698, %v2697
  %v2940 = vpack.c.bf16 %v2700, %v2699
  %v2941 = vpack.c.bf16 %v2702, %v2701
  %v2942 = vpack.c.bf16 %v2704, %v2703
  %v2943 = vpack.c.bf16 %v2706, %v2705
  %v2944 = vpack.c.bf16 %v2708, %v2707
  %v2945 = vpack.c.bf16 %v2710, %v2709
  %v2946 = vpack.c.bf16 %v2712, %v2711
  %v2947 = vpack.c.bf16 %v2714, %v2713
  %v2948 = vpack.c.bf16 %v2716, %v2715
  %v2949 = vpack.c.bf16 %v2718, %v2717
  %v2950 = vpack.c.bf16 %v2720, %v2719
  %v2951 = vpack.c.bf16 %v2722, %v2721
  %v2952 = vpack.c.bf16 %v2724, %v2723
  %v2953 = vpack.c.bf16 %v2726, %v2725
  %v2954 = vpack.c.bf16 %v2728, %v2727
  %v2955 = vpack.c.bf16 %v2730, %v2729
  %v2956 = vpack.c.bf16 %v2732, %v2731
  %v2957 = vpack.c.bf16 %v2734, %v2733
  %v2958 = vpack.c.bf16 %v2736, %v2735
  %v2959 = vpack.c.bf16 %v2738, %v2737
  %v2960 = vpack.c.bf16 %v2740, %v2739
  %v2961 = vpack.c.bf16 %v2742, %v2741
  %v2962 = vpack.c.bf16 %v2744, %v2743
  %v2963 = vpack.c.bf16 %v2746, %v2745
  %v2964 = vpack.c.bf16 %v2748, %v2747
  %v2965 = vpack.c.bf16 %v2750, %v2749
  %v2966 = vpack.c.bf16 %v2752, %v2751
  %v2967 = vpack.c.bf16 %v2754, %v2753
  %v2968 = vpack.c.bf16 %v2756, %v2755
  %v2969 = vpack.c.bf16 %v2758, %v2757
  %v2970 = vpack.c.bf16 %v2760, %v2759
  %v2971 = vpack.c.bf16 %v2762, %v2761
  %v2972 = vpack.c.bf16 %v2764, %v2763
  %v2973 = vpack.c.bf16 %v2766, %v2765
  %v2974 = vpack.c.bf16 %v2768, %v2767
  %v2975 = vpack.c.bf16 %v2770, %v2769
  %v2976 = vpack.c.bf16 %v2772, %v2771
  %v2977 = vpack.c.bf16 %v2774, %v2773
  %v2978 = vpack.c.bf16 %v2776, %v2775
  %v2979 = vpack.c.bf16 %v2778, %v2777
  %v2980 = vpack.c.bf16 %v2780, %v2779
  %v2981 = vpack.c.bf16 %v2782, %v2781
  %v2982 = vpack.c.bf16 %v2784, %v2783
  %v2983 = vpack.c.bf16 %v2786, %v2785
  %v2984 = vpack.c.bf16 %v2788, %v2787
  %v2985 = vpack.c.bf16 %v2790, %v2789
  %v2986 = vpack.c.bf16 %v2792, %v2791
  %v2987 = vpack.c.bf16 %v2794, %v2793
  %v2988 = vpack.c.bf16 %v2796, %v2795
  %v2989 = vpack.c.bf16 %v2798, %v2797
  %v2990 = vpack.c.bf16 %v2800, %v2799
  %v2991 = vpack.c.bf16 %v2802, %v2801
  %v2992 = vpack.c.bf16 %v2804, %v2803
  %v2993 = vpack.c.bf16 %v2806, %v2805
  %v2994 = vpack.c.bf16 %v2808, %v2807
  %v2995 = vpack.c.bf16 %v2810, %v2809
  %v2996 = vpack.c.bf16 %v2812, %v2811
  %v2997 = vpack.c.bf16 %v2814, %v2813
  %v2998 = vpack.c.bf16 %v2816, %v2815
  %v2999 = vpack.c.bf16 %v2818, %v2817
  %v3000 = vpack.c.bf16 %v2820, %v2819
  %v3001 = vpack.c.bf16 %v2822, %v2821
  %v3002 = vpack.c.bf16 %v2824, %v2823
  %v3003 = vpack.c.bf16 %v2826, %v2825
  %v3004 = vpack.c.bf16 %v2828, %v2827
  %v3005 = vpack.c.bf16 %v2830, %v2829
  %v3006 = vpack.c.bf16 %v2832, %v2831
  %v3007 = vpack.c.bf16 %v2834, %v2833
  %v3008 = vpack.c.bf16 %v2836, %v2835
  %v3009 = vpack.c.bf16 %v2838, %v2837
  %v3010 = vpack.c.bf16 %v2840, %v2839
  %v3011 = vpack.c.bf16 %v2842, %v2841
  %v3012 = vpack.c.bf16 %v2844, %v2843
  %v3013 = vpack.c.bf16 %v2846, %v2845
  %v3014 = vpack.c.bf16 %v2848, %v2847
  %v3015 = vpack.c.bf16 %v2850, %v2849
  %v3016 = vpack.c.bf16 %v2852, %v2851
  %v3017 = vpack.c.bf16 %v2854, %v2853
  %v3018 = vpack.c.bf16 %v2856, %v2855
  %v3019 = vpack.c.bf16 %v2858, %v2857
  %v3020 = vpack.c.bf16 %v2860, %v2859
  %v3021 = vpack.c.bf16 %v2862, %v2861
  %v3022 = vpack.c.bf16 %v2864, %v2863
  %v3023 = vpack.c.bf16 %v2866, %v2865
  %v3024 = vpack.c.bf16 %v2868, %v2867
  %v3025 = vpack.c.bf16 %v2870, %v2869
  %v3026 = vpack.c.bf16 %v2872, %v2871
  %v3027 = vpack.c.bf16 %v2874, %v2873
  %v3028 = vpack.c.bf16 %v2876, %v2875
  %v3029 = vpack.c.bf16 %v2878, %v2877
  %v3030 = vpack.c.bf16 %v2880, %v2879
  %v3031 = vpack.c.bf16 %v2882, %v2881
  %v3032 = vpack.c.bf16 %v2884, %v2883
  %v3033 = vpack.c.bf16 %v2886, %v2885
  %v3034 = vpack.c.bf16 %v2888, %v2887
  %v3035 = vpack.c.bf16 %v2890, %v2889
  %v3036 = vpack.c.bf16 %v2892, %v2891
  %v3037 = vpack.c.bf16 %v2894, %v2893
  %v3038 = vpack.c.bf16 %v2896, %v2895
  %v3039 = vpack.c.bf16 %v2898, %v2897
  %v3040 = vpack.c.bf16 %v2900, %v2899
  %v3041 = vpack.c.bf16 %v2902, %v2901
  %v3042 = vpack.c.bf16 %v2904, %v2903
  %v3043 = vpack.c.bf16 %v2906, %v2905
  %v3044 = vpack.c.bf16 %v2908, %v2907
  %v3045 = vpack.c.bf16 %v2910, %v2909
  %v3046 = vpack.c.bf16 %v2912, %v2911
  %v3047 = vpack.c.bf16 %v2914, %v2913
  %v3048 = vpack.c.bf16 %v2916, %v2915
  %v3049 = vpack.c.bf16 %v2918, %v2917
  %v3050 = vpack.c.bf16 %v2920, %v2919
  %v3051 = vpack.c.bf16 %v2922, %v2921
  %v3052 = vpack.c.bf16 %v2924, %v2923
  %v3181 = vunpack.c.l.b16 %v2925
  %v3182 = vunpack.c.h.b16 %v2925
  %v3183 = vunpack.c.l.b16 %v2926
  %v3184 = vunpack.c.h.b16 %v2926
  %v3185 = vunpack.c.l.b16 %v2927
  %v3186 = vunpack.c.h.b16 %v2927
  %v3187 = vunpack.c.l.b16 %v2928
  %v3188 = vunpack.c.h.b16 %v2928
  %v3189 = vunpack.c.l.b16 %v2929
  %v3190 = vunpack.c.h.b16 %v2929
  %v3191 = vunpack.c.l.b16 %v2930
  %v3192 = vunpack.c.h.b16 %v2930
  %v3193 = vunpack.c.l.b16 %v2931
  %v3194 = vunpack.c.h.b16 %v2931
  %v3195 = vunpack.c.l.b16 %v2932
  %v3196 = vunpack.c.h.b16 %v2932
  %v3197 = vunpack.c.l.b16 %v2933
  %v3198 = vunpack.c.h.b16 %v2933
  %v3199 = vunpack.c.l.b16 %v2934
  %v3200 = vunpack.c.h.b16 %v2934
  %v3201 = vunpack.c.l.b16 %v2935
  %v3202 = vunpack.c.h.b16 %v2935
  %v3203 = vunpack.c.l.b16 %v2936
  %v3204 = vunpack.c.h.b16 %v2936
  %v3205 = vunpack.c.l.b16 %v2937
  %v3206 = vunpack.c.h.b16 %v2937
  %v3207 = vunpack.c.l.b16 %v2938
  %v3208 = vunpack.c.h.b16 %v2938
  %v3209 = vunpack.c.l.b16 %v2939
  %v3210 = vunpack.c.h.b16 %v2939
  %v3211 = vunpack.c.l.b16 %v2940
  %v3212 = vunpack.c.h.b16 %v2940
  %v3213 = vunpack.c.l.b16 %v2941
  %v3214 = vunpack.c.h.b16 %v2941
  %v3215 = vunpack.c.l.b16 %v2942
  %v3216 = vunpack.c.h.b16 %v2942
  %v3217 = vunpack.c.l.b16 %v2943
  %v3218 = vunpack.c.h.b16 %v2943
  %v3219 = vunpack.c.l.b16 %v2944
  %v3220 = vunpack.c.h.b16 %v2944
  %v3221 = vunpack.c.l.b16 %v2945
  %v3222 = vunpack.c.h.b16 %v2945
  %v3223 = vunpack.c.l.b16 %v2946
  %v3224 = vunpack.c.h.b16 %v2946
  %v3225 = vunpack.c.l.b16 %v2947
  %v3226 = vunpack.c.h.b16 %v2947
  %v3227 = vunpack.c.l.b16 %v2948
  %v3228 = vunpack.c.h.b16 %v2948
  %v3229 = vunpack.c.l.b16 %v2949
  %v3230 = vunpack.c.h.b16 %v2949
  %v3231 = vunpack.c.l.b16 %v2950
  %v3232 = vunpack.c.h.b16 %v2950
  %v3233 = vunpack.c.l.b16 %v2951
  %v3234 = vunpack.c.h.b16 %v2951
  %v3235 = vunpack.c.l.b16 %v2952
  %v3236 = vunpack.c.h.b16 %v2952
  %v3237 = vunpack.c.l.b16 %v2953
  %v3238 = vunpack.c.h.b16 %v2953
  %v3239 = vunpack.c.l.b16 %v2954
  %v3240 = vunpack.c.h.b16 %v2954
  %v3241 = vunpack.c.l.b16 %v2955
  %v3242 = vunpack.c.h.b16 %v2955
  %v3243 = vunpack.c.l.b16 %v2956
  %v3244 = vunpack.c.h.b16 %v2956
  %v3245 = vunpack.c.l.b16 %v2957
  %v3246 = vunpack.c.h.b16 %v2957
  %v3247 = vunpack.c.l.b16 %v2958
  %v3248 = vunpack.c.h.b16 %v2958
  %v3249 = vunpack.c.l.b16 %v2959
  %v3250 = vunpack.c.h.b16 %v2959
  %v3251 = vunpack.c.l.b16 %v2960
  %v3252 = vunpack.c.h.b16 %v2960
  %v3253 = vunpack.c.l.b16 %v2961
  %v3254 = vunpack.c.h.b16 %v2961
  %v3255 = vunpack.c.l.b16 %v2962
  %v3256 = vunpack.c.h.b16 %v2962
  %v3257 = vunpack.c.l.b16 %v2963
  %v3258 = vunpack.c.h.b16 %v2963
  %v3259 = vunpack.c.l.b16 %v2964
  %v3260 = vunpack.c.h.b16 %v2964
  %v3261 = vunpack.c.l.b16 %v2965
  %v3262 = vunpack.c.h.b16 %v2965
  %v3263 = vunpack.c.l.b16 %v2966
  %v3264 = vunpack.c.h.b16 %v2966
  %v3265 = vunpack.c.l.b16 %v2967
  %v3266 = vunpack.c.h.b16 %v2967
  %v3267 = vunpack.c.l.b16 %v2968
  %v3268 = vunpack.c.h.b16 %v2968
  %v3269 = vunpack.c.l.b16 %v2969
  %v3270 = vunpack.c.h.b16 %v2969
  %v3271 = vunpack.c.l.b16 %v2970
  %v3272 = vunpack.c.h.b16 %v2970
  %v3273 = vunpack.c.l.b16 %v2971
  %v3274 = vunpack.c.h.b16 %v2971
  %v3275 = vunpack.c.l.b16 %v2972
  %v3276 = vunpack.c.h.b16 %v2972
  %v3277 = vunpack.c.l.b16 %v2973
  %v3278 = vunpack.c.h.b16 %v2973
  %v3279 = vunpack.c.l.b16 %v2974
  %v3280 = vunpack.c.h.b16 %v2974
  %v3281 = vunpack.c.l.b16 %v2975
  %v3282 = vunpack.c.h.b16 %v2975
  %v3283 = vunpack.c.l.b16 %v2976
  %v3284 = vunpack.c.h.b16 %v2976
  %v3285 = vunpack.c.l.b16 %v2977
  %v3286 = vunpack.c.h.b16 %v2977
  %v3287 = vunpack.c.l.b16 %v2978
  %v3288 = vunpack.c.h.b16 %v2978
  %v3289 = vunpack.c.l.b16 %v2979
  %v3290 = vunpack.c.h.b16 %v2979
  %v3291 = vunpack.c.l.b16 %v2980
  %v3292 = vunpack.c.h.b16 %v2980
  %v3293 = vunpack.c.l.b16 %v2981
  %v3294 = vunpack.c.h.b16 %v2981
  %v3295 = vunpack.c.l.b16 %v2982
  %v3296 = vunpack.c.h.b16 %v2982
  %v3297 = vunpack.c.l.b16 %v2983
  %v3298 = vunpack.c.h.b16 %v2983
  %v3299 = vunpack.c.l.b16 %v2984
  %v3300 = vunpack.c.h.b16 %v2984
  %v3301 = vunpack.c.l.b16 %v2985
  %v3302 = vunpack.c.h.b16 %v2985
  %v3303 = vunpack.c.l.b16 %v2986
  %v3304 = vunpack.c.h.b16 %v2986
  %v3305 = vunpack.c.l.b16 %v2987
  %v3306 = vunpack.c.h.b16 %v2987
  %v3307 = vunpack.c.l.b16 %v2988
  %v3308 = vunpack.c.h.b16 %v2988
  %v3309 = vunpack.c.l.b16 %v2989
  %v3310 = vunpack.c.h.b16 %v2989
  %v3311 = vunpack.c.l.b16 %v2990
  %v3312 = vunpack.c.h.b16 %v2990
  %v3313 = vunpack.c.l.b16 %v2991
  %v3314 = vunpack.c.h.b16 %v2991
  %v3315 = vunpack.c.l.b16 %v2992
  %v3316 = vunpack.c.h.b16 %v2992
  %v3317 = vunpack.c.l.b16 %v2993
  %v3318 = vunpack.c.h.b16 %v2993
  %v3319 = vunpack.c.l.b16 %v2994
  %v3320 = vunpack.c.h.b16 %v2994
  %v3321 = vunpack.c.l.b16 %v2995
  %v3322 = vunpack.c.h.b16 %v2995
  %v3323 = vunpack.c.l.b16 %v2996
  %v3324 = vunpack.c.h.b16 %v2996
  %v3325 = vunpack.c.l.b16 %v2997
  %v3326 = vunpack.c.h.b16 %v2997
  %v3327 = vunpack.c.l.b16 %v2998
  %v3328 = vunpack.c.h.b16 %v2998
  %v3329 = vunpack.c.l.b16 %v2999
  %v3330 = vunpack.c.h.b16 %v2999
  %v3331 = vunpack.c.l.b16 %v3000
  %v3332 = vunpack.c.h.b16 %v3000
  %v3333 = vunpack.c.l.b16 %v3001
  %v3334 = vunpack.c.h.b16 %v3001
  %v3335 = vunpack.c.l.b16 %v3002
  %v3336 = vunpack.c.h.b16 %v3002
  %v3337 = vunpack.c.l.b16 %v3003
  %v3338 = vunpack.c.h.b16 %v3003
  %v3339 = vunpack.c.l.b16 %v3004
  %v3340 = vunpack.c.h.b16 %v3004
  %v3341 = vunpack.c.l.b16 %v3005
  %v3342 = vunpack.c.h.b16 %v3005
  %v3343 = vunpack.c.l.b16 %v3006
  %v3344 = vunpack.c.h.b16 %v3006
  %v3345 = vunpack.c.l.b16 %v3007
  %v3346 = vunpack.c.h.b16 %v3007
  %v3347 = vunpack.c.l.b16 %v3008
  %v3348 = vunpack.c.h.b16 %v3008
  %v3349 = vunpack.c.l.b16 %v3009
  %v3350 = vunpack.c.h.b16 %v3009
  %v3351 = vunpack.c.l.b16 %v3010
  %v3352 = vunpack.c.h.b16 %v3010
  %v3353 = vunpack.c.l.b16 %v3011
  %v3354 = vunpack.c.h.b16 %v3011
  %v3355 = vunpack.c.l.b16 %v3012
  %v3356 = vunpack.c.h.b16 %v3012
  %v3357 = vunpack.c.l.b16 %v3013
  %v3358 = vunpack.c.h.b16 %v3013
  %v3359 = vunpack.c.l.b16 %v3014
  %v3360 = vunpack.c.h.b16 %v3014
  %v3361 = vunpack.c.l.b16 %v3015
  %v3362 = vunpack.c.h.b16 %v3015
  %v3363 = vunpack.c.l.b16 %v3016
  %v3364 = vunpack.c.h.b16 %v3016
  %v3365 = vunpack.c.l.b16 %v3017
  %v3366 = vunpack.c.h.b16 %v3017
  %v3367 = vunpack.c.l.b16 %v3018
  %v3368 = vunpack.c.h.b16 %v3018
  %v3369 = vunpack.c.l.b16 %v3019
  %v3370 = vunpack.c.h.b16 %v3019
  %v3371 = vunpack.c.l.b16 %v3020
  %v3372 = vunpack.c.h.b16 %v3020
  %v3373 = vunpack.c.l.b16 %v3021
  %v3374 = vunpack.c.h.b16 %v3021
  %v3375 = vunpack.c.l.b16 %v3022
  %v3376 = vunpack.c.h.b16 %v3022
  %v3377 = vunpack.c.l.b16 %v3023
  %v3378 = vunpack.c.h.b16 %v3023
  %v3379 = vunpack.c.l.b16 %v3024
  %v3380 = vunpack.c.h.b16 %v3024
  %v3381 = vunpack.c.l.b16 %v3025
  %v3382 = vunpack.c.h.b16 %v3025
  %v3383 = vunpack.c.l.b16 %v3026
  %v3384 = vunpack.c.h.b16 %v3026
  %v3385 = vunpack.c.l.b16 %v3027
  %v3386 = vunpack.c.h.b16 %v3027
  %v3387 = vunpack.c.l.b16 %v3028
  %v3388 = vunpack.c.h.b16 %v3028
  %v3389 = vunpack.c.l.b16 %v3029
  %v3390 = vunpack.c.h.b16 %v3029
  %v3391 = vunpack.c.l.b16 %v3030
  %v3392 = vunpack.c.h.b16 %v3030
  %v3393 = vunpack.c.l.b16 %v3031
  %v3394 = vunpack.c.h.b16 %v3031
  %v3395 = vunpack.c.l.b16 %v3032
  %v3396 = vunpack.c.h.b16 %v3032
  %v3397 = vunpack.c.l.b16 %v3033
  %v3398 = vunpack.c.h.b16 %v3033
  %v3399 = vunpack.c.l.b16 %v3034
  %v3400 = vunpack.c.h.b16 %v3034
  %v3401 = vunpack.c.l.b16 %v3035
  %v3402 = vunpack.c.h.b16 %v3035
  %v3403 = vunpack.c.l.b16 %v3036
  %v3404 = vunpack.c.h.b16 %v3036
  %v3405 = vunpack.c.l.b16 %v3037
  %v3406 = vunpack.c.h.b16 %v3037
  %v3407 = vunpack.c.l.b16 %v3038
  %v3408 = vunpack.c.h.b16 %v3038
  %v3409 = vunpack.c.l.b16 %v3039
  %v3410 = vunpack.c.h.b16 %v3039
  %v3411 = vunpack.c.l.b16 %v3040
  %v3412 = vunpack.c.h.b16 %v3040
  %v3413 = vunpack.c.l.b16 %v3041
  %v3414 = vunpack.c.h.b16 %v3041
  %v3415 = vunpack.c.l.b16 %v3042
  %v3416 = vunpack.c.h.b16 %v3042
  %v3417 = vunpack.c.l.b16 %v3043
  %v3418 = vunpack.c.h.b16 %v3043
  %v3419 = vunpack.c.l.b16 %v3044
  %v3420 = vunpack.c.h.b16 %v3044
  %v3421 = vunpack.c.l.b16 %v3045
  %v3422 = vunpack.c.h.b16 %v3045
  %v3423 = vunpack.c.l.b16 %v3046
  %v3424 = vunpack.c.h.b16 %v3046
  %v3425 = vunpack.c.l.b16 %v3047
  %v3426 = vunpack.c.h.b16 %v3047
  %v3427 = vunpack.c.l.b16 %v3048
  %v3428 = vunpack.c.h.b16 %v3048
  %v3429 = vunpack.c.l.b16 %v3049
  %v3430 = vunpack.c.h.b16 %v3049
  %v3431 = vunpack.c.l.b16 %v3050
  %v3432 = vunpack.c.h.b16 %v3050
  %v3433 = vunpack.c.l.b16 %v3051
  %v3434 = vunpack.c.h.b16 %v3051
  %v3435 = vunpack.c.l.b16 %v3052
  %v3436 = vunpack.c.h.b16 %v3052
  %v3437 = vpack.c.b16 %v3181, %v3181
  %v3438 = vpack.c.b16 %v3182, %v3182
  %v3439 = vpack.c.b16 %v3183, %v3183
  %v3440 = vpack.c.b16 %v3184, %v3184
  %v3441 = vpack.c.b16 %v3185, %v3185
  %v3442 = vpack.c.b16 %v3186, %v3186
  %v3443 = vpack.c.b16 %v3187, %v3187
  %v3444 = vpack.c.b16 %v3188, %v3188
  %v3445 = vpack.c.b16 %v3189, %v3189
  %v3446 = vpack.c.b16 %v3190, %v3190
  %v3447 = vpack.c.b16 %v3191, %v3191
  %v3448 = vpack.c.b16 %v3192, %v3192
  %v3449 = vpack.c.b16 %v3193, %v3193
  %v3450 = vpack.c.b16 %v3194, %v3194
  %v3451 = vpack.c.b16 %v3195, %v3195
  %v3452 = vpack.c.b16 %v3196, %v3196
  %v3453 = vpack.c.b16 %v3197, %v3197
  %v3454 = vpack.c.b16 %v3198, %v3198
  %v3455 = vpack.c.b16 %v3199, %v3199
  %v3456 = vpack.c.b16 %v3200, %v3200
  %v3457 = vpack.c.b16 %v3201, %v3201
  %v3458 = vpack.c.b16 %v3202, %v3202
  %v3459 = vpack.c.b16 %v3203, %v3203
  %v3460 = vpack.c.b16 %v3204, %v3204
  %v3461 = vpack.c.b16 %v3205, %v3205
  %v3462 = vpack.c.b16 %v3206, %v3206
  %v3463 = vpack.c.b16 %v3207, %v3207
  %v3464 = vpack.c.b16 %v3208, %v3208
  %v3465 = vpack.c.b16 %v3209, %v3209
  %v3466 = vpack.c.b16 %v3210, %v3210
  %v3467 = vpack.c.b16 %v3211, %v3211
  %v3468 = vpack.c.b16 %v3212, %v3212
  %v3469 = vpack.c.b16 %v3213, %v3213
  %v3470 = vpack.c.b16 %v3214, %v3214
  %v3471 = vpack.c.b16 %v3215, %v3215
  %v3472 = vpack.c.b16 %v3216, %v3216
  %v3473 = vpack.c.b16 %v3217, %v3217
  %v3474 = vpack.c.b16 %v3218, %v3218
  %v3475 = vpack.c.b16 %v3219, %v3219
  %v3476 = vpack.c.b16 %v3220, %v3220
  %v3477 = vpack.c.b16 %v3221, %v3221
  %v3478 = vpack.c.b16 %v3222, %v3222
  %v3479 = vpack.c.b16 %v3223, %v3223
  %v3480 = vpack.c.b16 %v3224, %v3224
  %v3481 = vpack.c.b16 %v3225, %v3225
  %v3482 = vpack.c.b16 %v3226, %v3226
  %v3483 = vpack.c.b16 %v3227, %v3227
  %v3484 = vpack.c.b16 %v3228, %v3228
  %v3485 = vpack.c.b16 %v3229, %v3229
  %v3486 = vpack.c.b16 %v3230, %v3230
  %v3487 = vpack.c.b16 %v3231, %v3231
  %v3488 = vpack.c.b16 %v3232, %v3232
  %v3489 = vpack.c.b16 %v3233, %v3233
  %v3490 = vpack.c.b16 %v3234, %v3234
  %v3491 = vpack.c.b16 %v3235, %v3235
  %v3492 = vpack.c.b16 %v3236, %v3236
  %v3493 = vpack.c.b16 %v3237, %v3237
  %v3494 = vpack.c.b16 %v3238, %v3238
  %v3495 = vpack.c.b16 %v3239, %v3239
  %v3496 = vpack.c.b16 %v3240, %v3240
  %v3497 = vpack.c.b16 %v3241, %v3241
  %v3498 = vpack.c.b16 %v3242, %v3242
  %v3499 = vpack.c.b16 %v3243, %v3243
  %v3500 = vpack.c.b16 %v3244, %v3244
  %v3501 = vpack.c.b16 %v3245, %v3245
  %v3502 = vpack.c.b16 %v3246, %v3246
  %v3503 = vpack.c.b16 %v3247, %v3247
  %v3504 = vpack.c.b16 %v3248, %v3248
  %v3505 = vpack.c.b16 %v3249, %v3249
  %v3506 = vpack.c.b16 %v3250, %v3250
  %v3507 = vpack.c.b16 %v3251, %v3251
  %v3508 = vpack.c.b16 %v3252, %v3252
  %v3509 = vpack.c.b16 %v3253, %v3253
  %v3510 = vpack.c.b16 %v3254, %v3254
  %v3511 = vpack.c.b16 %v3255, %v3255
  %v3512 = vpack.c.b16 %v3256, %v3256
  %v3513 = vpack.c.b16 %v3257, %v3257
  %v3514 = vpack.c.b16 %v3258, %v3258
  %v3515 = vpack.c.b16 %v3259, %v3259
  %v3516 = vpack.c.b16 %v3260, %v3260
  %v3517 = vpack.c.b16 %v3261, %v3261
  %v3518 = vpack.c.b16 %v3262, %v3262
  %v3519 = vpack.c.b16 %v3263, %v3263
  %v3520 = vpack.c.b16 %v3264, %v3264
  %v3521 = vpack.c.b16 %v3265, %v3265
  %v3522 = vpack.c.b16 %v3266, %v3266
  %v3523 = vpack.c.b16 %v3267, %v3267
  %v3524 = vpack.c.b16 %v3268, %v3268
  %v3525 = vpack.c.b16 %v3269, %v3269
  %v3526 = vpack.c.b16 %v3270, %v3270
  %v3527 = vpack.c.b16 %v3271, %v3271
  %v3528 = vpack.c.b16 %v3272, %v3272
  %v3529 = vpack.c.b16 %v3273, %v3273
  %v3530 = vpack.c.b16 %v3274, %v3274
  %v3531 = vpack.c.b16 %v3275, %v3275
  %v3532 = vpack.c.b16 %v3276, %v3276
  %v3533 = vpack.c.b16 %v3277, %v3277
  %v3534 = vpack.c.b16 %v3278, %v3278
  %v3535 = vpack.c.b16 %v3279, %v3279
  %v3536 = vpack.c.b16 %v3280, %v3280
  %v3537 = vpack.c.b16 %v3281, %v3281
  %v3538 = vpack.c.b16 %v3282, %v3282
  %v3539 = vpack.c.b16 %v3283, %v3283
  %v3540 = vpack.c.b16 %v3284, %v3284
  %v3541 = vpack.c.b16 %v3285, %v3285
  %v3542 = vpack.c.b16 %v3286, %v3286
  %v3543 = vpack.c.b16 %v3287, %v3287
  %v3544 = vpack.c.b16 %v3288, %v3288
  %v3545 = vpack.c.b16 %v3289, %v3289
  %v3546 = vpack.c.b16 %v3290, %v3290
  %v3547 = vpack.c.b16 %v3291, %v3291
  %v3548 = vpack.c.b16 %v3292, %v3292
  %v3549 = vpack.c.b16 %v3293, %v3293
  %v3550 = vpack.c.b16 %v3294, %v3294
  %v3551 = vpack.c.b16 %v3295, %v3295
  %v3552 = vpack.c.b16 %v3296, %v3296
  %v3553 = vpack.c.b16 %v3297, %v3297
  %v3554 = vpack.c.b16 %v3298, %v3298
  %v3555 = vpack.c.b16 %v3299, %v3299
  %v3556 = vpack.c.b16 %v3300, %v3300
  %v3557 = vpack.c.b16 %v3301, %v3301
  %v3558 = vpack.c.b16 %v3302, %v3302
  %v3559 = vpack.c.b16 %v3303, %v3303
  %v3560 = vpack.c.b16 %v3304, %v3304
  %v3561 = vpack.c.b16 %v3305, %v3305
  %v3562 = vpack.c.b16 %v3306, %v3306
  %v3563 = vpack.c.b16 %v3307, %v3307
  %v3564 = vpack.c.b16 %v3308, %v3308
  %v3565 = vpack.c.b16 %v3309, %v3309
  %v3566 = vpack.c.b16 %v3310, %v3310
  %v3567 = vpack.c.b16 %v3311, %v3311
  %v3568 = vpack.c.b16 %v3312, %v3312
  %v3569 = vpack.c.b16 %v3313, %v3313
  %v3570 = vpack.c.b16 %v3314, %v3314
  %v3571 = vpack.c.b16 %v3315, %v3315
  %v3572 = vpack.c.b16 %v3316, %v3316
  %v3573 = vpack.c.b16 %v3317, %v3317
  %v3574 = vpack.c.b16 %v3318, %v3318
  %v3575 = vpack.c.b16 %v3319, %v3319
  %v3576 = vpack.c.b16 %v3320, %v3320
  %v3577 = vpack.c.b16 %v3321, %v3321
  %v3578 = vpack.c.b16 %v3322, %v3322
  %v3579 = vpack.c.b16 %v3323, %v3323
  %v3580 = vpack.c.b16 %v3324, %v3324
  %v3581 = vpack.c.b16 %v3325, %v3325
  %v3582 = vpack.c.b16 %v3326, %v3326
  %v3583 = vpack.c.b16 %v3327, %v3327
  %v3584 = vpack.c.b16 %v3328, %v3328
  %v3585 = vpack.c.b16 %v3329, %v3329
  %v3586 = vpack.c.b16 %v3330, %v3330
  %v3587 = vpack.c.b16 %v3331, %v3331
  %v3588 = vpack.c.b16 %v3332, %v3332
  %v3589 = vpack.c.b16 %v3333, %v3333
  %v3590 = vpack.c.b16 %v3334, %v3334
  %v3591 = vpack.c.b16 %v3335, %v3335
  %v3592 = vpack.c.b16 %v3336, %v3336
  %v3593 = vpack.c.b16 %v3337, %v3337
  %v3594 = vpack.c.b16 %v3338, %v3338
  %v3595 = vpack.c.b16 %v3339, %v3339
  %v3596 = vpack.c.b16 %v3340, %v3340
  %v3597 = vpack.c.b16 %v3341, %v3341
  %v3598 = vpack.c.b16 %v3342, %v3342
  %v3599 = vpack.c.b16 %v3343, %v3343
  %v3600 = vpack.c.b16 %v3344, %v3344
  %v3601 = vpack.c.b16 %v3345, %v3345
  %v3602 = vpack.c.b16 %v3346, %v3346
  %v3603 = vpack.c.b16 %v3347, %v3347
  %v3604 = vpack.c.b16 %v3348, %v3348
  %v3605 = vpack.c.b16 %v3349, %v3349
  %v3606 = vpack.c.b16 %v3350, %v3350
  %v3607 = vpack.c.b16 %v3351, %v3351
  %v3608 = vpack.c.b16 %v3352, %v3352
  %v3609 = vpack.c.b16 %v3353, %v3353
  %v3610 = vpack.c.b16 %v3354, %v3354
  %v3611 = vpack.c.b16 %v3355, %v3355
  %v3612 = vpack.c.b16 %v3356, %v3356
  %v3613 = vpack.c.b16 %v3357, %v3357
  %v3614 = vpack.c.b16 %v3358, %v3358
  %v3615 = vpack.c.b16 %v3359, %v3359
  %v3616 = vpack.c.b16 %v3360, %v3360
  %v3617 = vpack.c.b16 %v3361, %v3361
  %v3618 = vpack.c.b16 %v3362, %v3362
  %v3619 = vpack.c.b16 %v3363, %v3363
  %v3620 = vpack.c.b16 %v3364, %v3364
  %v3621 = vpack.c.b16 %v3365, %v3365
  %v3622 = vpack.c.b16 %v3366, %v3366
  %v3623 = vpack.c.b16 %v3367, %v3367
  %v3624 = vpack.c.b16 %v3368, %v3368
  %v3625 = vpack.c.b16 %v3369, %v3369
  %v3626 = vpack.c.b16 %v3370, %v3370
  %v3627 = vpack.c.b16 %v3371, %v3371
  %v3628 = vpack.c.b16 %v3372, %v3372
  %v3629 = vpack.c.b16 %v3373, %v3373
  %v3630 = vpack.c.b16 %v3374, %v3374
  %v3631 = vpack.c.b16 %v3375, %v3375
  %v3632 = vpack.c.b16 %v3376, %v3376
  %v3633 = vpack.c.b16 %v3377, %v3377
  %v3634 = vpack.c.b16 %v3378, %v3378
  %v3635 = vpack.c.b16 %v3379, %v3379
  %v3636 = vpack.c.b16 %v3380, %v3380
  %v3637 = vpack.c.b16 %v3381, %v3381
  %v3638 = vpack.c.b16 %v3382, %v3382
  %v3639 = vpack.c.b16 %v3383, %v3383
  %v3640 = vpack.c.b16 %v3384, %v3384
  %v3641 = vpack.c.b16 %v3385, %v3385
  %v3642 = vpack.c.b16 %v3386, %v3386
  %v3643 = vpack.c.b16 %v3387, %v3387
  %v3644 = vpack.c.b16 %v3388, %v3388
  %v3645 = vpack.c.b16 %v3389, %v3389
  %v3646 = vpack.c.b16 %v3390, %v3390
  %v3647 = vpack.c.b16 %v3391, %v3391
  %v3648 = vpack.c.b16 %v3392, %v3392
  %v3649 = vpack.c.b16 %v3393, %v3393
  %v3650 = vpack.c.b16 %v3394, %v3394
  %v3651 = vpack.c.b16 %v3395, %v3395
  %v3652 = vpack.c.b16 %v3396, %v3396
  %v3653 = vpack.c.b16 %v3397, %v3397
  %v3654 = vpack.c.b16 %v3398, %v3398
  %v3655 = vpack.c.b16 %v3399, %v3399
  %v3656 = vpack.c.b16 %v3400, %v3400
  %v3657 = vpack.c.b16 %v3401, %v3401
  %v3658 = vpack.c.b16 %v3402, %v3402
  %v3659 = vpack.c.b16 %v3403, %v3403
  %v3660 = vpack.c.b16 %v3404, %v3404
  %v3661 = vpack.c.b16 %v3405, %v3405
  %v3662 = vpack.c.b16 %v3406, %v3406
  %v3663 = vpack.c.b16 %v3407, %v3407
  %v3664 = vpack.c.b16 %v3408, %v3408
  %v3665 = vpack.c.b16 %v3409, %v3409
  %v3666 = vpack.c.b16 %v3410, %v3410
  %v3667 = vpack.c.b16 %v3411, %v3411
  %v3668 = vpack.c.b16 %v3412, %v3412
  %v3669 = vpack.c.b16 %v3413, %v3413
  %v3670 = vpack.c.b16 %v3414, %v3414
  %v3671 = vpack.c.b16 %v3415, %v3415
  %v3672 = vpack.c.b16 %v3416, %v3416
  %v3673 = vpack.c.b16 %v3417, %v3417
  %v3674 = vpack.c.b16 %v3418, %v3418
  %v3675 = vpack.c.b16 %v3419, %v3419
  %v3676 = vpack.c.b16 %v3420, %v3420
  %v3677 = vpack.c.b16 %v3421, %v3421
  %v3678 = vpack.c.b16 %v3422, %v3422
  %v3679 = vpack.c.b16 %v3423, %v3423
  %v3680 = vpack.c.b16 %v3424, %v3424
  %v3681 = vpack.c.b16 %v3425, %v3425
  %v3682 = vpack.c.b16 %v3426, %v3426
  %v3683 = vpack.c.b16 %v3427, %v3427
  %v3684 = vpack.c.b16 %v3428, %v3428
  %v3685 = vpack.c.b16 %v3429, %v3429
  %v3686 = vpack.c.b16 %v3430, %v3430
  %v3687 = vpack.c.b16 %v3431, %v3431
  %v3688 = vpack.c.b16 %v3432, %v3432
  %v3689 = vpack.c.b16 %v3433, %v3433
  %v3690 = vpack.c.b16 %v3434, %v3434
  %v3691 = vpack.c.b16 %v3435, %v3435
  %v3692 = vpack.c.b16 %v3436, %v3436
  %3949 = vst [vmem:[%s2] sm:$0xf] %v3437
  %3950 = vst [vmem:[%s2 + $0x4] sm:$0xf] %v3438
  %3951 = vst [vmem:[%s2 + $0x8] sm:$0xf] %v3439
  %3952 = vst [vmem:[%s2 + $0xc] sm:$0xf] %v3440
  %3953 = vst [vmem:[%s2 + $0x10] sm:$0xf] %v3441
  %3954 = vst [vmem:[%s2 + $0x14] sm:$0xf] %v3442
  %3955 = vst [vmem:[%s2 + $0x18] sm:$0xf] %v3443
  %3956 = vst [vmem:[%s2 + $0x1c] sm:$0xf] %v3444
  %3957 = vst [vmem:[%s2 + $0x20] sm:$0xf] %v3445
  %3958 = vst [vmem:[%s2 + $0x24] sm:$0xf] %v3446
  %3959 = vst [vmem:[%s2 + $0x28] sm:$0xf] %v3447
  %3960 = vst [vmem:[%s2 + $0x2c] sm:$0xf] %v3448
  %3961 = vst [vmem:[%s2 + $0x30] sm:$0xf] %v3449
  %3962 = vst [vmem:[%s2 + $0x34] sm:$0xf] %v3450
  %3963 = vst [vmem:[%s2 + $0x38] sm:$0xf] %v3451
  %3964 = vst [vmem:[%s2 + $0x3c] sm:$0xf] %v3452
  %3965 = vst [vmem:[%s2 + $0x40] sm:$0xf] %v3453
  %3966 = vst [vmem:[%s2 + $0x44] sm:$0xf] %v3454
  %3967 = vst [vmem:[%s2 + $0x48] sm:$0xf] %v3455
  %3968 = vst [vmem:[%s2 + $0x4c] sm:$0xf] %v3456
  %3969 = vst [vmem:[%s2 + $0x50] sm:$0xf] %v3457
  %3970 = vst [vmem:[%s2 + $0x54] sm:$0xf] %v3458
  %3971 = vst [vmem:[%s2 + $0x58] sm:$0xf] %v3459
  %3972 = vst [vmem:[%s2 + $0x5c] sm:$0xf] %v3460
  %3973 = vst [vmem:[%s2 + $0x60] sm:$0xf] %v3461
  %3974 = vst [vmem:[%s2 + $0x64] sm:$0xf] %v3462
  %3975 = vst [vmem:[%s2 + $0x68] sm:$0xf] %v3463
  %3976 = vst [vmem:[%s2 + $0x6c] sm:$0xf] %v3464
  %3977 = vst [vmem:[%s2 + $0x70] sm:$0xf] %v3465
  %3978 = vst [vmem:[%s2 + $0x74] sm:$0xf] %v3466
  %3979 = vst [vmem:[%s2 + $0x78] sm:$0xf] %v3467
  %3980 = vst [vmem:[%s2 + $0x7c] sm:$0xf] %v3468
  %3981 = vst [vmem:[%s2 + $0x80] sm:$0xf] %v3469
  %3982 = vst [vmem:[%s2 + $0x84] sm:$0xf] %v3470
  %3983 = vst [vmem:[%s2 + $0x88] sm:$0xf] %v3471
  %3984 = vst [vmem:[%s2 + $0x8c] sm:$0xf] %v3472
  %3985 = vst [vmem:[%s2 + $0x90] sm:$0xf] %v3473
  %3986 = vst [vmem:[%s2 + $0x94] sm:$0xf] %v3474
  %3987 = vst [vmem:[%s2 + $0x98] sm:$0xf] %v3475
  %3988 = vst [vmem:[%s2 + $0x9c] sm:$0xf] %v3476
  %3989 = vst [vmem:[%s2 + $0xa0] sm:$0xf] %v3477
  %3990 = vst [vmem:[%s2 + $0xa4] sm:$0xf] %v3478
  %3991 = vst [vmem:[%s2 + $0xa8] sm:$0xf] %v3479
  %3992 = vst [vmem:[%s2 + $0xac] sm:$0xf] %v3480
  %3993 = vst [vmem:[%s2 + $0xb0] sm:$0xf] %v3481
  %3994 = vst [vmem:[%s2 + $0xb4] sm:$0xf] %v3482
  %3995 = vst [vmem:[%s2 + $0xb8] sm:$0xf] %v3483
  %3996 = vst [vmem:[%s2 + $0xbc] sm:$0xf] %v3484
  %3997 = vst [vmem:[%s2 + $0xc0] sm:$0xf] %v3485
  %3998 = vst [vmem:[%s2 + $0xc4] sm:$0xf] %v3486
  %3999 = vst [vmem:[%s2 + $0xc8] sm:$0xf] %v3487
  %4000 = vst [vmem:[%s2 + $0xcc] sm:$0xf] %v3488
  %4001 = vst [vmem:[%s2 + $0xd0] sm:$0xf] %v3489
  %4002 = vst [vmem:[%s2 + $0xd4] sm:$0xf] %v3490
  %4003 = vst [vmem:[%s2 + $0xd8] sm:$0xf] %v3491
  %4004 = vst [vmem:[%s2 + $0xdc] sm:$0xf] %v3492
  %4005 = vst [vmem:[%s2 + $0xe0] sm:$0xf] %v3493
  %4006 = vst [vmem:[%s2 + $0xe4] sm:$0xf] %v3494
  %4007 = vst [vmem:[%s2 + $0xe8] sm:$0xf] %v3495
  %4008 = vst [vmem:[%s2 + $0xec] sm:$0xf] %v3496
  %4009 = vst [vmem:[%s2 + $0xf0] sm:$0xf] %v3497
  %4010 = vst [vmem:[%s2 + $0xf4] sm:$0xf] %v3498
  %4011 = vst [vmem:[%s2 + $0xf8] sm:$0xf] %v3499
  %4012 = vst [vmem:[%s2 + $0xfc] sm:$0xf] %v3500
  %4013 = vst [vmem:[%s2 + $0x100] sm:$0xf] %v3501
  %4014 = vst [vmem:[%s2 + $0x104] sm:$0xf] %v3502
  %4015 = vst [vmem:[%s2 + $0x108] sm:$0xf] %v3503
  %4016 = vst [vmem:[%s2 + $0x10c] sm:$0xf] %v3504
  %4017 = vst [vmem:[%s2 + $0x110] sm:$0xf] %v3505
  %4018 = vst [vmem:[%s2 + $0x114] sm:$0xf] %v3506
  %4019 = vst [vmem:[%s2 + $0x118] sm:$0xf] %v3507
  %4020 = vst [vmem:[%s2 + $0x11c] sm:$0xf] %v3508
  %4021 = vst [vmem:[%s2 + $0x120] sm:$0xf] %v3509
  %4022 = vst [vmem:[%s2 + $0x124] sm:$0xf] %v3510
  %4023 = vst [vmem:[%s2 + $0x128] sm:$0xf] %v3511
  %4024 = vst [vmem:[%s2 + $0x12c] sm:$0xf] %v3512
  %4025 = vst [vmem:[%s2 + $0x130] sm:$0xf] %v3513
  %4026 = vst [vmem:[%s2 + $0x134] sm:$0xf] %v3514
  %4027 = vst [vmem:[%s2 + $0x138] sm:$0xf] %v3515
  %4028 = vst [vmem:[%s2 + $0x13c] sm:$0xf] %v3516
  %4029 = vst [vmem:[%s2 + $0x140] sm:$0xf] %v3517
  %4030 = vst [vmem:[%s2 + $0x144] sm:$0xf] %v3518
  %4031 = vst [vmem:[%s2 + $0x148] sm:$0xf] %v3519
  %4032 = vst [vmem:[%s2 + $0x14c] sm:$0xf] %v3520
  %4033 = vst [vmem:[%s2 + $0x150] sm:$0xf] %v3521
  %4034 = vst [vmem:[%s2 + $0x154] sm:$0xf] %v3522
  %4035 = vst [vmem:[%s2 + $0x158] sm:$0xf] %v3523
  %4036 = vst [vmem:[%s2 + $0x15c] sm:$0xf] %v3524
  %4037 = vst [vmem:[%s2 + $0x160] sm:$0xf] %v3525
  %4038 = vst [vmem:[%s2 + $0x164] sm:$0xf] %v3526
  %4039 = vst [vmem:[%s2 + $0x168] sm:$0xf] %v3527
  %4040 = vst [vmem:[%s2 + $0x16c] sm:$0xf] %v3528
  %4041 = vst [vmem:[%s2 + $0x170] sm:$0xf] %v3529
  %4042 = vst [vmem:[%s2 + $0x174] sm:$0xf] %v3530
  %4043 = vst [vmem:[%s2 + $0x178] sm:$0xf] %v3531
  %4044 = vst [vmem:[%s2 + $0x17c] sm:$0xf] %v3532
  %4045 = vst [vmem:[%s2 + $0x180] sm:$0xf] %v3533
  %4046 = vst [vmem:[%s2 + $0x184] sm:$0xf] %v3534
  %4047 = vst [vmem:[%s2 + $0x188] sm:$0xf] %v3535
  %4048 = vst [vmem:[%s2 + $0x18c] sm:$0xf] %v3536
  %4049 = vst [vmem:[%s2 + $0x190] sm:$0xf] %v3537
  %4050 = vst [vmem:[%s2 + $0x194] sm:$0xf] %v3538
  %4051 = vst [vmem:[%s2 + $0x198] sm:$0xf] %v3539
  %4052 = vst [vmem:[%s2 + $0x19c] sm:$0xf] %v3540
  %4053 = vst [vmem:[%s2 + $0x1a0] sm:$0xf] %v3541
  %4054 = vst [vmem:[%s2 + $0x1a4] sm:$0xf] %v3542
  %4055 = vst [vmem:[%s2 + $0x1a8] sm:$0xf] %v3543
  %4056 = vst [vmem:[%s2 + $0x1ac] sm:$0xf] %v3544
  %4057 = vst [vmem:[%s2 + $0x1b0] sm:$0xf] %v3545
  %4058 = vst [vmem:[%s2 + $0x1b4] sm:$0xf] %v3546
  %4059 = vst [vmem:[%s2 + $0x1b8] sm:$0xf] %v3547
  %4060 = vst [vmem:[%s2 + $0x1bc] sm:$0xf] %v3548
  %4061 = vst [vmem:[%s2 + $0x1c0] sm:$0xf] %v3549
  %4062 = vst [vmem:[%s2 + $0x1c4] sm:$0xf] %v3550
  %4063 = vst [vmem:[%s2 + $0x1c8] sm:$0xf] %v3551
  %4064 = vst [vmem:[%s2 + $0x1cc] sm:$0xf] %v3552
  %4065 = vst [vmem:[%s2 + $0x1d0] sm:$0xf] %v3553
  %4066 = vst [vmem:[%s2 + $0x1d4] sm:$0xf] %v3554
  %4067 = vst [vmem:[%s2 + $0x1d8] sm:$0xf] %v3555
  %4068 = vst [vmem:[%s2 + $0x1dc] sm:$0xf] %v3556
  %4069 = vst [vmem:[%s2 + $0x1e0] sm:$0xf] %v3557
  %4070 = vst [vmem:[%s2 + $0x1e4] sm:$0xf] %v3558
  %4071 = vst [vmem:[%s2 + $0x1e8] sm:$0xf] %v3559
  %4072 = vst [vmem:[%s2 + $0x1ec] sm:$0xf] %v3560
  %4073 = vst [vmem:[%s2 + $0x1f0] sm:$0xf] %v3561
  %4074 = vst [vmem:[%s2 + $0x1f4] sm:$0xf] %v3562
  %4075 = vst [vmem:[%s2 + $0x1f8] sm:$0xf] %v3563
  %4076 = vst [vmem:[%s2 + $0x1fc] sm:$0xf] %v3564
  %4077 = vst [vmem:[%s2 + $0x200] sm:$0xf] %v3565
  %4078 = vst [vmem:[%s2 + $0x204] sm:$0xf] %v3566
  %4079 = vst [vmem:[%s2 + $0x208] sm:$0xf] %v3567
  %4080 = vst [vmem:[%s2 + $0x20c] sm:$0xf] %v3568
  %4081 = vst [vmem:[%s2 + $0x210] sm:$0xf] %v3569
  %4082 = vst [vmem:[%s2 + $0x214] sm:$0xf] %v3570
  %4083 = vst [vmem:[%s2 + $0x218] sm:$0xf] %v3571
  %4084 = vst [vmem:[%s2 + $0x21c] sm:$0xf] %v3572
  %4085 = vst [vmem:[%s2 + $0x220] sm:$0xf] %v3573
  %4086 = vst [vmem:[%s2 + $0x224] sm:$0xf] %v3574
  %4087 = vst [vmem:[%s2 + $0x228] sm:$0xf] %v3575
  %4088 = vst [vmem:[%s2 + $0x22c] sm:$0xf] %v3576
  %4089 = vst [vmem:[%s2 + $0x230] sm:$0xf] %v3577
  %4090 = vst [vmem:[%s2 + $0x234] sm:$0xf] %v3578
  %4091 = vst [vmem:[%s2 + $0x238] sm:$0xf] %v3579
  %4092 = vst [vmem:[%s2 + $0x23c] sm:$0xf] %v3580
  %4093 = vst [vmem:[%s2 + $0x240] sm:$0xf] %v3581
  %4094 = vst [vmem:[%s2 + $0x244] sm:$0xf] %v3582
  %4095 = vst [vmem:[%s2 + $0x248] sm:$0xf] %v3583
  %4096 = vst [vmem:[%s2 + $0x24c] sm:$0xf] %v3584
  %4097 = vst [vmem:[%s2 + $0x250] sm:$0xf] %v3585
  %4098 = vst [vmem:[%s2 + $0x254] sm:$0xf] %v3586
  %4099 = vst [vmem:[%s2 + $0x258] sm:$0xf] %v3587
  %4100 = vst [vmem:[%s2 + $0x25c] sm:$0xf] %v3588
  %4101 = vst [vmem:[%s2 + $0x260] sm:$0xf] %v3589
  %4102 = vst [vmem:[%s2 + $0x264] sm:$0xf] %v3590
  %4103 = vst [vmem:[%s2 + $0x268] sm:$0xf] %v3591
  %4104 = vst [vmem:[%s2 + $0x26c] sm:$0xf] %v3592
  %4105 = vst [vmem:[%s2 + $0x270] sm:$0xf] %v3593
  %4106 = vst [vmem:[%s2 + $0x274] sm:$0xf] %v3594
  %4107 = vst [vmem:[%s2 + $0x278] sm:$0xf] %v3595
  %4108 = vst [vmem:[%s2 + $0x27c] sm:$0xf] %v3596
  %4109 = vst [vmem:[%s2 + $0x280] sm:$0xf] %v3597
  %4110 = vst [vmem:[%s2 + $0x284] sm:$0xf] %v3598
  %4111 = vst [vmem:[%s2 + $0x288] sm:$0xf] %v3599
  %4112 = vst [vmem:[%s2 + $0x28c] sm:$0xf] %v3600
  %4113 = vst [vmem:[%s2 + $0x290] sm:$0xf] %v3601
  %4114 = vst [vmem:[%s2 + $0x294] sm:$0xf] %v3602
  %4115 = vst [vmem:[%s2 + $0x298] sm:$0xf] %v3603
  %4116 = vst [vmem:[%s2 + $0x29c] sm:$0xf] %v3604
  %4117 = vst [vmem:[%s2 + $0x2a0] sm:$0xf] %v3605
  %4118 = vst [vmem:[%s2 + $0x2a4] sm:$0xf] %v3606
  %4119 = vst [vmem:[%s2 + $0x2a8] sm:$0xf] %v3607
  %4120 = vst [vmem:[%s2 + $0x2ac] sm:$0xf] %v3608
  %4121 = vst [vmem:[%s2 + $0x2b0] sm:$0xf] %v3609
  %4122 = vst [vmem:[%s2 + $0x2b4] sm:$0xf] %v3610
  %4123 = vst [vmem:[%s2 + $0x2b8] sm:$0xf] %v3611
  %4124 = vst [vmem:[%s2 + $0x2bc] sm:$0xf] %v3612
  %4125 = vst [vmem:[%s2 + $0x2c0] sm:$0xf] %v3613
  %4126 = vst [vmem:[%s2 + $0x2c4] sm:$0xf] %v3614
  %4127 = vst [vmem:[%s2 + $0x2c8] sm:$0xf] %v3615
  %4128 = vst [vmem:[%s2 + $0x2cc] sm:$0xf] %v3616
  %4129 = vst [vmem:[%s2 + $0x2d0] sm:$0xf] %v3617
  %4130 = vst [vmem:[%s2 + $0x2d4] sm:$0xf] %v3618
  %4131 = vst [vmem:[%s2 + $0x2d8] sm:$0xf] %v3619
  %4132 = vst [vmem:[%s2 + $0x2dc] sm:$0xf] %v3620
  %4133 = vst [vmem:[%s2 + $0x2e0] sm:$0xf] %v3621
  %4134 = vst [vmem:[%s2 + $0x2e4] sm:$0xf] %v3622
  %4135 = vst [vmem:[%s2 + $0x2e8] sm:$0xf] %v3623
  %4136 = vst [vmem:[%s2 + $0x2ec] sm:$0xf] %v3624
  %4137 = vst [vmem:[%s2 + $0x2f0] sm:$0xf] %v3625
  %4138 = vst [vmem:[%s2 + $0x2f4] sm:$0xf] %v3626
  %4139 = vst [vmem:[%s2 + $0x2f8] sm:$0xf] %v3627
  %4140 = vst [vmem:[%s2 + $0x2fc] sm:$0xf] %v3628
  %4141 = vst [vmem:[%s2 + $0x300] sm:$0xf] %v3629
  %4142 = vst [vmem:[%s2 + $0x304] sm:$0xf] %v3630
  %4143 = vst [vmem:[%s2 + $0x308] sm:$0xf] %v3631
  %4144 = vst [vmem:[%s2 + $0x30c] sm:$0xf] %v3632
  %4145 = vst [vmem:[%s2 + $0x310] sm:$0xf] %v3633
  %4146 = vst [vmem:[%s2 + $0x314] sm:$0xf] %v3634
  %4147 = vst [vmem:[%s2 + $0x318] sm:$0xf] %v3635
  %4148 = vst [vmem:[%s2 + $0x31c] sm:$0xf] %v3636
  %4149 = vst [vmem:[%s2 + $0x320] sm:$0xf] %v3637
  %4150 = vst [vmem:[%s2 + $0x324] sm:$0xf] %v3638
  %4151 = vst [vmem:[%s2 + $0x328] sm:$0xf] %v3639
  %4152 = vst [vmem:[%s2 + $0x32c] sm:$0xf] %v3640
  %4153 = vst [vmem:[%s2 + $0x330] sm:$0xf] %v3641
  %4154 = vst [vmem:[%s2 + $0x334] sm:$0xf] %v3642
  %4155 = vst [vmem:[%s2 + $0x338] sm:$0xf] %v3643
  %4156 = vst [vmem:[%s2 + $0x33c] sm:$0xf] %v3644
  %4157 = vst [vmem:[%s2 + $0x340] sm:$0xf] %v3645
  %4158 = vst [vmem:[%s2 + $0x344] sm:$0xf] %v3646
  %4159 = vst [vmem:[%s2 + $0x348] sm:$0xf] %v3647
  %4160 = vst [vmem:[%s2 + $0x34c] sm:$0xf] %v3648
  %4161 = vst [vmem:[%s2 + $0x350] sm:$0xf] %v3649
  %4162 = vst [vmem:[%s2 + $0x354] sm:$0xf] %v3650
  %4163 = vst [vmem:[%s2 + $0x358] sm:$0xf] %v3651
  %4164 = vst [vmem:[%s2 + $0x35c] sm:$0xf] %v3652
  %4165 = vst [vmem:[%s2 + $0x360] sm:$0xf] %v3653
  %4166 = vst [vmem:[%s2 + $0x364] sm:$0xf] %v3654
  %4167 = vst [vmem:[%s2 + $0x368] sm:$0xf] %v3655
  %4168 = vst [vmem:[%s2 + $0x36c] sm:$0xf] %v3656
  %4169 = vst [vmem:[%s2 + $0x370] sm:$0xf] %v3657
  %4170 = vst [vmem:[%s2 + $0x374] sm:$0xf] %v3658
  %4171 = vst [vmem:[%s2 + $0x378] sm:$0xf] %v3659
  %4172 = vst [vmem:[%s2 + $0x37c] sm:$0xf] %v3660
  %4173 = vst [vmem:[%s2 + $0x380] sm:$0xf] %v3661
  %4174 = vst [vmem:[%s2 + $0x384] sm:$0xf] %v3662
  %4175 = vst [vmem:[%s2 + $0x388] sm:$0xf] %v3663
  %4176 = vst [vmem:[%s2 + $0x38c] sm:$0xf] %v3664
  %4177 = vst [vmem:[%s2 + $0x390] sm:$0xf] %v3665
  %4178 = vst [vmem:[%s2 + $0x394] sm:$0xf] %v3666
  %4179 = vst [vmem:[%s2 + $0x398] sm:$0xf] %v3667
  %4180 = vst [vmem:[%s2 + $0x39c] sm:$0xf] %v3668
  %4181 = vst [vmem:[%s2 + $0x3a0] sm:$0xf] %v3669
  %4182 = vst [vmem:[%s2 + $0x3a4] sm:$0xf] %v3670
  %4183 = vst [vmem:[%s2 + $0x3a8] sm:$0xf] %v3671
  %4184 = vst [vmem:[%s2 + $0x3ac] sm:$0xf] %v3672
  %4185 = vst [vmem:[%s2 + $0x3b0] sm:$0xf] %v3673
  %4186 = vst [vmem:[%s2 + $0x3b4] sm:$0xf] %v3674
  %4187 = vst [vmem:[%s2 + $0x3b8] sm:$0xf] %v3675
  %4188 = vst [vmem:[%s2 + $0x3bc] sm:$0xf] %v3676
  %4189 = vst [vmem:[%s2 + $0x3c0] sm:$0xf] %v3677
  %4190 = vst [vmem:[%s2 + $0x3c4] sm:$0xf] %v3678
  %4191 = vst [vmem:[%s2 + $0x3c8] sm:$0xf] %v3679
  %4192 = vst [vmem:[%s2 + $0x3cc] sm:$0xf] %v3680
  %4193 = vst [vmem:[%s2 + $0x3d0] sm:$0xf] %v3681
  %4194 = vst [vmem:[%s2 + $0x3d4] sm:$0xf] %v3682
  %4195 = vst [vmem:[%s2 + $0x3d8] sm:$0xf] %v3683
  %4196 = vst [vmem:[%s2 + $0x3dc] sm:$0xf] %v3684
  %4197 = vst [vmem:[%s2 + $0x3e0] sm:$0xf] %v3685
  %4198 = vst [vmem:[%s2 + $0x3e4] sm:$0xf] %v3686
  %4199 = vst [vmem:[%s2 + $0x3e8] sm:$0xf] %v3687
  %4200 = vst [vmem:[%s2 + $0x3ec] sm:$0xf] %v3688
  %4201 = vst [vmem:[%s2 + $0x3f0] sm:$0xf] %v3689
  %4202 = vst [vmem:[%s2 + $0x3f4] sm:$0xf] %v3690
  %4203 = vst [vmem:[%s2 + $0x3f8] sm:$0xf] %v3691
  %4204 = vst [vmem:[%s2 + $0x3fc] sm:$0xf] %v3692
  // Predicated region
  $region10: #{d_stage2_forward.5} parent=0 // pred_check
    _
  $region11: #{d_stage2_forward.5} parent=0 // pred_check_branch
    %4206 = sbr.rel (0) target = $region13
  $region12: #{d_stage2_forward.5} parent=0 // pred_region
    _
  $region13: #{d_stage2_forward.5} parent=0 // pred_fallthru
    _
  // Predicated region
  $region14: #{d_stage2_forward.5} parent=0 // pred_check
    _
  $region15: #{d_stage2_forward.5} parent=0 // pred_check_branch
    %4208 = sbr.rel (0) target = $region17
  $region16: #{d_stage2_forward.5} parent=0 // pred_region
    _
  $region17: #{d_stage2_forward.5} parent=0 // pred_fallthru
    _

// kernel: d_stage2_forward.6
$region0: #{d_stage2_forward.6}
  #allocation0 [shape = 'u32[]', space=smem, size = 0x4, offset = 0x4, fixed_abs, tag = 'smem constant byte address 0x4 - core index']
  #allocation1 [shape = 'u32[144,128]{1,0:T(1,128)}', space=vmem, size = 0x12000, scoped, tag = 'internal scratch']
  %s0 = inlined_call_operand.vmem [shape: bf16[512,128], index: 0, kind: input, shape index: {}]
  %s1 = inlined_call_operand.vmem [shape: bf16[128,128], index: 1, kind: input, shape index: {}]
  %s2 = inlined_call_operand.vmem [shape: bf16[512,128], index: 2, kind: output, shape index: {}]
  %s3 = sld [smem:[#allocation0]]
  $region18: #{d_stage2_forward.6} parent=0
    _
  %s5 = ssub.s32 1, %s3
  %s6 = scalar_select 0, %s5, %s3
  // Predicated region
  $region2: #{d_stage2_forward.6} parent=0 // pred_check
    _
  $region3: #{d_stage2_forward.6} parent=0 // pred_check_branch
    %8 = sbr.rel (0) target = $region5
  $region4: #{d_stage2_forward.6} parent=0 // pred_region
    _
  $region5: #{d_stage2_forward.6} parent=0 // pred_fallthru
    _
  // Predicated region
  $region6: #{d_stage2_forward.6} parent=0 // pred_check
    _
  $region7: #{d_stage2_forward.6} parent=0 // pred_check_branch
    %10 = sbr.rel (0) target = $region9
  $region8: #{d_stage2_forward.6} parent=0 // pred_region
    _
  $region9: #{d_stage2_forward.6} parent=0 // pred_fallthru
    _
  %v12 = vld [vmem:[%s0] sm:$0xf]
  %v13 = vld [vmem:[%s0 + $0x4] sm:$0xf]
  %v14 = vld [vmem:[%s0 + $0x8] sm:$0xf]
  %v15 = vld [vmem:[%s0 + $0xc] sm:$0xf]
  %v16 = vld [vmem:[%s0 + $0x10] sm:$0xf]
  %v17 = vld [vmem:[%s0 + $0x14] sm:$0xf]
  %v18 = vld [vmem:[%s0 + $0x18] sm:$0xf]
  %v19 = vld [vmem:[%s0 + $0x1c] sm:$0xf]
  %v20 = vld [vmem:[%s0 + $0x20] sm:$0xf]
  %v21 = vld [vmem:[%s0 + $0x24] sm:$0xf]
  %v22 = vld [vmem:[%s0 + $0x28] sm:$0xf]
  %v23 = vld [vmem:[%s0 + $0x2c] sm:$0xf]
  %v24 = vld [vmem:[%s0 + $0x30] sm:$0xf]
  %v25 = vld [vmem:[%s0 + $0x34] sm:$0xf]
  %v26 = vld [vmem:[%s0 + $0x38] sm:$0xf]
  %v27 = vld [vmem:[%s0 + $0x3c] sm:$0xf]
  %v28 = vld [vmem:[%s0 + $0x40] sm:$0xf]
  %v29 = vld [vmem:[%s0 + $0x44] sm:$0xf]
  %v30 = vld [vmem:[%s0 + $0x48] sm:$0xf]
  %v31 = vld [vmem:[%s0 + $0x4c] sm:$0xf]
  %v32 = vld [vmem:[%s0 + $0x50] sm:$0xf]
  %v33 = vld [vmem:[%s0 + $0x54] sm:$0xf]
  %v34 = vld [vmem:[%s0 + $0x58] sm:$0xf]
  %v35 = vld [vmem:[%s0 + $0x5c] sm:$0xf]
  %v36 = vld [vmem:[%s0 + $0x60] sm:$0xf]
  %v37 = vld [vmem:[%s0 + $0x64] sm:$0xf]
  %v38 = vld [vmem:[%s0 + $0x68] sm:$0xf]
  %v39 = vld [vmem:[%s0 + $0x6c] sm:$0xf]
  %v40 = vld [vmem:[%s0 + $0x70] sm:$0xf]
  %v41 = vld [vmem:[%s0 + $0x74] sm:$0xf]
  %v42 = vld [vmem:[%s0 + $0x78] sm:$0xf]
  %v43 = vld [vmem:[%s0 + $0x7c] sm:$0xf]
  %v44 = vld [vmem:[%s0 + $0x80] sm:$0xf]
  %v45 = vld [vmem:[%s0 + $0x84] sm:$0xf]
  %v46 = vld [vmem:[%s0 + $0x88] sm:$0xf]
  %v47 = vld [vmem:[%s0 + $0x8c] sm:$0xf]
  %v48 = vld [vmem:[%s0 + $0x90] sm:$0xf]
  %v49 = vld [vmem:[%s0 + $0x94] sm:$0xf]
  %v50 = vld [vmem:[%s0 + $0x98] sm:$0xf]
  %v51 = vld [vmem:[%s0 + $0x9c] sm:$0xf]
  %v52 = vld [vmem:[%s0 + $0xa0] sm:$0xf]
  %v53 = vld [vmem:[%s0 + $0xa4] sm:$0xf]
  %v54 = vld [vmem:[%s0 + $0xa8] sm:$0xf]
  %v55 = vld [vmem:[%s0 + $0xac] sm:$0xf]
  %v56 = vld [vmem:[%s0 + $0xb0] sm:$0xf]
  %v57 = vld [vmem:[%s0 + $0xb4] sm:$0xf]
  %v58 = vld [vmem:[%s0 + $0xb8] sm:$0xf]
  %v59 = vld [vmem:[%s0 + $0xbc] sm:$0xf]
  %v60 = vld [vmem:[%s0 + $0xc0] sm:$0xf]
  %v61 = vld [vmem:[%s0 + $0xc4] sm:$0xf]
  %v62 = vld [vmem:[%s0 + $0xc8] sm:$0xf]
  %v63 = vld [vmem:[%s0 + $0xcc] sm:$0xf]
  %v64 = vld [vmem:[%s0 + $0xd0] sm:$0xf]
  %v65 = vld [vmem:[%s0 + $0xd4] sm:$0xf]
  %v66 = vld [vmem:[%s0 + $0xd8] sm:$0xf]
  %v67 = vld [vmem:[%s0 + $0xdc] sm:$0xf]
  %v68 = vld [vmem:[%s0 + $0xe0] sm:$0xf]
  %v69 = vld [vmem:[%s0 + $0xe4] sm:$0xf]
  %v70 = vld [vmem:[%s0 + $0xe8] sm:$0xf]
  %v71 = vld [vmem:[%s0 + $0xec] sm:$0xf]
  %v72 = vld [vmem:[%s0 + $0xf0] sm:$0xf]
  %v73 = vld [vmem:[%s0 + $0xf4] sm:$0xf]
  %v74 = vld [vmem:[%s0 + $0xf8] sm:$0xf]
  %v75 = vld [vmem:[%s0 + $0xfc] sm:$0xf]
  %v76 = vld [vmem:[%s1] sm:$0xf]
  %v77 = vld [vmem:[%s1 + $0x4] sm:$0xf]
  %v78 = vld [vmem:[%s1 + $0x8] sm:$0xf]
  %v79 = vld [vmem:[%s1 + $0xc] sm:$0xf]
  %v80 = vld [vmem:[%s1 + $0x10] sm:$0xf]
  %v81 = vld [vmem:[%s1 + $0x14] sm:$0xf]
  %v82 = vld [vmem:[%s1 + $0x18] sm:$0xf]
  %v83 = vld [vmem:[%s1 + $0x1c] sm:$0xf]
  %v84 = vld [vmem:[%s1 + $0x20] sm:$0xf]
  %v85 = vld [vmem:[%s1 + $0x24] sm:$0xf]
  %v86 = vld [vmem:[%s1 + $0x28] sm:$0xf]
  %v87 = vld [vmem:[%s1 + $0x2c] sm:$0xf]
  %v88 = vld [vmem:[%s1 + $0x30] sm:$0xf]
  %v89 = vld [vmem:[%s1 + $0x34] sm:$0xf]
  %v90 = vld [vmem:[%s1 + $0x38] sm:$0xf]
  %v91 = vld [vmem:[%s1 + $0x3c] sm:$0xf]
  %v156 = vunpack.c.l.b16 %v12
  %v157 = vunpack.c.l.b16 %v13
  %v158 = vunpack.c.l.b16 %v14
  %v159 = vunpack.c.l.b16 %v15
  %v160 = vunpack.c.l.b16 %v16
  %v161 = vunpack.c.l.b16 %v17
  %v162 = vunpack.c.l.b16 %v18
  %v163 = vunpack.c.l.b16 %v19
  %v164 = vunpack.c.l.b16 %v20
  %v165 = vunpack.c.l.b16 %v21
  %v166 = vunpack.c.l.b16 %v22
  %v167 = vunpack.c.l.b16 %v23
  %v168 = vunpack.c.l.b16 %v24
  %v169 = vunpack.c.l.b16 %v25
  %v170 = vunpack.c.l.b16 %v26
  %v171 = vunpack.c.l.b16 %v27
  %v172 = vunpack.c.l.b16 %v28
  %v173 = vunpack.c.l.b16 %v29
  %v174 = vunpack.c.l.b16 %v30
  %v175 = vunpack.c.l.b16 %v31
  %v176 = vunpack.c.l.b16 %v32
  %v177 = vunpack.c.l.b16 %v33
  %v178 = vunpack.c.l.b16 %v34
  %v179 = vunpack.c.l.b16 %v35
  %v180 = vunpack.c.l.b16 %v36
  %v181 = vunpack.c.l.b16 %v37
  %v182 = vunpack.c.l.b16 %v38
  %v183 = vunpack.c.l.b16 %v39
  %v184 = vunpack.c.l.b16 %v40
  %v185 = vunpack.c.l.b16 %v41
  %v186 = vunpack.c.l.b16 %v42
  %v187 = vunpack.c.l.b16 %v43
  %v188 = vunpack.c.l.b16 %v44
  %v189 = vunpack.c.l.b16 %v45
  %v190 = vunpack.c.l.b16 %v46
  %v191 = vunpack.c.l.b16 %v47
  %v192 = vunpack.c.l.b16 %v48
  %v193 = vunpack.c.l.b16 %v49
  %v194 = vunpack.c.l.b16 %v50
  %v195 = vunpack.c.l.b16 %v51
  %v196 = vunpack.c.l.b16 %v52
  %v197 = vunpack.c.l.b16 %v53
  %v198 = vunpack.c.l.b16 %v54
  %v199 = vunpack.c.l.b16 %v55
  %v200 = vunpack.c.l.b16 %v56
  %v201 = vunpack.c.l.b16 %v57
  %v202 = vunpack.c.l.b16 %v58
  %v203 = vunpack.c.l.b16 %v59
  %v204 = vunpack.c.l.b16 %v60
  %v205 = vunpack.c.l.b16 %v61
  %v206 = vunpack.c.l.b16 %v62
  %v207 = vunpack.c.l.b16 %v63
  %v208 = vunpack.c.l.b16 %v64
  %v209 = vunpack.c.l.b16 %v65
  %v210 = vunpack.c.l.b16 %v66
  %v211 = vunpack.c.l.b16 %v67
  %v212 = vunpack.c.l.b16 %v68
  %v213 = vunpack.c.l.b16 %v69
  %v214 = vunpack.c.l.b16 %v70
  %v215 = vunpack.c.l.b16 %v71
  %v216 = vunpack.c.l.b16 %v72
  %v217 = vunpack.c.l.b16 %v73
  %v218 = vunpack.c.l.b16 %v74
  %v219 = vunpack.c.l.b16 %v75
  %v220 = vpack.c.b16 %v157, %v156
  %v221 = vpack.c.b16 %v159, %v158
  %v222 = vpack.c.b16 %v161, %v160
  %v223 = vpack.c.b16 %v163, %v162
  %v224 = vpack.c.b16 %v165, %v164
  %v225 = vpack.c.b16 %v167, %v166
  %v226 = vpack.c.b16 %v169, %v168
  %v227 = vpack.c.b16 %v171, %v170
  %v228 = vpack.c.b16 %v173, %v172
  %v229 = vpack.c.b16 %v175, %v174
  %v230 = vpack.c.b16 %v177, %v176
  %v231 = vpack.c.b16 %v179, %v178
  %v232 = vpack.c.b16 %v181, %v180
  %v233 = vpack.c.b16 %v183, %v182
  %v234 = vpack.c.b16 %v185, %v184
  %v235 = vpack.c.b16 %v187, %v186
  %v236 = vpack.c.b16 %v189, %v188
  %v237 = vpack.c.b16 %v191, %v190
  %v238 = vpack.c.b16 %v193, %v192
  %v239 = vpack.c.b16 %v195, %v194
  %v240 = vpack.c.b16 %v197, %v196
  %v241 = vpack.c.b16 %v199, %v198
  %v242 = vpack.c.b16 %v201, %v200
  %v243 = vpack.c.b16 %v203, %v202
  %v244 = vpack.c.b16 %v205, %v204
  %v245 = vpack.c.b16 %v207, %v206
  %v246 = vpack.c.b16 %v209, %v208
  %v247 = vpack.c.b16 %v211, %v210
  %v248 = vpack.c.b16 %v213, %v212
  %v249 = vpack.c.b16 %v215, %v214
  %v250 = vpack.c.b16 %v217, %v216
  %v251 = vpack.c.b16 %v219, %v218
  %v300 = vunpack.c.l.b16 %v76
  %v301 = vunpack.c.l.b16 %v77
  %v302 = vunpack.c.l.b16 %v78
  %v303 = vunpack.c.l.b16 %v79
  %v304 = vunpack.c.l.b16 %v80
  %v305 = vunpack.c.l.b16 %v81
  %v306 = vunpack.c.l.b16 %v82
  %v307 = vunpack.c.l.b16 %v83
  %v308 = vunpack.c.l.b16 %v84
  %v309 = vunpack.c.l.b16 %v85
  %v310 = vunpack.c.l.b16 %v86
  %v311 = vunpack.c.l.b16 %v87
  %v312 = vunpack.c.l.b16 %v88
  %v313 = vunpack.c.l.b16 %v89
  %v314 = vunpack.c.l.b16 %v90
  %v315 = vunpack.c.l.b16 %v91
  %v316 = vpack.c.b16 %v301, %v300
  %v317 = vpack.c.b16 %v303, %v302
  %v318 = vpack.c.b16 %v305, %v304
  %v319 = vpack.c.b16 %v307, %v306
  %v320 = vpack.c.b16 %v309, %v308
  %v321 = vpack.c.b16 %v311, %v310
  %v322 = vpack.c.b16 %v313, %v312
  %v323 = vpack.c.b16 %v315, %v314
  %332 = vmatprep.subr.bf16.mxu0 0
  %333 = vmatpush1.bf16.msra.mxu0 %v316
  %334 = vmatprep.subr.bf16.mxu0 0
  %335 = vmatpush1.bf16.msra.mxu0 %v317
  %336 = vmatprep.subr.bf16.mxu0 0
  %337 = vmatpush1.bf16.msra.mxu0 %v318
  %338 = vmatprep.subr.bf16.mxu0 0
  %339 = vmatpush1.bf16.msra.mxu0 %v319
  %340 = vmatprep.subr.bf16.mxu0 0
  %341 = vmatpush1.bf16.msra.mxu0 %v320
  %342 = vmatprep.subr.bf16.mxu0 0
  %343 = vmatpush1.bf16.msra.mxu0 %v321
  %344 = vmatprep.subr.bf16.mxu0 0
  %345 = vmatpush1.bf16.msra.mxu0 %v322
  %346 = vmatprep.subr.bf16.mxu0 0
  %347 = vmatpush1.bf16.msra.mxu0 %v323
  %348 = vmatprep.subr.bf16.mxu0 0
  %349 = vmatpush1.bf16.msra.mxu0 0
  %350 = vmatprep.subr.bf16.mxu0 0
  %351 = vmatpush1.bf16.msra.mxu0 0
  %352 = vmatprep.subr.bf16.mxu0 0
  %353 = vmatpush1.bf16.msra.mxu0 0
  %354 = vmatprep.subr.bf16.mxu0 0
  %355 = vmatpush1.bf16.msra.mxu0 0
  %356 = vmatprep.subr.bf16.mxu0 0
  %357 = vmatpush1.bf16.msra.mxu0 0
  %358 = vmatprep.subr.bf16.mxu0 0
  %359 = vmatpush1.bf16.msra.mxu0 0
  %360 = vmatprep.subr.bf16.mxu0 0
  %361 = vmatpush1.bf16.msra.mxu0 0
  %362 = vmatprep.subr.bf16.mxu0 0
  %363 = vmatpush1.bf16.msra.mxu0 0
  %364 = vmatprep.mubr.bf16.mxu0 0
  %365 = vmatmul.mubr.bf16.gmra.mrb[0].mxu0 %v220
  %v366 = vpop.f32.mrb[0].mxu0
  %v367 = vadd.f32 0.0, %v366
  %v368 = vpop.f32.mrb[0].mxu0
  %v369 = vpop.f32.mrb[0].mxu0
  %v370 = vadd.f32 0.0, %v369
  %v371 = vpop.f32.mrb[0].mxu0
  %372 = vmatprep.mubr.bf16.mxu0 0
  %373 = vmatmul.mubr.bf16.gmra.mrb[0].mxu0 %v221
  %v374 = vpop.f32.mrb[0].mxu0
  %v375 = vadd.f32 0.0, %v374
  %v376 = vpop.f32.mrb[0].mxu0
  %v377 = vpop.f32.mrb[0].mxu0
  %v378 = vadd.f32 0.0, %v377
  %v379 = vpop.f32.mrb[0].mxu0
  %380 = vmatprep.mubr.bf16.mxu0 0
  %381 = vmatmul.mubr.bf16.gmra.mrb[0].mxu0 %v222
  %v382 = vpop.f32.mrb[0].mxu0
  %v383 = vadd.f32 0.0, %v382
  %v384 = vpop.f32.mrb[0].mxu0
  %v385 = vpop.f32.mrb[0].mxu0
  %v386 = vadd.f32 0.0, %v385
  %v387 = vpop.f32.mrb[0].mxu0
  %388 = vmatprep.mubr.bf16.mxu0 0
  %389 = vmatmul.mubr.bf16.gmra.mrb[0].mxu0 %v223
  %v390 = vpop.f32.mrb[0].mxu0
  %v391 = vadd.f32 0.0, %v390
  %v392 = vpop.f32.mrb[0].mxu0
  %v393 = vpop.f32.mrb[0].mxu0
  %v394 = vadd.f32 0.0, %v393
  %v395 = vpop.f32.mrb[0].mxu0
  %396 = vmatprep.mubr.bf16.mxu0 0
  %397 = vmatmul.mubr.bf16.gmra.mrb[0].mxu0 %v224
  %v398 = vpop.f32.mrb[0].mxu0
  %v399 = vadd.f32 0.0, %v398
  %v400 = vpop.f32.mrb[0].mxu0
  %v401 = vpop.f32.mrb[0].mxu0
  %v402 = vadd.f32 0.0, %v401
  %v403 = vpop.f32.mrb[0].mxu0
  %404 = vmatprep.mubr.bf16.mxu0 0
  %405 = vmatmul.mubr.bf16.gmra.mrb[0].mxu0 %v225
  %v406 = vpop.f32.mrb[0].mxu0
  %v407 = vadd.f32 0.0, %v406
  %v408 = vpop.f32.mrb[0].mxu0
  %v409 = vpop.f32.mrb[0].mxu0
  %v410 = vadd.f32 0.0, %v409
  %v411 = vpop.f32.mrb[0].mxu0
  %412 = vmatprep.mubr.bf16.mxu0 0
  %413 = vmatmul.mubr.bf16.gmra.mrb[0].mxu0 %v226
  %v414 = vpop.f32.mrb[0].mxu0
  %v415 = vadd.f32 0.0, %v414
  %v416 = vpop.f32.mrb[0].mxu0
  %v417 = vpop.f32.mrb[0].mxu0
  %v418 = vadd.f32 0.0, %v417
  %v419 = vpop.f32.mrb[0].mxu0
  %420 = vmatprep.mubr.bf16.mxu0 0
  %421 = vmatmul.mubr.bf16.gmra.mrb[0].mxu0 %v227
  %v422 = vpop.f32.mrb[0].mxu0
  %v423 = vadd.f32 0.0, %v422
  %v424 = vpop.f32.mrb[0].mxu0
  %v425 = vpop.f32.mrb[0].mxu0
  %v426 = vadd.f32 0.0, %v425
  %v427 = vpop.f32.mrb[0].mxu0
  %428 = vmatprep.mubr.bf16.mxu0 0
  %429 = vmatmul.mubr.bf16.gmra.mrb[0].mxu0 %v228
  %v430 = vpop.f32.mrb[0].mxu0
  %v431 = vadd.f32 0.0, %v430
  %v432 = vpop.f32.mrb[0].mxu0
  %v433 = vpop.f32.mrb[0].mxu0
  %v434 = vadd.f32 0.0, %v433
  %v435 = vpop.f32.mrb[0].mxu0
  %436 = vmatprep.mubr.bf16.mxu0 0
  %437 = vmatmul.mubr.bf16.gmra.mrb[0].mxu0 %v229
  %v438 = vpop.f32.mrb[0].mxu0
  %v439 = vadd.f32 0.0, %v438
  %v440 = vpop.f32.mrb[0].mxu0
  %v441 = vpop.f32.mrb[0].mxu0
  %v442 = vadd.f32 0.0, %v441
  %v443 = vpop.f32.mrb[0].mxu0
  %444 = vmatprep.mubr.bf16.mxu0 0
  %445 = vmatmul.mubr.bf16.gmra.mrb[0].mxu0 %v230
  %v446 = vpop.f32.mrb[0].mxu0
  %v447 = vadd.f32 0.0, %v446
  %v448 = vpop.f32.mrb[0].mxu0
  %v449 = vpop.f32.mrb[0].mxu0
  %v450 = vadd.f32 0.0, %v449
  %v451 = vpop.f32.mrb[0].mxu0
  %452 = vmatprep.mubr.bf16.mxu0 0
  %453 = vmatmul.mubr.bf16.gmra.mrb[0].mxu0 %v231
  %v454 = vpop.f32.mrb[0].mxu0
  %v455 = vadd.f32 0.0, %v454
  %v456 = vpop.f32.mrb[0].mxu0
  %v457 = vpop.f32.mrb[0].mxu0
  %v458 = vadd.f32 0.0, %v457
  %v459 = vpop.f32.mrb[0].mxu0
  %460 = vmatprep.mubr.bf16.mxu0 0
  %461 = vmatmul.mubr.bf16.gmra.mrb[0].mxu0 %v232
  %v462 = vpop.f32.mrb[0].mxu0
  %v463 = vadd.f32 0.0, %v462
  %v464 = vpop.f32.mrb[0].mxu0
  %v465 = vpop.f32.mrb[0].mxu0
  %v466 = vadd.f32 0.0, %v465
  %v467 = vpop.f32.mrb[0].mxu0
  %468 = vmatprep.mubr.bf16.mxu0 0
  %469 = vmatmul.mubr.bf16.gmra.mrb[0].mxu0 %v233
  %v470 = vpop.f32.mrb[0].mxu0
  %v471 = vadd.f32 0.0, %v470
  %v472 = vpop.f32.mrb[0].mxu0
  %v473 = vpop.f32.mrb[0].mxu0
  %v474 = vadd.f32 0.0, %v473
  %v475 = vpop.f32.mrb[0].mxu0
  %476 = vmatprep.mubr.bf16.mxu0 0
  %477 = vmatmul.mubr.bf16.gmra.mrb[0].mxu0 %v234
  %v478 = vpop.f32.mrb[0].mxu0
  %v479 = vadd.f32 0.0, %v478
  %v480 = vpop.f32.mrb[0].mxu0
  %v481 = vpop.f32.mrb[0].mxu0
  %v482 = vadd.f32 0.0, %v481
  %v483 = vpop.f32.mrb[0].mxu0
  %484 = vmatprep.mubr.bf16.mxu0 0
  %485 = vmatmul.mubr.bf16.gmra.mrb[0].mxu0 %v235
  %v486 = vpop.f32.mrb[0].mxu0
  %v487 = vadd.f32 0.0, %v486
  %v488 = vpop.f32.mrb[0].mxu0
  %v489 = vpop.f32.mrb[0].mxu0
  %v490 = vadd.f32 0.0, %v489
  %v491 = vpop.f32.mrb[0].mxu0
  %492 = vmatprep.mubr.bf16.mxu0 0
  %493 = vmatmul.mubr.bf16.gmra.mrb[0].mxu0 %v236
  %v494 = vpop.f32.mrb[0].mxu0
  %v495 = vadd.f32 0.0, %v494
  %v496 = vpop.f32.mrb[0].mxu0
  %v497 = vpop.f32.mrb[0].mxu0
  %v498 = vadd.f32 0.0, %v497
  %v499 = vpop.f32.mrb[0].mxu0
  %500 = vmatprep.mubr.bf16.mxu0 0
  %501 = vmatmul.mubr.bf16.gmra.mrb[0].mxu0 %v237
  %v502 = vpop.f32.mrb[0].mxu0
  %v503 = vadd.f32 0.0, %v502
  %v504 = vpop.f32.mrb[0].mxu0
  %v505 = vpop.f32.mrb[0].mxu0
  %v506 = vadd.f32 0.0, %v505
  %v507 = vpop.f32.mrb[0].mxu0
  %508 = vmatprep.mubr.bf16.mxu0 0
  %509 = vmatmul.mubr.bf16.gmra.mrb[0].mxu0 %v238
  %v510 = vpop.f32.mrb[0].mxu0
  %v511 = vadd.f32 0.0, %v510
  %v512 = vpop.f32.mrb[0].mxu0
  %v513 = vpop.f32.mrb[0].mxu0
  %v514 = vadd.f32 0.0, %v513
  %v515 = vpop.f32.mrb[0].mxu0
  %516 = vmatprep.mubr.bf16.mxu0 0
  %517 = vmatmul.mubr.bf16.gmra.mrb[0].mxu0 %v239
  %v518 = vpop.f32.mrb[0].mxu0
  %v519 = vadd.f32 0.0, %v518
  %v520 = vpop.f32.mrb[0].mxu0
  %v521 = vpop.f32.mrb[0].mxu0
  %v522 = vadd.f32 0.0, %v521
  %v523 = vpop.f32.mrb[0].mxu0
  %524 = vmatprep.mubr.bf16.mxu0 0
  %525 = vmatmul.mubr.bf16.gmra.mrb[0].mxu0 %v240
  %v526 = vpop.f32.mrb[0].mxu0
  %v527 = vadd.f32 0.0, %v526
  %v528 = vpop.f32.mrb[0].mxu0
  %v529 = vpop.f32.mrb[0].mxu0
  %v530 = vadd.f32 0.0, %v529
  %v531 = vpop.f32.mrb[0].mxu0
  %532 = vmatprep.mubr.bf16.mxu0 0
  %533 = vmatmul.mubr.bf16.gmra.mrb[0].mxu0 %v241
  %v534 = vpop.f32.mrb[0].mxu0
  %v535 = vadd.f32 0.0, %v534
  %v536 = vpop.f32.mrb[0].mxu0
  %v537 = vpop.f32.mrb[0].mxu0
  %v538 = vadd.f32 0.0, %v537
  %v539 = vpop.f32.mrb[0].mxu0
  %540 = vmatprep.mubr.bf16.mxu0 0
  %541 = vmatmul.mubr.bf16.gmra.mrb[0].mxu0 %v242
  %v542 = vpop.f32.mrb[0].mxu0
  %v543 = vadd.f32 0.0, %v542
  %v544 = vpop.f32.mrb[0].mxu0
  %v545 = vpop.f32.mrb[0].mxu0
  %v546 = vadd.f32 0.0, %v545
  %v547 = vpop.f32.mrb[0].mxu0
  %548 = vmatprep.mubr.bf16.mxu0 0
  %549 = vmatmul.mubr.bf16.gmra.mrb[0].mxu0 %v243
  %v550 = vpop.f32.mrb[0].mxu0
  %v551 = vadd.f32 0.0, %v550
  %v552 = vpop.f32.mrb[0].mxu0
  %v553 = vpop.f32.mrb[0].mxu0
  %v554 = vadd.f32 0.0, %v553
  %v555 = vpop.f32.mrb[0].mxu0
  %556 = vmatprep.mubr.bf16.mxu0 0
  %557 = vmatmul.mubr.bf16.gmra.mrb[0].mxu0 %v244
  %v558 = vpop.f32.mrb[0].mxu0
  %v559 = vadd.f32 0.0, %v558
  %v560 = vpop.f32.mrb[0].mxu0
  %v561 = vpop.f32.mrb[0].mxu0
  %v562 = vadd.f32 0.0, %v561
  %v563 = vpop.f32.mrb[0].mxu0
  %564 = vmatprep.mubr.bf16.mxu0 0
  %565 = vmatmul.mubr.bf16.gmra.mrb[0].mxu0 %v245
  %v566 = vpop.f32.mrb[0].mxu0
  %v567 = vadd.f32 0.0, %v566
  %v568 = vpop.f32.mrb[0].mxu0
  %v569 = vpop.f32.mrb[0].mxu0
  %v570 = vadd.f32 0.0, %v569
  %v571 = vpop.f32.mrb[0].mxu0
  %572 = vmatprep.mubr.bf16.mxu0 0
  %573 = vmatmul.mubr.bf16.gmra.mrb[0].mxu0 %v246
  %v574 = vpop.f32.mrb[0].mxu0
  %v575 = vadd.f32 0.0, %v574
  %v576 = vpop.f32.mrb[0].mxu0
  %v577 = vpop.f32.mrb[0].mxu0
  %v578 = vadd.f32 0.0, %v577
  %v579 = vpop.f32.mrb[0].mxu0
  %580 = vmatprep.mubr.bf16.mxu0 0
  %581 = vmatmul.mubr.bf16.gmra.mrb[0].mxu0 %v247
  %v582 = vpop.f32.mrb[0].mxu0
  %v583 = vadd.f32 0.0, %v582
  %v584 = vpop.f32.mrb[0].mxu0
  %v585 = vpop.f32.mrb[0].mxu0
  %v586 = vadd.f32 0.0, %v585
  %v587 = vpop.f32.mrb[0].mxu0
  %588 = vmatprep.mubr.bf16.mxu0 0
  %589 = vmatmul.mubr.bf16.gmra.mrb[0].mxu0 %v248
  %v590 = vpop.f32.mrb[0].mxu0
  %v591 = vadd.f32 0.0, %v590
  %v592 = vpop.f32.mrb[0].mxu0
  %v593 = vpop.f32.mrb[0].mxu0
  %v594 = vadd.f32 0.0, %v593
  %v595 = vpop.f32.mrb[0].mxu0
  %596 = vmatprep.mubr.bf16.mxu0 0
  %597 = vmatmul.mubr.bf16.gmra.mrb[0].mxu0 %v249
  %v598 = vpop.f32.mrb[0].mxu0
  %v599 = vadd.f32 0.0, %v598
  %v600 = vpop.f32.mrb[0].mxu0
  %v601 = vpop.f32.mrb[0].mxu0
  %v602 = vadd.f32 0.0, %v601
  %v603 = vpop.f32.mrb[0].mxu0
  %604 = vmatprep.mubr.bf16.mxu0 0
  %605 = vmatmul.mubr.bf16.gmra.mrb[0].mxu0 %v250
  %v606 = vpop.f32.mrb[0].mxu0
  %v607 = vadd.f32 0.0, %v606
  %v608 = vpop.f32.mrb[0].mxu0
  %v609 = vpop.f32.mrb[0].mxu0
  %v610 = vadd.f32 0.0, %v609
  %v611 = vpop.f32.mrb[0].mxu0
  %612 = vmatprep.mubr.bf16.mxu0 0
  %613 = vmatmul.mubr.bf16.gmra.mrb[0].mxu0 %v251
  %v614 = vpop.f32.mrb[0].mxu0
  %v615 = vadd.f32 0.0, %v614
  %v616 = vpop.f32.mrb[0].mxu0
  %v617 = vpop.f32.mrb[0].mxu0
  %v618 = vadd.f32 0.0, %v617
  %v619 = vpop.f32.mrb[0].mxu0
  %620 = vdwg.mxu0
  %v621 = vmin.f32 %v367, 0.0
  %v622 = vmin.f32 %v370, 0.0
  %v623 = vmin.f32 %v375, 0.0
  %v624 = vmin.f32 %v378, 0.0
  %v625 = vmin.f32 %v383, 0.0
  %v626 = vmin.f32 %v386, 0.0
  %v627 = vmin.f32 %v391, 0.0
  %v628 = vmin.f32 %v394, 0.0
  %v629 = vmin.f32 %v399, 0.0
  %v630 = vmin.f32 %v402, 0.0
  %v631 = vmin.f32 %v407, 0.0
  %v632 = vmin.f32 %v410, 0.0
  %v633 = vmin.f32 %v415, 0.0
  %v634 = vmin.f32 %v418, 0.0
  %v635 = vmin.f32 %v423, 0.0
  %v636 = vmin.f32 %v426, 0.0
  %v637 = vmin.f32 %v431, 0.0
  %v638 = vmin.f32 %v434, 0.0
  %v639 = vmin.f32 %v439, 0.0
  %v640 = vmin.f32 %v442, 0.0
  %v641 = vmin.f32 %v447, 0.0
  %v642 = vmin.f32 %v450, 0.0
  %v643 = vmin.f32 %v455, 0.0
  %v644 = vmin.f32 %v458, 0.0
  %v645 = vmin.f32 %v463, 0.0
  %v646 = vmin.f32 %v466, 0.0
  %v647 = vmin.f32 %v471, 0.0
  %v648 = vmin.f32 %v474, 0.0
  %v649 = vmin.f32 %v479, 0.0
  %v650 = vmin.f32 %v482, 0.0
  %v651 = vmin.f32 %v487, 0.0
  %v652 = vmin.f32 %v490, 0.0
  %v653 = vmin.f32 %v495, 0.0
  %v654 = vmin.f32 %v498, 0.0
  %v655 = vmin.f32 %v503, 0.0
  %v656 = vmin.f32 %v506, 0.0
  %v657 = vmin.f32 %v511, 0.0
  %v658 = vmin.f32 %v514, 0.0
  %v659 = vmin.f32 %v519, 0.0
  %v660 = vmin.f32 %v522, 0.0
  %v661 = vmin.f32 %v527, 0.0
  %v662 = vmin.f32 %v530, 0.0
  %v663 = vmin.f32 %v535, 0.0
  %v664 = vmin.f32 %v538, 0.0
  %v665 = vmin.f32 %v543, 0.0
  %v666 = vmin.f32 %v546, 0.0
  %v667 = vmin.f32 %v551, 0.0
  %v668 = vmin.f32 %v554, 0.0
  %v669 = vmin.f32 %v559, 0.0
  %v670 = vmin.f32 %v562, 0.0
  %v671 = vmin.f32 %v567, 0.0
  %v672 = vmin.f32 %v570, 0.0
  %v673 = vmin.f32 %v575, 0.0
  %v674 = vmin.f32 %v578, 0.0
  %v675 = vmin.f32 %v583, 0.0
  %v676 = vmin.f32 %v586, 0.0
  %v677 = vmin.f32 %v591, 0.0
  %v678 = vmin.f32 %v594, 0.0
  %v679 = vmin.f32 %v599, 0.0
  %v680 = vmin.f32 %v602, 0.0
  %v681 = vmin.f32 %v607, 0.0
  %v682 = vmin.f32 %v610, 0.0
  %v683 = vmin.f32 %v615, 0.0
  %v684 = vmin.f32 %v618, 0.0
  %v685 = vmul.f32 %v621, 1.442695
  %v686 = vpow.pop %v685
  %v687 = vmul.f32 %v622, 1.442695
  %v688 = vpow.pop %v687
  %v689 = vmul.f32 %v623, 1.442695
  %v690 = vpow.pop %v689
  %v691 = vmul.f32 %v624, 1.442695
  %v692 = vpow.pop %v691
  %v693 = vmul.f32 %v625, 1.442695
  %v694 = vpow.pop %v693
  %v695 = vmul.f32 %v626, 1.442695
  %v696 = vpow.pop %v695
  %v697 = vmul.f32 %v627, 1.442695
  %v698 = vpow.pop %v697
  %v699 = vmul.f32 %v628, 1.442695
  %v700 = vpow.pop %v699
  %v701 = vmul.f32 %v629, 1.442695
  %v702 = vpow.pop %v701
  %v703 = vmul.f32 %v630, 1.442695
  %v704 = vpow.pop %v703
  %v705 = vmul.f32 %v631, 1.442695
  %v706 = vpow.pop %v705
  %v707 = vmul.f32 %v632, 1.442695
  %v708 = vpow.pop %v707
  %v709 = vmul.f32 %v633, 1.442695
  %v710 = vpow.pop %v709
  %v711 = vmul.f32 %v634, 1.442695
  %v712 = vpow.pop %v711
  %v713 = vmul.f32 %v635, 1.442695
  %v714 = vpow.pop %v713
  %v715 = vmul.f32 %v636, 1.442695
  %v716 = vpow.pop %v715
  %v717 = vmul.f32 %v637, 1.442695
  %v718 = vpow.pop %v717
  %v719 = vmul.f32 %v638, 1.442695
  %v720 = vpow.pop %v719
  %v721 = vmul.f32 %v639, 1.442695
  %v722 = vpow.pop %v721
  %v723 = vmul.f32 %v640, 1.442695
  %v724 = vpow.pop %v723
  %v725 = vmul.f32 %v641, 1.442695
  %v726 = vpow.pop %v725
  %v727 = vmul.f32 %v642, 1.442695
  %v728 = vpow.pop %v727
  %v729 = vmul.f32 %v643, 1.442695
  %v730 = vpow.pop %v729
  %v731 = vmul.f32 %v644, 1.442695
  %v732 = vpow.pop %v731
  %v733 = vmul.f32 %v645, 1.442695
  %v734 = vpow.pop %v733
  %v735 = vmul.f32 %v646, 1.442695
  %v736 = vpow.pop %v735
  %v737 = vmul.f32 %v647, 1.442695
  %v738 = vpow.pop %v737
  %v739 = vmul.f32 %v648, 1.442695
  %v740 = vpow.pop %v739
  %v741 = vmul.f32 %v649, 1.442695
  %v742 = vpow.pop %v741
  %v743 = vmul.f32 %v650, 1.442695
  %v744 = vpow.pop %v743
  %v745 = vmul.f32 %v651, 1.442695
  %v746 = vpow.pop %v745
  %v747 = vmul.f32 %v652, 1.442695
  %v748 = vpow.pop %v747
  %v749 = vmul.f32 %v653, 1.442695
  %v750 = vpow.pop %v749
  %v751 = vmul.f32 %v654, 1.442695
  %v752 = vpow.pop %v751
  %v753 = vmul.f32 %v655, 1.442695
  %v754 = vpow.pop %v753
  %v755 = vmul.f32 %v656, 1.442695
  %v756 = vpow.pop %v755
  %v757 = vmul.f32 %v657, 1.442695
  %v758 = vpow.pop %v757
  %v759 = vmul.f32 %v658, 1.442695
  %v760 = vpow.pop %v759
  %v761 = vmul.f32 %v659, 1.442695
  %v762 = vpow.pop %v761
  %v763 = vmul.f32 %v660, 1.442695
  %v764 = vpow.pop %v763
  %v765 = vmul.f32 %v661, 1.442695
  %v766 = vpow.pop %v765
  %v767 = vmul.f32 %v662, 1.442695
  %v768 = vpow.pop %v767
  %v769 = vmul.f32 %v663, 1.442695
  %v770 = vpow.pop %v769
  %v771 = vmul.f32 %v664, 1.442695
  %v772 = vpow.pop %v771
  %v773 = vmul.f32 %v665, 1.442695
  %v774 = vpow.pop %v773
  %v775 = vmul.f32 %v666, 1.442695
  %v776 = vpow.pop %v775
  %v777 = vmul.f32 %v667, 1.442695
  %v778 = vpow.pop %v777
  %v779 = vmul.f32 %v668, 1.442695
  %v780 = vpow.pop %v779
  %v781 = vmul.f32 %v669, 1.442695
  %v782 = vpow.pop %v781
  %v783 = vmul.f32 %v670, 1.442695
  %v784 = vpow.pop %v783
  %v785 = vmul.f32 %v671, 1.442695
  %v786 = vpow.pop %v785
  %v787 = vmul.f32 %v672, 1.442695
  %v788 = vpow.pop %v787
  %v789 = vmul.f32 %v673, 1.442695
  %v790 = vpow.pop %v789
  %v791 = vmul.f32 %v674, 1.442695
  %v792 = vpow.pop %v791
  %v793 = vmul.f32 %v675, 1.442695
  %v794 = vpow.pop %v793
  %v795 = vmul.f32 %v676, 1.442695
  %v796 = vpow.pop %v795
  %v797 = vmul.f32 %v677, 1.442695
  %v798 = vpow.pop %v797
  %v799 = vmul.f32 %v678, 1.442695
  %v800 = vpow.pop %v799
  %v801 = vmul.f32 %v679, 1.442695
  %v802 = vpow.pop %v801
  %v803 = vmul.f32 %v680, 1.442695
  %v804 = vpow.pop %v803
  %v805 = vmul.f32 %v681, 1.442695
  %v806 = vpow.pop %v805
  %v807 = vmul.f32 %v682, 1.442695
  %v808 = vpow.pop %v807
  %v809 = vmul.f32 %v683, 1.442695
  %v810 = vpow.pop %v809
  %v811 = vmul.f32 %v684, 1.442695
  %v812 = vpow.pop %v811
  %v813 = vsub.f32 %v686, 1.0
  %v814 = vsub.f32 %v688, 1.0
  %v815 = vsub.f32 %v690, 1.0
  %v816 = vsub.f32 %v692, 1.0
  %v817 = vsub.f32 %v694, 1.0
  %v818 = vsub.f32 %v696, 1.0
  %v819 = vsub.f32 %v698, 1.0
  %v820 = vsub.f32 %v700, 1.0
  %v821 = vsub.f32 %v702, 1.0
  %v822 = vsub.f32 %v704, 1.0
  %v823 = vsub.f32 %v706, 1.0
  %v824 = vsub.f32 %v708, 1.0
  %v825 = vsub.f32 %v710, 1.0
  %v826 = vsub.f32 %v712, 1.0
  %v827 = vsub.f32 %v714, 1.0
  %v828 = vsub.f32 %v716, 1.0
  %v829 = vsub.f32 %v718, 1.0
  %v830 = vsub.f32 %v720, 1.0
  %v831 = vsub.f32 %v722, 1.0
  %v832 = vsub.f32 %v724, 1.0
  %v833 = vsub.f32 %v726, 1.0
  %v834 = vsub.f32 %v728, 1.0
  %v835 = vsub.f32 %v730, 1.0
  %v836 = vsub.f32 %v732, 1.0
  %v837 = vsub.f32 %v734, 1.0
  %v838 = vsub.f32 %v736, 1.0
  %v839 = vsub.f32 %v738, 1.0
  %v840 = vsub.f32 %v740, 1.0
  %v841 = vsub.f32 %v742, 1.0
  %v842 = vsub.f32 %v744, 1.0
  %v843 = vsub.f32 %v746, 1.0
  %v844 = vsub.f32 %v748, 1.0
  %v845 = vsub.f32 %v750, 1.0
  %v846 = vsub.f32 %v752, 1.0
  %v847 = vsub.f32 %v754, 1.0
  %v848 = vsub.f32 %v756, 1.0
  %v849 = vsub.f32 %v758, 1.0
  %v850 = vsub.f32 %v760, 1.0
  %v851 = vsub.f32 %v762, 1.0
  %v852 = vsub.f32 %v764, 1.0
  %v853 = vsub.f32 %v766, 1.0
  %v854 = vsub.f32 %v768, 1.0
  %v855 = vsub.f32 %v770, 1.0
  %v856 = vsub.f32 %v772, 1.0
  %v857 = vsub.f32 %v774, 1.0
  %v858 = vsub.f32 %v776, 1.0
  %v859 = vsub.f32 %v778, 1.0
  %v860 = vsub.f32 %v780, 1.0
  %v861 = vsub.f32 %v782, 1.0
  %v862 = vsub.f32 %v784, 1.0
  %v863 = vsub.f32 %v786, 1.0
  %v864 = vsub.f32 %v788, 1.0
  %v865 = vsub.f32 %v790, 1.0
  %v866 = vsub.f32 %v792, 1.0
  %v867 = vsub.f32 %v794, 1.0
  %v868 = vsub.f32 %v796, 1.0
  %v869 = vsub.f32 %v798, 1.0
  %v870 = vsub.f32 %v800, 1.0
  %v871 = vsub.f32 %v802, 1.0
  %v872 = vsub.f32 %v804, 1.0
  %v873 = vsub.f32 %v806, 1.0
  %v874 = vsub.f32 %v808, 1.0
  %v875 = vsub.f32 %v810, 1.0
  %v876 = vsub.f32 %v812, 1.0
  %v877 = vmul.f32 %v813, 1.6732632
  %v878 = vmul.f32 %v814, 1.6732632
  %v879 = vmul.f32 %v815, 1.6732632
  %v880 = vmul.f32 %v816, 1.6732632
  %v881 = vmul.f32 %v817, 1.6732632
  %v882 = vmul.f32 %v818, 1.6732632
  %v883 = vmul.f32 %v819, 1.6732632
  %v884 = vmul.f32 %v820, 1.6732632
  %v885 = vmul.f32 %v821, 1.6732632
  %v886 = vmul.f32 %v822, 1.6732632
  %v887 = vmul.f32 %v823, 1.6732632
  %v888 = vmul.f32 %v824, 1.6732632
  %v889 = vmul.f32 %v825, 1.6732632
  %v890 = vmul.f32 %v826, 1.6732632
  %v891 = vmul.f32 %v827, 1.6732632
  %v892 = vmul.f32 %v828, 1.6732632
  %v893 = vmul.f32 %v829, 1.6732632
  %v894 = vmul.f32 %v830, 1.6732632
  %v895 = vmul.f32 %v831, 1.6732632
  %v896 = vmul.f32 %v832, 1.6732632
  %v897 = vmul.f32 %v833, 1.6732632
  %v898 = vmul.f32 %v834, 1.6732632
  %v899 = vmul.f32 %v835, 1.6732632
  %v900 = vmul.f32 %v836, 1.6732632
  %v901 = vmul.f32 %v837, 1.6732632
  %v902 = vmul.f32 %v838, 1.6732632
  %v903 = vmul.f32 %v839, 1.6732632
  %v904 = vmul.f32 %v840, 1.6732632
  %v905 = vmul.f32 %v841, 1.6732632
  %v906 = vmul.f32 %v842, 1.6732632
  %v907 = vmul.f32 %v843, 1.6732632
  %v908 = vmul.f32 %v844, 1.6732632
  %v909 = vmul.f32 %v845, 1.6732632
  %v910 = vmul.f32 %v846, 1.6732632
  %v911 = vmul.f32 %v847, 1.6732632
  %v912 = vmul.f32 %v848, 1.6732632
  %v913 = vmul.f32 %v849, 1.6732632
  %v914 = vmul.f32 %v850, 1.6732632
  %v915 = vmul.f32 %v851, 1.6732632
  %v916 = vmul.f32 %v852, 1.6732632
  %v917 = vmul.f32 %v853, 1.6732632
  %v918 = vmul.f32 %v854, 1.6732632
  %v919 = vmul.f32 %v855, 1.6732632
  %v920 = vmul.f32 %v856, 1.6732632
  %v921 = vmul.f32 %v857, 1.6732632
  %v922 = vmul.f32 %v858, 1.6732632
  %v923 = vmul.f32 %v859, 1.6732632
  %v924 = vmul.f32 %v860, 1.6732632
  %v925 = vmul.f32 %v861, 1.6732632
  %v926 = vmul.f32 %v862, 1.6732632
  %v927 = vmul.f32 %v863, 1.6732632
  %v928 = vmul.f32 %v864, 1.6732632
  %v929 = vmul.f32 %v865, 1.6732632
  %v930 = vmul.f32 %v866, 1.6732632
  %v931 = vmul.f32 %v867, 1.6732632
  %v932 = vmul.f32 %v868, 1.6732632
  %v933 = vmul.f32 %v869, 1.6732632
  %v934 = vmul.f32 %v870, 1.6732632
  %v935 = vmul.f32 %v871, 1.6732632
  %v936 = vmul.f32 %v872, 1.6732632
  %v937 = vmul.f32 %v873, 1.6732632
  %v938 = vmul.f32 %v874, 1.6732632
  %v939 = vmul.f32 %v875, 1.6732632
  %v940 = vmul.f32 %v876, 1.6732632
  %vm941 = vcmp.gt.f32.partialorder %v367, 0.0
  %vm942 = vcmp.gt.f32.partialorder %v370, 0.0
  %vm943 = vcmp.gt.f32.partialorder %v375, 0.0
  %vm944 = vcmp.gt.f32.partialorder %v378, 0.0
  %vm945 = vcmp.gt.f32.partialorder %v383, 0.0
  %vm946 = vcmp.gt.f32.partialorder %v386, 0.0
  %vm947 = vcmp.gt.f32.partialorder %v391, 0.0
  %vm948 = vcmp.gt.f32.partialorder %v394, 0.0
  %vm949 = vcmp.gt.f32.partialorder %v399, 0.0
  %vm950 = vcmp.gt.f32.partialorder %v402, 0.0
  %vm951 = vcmp.gt.f32.partialorder %v407, 0.0
  %vm952 = vcmp.gt.f32.partialorder %v410, 0.0
  %vm953 = vcmp.gt.f32.partialorder %v415, 0.0
  %vm954 = vcmp.gt.f32.partialorder %v418, 0.0
  %vm955 = vcmp.gt.f32.partialorder %v423, 0.0
  %vm956 = vcmp.gt.f32.partialorder %v426, 0.0
  %vm957 = vcmp.gt.f32.partialorder %v431, 0.0
  %vm958 = vcmp.gt.f32.partialorder %v434, 0.0
  %vm959 = vcmp.gt.f32.partialorder %v439, 0.0
  %vm960 = vcmp.gt.f32.partialorder %v442, 0.0
  %vm961 = vcmp.gt.f32.partialorder %v447, 0.0
  %vm962 = vcmp.gt.f32.partialorder %v450, 0.0
  %vm963 = vcmp.gt.f32.partialorder %v455, 0.0
  %vm964 = vcmp.gt.f32.partialorder %v458, 0.0
  %vm965 = vcmp.gt.f32.partialorder %v463, 0.0
  %vm966 = vcmp.gt.f32.partialorder %v466, 0.0
  %vm967 = vcmp.gt.f32.partialorder %v471, 0.0
  %vm968 = vcmp.gt.f32.partialorder %v474, 0.0
  %vm969 = vcmp.gt.f32.partialorder %v479, 0.0
  %vm970 = vcmp.gt.f32.partialorder %v482, 0.0
  %vm971 = vcmp.gt.f32.partialorder %v487, 0.0
  %vm972 = vcmp.gt.f32.partialorder %v490, 0.0
  %vm973 = vcmp.gt.f32.partialorder %v495, 0.0
  %vm974 = vcmp.gt.f32.partialorder %v498, 0.0
  %vm975 = vcmp.gt.f32.partialorder %v503, 0.0
  %vm976 = vcmp.gt.f32.partialorder %v506, 0.0
  %vm977 = vcmp.gt.f32.partialorder %v511, 0.0
  %vm978 = vcmp.gt.f32.partialorder %v514, 0.0
  %vm979 = vcmp.gt.f32.partialorder %v519, 0.0
  %vm980 = vcmp.gt.f32.partialorder %v522, 0.0
  %vm981 = vcmp.gt.f32.partialorder %v527, 0.0
  %vm982 = vcmp.gt.f32.partialorder %v530, 0.0
  %vm983 = vcmp.gt.f32.partialorder %v535, 0.0
  %vm984 = vcmp.gt.f32.partialorder %v538, 0.0
  %vm985 = vcmp.gt.f32.partialorder %v543, 0.0
  %vm986 = vcmp.gt.f32.partialorder %v546, 0.0
  %vm987 = vcmp.gt.f32.partialorder %v551, 0.0
  %vm988 = vcmp.gt.f32.partialorder %v554, 0.0
  %vm989 = vcmp.gt.f32.partialorder %v559, 0.0
  %vm990 = vcmp.gt.f32.partialorder %v562, 0.0
  %vm991 = vcmp.gt.f32.partialorder %v567, 0.0
  %vm992 = vcmp.gt.f32.partialorder %v570, 0.0
  %vm993 = vcmp.gt.f32.partialorder %v575, 0.0
  %vm994 = vcmp.gt.f32.partialorder %v578, 0.0
  %vm995 = vcmp.gt.f32.partialorder %v583, 0.0
  %vm996 = vcmp.gt.f32.partialorder %v586, 0.0
  %vm997 = vcmp.gt.f32.partialorder %v591, 0.0
  %vm998 = vcmp.gt.f32.partialorder %v594, 0.0
  %vm999 = vcmp.gt.f32.partialorder %v599, 0.0
  %vm1000 = vcmp.gt.f32.partialorder %v602, 0.0
  %vm1001 = vcmp.gt.f32.partialorder %v607, 0.0
  %vm1002 = vcmp.gt.f32.partialorder %v610, 0.0
  %vm1003 = vcmp.gt.f32.partialorder %v615, 0.0
  %vm1004 = vcmp.gt.f32.partialorder %v618, 0.0
  %v1005 = vsel %vm941, %v367, %v877
  %v1006 = vsel %vm942, %v370, %v878
  %v1007 = vsel %vm943, %v375, %v879
  %v1008 = vsel %vm944, %v378, %v880
  %v1009 = vsel %vm945, %v383, %v881
  %v1010 = vsel %vm946, %v386, %v882
  %v1011 = vsel %vm947, %v391, %v883
  %v1012 = vsel %vm948, %v394, %v884
  %v1013 = vsel %vm949, %v399, %v885
  %v1014 = vsel %vm950, %v402, %v886
  %v1015 = vsel %vm951, %v407, %v887
  %v1016 = vsel %vm952, %v410, %v888
  %v1017 = vsel %vm953, %v415, %v889
  %v1018 = vsel %vm954, %v418, %v890
  %v1019 = vsel %vm955, %v423, %v891
  %v1020 = vsel %vm956, %v426, %v892
  %v1021 = vsel %vm957, %v431, %v893
  %v1022 = vsel %vm958, %v434, %v894
  %v1023 = vsel %vm959, %v439, %v895
  %v1024 = vsel %vm960, %v442, %v896
  %v1025 = vsel %vm961, %v447, %v897
  %v1026 = vsel %vm962, %v450, %v898
  %v1027 = vsel %vm963, %v455, %v899
  %v1028 = vsel %vm964, %v458, %v900
  %v1029 = vsel %vm965, %v463, %v901
  %v1030 = vsel %vm966, %v466, %v902
  %v1031 = vsel %vm967, %v471, %v903
  %v1032 = vsel %vm968, %v474, %v904
  %v1033 = vsel %vm969, %v479, %v905
  %v1034 = vsel %vm970, %v482, %v906
  %v1035 = vsel %vm971, %v487, %v907
  %v1036 = vsel %vm972, %v490, %v908
  %v1037 = vsel %vm973, %v495, %v909
  %v1038 = vsel %vm974, %v498, %v910
  %v1039 = vsel %vm975, %v503, %v911
  %v1040 = vsel %vm976, %v506, %v912
  %v1041 = vsel %vm977, %v511, %v913
  %v1042 = vsel %vm978, %v514, %v914
  %v1043 = vsel %vm979, %v519, %v915
  %v1044 = vsel %vm980, %v522, %v916
  %v1045 = vsel %vm981, %v527, %v917
  %v1046 = vsel %vm982, %v530, %v918
  %v1047 = vsel %vm983, %v535, %v919
  %v1048 = vsel %vm984, %v538, %v920
  %v1049 = vsel %vm985, %v543, %v921
  %v1050 = vsel %vm986, %v546, %v922
  %v1051 = vsel %vm987, %v551, %v923
  %v1052 = vsel %vm988, %v554, %v924
  %v1053 = vsel %vm989, %v559, %v925
  %v1054 = vsel %vm990, %v562, %v926
  %v1055 = vsel %vm991, %v567, %v927
  %v1056 = vsel %vm992, %v570, %v928
  %v1057 = vsel %vm993, %v575, %v929
  %v1058 = vsel %vm994, %v578, %v930
  %v1059 = vsel %vm995, %v583, %v931
  %v1060 = vsel %vm996, %v586, %v932
  %v1061 = vsel %vm997, %v591, %v933
  %v1062 = vsel %vm998, %v594, %v934
  %v1063 = vsel %vm999, %v599, %v935
  %v1064 = vsel %vm1000, %v602, %v936
  %v1065 = vsel %vm1001, %v607, %v937
  %v1066 = vsel %vm1002, %v610, %v938
  %v1067 = vsel %vm1003, %v615, %v939
  %v1068 = vsel %vm1004, %v618, %v940
  %v1069 = vmul.f32 %v1005, 1.050701
  %v1070 = vmul.f32 %v1006, 1.050701
  %v1071 = vmul.f32 %v1007, 1.050701
  %v1072 = vmul.f32 %v1008, 1.050701
  %v1073 = vmul.f32 %v1009, 1.050701
  %v1074 = vmul.f32 %v1010, 1.050701
  %v1075 = vmul.f32 %v1011, 1.050701
  %v1076 = vmul.f32 %v1012, 1.050701
  %v1077 = vmul.f32 %v1013, 1.050701
  %v1078 = vmul.f32 %v1014, 1.050701
  %v1079 = vmul.f32 %v1015, 1.050701
  %v1080 = vmul.f32 %v1016, 1.050701
  %v1081 = vmul.f32 %v1017, 1.050701
  %v1082 = vmul.f32 %v1018, 1.050701
  %v1083 = vmul.f32 %v1019, 1.050701
  %v1084 = vmul.f32 %v1020, 1.050701
  %v1085 = vmul.f32 %v1021, 1.050701
  %v1086 = vmul.f32 %v1022, 1.050701
  %v1087 = vmul.f32 %v1023, 1.050701
  %v1088 = vmul.f32 %v1024, 1.050701
  %v1089 = vmul.f32 %v1025, 1.050701
  %v1090 = vmul.f32 %v1026, 1.050701
  %v1091 = vmul.f32 %v1027, 1.050701
  %v1092 = vmul.f32 %v1028, 1.050701
  %v1093 = vmul.f32 %v1029, 1.050701
  %v1094 = vmul.f32 %v1030, 1.050701
  %v1095 = vmul.f32 %v1031, 1.050701
  %v1096 = vmul.f32 %v1032, 1.050701
  %v1097 = vmul.f32 %v1033, 1.050701
  %v1098 = vmul.f32 %v1034, 1.050701
  %v1099 = vmul.f32 %v1035, 1.050701
  %v1100 = vmul.f32 %v1036, 1.050701
  %v1101 = vmul.f32 %v1037, 1.050701
  %v1102 = vmul.f32 %v1038, 1.050701
  %v1103 = vmul.f32 %v1039, 1.050701
  %v1104 = vmul.f32 %v1040, 1.050701
  %v1105 = vmul.f32 %v1041, 1.050701
  %v1106 = vmul.f32 %v1042, 1.050701
  %v1107 = vmul.f32 %v1043, 1.050701
  %v1108 = vmul.f32 %v1044, 1.050701
  %v1109 = vmul.f32 %v1045, 1.050701
  %v1110 = vmul.f32 %v1046, 1.050701
  %v1111 = vmul.f32 %v1047, 1.050701
  %v1112 = vmul.f32 %v1048, 1.050701
  %v1113 = vmul.f32 %v1049, 1.050701
  %v1114 = vmul.f32 %v1050, 1.050701
  %v1115 = vmul.f32 %v1051, 1.050701
  %v1116 = vmul.f32 %v1052, 1.050701
  %v1117 = vmul.f32 %v1053, 1.050701
  %v1118 = vmul.f32 %v1054, 1.050701
  %v1119 = vmul.f32 %v1055, 1.050701
  %v1120 = vmul.f32 %v1056, 1.050701
  %v1121 = vmul.f32 %v1057, 1.050701
  %v1122 = vmul.f32 %v1058, 1.050701
  %v1123 = vmul.f32 %v1059, 1.050701
  %v1124 = vmul.f32 %v1060, 1.050701
  %v1125 = vmul.f32 %v1061, 1.050701
  %v1126 = vmul.f32 %v1062, 1.050701
  %v1127 = vmul.f32 %v1063, 1.050701
  %v1128 = vmul.f32 %v1064, 1.050701
  %v1129 = vmul.f32 %v1065, 1.050701
  %v1130 = vmul.f32 %v1066, 1.050701
  %v1131 = vmul.f32 %v1067, 1.050701
  %v1132 = vmul.f32 %v1068, 1.050701
  %v1133 = vpack.c.bf16 %v1070, %v1069
  %v1134 = vpack.c.bf16 %v1072, %v1071
  %v1135 = vpack.c.bf16 %v1074, %v1073
  %v1136 = vpack.c.bf16 %v1076, %v1075
  %v1137 = vpack.c.bf16 %v1078, %v1077
  %v1138 = vpack.c.bf16 %v1080, %v1079
  %v1139 = vpack.c.bf16 %v1082, %v1081
  %v1140 = vpack.c.bf16 %v1084, %v1083
  %v1141 = vpack.c.bf16 %v1086, %v1085
  %v1142 = vpack.c.bf16 %v1088, %v1087
  %v1143 = vpack.c.bf16 %v1090, %v1089
  %v1144 = vpack.c.bf16 %v1092, %v1091
  %v1145 = vpack.c.bf16 %v1094, %v1093
  %v1146 = vpack.c.bf16 %v1096, %v1095
  %v1147 = vpack.c.bf16 %v1098, %v1097
  %v1148 = vpack.c.bf16 %v1100, %v1099
  %v1149 = vpack.c.bf16 %v1102, %v1101
  %v1150 = vpack.c.bf16 %v1104, %v1103
  %v1151 = vpack.c.bf16 %v1106, %v1105
  %v1152 = vpack.c.bf16 %v1108, %v1107
  %v1153 = vpack.c.bf16 %v1110, %v1109
  %v1154 = vpack.c.bf16 %v1112, %v1111
  %v1155 = vpack.c.bf16 %v1114, %v1113
  %v1156 = vpack.c.bf16 %v1116, %v1115
  %v1157 = vpack.c.bf16 %v1118, %v1117
  %v1158 = vpack.c.bf16 %v1120, %v1119
  %v1159 = vpack.c.bf16 %v1122, %v1121
  %v1160 = vpack.c.bf16 %v1124, %v1123
  %v1161 = vpack.c.bf16 %v1126, %v1125
  %v1162 = vpack.c.bf16 %v1128, %v1127
  %v1163 = vpack.c.bf16 %v1130, %v1129
  %v1164 = vpack.c.bf16 %v1132, %v1131
  %v1197 = vunpack.c.l.b16 %v1133
  %v1198 = vunpack.c.h.b16 %v1133
  %v1199 = vunpack.c.l.b16 %v1134
  %v1200 = vunpack.c.h.b16 %v1134
  %v1201 = vunpack.c.l.b16 %v1135
  %v1202 = vunpack.c.h.b16 %v1135
  %v1203 = vunpack.c.l.b16 %v1136
  %v1204 = vunpack.c.h.b16 %v1136
  %v1205 = vunpack.c.l.b16 %v1137
  %v1206 = vunpack.c.h.b16 %v1137
  %v1207 = vunpack.c.l.b16 %v1138
  %v1208 = vunpack.c.h.b16 %v1138
  %v1209 = vunpack.c.l.b16 %v1139
  %v1210 = vunpack.c.h.b16 %v1139
  %v1211 = vunpack.c.l.b16 %v1140
  %v1212 = vunpack.c.h.b16 %v1140
  %v1213 = vunpack.c.l.b16 %v1141
  %v1214 = vunpack.c.h.b16 %v1141
  %v1215 = vunpack.c.l.b16 %v1142
  %v1216 = vunpack.c.h.b16 %v1142
  %v1217 = vunpack.c.l.b16 %v1143
  %v1218 = vunpack.c.h.b16 %v1143
  %v1219 = vunpack.c.l.b16 %v1144
  %v1220 = vunpack.c.h.b16 %v1144
  %v1221 = vunpack.c.l.b16 %v1145
  %v1222 = vunpack.c.h.b16 %v1145
  %v1223 = vunpack.c.l.b16 %v1146
  %v1224 = vunpack.c.h.b16 %v1146
  %v1225 = vunpack.c.l.b16 %v1147
  %v1226 = vunpack.c.h.b16 %v1147
  %v1227 = vunpack.c.l.b16 %v1148
  %v1228 = vunpack.c.h.b16 %v1148
  %v1229 = vunpack.c.l.b16 %v1149
  %v1230 = vunpack.c.h.b16 %v1149
  %v1231 = vunpack.c.l.b16 %v1150
  %v1232 = vunpack.c.h.b16 %v1150
  %v1233 = vunpack.c.l.b16 %v1151
  %v1234 = vunpack.c.h.b16 %v1151
  %v1235 = vunpack.c.l.b16 %v1152
  %v1236 = vunpack.c.h.b16 %v1152
  %v1237 = vunpack.c.l.b16 %v1153
  %v1238 = vunpack.c.h.b16 %v1153
  %v1239 = vunpack.c.l.b16 %v1154
  %v1240 = vunpack.c.h.b16 %v1154
  %v1241 = vunpack.c.l.b16 %v1155
  %v1242 = vunpack.c.h.b16 %v1155
  %v1243 = vunpack.c.l.b16 %v1156
  %v1244 = vunpack.c.h.b16 %v1156
  %v1245 = vunpack.c.l.b16 %v1157
  %v1246 = vunpack.c.h.b16 %v1157
  %v1247 = vunpack.c.l.b16 %v1158
  %v1248 = vunpack.c.h.b16 %v1158
  %v1249 = vunpack.c.l.b16 %v1159
  %v1250 = vunpack.c.h.b16 %v1159
  %v1251 = vunpack.c.l.b16 %v1160
  %v1252 = vunpack.c.h.b16 %v1160
  %v1253 = vunpack.c.l.b16 %v1161
  %v1254 = vunpack.c.h.b16 %v1161
  %v1255 = vunpack.c.l.b16 %v1162
  %v1256 = vunpack.c.h.b16 %v1162
  %v1257 = vunpack.c.l.b16 %v1163
  %v1258 = vunpack.c.h.b16 %v1163
  %v1259 = vunpack.c.l.b16 %v1164
  %v1260 = vunpack.c.h.b16 %v1164
  %v1261 = vpack.c.b16 %v1197, %v1197
  %v1262 = vpack.c.b16 %v1198, %v1198
  %v1263 = vpack.c.b16 %v1199, %v1199
  %v1264 = vpack.c.b16 %v1200, %v1200
  %v1265 = vpack.c.b16 %v1201, %v1201
  %v1266 = vpack.c.b16 %v1202, %v1202
  %v1267 = vpack.c.b16 %v1203, %v1203
  %v1268 = vpack.c.b16 %v1204, %v1204
  %v1269 = vpack.c.b16 %v1205, %v1205
  %v1270 = vpack.c.b16 %v1206, %v1206
  %v1271 = vpack.c.b16 %v1207, %v1207
  %v1272 = vpack.c.b16 %v1208, %v1208
  %v1273 = vpack.c.b16 %v1209, %v1209
  %v1274 = vpack.c.b16 %v1210, %v1210
  %v1275 = vpack.c.b16 %v1211, %v1211
  %v1276 = vpack.c.b16 %v1212, %v1212
  %v1277 = vpack.c.b16 %v1213, %v1213
  %v1278 = vpack.c.b16 %v1214, %v1214
  %v1279 = vpack.c.b16 %v1215, %v1215
  %v1280 = vpack.c.b16 %v1216, %v1216
  %v1281 = vpack.c.b16 %v1217, %v1217
  %v1282 = vpack.c.b16 %v1218, %v1218
  %v1283 = vpack.c.b16 %v1219, %v1219
  %v1284 = vpack.c.b16 %v1220, %v1220
  %v1285 = vpack.c.b16 %v1221, %v1221
  %v1286 = vpack.c.b16 %v1222, %v1222
  %v1287 = vpack.c.b16 %v1223, %v1223
  %v1288 = vpack.c.b16 %v1224, %v1224
  %v1289 = vpack.c.b16 %v1225, %v1225
  %v1290 = vpack.c.b16 %v1226, %v1226
  %v1291 = vpack.c.b16 %v1227, %v1227
  %v1292 = vpack.c.b16 %v1228, %v1228
  %v1293 = vpack.c.b16 %v1229, %v1229
  %v1294 = vpack.c.b16 %v1230, %v1230
  %v1295 = vpack.c.b16 %v1231, %v1231
  %v1296 = vpack.c.b16 %v1232, %v1232
  %v1297 = vpack.c.b16 %v1233, %v1233
  %v1298 = vpack.c.b16 %v1234, %v1234
  %v1299 = vpack.c.b16 %v1235, %v1235
  %v1300 = vpack.c.b16 %v1236, %v1236
  %v1301 = vpack.c.b16 %v1237, %v1237
  %v1302 = vpack.c.b16 %v1238, %v1238
  %v1303 = vpack.c.b16 %v1239, %v1239
  %v1304 = vpack.c.b16 %v1240, %v1240
  %v1305 = vpack.c.b16 %v1241, %v1241
  %v1306 = vpack.c.b16 %v1242, %v1242
  %v1307 = vpack.c.b16 %v1243, %v1243
  %v1308 = vpack.c.b16 %v1244, %v1244
  %v1309 = vpack.c.b16 %v1245, %v1245
  %v1310 = vpack.c.b16 %v1246, %v1246
  %v1311 = vpack.c.b16 %v1247, %v1247
  %v1312 = vpack.c.b16 %v1248, %v1248
  %v1313 = vpack.c.b16 %v1249, %v1249
  %v1314 = vpack.c.b16 %v1250, %v1250
  %v1315 = vpack.c.b16 %v1251, %v1251
  %v1316 = vpack.c.b16 %v1252, %v1252
  %v1317 = vpack.c.b16 %v1253, %v1253
  %v1318 = vpack.c.b16 %v1254, %v1254
  %v1319 = vpack.c.b16 %v1255, %v1255
  %v1320 = vpack.c.b16 %v1256, %v1256
  %v1321 = vpack.c.b16 %v1257, %v1257
  %v1322 = vpack.c.b16 %v1258, %v1258
  %v1323 = vpack.c.b16 %v1259, %v1259
  %v1324 = vpack.c.b16 %v1260, %v1260
  %1389 = vst [vmem:[%s2] sm:$0xf] %v1261
  %1390 = vst [vmem:[%s2 + $0x4] sm:$0xf] %v1262
  %1391 = vst [vmem:[%s2 + $0x8] sm:$0xf] %v1263
  %1392 = vst [vmem:[%s2 + $0xc] sm:$0xf] %v1264
  %1393 = vst [vmem:[%s2 + $0x10] sm:$0xf] %v1265
  %1394 = vst [vmem:[%s2 + $0x14] sm:$0xf] %v1266
  %1395 = vst [vmem:[%s2 + $0x18] sm:$0xf] %v1267
  %1396 = vst [vmem:[%s2 + $0x1c] sm:$0xf] %v1268
  %1397 = vst [vmem:[%s2 + $0x20] sm:$0xf] %v1269
  %1398 = vst [vmem:[%s2 + $0x24] sm:$0xf] %v1270
  %1399 = vst [vmem:[%s2 + $0x28] sm:$0xf] %v1271
  %1400 = vst [vmem:[%s2 + $0x2c] sm:$0xf] %v1272
  %1401 = vst [vmem:[%s2 + $0x30] sm:$0xf] %v1273
  %1402 = vst [vmem:[%s2 + $0x34] sm:$0xf] %v1274
  %1403 = vst [vmem:[%s2 + $0x38] sm:$0xf] %v1275
  %1404 = vst [vmem:[%s2 + $0x3c] sm:$0xf] %v1276
  %1405 = vst [vmem:[%s2 + $0x40] sm:$0xf] %v1277
  %1406 = vst [vmem:[%s2 + $0x44] sm:$0xf] %v1278
  %1407 = vst [vmem:[%s2 + $0x48] sm:$0xf] %v1279
  %1408 = vst [vmem:[%s2 + $0x4c] sm:$0xf] %v1280
  %1409 = vst [vmem:[%s2 + $0x50] sm:$0xf] %v1281
  %1410 = vst [vmem:[%s2 + $0x54] sm:$0xf] %v1282
  %1411 = vst [vmem:[%s2 + $0x58] sm:$0xf] %v1283
  %1412 = vst [vmem:[%s2 + $0x5c] sm:$0xf] %v1284
  %1413 = vst [vmem:[%s2 + $0x60] sm:$0xf] %v1285
  %1414 = vst [vmem:[%s2 + $0x64] sm:$0xf] %v1286
  %1415 = vst [vmem:[%s2 + $0x68] sm:$0xf] %v1287
  %1416 = vst [vmem:[%s2 + $0x6c] sm:$0xf] %v1288
  %1417 = vst [vmem:[%s2 + $0x70] sm:$0xf] %v1289
  %1418 = vst [vmem:[%s2 + $0x74] sm:$0xf] %v1290
  %1419 = vst [vmem:[%s2 + $0x78] sm:$0xf] %v1291
  %1420 = vst [vmem:[%s2 + $0x7c] sm:$0xf] %v1292
  %1421 = vst [vmem:[%s2 + $0x80] sm:$0xf] %v1293
  %1422 = vst [vmem:[%s2 + $0x84] sm:$0xf] %v1294
  %1423 = vst [vmem:[%s2 + $0x88] sm:$0xf] %v1295
  %1424 = vst [vmem:[%s2 + $0x8c] sm:$0xf] %v1296
  %1425 = vst [vmem:[%s2 + $0x90] sm:$0xf] %v1297
  %1426 = vst [vmem:[%s2 + $0x94] sm:$0xf] %v1298
  %1427 = vst [vmem:[%s2 + $0x98] sm:$0xf] %v1299
  %1428 = vst [vmem:[%s2 + $0x9c] sm:$0xf] %v1300
  %1429 = vst [vmem:[%s2 + $0xa0] sm:$0xf] %v1301
  %1430 = vst [vmem:[%s2 + $0xa4] sm:$0xf] %v1302
  %1431 = vst [vmem:[%s2 + $0xa8] sm:$0xf] %v1303
  %1432 = vst [vmem:[%s2 + $0xac] sm:$0xf] %v1304
  %1433 = vst [vmem:[%s2 + $0xb0] sm:$0xf] %v1305
  %1434 = vst [vmem:[%s2 + $0xb4] sm:$0xf] %v1306
  %1435 = vst [vmem:[%s2 + $0xb8] sm:$0xf] %v1307
  %1436 = vst [vmem:[%s2 + $0xbc] sm:$0xf] %v1308
  %1437 = vst [vmem:[%s2 + $0xc0] sm:$0xf] %v1309
  %1438 = vst [vmem:[%s2 + $0xc4] sm:$0xf] %v1310
  %1439 = vst [vmem:[%s2 + $0xc8] sm:$0xf] %v1311
  %1440 = vst [vmem:[%s2 + $0xcc] sm:$0xf] %v1312
  %1441 = vst [vmem:[%s2 + $0xd0] sm:$0xf] %v1313
  %1442 = vst [vmem:[%s2 + $0xd4] sm:$0xf] %v1314
  %1443 = vst [vmem:[%s2 + $0xd8] sm:$0xf] %v1315
  %1444 = vst [vmem:[%s2 + $0xdc] sm:$0xf] %v1316
  %1445 = vst [vmem:[%s2 + $0xe0] sm:$0xf] %v1317
  %1446 = vst [vmem:[%s2 + $0xe4] sm:$0xf] %v1318
  %1447 = vst [vmem:[%s2 + $0xe8] sm:$0xf] %v1319
  %1448 = vst [vmem:[%s2 + $0xec] sm:$0xf] %v1320
  %1449 = vst [vmem:[%s2 + $0xf0] sm:$0xf] %v1321
  %1450 = vst [vmem:[%s2 + $0xf4] sm:$0xf] %v1322
  %1451 = vst [vmem:[%s2 + $0xf8] sm:$0xf] %v1323
  %1452 = vst [vmem:[%s2 + $0xfc] sm:$0xf] %v1324
  // Predicated region
  $region10: #{d_stage2_forward.6} parent=0 // pred_check
    _
  $region11: #{d_stage2_forward.6} parent=0 // pred_check_branch
    %1454 = sbr.rel (0) target = $region13
  $region12: #{d_stage2_forward.6} parent=0 // pred_region
    _
  $region13: #{d_stage2_forward.6} parent=0 // pred_fallthru
    _
  // Predicated region
  $region14: #{d_stage2_forward.6} parent=0 // pred_check
    _
  $region15: #{d_stage2_forward.6} parent=0 // pred_check_branch
    %1456 = sbr.rel (0) target = $region17
  $region16: #{d_stage2_forward.6} parent=0 // pred_region
    _
  $region17: #{d_stage2_forward.6} parent=0 // pred_fallthru
    _

// kernel: d_stage2_forward.7
$region0: #{d_stage2_forward.7}
  #allocation0 [shape = 'u32[]', space=smem, size = 0x4, offset = 0x4, fixed_abs, tag = 'smem constant byte address 0x4 - core index']
  #allocation1 [shape = 'u32[144,128]{1,0:T(1,128)}', space=vmem, size = 0x12000, scoped, tag = 'internal scratch']
  %s0 = inlined_call_operand.vmem [shape: bf16[128,256], index: 0, kind: input, shape index: {}]
  %s1 = inlined_call_operand.vmem [shape: bf16[256,128], index: 1, kind: input, shape index: {}]
  %s2 = inlined_call_operand.vmem [shape: bf16[128,128], index: 2, kind: output, shape index: {}]
  %s3 = sld [smem:[#allocation0]]
  $region18: #{d_stage2_forward.7} parent=0
    _
  %s5 = ssub.s32 1, %s3
  %s6 = scalar_select 0, %s5, %s3
  // Predicated region
  $region2: #{d_stage2_forward.7} parent=0 // pred_check
    _
  $region3: #{d_stage2_forward.7} parent=0 // pred_check_branch
    %8 = sbr.rel (0) target = $region5
  $region4: #{d_stage2_forward.7} parent=0 // pred_region
    _
  $region5: #{d_stage2_forward.7} parent=0 // pred_fallthru
    _
  // Predicated region
  $region6: #{d_stage2_forward.7} parent=0 // pred_check
    _
  $region7: #{d_stage2_forward.7} parent=0 // pred_check_branch
    %10 = sbr.rel (0) target = $region9
  $region8: #{d_stage2_forward.7} parent=0 // pred_region
    _
  $region9: #{d_stage2_forward.7} parent=0 // pred_fallthru
    _
  %v12 = vld [vmem:[%s0] sm:$0xff]
  %v13 = vld [vmem:[%s0 + $0x8] sm:$0xff]
  %v14 = vld [vmem:[%s0 + $0x10] sm:$0xff]
  %v15 = vld [vmem:[%s0 + $0x18] sm:$0xff]
  %v16 = vld [vmem:[%s0 + $0x20] sm:$0xff]
  %v17 = vld [vmem:[%s0 + $0x28] sm:$0xff]
  %v18 = vld [vmem:[%s0 + $0x30] sm:$0xff]
  %v19 = vld [vmem:[%s0 + $0x38] sm:$0xff]
  %v20 = vld [vmem:[%s0 + $0x40] sm:$0xff]
  %v21 = vld [vmem:[%s0 + $0x48] sm:$0xff]
  %v22 = vld [vmem:[%s0 + $0x50] sm:$0xff]
  %v23 = vld [vmem:[%s0 + $0x58] sm:$0xff]
  %v24 = vld [vmem:[%s0 + $0x60] sm:$0xff]
  %v25 = vld [vmem:[%s0 + $0x68] sm:$0xff]
  %v26 = vld [vmem:[%s0 + $0x70] sm:$0xff]
  %v27 = vld [vmem:[%s0 + $0x78] sm:$0xff]
  %v28 = vld [vmem:[%s1] sm:$0xf]
  %v29 = vld [vmem:[%s1 + $0x4] sm:$0xf]
  %v30 = vld [vmem:[%s1 + $0x8] sm:$0xf]
  %v31 = vld [vmem:[%s1 + $0xc] sm:$0xf]
  %v32 = vld [vmem:[%s1 + $0x10] sm:$0xf]
  %v33 = vld [vmem:[%s1 + $0x14] sm:$0xf]
  %v34 = vld [vmem:[%s1 + $0x18] sm:$0xf]
  %v35 = vld [vmem:[%s1 + $0x1c] sm:$0xf]
  %v36 = vld [vmem:[%s1 + $0x20] sm:$0xf]
  %v37 = vld [vmem:[%s1 + $0x24] sm:$0xf]
  %v38 = vld [vmem:[%s1 + $0x28] sm:$0xf]
  %v39 = vld [vmem:[%s1 + $0x2c] sm:$0xf]
  %v40 = vld [vmem:[%s1 + $0x30] sm:$0xf]
  %v41 = vld [vmem:[%s1 + $0x34] sm:$0xf]
  %v42 = vld [vmem:[%s1 + $0x38] sm:$0xf]
  %v43 = vld [vmem:[%s1 + $0x3c] sm:$0xf]
  %v44 = vld [vmem:[%s1 + $0x40] sm:$0xf]
  %v45 = vld [vmem:[%s1 + $0x44] sm:$0xf]
  %v46 = vld [vmem:[%s1 + $0x48] sm:$0xf]
  %v47 = vld [vmem:[%s1 + $0x4c] sm:$0xf]
  %v48 = vld [vmem:[%s1 + $0x50] sm:$0xf]
  %v49 = vld [vmem:[%s1 + $0x54] sm:$0xf]
  %v50 = vld [vmem:[%s1 + $0x58] sm:$0xf]
  %v51 = vld [vmem:[%s1 + $0x5c] sm:$0xf]
  %v52 = vld [vmem:[%s1 + $0x60] sm:$0xf]
  %v53 = vld [vmem:[%s1 + $0x64] sm:$0xf]
  %v54 = vld [vmem:[%s1 + $0x68] sm:$0xf]
  %v55 = vld [vmem:[%s1 + $0x6c] sm:$0xf]
  %v56 = vld [vmem:[%s1 + $0x70] sm:$0xf]
  %v57 = vld [vmem:[%s1 + $0x74] sm:$0xf]
  %v58 = vld [vmem:[%s1 + $0x78] sm:$0xf]
  %v59 = vld [vmem:[%s1 + $0x7c] sm:$0xf]
  %v76 = vunpack.c.l.b16 %v12
  %v77 = vunpack.c.h.b16 %v12
  %v78 = vunpack.c.l.b16 %v13
  %v79 = vunpack.c.h.b16 %v13
  %v80 = vunpack.c.l.b16 %v14
  %v81 = vunpack.c.h.b16 %v14
  %v82 = vunpack.c.l.b16 %v15
  %v83 = vunpack.c.h.b16 %v15
  %v84 = vunpack.c.l.b16 %v16
  %v85 = vunpack.c.h.b16 %v16
  %v86 = vunpack.c.l.b16 %v17
  %v87 = vunpack.c.h.b16 %v17
  %v88 = vunpack.c.l.b16 %v18
  %v89 = vunpack.c.h.b16 %v18
  %v90 = vunpack.c.l.b16 %v19
  %v91 = vunpack.c.h.b16 %v19
  %v92 = vunpack.c.l.b16 %v20
  %v93 = vunpack.c.h.b16 %v20
  %v94 = vunpack.c.l.b16 %v21
  %v95 = vunpack.c.h.b16 %v21
  %v96 = vunpack.c.l.b16 %v22
  %v97 = vunpack.c.h.b16 %v22
  %v98 = vunpack.c.l.b16 %v23
  %v99 = vunpack.c.h.b16 %v23
  %v100 = vunpack.c.l.b16 %v24
  %v101 = vunpack.c.h.b16 %v24
  %v102 = vunpack.c.l.b16 %v25
  %v103 = vunpack.c.h.b16 %v25
  %v104 = vunpack.c.l.b16 %v26
  %v105 = vunpack.c.h.b16 %v26
  %v106 = vunpack.c.l.b16 %v27
  %v107 = vunpack.c.h.b16 %v27
  %v108 = vpack.c.b16 %v78, %v76
  %v109 = vpack.c.b16 %v79, %v77
  %v110 = vpack.c.b16 %v82, %v80
  %v111 = vpack.c.b16 %v83, %v81
  %v112 = vpack.c.b16 %v86, %v84
  %v113 = vpack.c.b16 %v87, %v85
  %v114 = vpack.c.b16 %v90, %v88
  %v115 = vpack.c.b16 %v91, %v89
  %v116 = vpack.c.b16 %v94, %v92
  %v117 = vpack.c.b16 %v95, %v93
  %v118 = vpack.c.b16 %v98, %v96
  %v119 = vpack.c.b16 %v99, %v97
  %v120 = vpack.c.b16 %v102, %v100
  %v121 = vpack.c.b16 %v103, %v101
  %v122 = vpack.c.b16 %v106, %v104
  %v123 = vpack.c.b16 %v107, %v105
  %v172 = vunpack.c.l.b16 %v28
  %v173 = vunpack.c.l.b16 %v29
  %v174 = vunpack.c.l.b16 %v30
  %v175 = vunpack.c.l.b16 %v31
  %v176 = vunpack.c.l.b16 %v32
  %v177 = vunpack.c.l.b16 %v33
  %v178 = vunpack.c.l.b16 %v34
  %v179 = vunpack.c.l.b16 %v35
  %v180 = vunpack.c.l.b16 %v36
  %v181 = vunpack.c.l.b16 %v37
  %v182 = vunpack.c.l.b16 %v38
  %v183 = vunpack.c.l.b16 %v39
  %v184 = vunpack.c.l.b16 %v40
  %v185 = vunpack.c.l.b16 %v41
  %v186 = vunpack.c.l.b16 %v42
  %v187 = vunpack.c.l.b16 %v43
  %v188 = vunpack.c.l.b16 %v44
  %v189 = vunpack.c.l.b16 %v45
  %v190 = vunpack.c.l.b16 %v46
  %v191 = vunpack.c.l.b16 %v47
  %v192 = vunpack.c.l.b16 %v48
  %v193 = vunpack.c.l.b16 %v49
  %v194 = vunpack.c.l.b16 %v50
  %v195 = vunpack.c.l.b16 %v51
  %v196 = vunpack.c.l.b16 %v52
  %v197 = vunpack.c.l.b16 %v53
  %v198 = vunpack.c.l.b16 %v54
  %v199 = vunpack.c.l.b16 %v55
  %v200 = vunpack.c.l.b16 %v56
  %v201 = vunpack.c.l.b16 %v57
  %v202 = vunpack.c.l.b16 %v58
  %v203 = vunpack.c.l.b16 %v59
  %v204 = vpack.c.b16 %v173, %v172
  %v205 = vpack.c.b16 %v175, %v174
  %v206 = vpack.c.b16 %v177, %v176
  %v207 = vpack.c.b16 %v179, %v178
  %v208 = vpack.c.b16 %v181, %v180
  %v209 = vpack.c.b16 %v183, %v182
  %v210 = vpack.c.b16 %v185, %v184
  %v211 = vpack.c.b16 %v187, %v186
  %v212 = vpack.c.b16 %v189, %v188
  %v213 = vpack.c.b16 %v191, %v190
  %v214 = vpack.c.b16 %v193, %v192
  %v215 = vpack.c.b16 %v195, %v194
  %v216 = vpack.c.b16 %v197, %v196
  %v217 = vpack.c.b16 %v199, %v198
  %v218 = vpack.c.b16 %v201, %v200
  %v219 = vpack.c.b16 %v203, %v202
  %236 = vmatprep.subr.bf16.mxu0 0
  %237 = vmatpush1.bf16.msra.mxu0 %v204
  %238 = vmatprep.subr.bf16.mxu0 0
  %239 = vmatpush1.bf16.msra.mxu0 %v205
  %240 = vmatprep.subr.bf16.mxu0 0
  %241 = vmatpush1.bf16.msra.mxu0 %v206
  %242 = vmatprep.subr.bf16.mxu0 0
  %243 = vmatpush1.bf16.msra.mxu0 %v207
  %244 = vmatprep.subr.bf16.mxu0 0
  %245 = vmatpush1.bf16.msra.mxu0 %v208
  %246 = vmatprep.subr.bf16.mxu0 0
  %247 = vmatpush1.bf16.msra.mxu0 %v209
  %248 = vmatprep.subr.bf16.mxu0 0
  %249 = vmatpush1.bf16.msra.mxu0 %v210
  %250 = vmatprep.subr.bf16.mxu0 0
  %251 = vmatpush1.bf16.msra.mxu0 %v211
  %252 = vmatprep.subr.bf16.mxu0 0
  %253 = vmatpush1.bf16.msra.mxu0 %v212
  %254 = vmatprep.subr.bf16.mxu0 0
  %255 = vmatpush1.bf16.msra.mxu0 %v213
  %256 = vmatprep.subr.bf16.mxu0 0
  %257 = vmatpush1.bf16.msra.mxu0 %v214
  %258 = vmatprep.subr.bf16.mxu0 0
  %259 = vmatpush1.bf16.msra.mxu0 %v215
  %260 = vmatprep.subr.bf16.mxu0 0
  %261 = vmatpush1.bf16.msra.mxu0 %v216
  %262 = vmatprep.subr.bf16.mxu0 0
  %263 = vmatpush1.bf16.msra.mxu0 %v217
  %264 = vmatprep.subr.bf16.mxu0 0
  %265 = vmatpush1.bf16.msra.mxu0 %v218
  %266 = vmatprep.subr.bf16.mxu0 0
  %267 = vmatpush1.bf16.msra.mxu0 %v219
  %268 = vmatprep.mubr.bf16.mxu0 %v109
  %269 = vmatmul.mubr.bf16.gmra.mrb[0].mxu0 %v108
  %v270 = vpop.f32.mrb[0].mxu0
  %v271 = vadd.f32 0.0, %v270
  %v272 = vpop.f32.mrb[0].mxu0
  %v273 = vpop.f32.mrb[0].mxu0
  %v274 = vadd.f32 0.0, %v273
  %v275 = vpop.f32.mrb[0].mxu0
  %276 = vmatprep.mubr.bf16.mxu0 %v111
  %277 = vmatmul.mubr.bf16.gmra.mrb[0].mxu0 %v110
  %v278 = vpop.f32.mrb[0].mxu0
  %v279 = vadd.f32 0.0, %v278
  %v280 = vpop.f32.mrb[0].mxu0
  %v281 = vpop.f32.mrb[0].mxu0
  %v282 = vadd.f32 0.0, %v281
  %v283 = vpop.f32.mrb[0].mxu0
  %284 = vmatprep.mubr.bf16.mxu0 %v113
  %285 = vmatmul.mubr.bf16.gmra.mrb[0].mxu0 %v112
  %v286 = vpop.f32.mrb[0].mxu0
  %v287 = vadd.f32 0.0, %v286
  %v288 = vpop.f32.mrb[0].mxu0
  %v289 = vpop.f32.mrb[0].mxu0
  %v290 = vadd.f32 0.0, %v289
  %v291 = vpop.f32.mrb[0].mxu0
  %292 = vmatprep.mubr.bf16.mxu0 %v115
  %293 = vmatmul.mubr.bf16.gmra.mrb[0].mxu0 %v114
  %v294 = vpop.f32.mrb[0].mxu0
  %v295 = vadd.f32 0.0, %v294
  %v296 = vpop.f32.mrb[0].mxu0
  %v297 = vpop.f32.mrb[0].mxu0
  %v298 = vadd.f32 0.0, %v297
  %v299 = vpop.f32.mrb[0].mxu0
  %300 = vmatprep.mubr.bf16.mxu0 %v117
  %301 = vmatmul.mubr.bf16.gmra.mrb[0].mxu0 %v116
  %v302 = vpop.f32.mrb[0].mxu0
  %v303 = vadd.f32 0.0, %v302
  %v304 = vpop.f32.mrb[0].mxu0
  %v305 = vpop.f32.mrb[0].mxu0
  %v306 = vadd.f32 0.0, %v305
  %v307 = vpop.f32.mrb[0].mxu0
  %308 = vmatprep.mubr.bf16.mxu0 %v119
  %309 = vmatmul.mubr.bf16.gmra.mrb[0].mxu0 %v118
  %v310 = vpop.f32.mrb[0].mxu0
  %v311 = vadd.f32 0.0, %v310
  %v312 = vpop.f32.mrb[0].mxu0
  %v313 = vpop.f32.mrb[0].mxu0
  %v314 = vadd.f32 0.0, %v313
  %v315 = vpop.f32.mrb[0].mxu0
  %316 = vmatprep.mubr.bf16.mxu0 %v121
  %317 = vmatmul.mubr.bf16.gmra.mrb[0].mxu0 %v120
  %v318 = vpop.f32.mrb[0].mxu0
  %v319 = vadd.f32 0.0, %v318
  %v320 = vpop.f32.mrb[0].mxu0
  %v321 = vpop.f32.mrb[0].mxu0
  %v322 = vadd.f32 0.0, %v321
  %v323 = vpop.f32.mrb[0].mxu0
  %324 = vmatprep.mubr.bf16.mxu0 %v123
  %325 = vmatmul.mubr.bf16.gmra.mrb[0].mxu0 %v122
  %v326 = vpop.f32.mrb[0].mxu0
  %v327 = vadd.f32 0.0, %v326
  %v328 = vpop.f32.mrb[0].mxu0
  %v329 = vpop.f32.mrb[0].mxu0
  %v330 = vadd.f32 0.0, %v329
  %v331 = vpop.f32.mrb[0].mxu0
  %332 = vdwg.mxu0
  %v333 = vmin.f32 %v271, 0.0
  %v334 = vmin.f32 %v274, 0.0
  %v335 = vmin.f32 %v279, 0.0
  %v336 = vmin.f32 %v282, 0.0
  %v337 = vmin.f32 %v287, 0.0
  %v338 = vmin.f32 %v290, 0.0
  %v339 = vmin.f32 %v295, 0.0
  %v340 = vmin.f32 %v298, 0.0
  %v341 = vmin.f32 %v303, 0.0
  %v342 = vmin.f32 %v306, 0.0
  %v343 = vmin.f32 %v311, 0.0
  %v344 = vmin.f32 %v314, 0.0
  %v345 = vmin.f32 %v319, 0.0
  %v346 = vmin.f32 %v322, 0.0
  %v347 = vmin.f32 %v327, 0.0
  %v348 = vmin.f32 %v330, 0.0
  %v349 = vmul.f32 %v333, 1.442695
  %v350 = vpow.pop %v349
  %v351 = vmul.f32 %v334, 1.442695
  %v352 = vpow.pop %v351
  %v353 = vmul.f32 %v335, 1.442695
  %v354 = vpow.pop %v353
  %v355 = vmul.f32 %v336, 1.442695
  %v356 = vpow.pop %v355
  %v357 = vmul.f32 %v337, 1.442695
  %v358 = vpow.pop %v357
  %v359 = vmul.f32 %v338, 1.442695
  %v360 = vpow.pop %v359
  %v361 = vmul.f32 %v339, 1.442695
  %v362 = vpow.pop %v361
  %v363 = vmul.f32 %v340, 1.442695
  %v364 = vpow.pop %v363
  %v365 = vmul.f32 %v341, 1.442695
  %v366 = vpow.pop %v365
  %v367 = vmul.f32 %v342, 1.442695
  %v368 = vpow.pop %v367
  %v369 = vmul.f32 %v343, 1.442695
  %v370 = vpow.pop %v369
  %v371 = vmul.f32 %v344, 1.442695
  %v372 = vpow.pop %v371
  %v373 = vmul.f32 %v345, 1.442695
  %v374 = vpow.pop %v373
  %v375 = vmul.f32 %v346, 1.442695
  %v376 = vpow.pop %v375
  %v377 = vmul.f32 %v347, 1.442695
  %v378 = vpow.pop %v377
  %v379 = vmul.f32 %v348, 1.442695
  %v380 = vpow.pop %v379
  %v381 = vsub.f32 %v350, 1.0
  %v382 = vsub.f32 %v352, 1.0
  %v383 = vsub.f32 %v354, 1.0
  %v384 = vsub.f32 %v356, 1.0
  %v385 = vsub.f32 %v358, 1.0
  %v386 = vsub.f32 %v360, 1.0
  %v387 = vsub.f32 %v362, 1.0
  %v388 = vsub.f32 %v364, 1.0
  %v389 = vsub.f32 %v366, 1.0
  %v390 = vsub.f32 %v368, 1.0
  %v391 = vsub.f32 %v370, 1.0
  %v392 = vsub.f32 %v372, 1.0
  %v393 = vsub.f32 %v374, 1.0
  %v394 = vsub.f32 %v376, 1.0
  %v395 = vsub.f32 %v378, 1.0
  %v396 = vsub.f32 %v380, 1.0
  %v397 = vmul.f32 %v381, 1.6732632
  %v398 = vmul.f32 %v382, 1.6732632
  %v399 = vmul.f32 %v383, 1.6732632
  %v400 = vmul.f32 %v384, 1.6732632
  %v401 = vmul.f32 %v385, 1.6732632
  %v402 = vmul.f32 %v386, 1.6732632
  %v403 = vmul.f32 %v387, 1.6732632
  %v404 = vmul.f32 %v388, 1.6732632
  %v405 = vmul.f32 %v389, 1.6732632
  %v406 = vmul.f32 %v390, 1.6732632
  %v407 = vmul.f32 %v391, 1.6732632
  %v408 = vmul.f32 %v392, 1.6732632
  %v409 = vmul.f32 %v393, 1.6732632
  %v410 = vmul.f32 %v394, 1.6732632
  %v411 = vmul.f32 %v395, 1.6732632
  %v412 = vmul.f32 %v396, 1.6732632
  %vm413 = vcmp.gt.f32.partialorder %v271, 0.0
  %vm414 = vcmp.gt.f32.partialorder %v274, 0.0
  %vm415 = vcmp.gt.f32.partialorder %v279, 0.0
  %vm416 = vcmp.gt.f32.partialorder %v282, 0.0
  %vm417 = vcmp.gt.f32.partialorder %v287, 0.0
  %vm418 = vcmp.gt.f32.partialorder %v290, 0.0
  %vm419 = vcmp.gt.f32.partialorder %v295, 0.0
  %vm420 = vcmp.gt.f32.partialorder %v298, 0.0
  %vm421 = vcmp.gt.f32.partialorder %v303, 0.0
  %vm422 = vcmp.gt.f32.partialorder %v306, 0.0
  %vm423 = vcmp.gt.f32.partialorder %v311, 0.0
  %vm424 = vcmp.gt.f32.partialorder %v314, 0.0
  %vm425 = vcmp.gt.f32.partialorder %v319, 0.0
  %vm426 = vcmp.gt.f32.partialorder %v322, 0.0
  %vm427 = vcmp.gt.f32.partialorder %v327, 0.0
  %vm428 = vcmp.gt.f32.partialorder %v330, 0.0
  %v429 = vsel %vm413, %v271, %v397
  %v430 = vsel %vm414, %v274, %v398
  %v431 = vsel %vm415, %v279, %v399
  %v432 = vsel %vm416, %v282, %v400
  %v433 = vsel %vm417, %v287, %v401
  %v434 = vsel %vm418, %v290, %v402
  %v435 = vsel %vm419, %v295, %v403
  %v436 = vsel %vm420, %v298, %v404
  %v437 = vsel %vm421, %v303, %v405
  %v438 = vsel %vm422, %v306, %v406
  %v439 = vsel %vm423, %v311, %v407
  %v440 = vsel %vm424, %v314, %v408
  %v441 = vsel %vm425, %v319, %v409
  %v442 = vsel %vm426, %v322, %v410
  %v443 = vsel %vm427, %v327, %v411
  %v444 = vsel %vm428, %v330, %v412
  %v445 = vmul.f32 %v429, 1.050701
  %v446 = vmul.f32 %v430, 1.050701
  %v447 = vmul.f32 %v431, 1.050701
  %v448 = vmul.f32 %v432, 1.050701
  %v449 = vmul.f32 %v433, 1.050701
  %v450 = vmul.f32 %v434, 1.050701
  %v451 = vmul.f32 %v435, 1.050701
  %v452 = vmul.f32 %v436, 1.050701
  %v453 = vmul.f32 %v437, 1.050701
  %v454 = vmul.f32 %v438, 1.050701
  %v455 = vmul.f32 %v439, 1.050701
  %v456 = vmul.f32 %v440, 1.050701
  %v457 = vmul.f32 %v441, 1.050701
  %v458 = vmul.f32 %v442, 1.050701
  %v459 = vmul.f32 %v443, 1.050701
  %v460 = vmul.f32 %v444, 1.050701
  %v461 = vpack.c.bf16 %v446, %v445
  %v462 = vpack.c.bf16 %v448, %v447
  %v463 = vpack.c.bf16 %v450, %v449
  %v464 = vpack.c.bf16 %v452, %v451
  %v465 = vpack.c.bf16 %v454, %v453
  %v466 = vpack.c.bf16 %v456, %v455
  %v467 = vpack.c.bf16 %v458, %v457
  %v468 = vpack.c.bf16 %v460, %v459
  %v477 = vunpack.c.l.b16 %v461
  %v478 = vunpack.c.h.b16 %v461
  %v479 = vunpack.c.l.b16 %v462
  %v480 = vunpack.c.h.b16 %v462
  %v481 = vunpack.c.l.b16 %v463
  %v482 = vunpack.c.h.b16 %v463
  %v483 = vunpack.c.l.b16 %v464
  %v484 = vunpack.c.h.b16 %v464
  %v485 = vunpack.c.l.b16 %v465
  %v486 = vunpack.c.h.b16 %v465
  %v487 = vunpack.c.l.b16 %v466
  %v488 = vunpack.c.h.b16 %v466
  %v489 = vunpack.c.l.b16 %v467
  %v490 = vunpack.c.h.b16 %v467
  %v491 = vunpack.c.l.b16 %v468
  %v492 = vunpack.c.h.b16 %v468
  %v493 = vpack.c.b16 %v477, %v477
  %v494 = vpack.c.b16 %v478, %v478
  %v495 = vpack.c.b16 %v479, %v479
  %v496 = vpack.c.b16 %v480, %v480
  %v497 = vpack.c.b16 %v481, %v481
  %v498 = vpack.c.b16 %v482, %v482
  %v499 = vpack.c.b16 %v483, %v483
  %v500 = vpack.c.b16 %v484, %v484
  %v501 = vpack.c.b16 %v485, %v485
  %v502 = vpack.c.b16 %v486, %v486
  %v503 = vpack.c.b16 %v487, %v487
  %v504 = vpack.c.b16 %v488, %v488
  %v505 = vpack.c.b16 %v489, %v489
  %v506 = vpack.c.b16 %v490, %v490
  %v507 = vpack.c.b16 %v491, %v491
  %v508 = vpack.c.b16 %v492, %v492
  %525 = vst [vmem:[%s2] sm:$0xf] %v493
  %526 = vst [vmem:[%s2 + $0x4] sm:$0xf] %v494
  %527 = vst [vmem:[%s2 + $0x8] sm:$0xf] %v495
  %528 = vst [vmem:[%s2 + $0xc] sm:$0xf] %v496
  %529 = vst [vmem:[%s2 + $0x10] sm:$0xf] %v497
  %530 = vst [vmem:[%s2 + $0x14] sm:$0xf] %v498
  %531 = vst [vmem:[%s2 + $0x18] sm:$0xf] %v499
  %532 = vst [vmem:[%s2 + $0x1c] sm:$0xf] %v500
  %533 = vst [vmem:[%s2 + $0x20] sm:$0xf] %v501
  %534 = vst [vmem:[%s2 + $0x24] sm:$0xf] %v502
  %535 = vst [vmem:[%s2 + $0x28] sm:$0xf] %v503
  %536 = vst [vmem:[%s2 + $0x2c] sm:$0xf] %v504
  %537 = vst [vmem:[%s2 + $0x30] sm:$0xf] %v505
  %538 = vst [vmem:[%s2 + $0x34] sm:$0xf] %v506
  %539 = vst [vmem:[%s2 + $0x38] sm:$0xf] %v507
  %540 = vst [vmem:[%s2 + $0x3c] sm:$0xf] %v508
  // Predicated region
  $region10: #{d_stage2_forward.7} parent=0 // pred_check
    _
  $region11: #{d_stage2_forward.7} parent=0 // pred_check_branch
    %542 = sbr.rel (0) target = $region13
  $region12: #{d_stage2_forward.7} parent=0 // pred_region
    _
  $region13: #{d_stage2_forward.7} parent=0 // pred_fallthru
    _
  // Predicated region
  $region14: #{d_stage2_forward.7} parent=0 // pred_check
    _
  $region15: #{d_stage2_forward.7} parent=0 // pred_check_branch
    %544 = sbr.rel (0) target = $region17
  $region16: #{d_stage2_forward.7} parent=0 // pred_region
    _
  $region17: #{d_stage2_forward.7} parent=0 // pred_fallthru
    _

// kernel: d_stage2_forward.8
$region0: #{d_stage2_forward.8}
  #allocation0 [shape = 'u32[]', space=smem, size = 0x4, offset = 0x4, fixed_abs, tag = 'smem constant byte address 0x4 - core index']
  #allocation1 [shape = 'u32[144,128]{1,0:T(1,128)}', space=vmem, size = 0x12000, scoped, tag = 'internal scratch']
  %s0 = inlined_call_operand.vmem [shape: bf16[32,512], index: 0, kind: input, shape index: {}]
  %s1 = inlined_call_operand.vmem [shape: bf16[512,128], index: 1, kind: input, shape index: {}]
  %s2 = inlined_call_operand.vmem [shape: bf16[32,128], index: 2, kind: output, shape index: {}]
  %s3 = sld [smem:[#allocation0]]
  $region18: #{d_stage2_forward.8} parent=0
    _
  %s5 = ssub.s32 1, %s3
  %s6 = scalar_select 0, %s5, %s3
  // Predicated region
  $region2: #{d_stage2_forward.8} parent=0 // pred_check
    _
  $region3: #{d_stage2_forward.8} parent=0 // pred_check_branch
    %8 = sbr.rel (0) target = $region5
  $region4: #{d_stage2_forward.8} parent=0 // pred_region
    _
  $region5: #{d_stage2_forward.8} parent=0 // pred_fallthru
    _
  // Predicated region
  $region6: #{d_stage2_forward.8} parent=0 // pred_check
    _
  $region7: #{d_stage2_forward.8} parent=0 // pred_check_branch
    %10 = sbr.rel (0) target = $region9
  $region8: #{d_stage2_forward.8} parent=0 // pred_region
    _
  $region9: #{d_stage2_forward.8} parent=0 // pred_fallthru
    _
  %v12 = vld [vmem:[%s0] sm:$0xff]
  %v13 = vld [vmem:[%s0 + $0x8] sm:$0xff]
  %v14 = vld [vmem:[%s0 + $0x10] sm:$0xff]
  %v15 = vld [vmem:[%s0 + $0x18] sm:$0xff]
  %v16 = vld [vmem:[%s0 + $0x20] sm:$0xff]
  %v17 = vld [vmem:[%s0 + $0x28] sm:$0xff]
  %v18 = vld [vmem:[%s0 + $0x30] sm:$0xff]
  %v19 = vld [vmem:[%s0 + $0x38] sm:$0xff]
  %v20 = vld [vmem:[%s1] sm:$0xf]
  %v21 = vld [vmem:[%s1 + $0x4] sm:$0xf]
  %v22 = vld [vmem:[%s1 + $0x8] sm:$0xf]
  %v23 = vld [vmem:[%s1 + $0xc] sm:$0xf]
  %v24 = vld [vmem:[%s1 + $0x10] sm:$0xf]
  %v25 = vld [vmem:[%s1 + $0x14] sm:$0xf]
  %v26 = vld [vmem:[%s1 + $0x18] sm:$0xf]
  %v27 = vld [vmem:[%s1 + $0x1c] sm:$0xf]
  %v28 = vld [vmem:[%s1 + $0x20] sm:$0xf]
  %v29 = vld [vmem:[%s1 + $0x24] sm:$0xf]
  %v30 = vld [vmem:[%s1 + $0x28] sm:$0xf]
  %v31 = vld [vmem:[%s1 + $0x2c] sm:$0xf]
  %v32 = vld [vmem:[%s1 + $0x30] sm:$0xf]
  %v33 = vld [vmem:[%s1 + $0x34] sm:$0xf]
  %v34 = vld [vmem:[%s1 + $0x38] sm:$0xf]
  %v35 = vld [vmem:[%s1 + $0x3c] sm:$0xf]
  %v36 = vld [vmem:[%s1 + $0x40] sm:$0xf]
  %v37 = vld [vmem:[%s1 + $0x44] sm:$0xf]
  %v38 = vld [vmem:[%s1 + $0x48] sm:$0xf]
  %v39 = vld [vmem:[%s1 + $0x4c] sm:$0xf]
  %v40 = vld [vmem:[%s1 + $0x50] sm:$0xf]
  %v41 = vld [vmem:[%s1 + $0x54] sm:$0xf]
  %v42 = vld [vmem:[%s1 + $0x58] sm:$0xf]
  %v43 = vld [vmem:[%s1 + $0x5c] sm:$0xf]
  %v44 = vld [vmem:[%s1 + $0x60] sm:$0xf]
  %v45 = vld [vmem:[%s1 + $0x64] sm:$0xf]
  %v46 = vld [vmem:[%s1 + $0x68] sm:$0xf]
  %v47 = vld [vmem:[%s1 + $0x6c] sm:$0xf]
  %v48 = vld [vmem:[%s1 + $0x70] sm:$0xf]
  %v49 = vld [vmem:[%s1 + $0x74] sm:$0xf]
  %v50 = vld [vmem:[%s1 + $0x78] sm:$0xf]
  %v51 = vld [vmem:[%s1 + $0x7c] sm:$0xf]
  %v52 = vld [vmem:[%s1 + $0x80] sm:$0xf]
  %v53 = vld [vmem:[%s1 + $0x84] sm:$0xf]
  %v54 = vld [vmem:[%s1 + $0x88] sm:$0xf]
  %v55 = vld [vmem:[%s1 + $0x8c] sm:$0xf]
  %v56 = vld [vmem:[%s1 + $0x90] sm:$0xf]
  %v57 = vld [vmem:[%s1 + $0x94] sm:$0xf]
  %v58 = vld [vmem:[%s1 + $0x98] sm:$0xf]
  %v59 = vld [vmem:[%s1 + $0x9c] sm:$0xf]
  %v60 = vld [vmem:[%s1 + $0xa0] sm:$0xf]
  %v61 = vld [vmem:[%s1 + $0xa4] sm:$0xf]
  %v62 = vld [vmem:[%s1 + $0xa8] sm:$0xf]
  %v63 = vld [vmem:[%s1 + $0xac] sm:$0xf]
  %v64 = vld [vmem:[%s1 + $0xb0] sm:$0xf]
  %v65 = vld [vmem:[%s1 + $0xb4] sm:$0xf]
  %v66 = vld [vmem:[%s1 + $0xb8] sm:$0xf]
  %v67 = vld [vmem:[%s1 + $0xbc] sm:$0xf]
  %v68 = vld [vmem:[%s1 + $0xc0] sm:$0xf]
  %v69 = vld [vmem:[%s1 + $0xc4] sm:$0xf]
  %v70 = vld [vmem:[%s1 + $0xc8] sm:$0xf]
  %v71 = vld [vmem:[%s1 + $0xcc] sm:$0xf]
  %v72 = vld [vmem:[%s1 + $0xd0] sm:$0xf]
  %v73 = vld [vmem:[%s1 + $0xd4] sm:$0xf]
  %v74 = vld [vmem:[%s1 + $0xd8] sm:$0xf]
  %v75 = vld [vmem:[%s1 + $0xdc] sm:$0xf]
  %v76 = vld [vmem:[%s1 + $0xe0] sm:$0xf]
  %v77 = vld [vmem:[%s1 + $0xe4] sm:$0xf]
  %v78 = vld [vmem:[%s1 + $0xe8] sm:$0xf]
  %v79 = vld [vmem:[%s1 + $0xec] sm:$0xf]
  %v80 = vld [vmem:[%s1 + $0xf0] sm:$0xf]
  %v81 = vld [vmem:[%s1 + $0xf4] sm:$0xf]
  %v82 = vld [vmem:[%s1 + $0xf8] sm:$0xf]
  %v83 = vld [vmem:[%s1 + $0xfc] sm:$0xf]
  %v92 = vunpack.c.l.b16 %v12
  %v93 = vunpack.c.h.b16 %v12
  %v94 = vunpack.c.l.b16 %v13
  %v95 = vunpack.c.h.b16 %v13
  %v96 = vunpack.c.l.b16 %v14
  %v97 = vunpack.c.h.b16 %v14
  %v98 = vunpack.c.l.b16 %v15
  %v99 = vunpack.c.h.b16 %v15
  %v100 = vunpack.c.l.b16 %v16
  %v101 = vunpack.c.h.b16 %v16
  %v102 = vunpack.c.l.b16 %v17
  %v103 = vunpack.c.h.b16 %v17
  %v104 = vunpack.c.l.b16 %v18
  %v105 = vunpack.c.h.b16 %v18
  %v106 = vunpack.c.l.b16 %v19
  %v107 = vunpack.c.h.b16 %v19
  %v108 = vpack.c.b16 %v96, %v92
  %v109 = vpack.c.b16 %v97, %v93
  %v110 = vpack.c.b16 %v98, %v94
  %v111 = vpack.c.b16 %v99, %v95
  %v112 = vpack.c.b16 %v104, %v100
  %v113 = vpack.c.b16 %v105, %v101
  %v114 = vpack.c.b16 %v106, %v102
  %v115 = vpack.c.b16 %v107, %v103
  %v188 = vunpack.c.l.b16 %v20
  %v189 = vunpack.c.l.b16 %v21
  %v190 = vunpack.c.l.b16 %v22
  %v191 = vunpack.c.l.b16 %v23
  %v192 = vunpack.c.l.b16 %v24
  %v193 = vunpack.c.l.b16 %v25
  %v194 = vunpack.c.l.b16 %v26
  %v195 = vunpack.c.l.b16 %v27
  %v196 = vunpack.c.l.b16 %v28
  %v197 = vunpack.c.l.b16 %v29
  %v198 = vunpack.c.l.b16 %v30
  %v199 = vunpack.c.l.b16 %v31
  %v200 = vunpack.c.l.b16 %v32
  %v201 = vunpack.c.l.b16 %v33
  %v202 = vunpack.c.l.b16 %v34
  %v203 = vunpack.c.l.b16 %v35
  %v204 = vunpack.c.l.b16 %v36
  %v205 = vunpack.c.l.b16 %v37
  %v206 = vunpack.c.l.b16 %v38
  %v207 = vunpack.c.l.b16 %v39
  %v208 = vunpack.c.l.b16 %v40
  %v209 = vunpack.c.l.b16 %v41
  %v210 = vunpack.c.l.b16 %v42
  %v211 = vunpack.c.l.b16 %v43
  %v212 = vunpack.c.l.b16 %v44
  %v213 = vunpack.c.l.b16 %v45
  %v214 = vunpack.c.l.b16 %v46
  %v215 = vunpack.c.l.b16 %v47
  %v216 = vunpack.c.l.b16 %v48
  %v217 = vunpack.c.l.b16 %v49
  %v218 = vunpack.c.l.b16 %v50
  %v219 = vunpack.c.l.b16 %v51
  %v220 = vunpack.c.l.b16 %v52
  %v221 = vunpack.c.l.b16 %v53
  %v222 = vunpack.c.l.b16 %v54
  %v223 = vunpack.c.l.b16 %v55
  %v224 = vunpack.c.l.b16 %v56
  %v225 = vunpack.c.l.b16 %v57
  %v226 = vunpack.c.l.b16 %v58
  %v227 = vunpack.c.l.b16 %v59
  %v228 = vunpack.c.l.b16 %v60
  %v229 = vunpack.c.l.b16 %v61
  %v230 = vunpack.c.l.b16 %v62
  %v231 = vunpack.c.l.b16 %v63
  %v232 = vunpack.c.l.b16 %v64
  %v233 = vunpack.c.l.b16 %v65
  %v234 = vunpack.c.l.b16 %v66
  %v235 = vunpack.c.l.b16 %v67
  %v236 = vunpack.c.l.b16 %v68
  %v237 = vunpack.c.l.b16 %v69
  %v238 = vunpack.c.l.b16 %v70
  %v239 = vunpack.c.l.b16 %v71
  %v240 = vunpack.c.l.b16 %v72
  %v241 = vunpack.c.l.b16 %v73
  %v242 = vunpack.c.l.b16 %v74
  %v243 = vunpack.c.l.b16 %v75
  %v244 = vunpack.c.l.b16 %v76
  %v245 = vunpack.c.l.b16 %v77
  %v246 = vunpack.c.l.b16 %v78
  %v247 = vunpack.c.l.b16 %v79
  %v248 = vunpack.c.l.b16 %v80
  %v249 = vunpack.c.l.b16 %v81
  %v250 = vunpack.c.l.b16 %v82
  %v251 = vunpack.c.l.b16 %v83
  %v252 = vpack.c.b16 %v189, %v188
  %v253 = vpack.c.b16 %v191, %v190
  %v254 = vpack.c.b16 %v193, %v192
  %v255 = vpack.c.b16 %v195, %v194
  %v256 = vpack.c.b16 %v197, %v196
  %v257 = vpack.c.b16 %v199, %v198
  %v258 = vpack.c.b16 %v201, %v200
  %v259 = vpack.c.b16 %v203, %v202
  %v260 = vpack.c.b16 %v205, %v204
  %v261 = vpack.c.b16 %v207, %v206
  %v262 = vpack.c.b16 %v209, %v208
  %v263 = vpack.c.b16 %v211, %v210
  %v264 = vpack.c.b16 %v213, %v212
  %v265 = vpack.c.b16 %v215, %v214
  %v266 = vpack.c.b16 %v217, %v216
  %v267 = vpack.c.b16 %v219, %v218
  %v268 = vpack.c.b16 %v221, %v220
  %v269 = vpack.c.b16 %v223, %v222
  %v270 = vpack.c.b16 %v225, %v224
  %v271 = vpack.c.b16 %v227, %v226
  %v272 = vpack.c.b16 %v229, %v228
  %v273 = vpack.c.b16 %v231, %v230
  %v274 = vpack.c.b16 %v233, %v232
  %v275 = vpack.c.b16 %v235, %v234
  %v276 = vpack.c.b16 %v237, %v236
  %v277 = vpack.c.b16 %v239, %v238
  %v278 = vpack.c.b16 %v241, %v240
  %v279 = vpack.c.b16 %v243, %v242
  %v280 = vpack.c.b16 %v245, %v244
  %v281 = vpack.c.b16 %v247, %v246
  %v282 = vpack.c.b16 %v249, %v248
  %v283 = vpack.c.b16 %v251, %v250
  %316 = vmatprep.subr.bf16.mxu0 0
  %317 = vmatpush1.bf16.msra.mxu0 %v252
  %318 = vmatprep.subr.bf16.mxu0 0
  %319 = vmatpush1.bf16.msra.mxu0 %v253
  %320 = vmatprep.subr.bf16.mxu0 0
  %321 = vmatpush1.bf16.msra.mxu0 %v254
  %322 = vmatprep.subr.bf16.mxu0 0
  %323 = vmatpush1.bf16.msra.mxu0 %v255
  %324 = vmatprep.subr.bf16.mxu0 0
  %325 = vmatpush1.bf16.msra.mxu0 %v256
  %326 = vmatprep.subr.bf16.mxu0 0
  %327 = vmatpush1.bf16.msra.mxu0 %v257
  %328 = vmatprep.subr.bf16.mxu0 0
  %329 = vmatpush1.bf16.msra.mxu0 %v258
  %330 = vmatprep.subr.bf16.mxu0 0
  %331 = vmatpush1.bf16.msra.mxu0 %v259
  %332 = vmatprep.subr.bf16.mxu0 0
  %333 = vmatpush1.bf16.msra.mxu0 %v260
  %334 = vmatprep.subr.bf16.mxu0 0
  %335 = vmatpush1.bf16.msra.mxu0 %v261
  %336 = vmatprep.subr.bf16.mxu0 0
  %337 = vmatpush1.bf16.msra.mxu0 %v262
  %338 = vmatprep.subr.bf16.mxu0 0
  %339 = vmatpush1.bf16.msra.mxu0 %v263
  %340 = vmatprep.subr.bf16.mxu0 0
  %341 = vmatpush1.bf16.msra.mxu0 %v264
  %342 = vmatprep.subr.bf16.mxu0 0
  %343 = vmatpush1.bf16.msra.mxu0 %v265
  %344 = vmatprep.subr.bf16.mxu0 0
  %345 = vmatpush1.bf16.msra.mxu0 %v266
  %346 = vmatprep.subr.bf16.mxu0 0
  %347 = vmatpush1.bf16.msra.mxu0 %v267
  %348 = vmatprep.mubr.bf16.mxu0 %v109
  %349 = vmatmul.mubr.bf16.gmra.mrb[0].mxu0 %v108
  %v350 = vpop.f32.mrb[0].mxu0
  %v351 = vadd.f32 0.0, %v350
  %v352 = vpop.f32.mrb[0].mxu0
  %v353 = vpop.f32.mrb[0].mxu0
  %v354 = vadd.f32 0.0, %v353
  %v355 = vpop.f32.mrb[0].mxu0
  %356 = vmatprep.mubr.bf16.mxu0 %v113
  %357 = vmatmul.mubr.bf16.gmra.mrb[0].mxu0 %v112
  %v358 = vpop.f32.mrb[0].mxu0
  %v359 = vadd.f32 0.0, %v358
  %v360 = vpop.f32.mrb[0].mxu0
  %v361 = vpop.f32.mrb[0].mxu0
  %v362 = vadd.f32 0.0, %v361
  %v363 = vpop.f32.mrb[0].mxu0
  %364 = vdwg.mxu0
  %365 = vmatprep.subr.bf16.mxu0 0
  %366 = vmatpush1.bf16.msra.mxu0 %v268
  %367 = vmatprep.subr.bf16.mxu0 0
  %368 = vmatpush1.bf16.msra.mxu0 %v269
  %369 = vmatprep.subr.bf16.mxu0 0
  %370 = vmatpush1.bf16.msra.mxu0 %v270
  %371 = vmatprep.subr.bf16.mxu0 0
  %372 = vmatpush1.bf16.msra.mxu0 %v271
  %373 = vmatprep.subr.bf16.mxu0 0
  %374 = vmatpush1.bf16.msra.mxu0 %v272
  %375 = vmatprep.subr.bf16.mxu0 0
  %376 = vmatpush1.bf16.msra.mxu0 %v273
  %377 = vmatprep.subr.bf16.mxu0 0
  %378 = vmatpush1.bf16.msra.mxu0 %v274
  %379 = vmatprep.subr.bf16.mxu0 0
  %380 = vmatpush1.bf16.msra.mxu0 %v275
  %381 = vmatprep.subr.bf16.mxu0 0
  %382 = vmatpush1.bf16.msra.mxu0 %v276
  %383 = vmatprep.subr.bf16.mxu0 0
  %384 = vmatpush1.bf16.msra.mxu0 %v277
  %385 = vmatprep.subr.bf16.mxu0 0
  %386 = vmatpush1.bf16.msra.mxu0 %v278
  %387 = vmatprep.subr.bf16.mxu0 0
  %388 = vmatpush1.bf16.msra.mxu0 %v279
  %389 = vmatprep.subr.bf16.mxu0 0
  %390 = vmatpush1.bf16.msra.mxu0 %v280
  %391 = vmatprep.subr.bf16.mxu0 0
  %392 = vmatpush1.bf16.msra.mxu0 %v281
  %393 = vmatprep.subr.bf16.mxu0 0
  %394 = vmatpush1.bf16.msra.mxu0 %v282
  %395 = vmatprep.subr.bf16.mxu0 0
  %396 = vmatpush1.bf16.msra.mxu0 %v283
  %397 = vmatprep.mubr.bf16.mxu0 %v111
  %398 = vmatmul.mubr.bf16.gmra.mrb[0].mxu0 %v110
  %v399 = vpop.f32.mrb[0].mxu0
  %v400 = vadd.f32 %v351, %v399
  %v401 = vpop.f32.mrb[0].mxu0
  %v402 = vpop.f32.mrb[0].mxu0
  %v403 = vadd.f32 %v354, %v402
  %v404 = vpop.f32.mrb[0].mxu0
  %405 = vmatprep.mubr.bf16.mxu0 %v115
  %406 = vmatmul.mubr.bf16.gmra.mrb[0].mxu0 %v114
  %v407 = vpop.f32.mrb[0].mxu0
  %v408 = vadd.f32 %v359, %v407
  %v409 = vpop.f32.mrb[0].mxu0
  %v410 = vpop.f32.mrb[0].mxu0
  %v411 = vadd.f32 %v362, %v410
  %v412 = vpop.f32.mrb[0].mxu0
  %413 = vdwg.mxu0
  %v414 = vmin.f32 %v400, 0.0
  %v415 = vmin.f32 %v403, 0.0
  %v416 = vmin.f32 %v408, 0.0
  %v417 = vmin.f32 %v411, 0.0
  %v418 = vmul.f32 %v414, 1.442695
  %v419 = vpow.pop %v418
  %v420 = vmul.f32 %v415, 1.442695
  %v421 = vpow.pop %v420
  %v422 = vmul.f32 %v416, 1.442695
  %v423 = vpow.pop %v422
  %v424 = vmul.f32 %v417, 1.442695
  %v425 = vpow.pop %v424
  %v426 = vsub.f32 %v419, 1.0
  %v427 = vsub.f32 %v421, 1.0
  %v428 = vsub.f32 %v423, 1.0
  %v429 = vsub.f32 %v425, 1.0
  %v430 = vmul.f32 %v426, 1.6732632
  %v431 = vmul.f32 %v427, 1.6732632
  %v432 = vmul.f32 %v428, 1.6732632
  %v433 = vmul.f32 %v429, 1.6732632
  %vm434 = vcmp.gt.f32.partialorder %v400, 0.0
  %vm435 = vcmp.gt.f32.partialorder %v403, 0.0
  %vm436 = vcmp.gt.f32.partialorder %v408, 0.0
  %vm437 = vcmp.gt.f32.partialorder %v411, 0.0
  %v438 = vsel %vm434, %v400, %v430
  %v439 = vsel %vm435, %v403, %v431
  %v440 = vsel %vm436, %v408, %v432
  %v441 = vsel %vm437, %v411, %v433
  %v442 = vmul.f32 %v438, 1.050701
  %v443 = vmul.f32 %v439, 1.050701
  %v444 = vmul.f32 %v440, 1.050701
  %v445 = vmul.f32 %v441, 1.050701
  %v446 = vpack.c.bf16 %v443, %v442
  %v447 = vpack.c.bf16 %v445, %v444
  %v450 = vunpack.c.l.b16 %v446
  %v451 = vunpack.c.h.b16 %v446
  %v452 = vunpack.c.l.b16 %v447
  %v453 = vunpack.c.h.b16 %v447
  %v454 = vpack.c.b16 %v450, %v450
  %v455 = vpack.c.b16 %v451, %v451
  %v456 = vpack.c.b16 %v452, %v452
  %v457 = vpack.c.b16 %v453, %v453
  %462 = vst [vmem:[%s2] sm:$0xf] %v454
  %463 = vst [vmem:[%s2 + $0x4] sm:$0xf] %v455
  %464 = vst [vmem:[%s2 + $0x8] sm:$0xf] %v456
  %465 = vst [vmem:[%s2 + $0xc] sm:$0xf] %v457
  // Predicated region
  $region10: #{d_stage2_forward.8} parent=0 // pred_check
    _
  $region11: #{d_stage2_forward.8} parent=0 // pred_check_branch
    %467 = sbr.rel (0) target = $region13
  $region12: #{d_stage2_forward.8} parent=0 // pred_region
    _
  $region13: #{d_stage2_forward.8} parent=0 // pred_fallthru
    _
  // Predicated region
  $region14: #{d_stage2_forward.8} parent=0 // pred_check
    _
  $region15: #{d_stage2_forward.8} parent=0 // pred_check_branch
    %469 = sbr.rel (0) target = $region17
  $region16: #{d_stage2_forward.8} parent=0 // pred_region
    _
  $region17: #{d_stage2_forward.8} parent=0 // pred_fallthru
    _

// kernel: d_stage2_forward.9
$region0: #{d_stage2_forward.9}
  #allocation0 [shape = 'u32[]', space=smem, size = 0x4, offset = 0x4, fixed_abs, tag = 'smem constant byte address 0x4 - core index']
  #allocation1 [shape = 'u32[144,128]{1,0:T(1,128)}', space=vmem, size = 0x12000, scoped, tag = 'internal scratch']
  %s0 = inlined_call_operand.vmem [shape: bf16[8,1024], index: 0, kind: input, shape index: {}]
  %s1 = inlined_call_operand.vmem [shape: bf16[1024,128], index: 1, kind: input, shape index: {}]
  %s2 = inlined_call_operand.vmem [shape: f32[8,128], index: 2, kind: output, shape index: {}]
  %s3 = sld [smem:[#allocation0]]
  $region18: #{d_stage2_forward.9} parent=0
    _
  %s5 = ssub.s32 1, %s3
  %s6 = scalar_select 0, %s5, %s3
  // Predicated region
  $region2: #{d_stage2_forward.9} parent=0 // pred_check
    _
  $region3: #{d_stage2_forward.9} parent=0 // pred_check_branch
    %8 = sbr.rel (0) target = $region5
  $region4: #{d_stage2_forward.9} parent=0 // pred_region
    _
  $region5: #{d_stage2_forward.9} parent=0 // pred_fallthru
    _
  // Predicated region
  $region6: #{d_stage2_forward.9} parent=0 // pred_check
    _
  $region7: #{d_stage2_forward.9} parent=0 // pred_check_branch
    %10 = sbr.rel (0) target = $region9
  $region8: #{d_stage2_forward.9} parent=0 // pred_region
    _
  $region9: #{d_stage2_forward.9} parent=0 // pred_fallthru
    _
  %v12 = vld [vmem:[%s0] sm:$0xff]
  %v13 = vld [vmem:[%s0 + $0x8] sm:$0xff]
  %v14 = vld [vmem:[%s0 + $0x10] sm:$0xff]
  %v15 = vld [vmem:[%s0 + $0x18] sm:$0xff]
  %v16 = vld [vmem:[%s1] sm:$0xf]
  %v17 = vld [vmem:[%s1 + $0x4] sm:$0xf]
  %v18 = vld [vmem:[%s1 + $0x8] sm:$0xf]
  %v19 = vld [vmem:[%s1 + $0xc] sm:$0xf]
  %v20 = vld [vmem:[%s1 + $0x10] sm:$0xf]
  %v21 = vld [vmem:[%s1 + $0x14] sm:$0xf]
  %v22 = vld [vmem:[%s1 + $0x18] sm:$0xf]
  %v23 = vld [vmem:[%s1 + $0x1c] sm:$0xf]
  %v24 = vld [vmem:[%s1 + $0x20] sm:$0xf]
  %v25 = vld [vmem:[%s1 + $0x24] sm:$0xf]
  %v26 = vld [vmem:[%s1 + $0x28] sm:$0xf]
  %v27 = vld [vmem:[%s1 + $0x2c] sm:$0xf]
  %v28 = vld [vmem:[%s1 + $0x30] sm:$0xf]
  %v29 = vld [vmem:[%s1 + $0x34] sm:$0xf]
  %v30 = vld [vmem:[%s1 + $0x38] sm:$0xf]
  %v31 = vld [vmem:[%s1 + $0x3c] sm:$0xf]
  %v32 = vld [vmem:[%s1 + $0x40] sm:$0xf]
  %v33 = vld [vmem:[%s1 + $0x44] sm:$0xf]
  %v34 = vld [vmem:[%s1 + $0x48] sm:$0xf]
  %v35 = vld [vmem:[%s1 + $0x4c] sm:$0xf]
  %v36 = vld [vmem:[%s1 + $0x50] sm:$0xf]
  %v37 = vld [vmem:[%s1 + $0x54] sm:$0xf]
  %v38 = vld [vmem:[%s1 + $0x58] sm:$0xf]
  %v39 = vld [vmem:[%s1 + $0x5c] sm:$0xf]
  %v40 = vld [vmem:[%s1 + $0x60] sm:$0xf]
  %v41 = vld [vmem:[%s1 + $0x64] sm:$0xf]
  %v42 = vld [vmem:[%s1 + $0x68] sm:$0xf]
  %v43 = vld [vmem:[%s1 + $0x6c] sm:$0xf]
  %v44 = vld [vmem:[%s1 + $0x70] sm:$0xf]
  %v45 = vld [vmem:[%s1 + $0x74] sm:$0xf]
  %v46 = vld [vmem:[%s1 + $0x78] sm:$0xf]
  %v47 = vld [vmem:[%s1 + $0x7c] sm:$0xf]
  %v48 = vld [vmem:[%s1 + $0x80] sm:$0xf]
  %v49 = vld [vmem:[%s1 + $0x84] sm:$0xf]
  %v50 = vld [vmem:[%s1 + $0x88] sm:$0xf]
  %v51 = vld [vmem:[%s1 + $0x8c] sm:$0xf]
  %v52 = vld [vmem:[%s1 + $0x90] sm:$0xf]
  %v53 = vld [vmem:[%s1 + $0x94] sm:$0xf]
  %v54 = vld [vmem:[%s1 + $0x98] sm:$0xf]
  %v55 = vld [vmem:[%s1 + $0x9c] sm:$0xf]
  %v56 = vld [vmem:[%s1 + $0xa0] sm:$0xf]
  %v57 = vld [vmem:[%s1 + $0xa4] sm:$0xf]
  %v58 = vld [vmem:[%s1 + $0xa8] sm:$0xf]
  %v59 = vld [vmem:[%s1 + $0xac] sm:$0xf]
  %v60 = vld [vmem:[%s1 + $0xb0] sm:$0xf]
  %v61 = vld [vmem:[%s1 + $0xb4] sm:$0xf]
  %v62 = vld [vmem:[%s1 + $0xb8] sm:$0xf]
  %v63 = vld [vmem:[%s1 + $0xbc] sm:$0xf]
  %v64 = vld [vmem:[%s1 + $0xc0] sm:$0xf]
  %v65 = vld [vmem:[%s1 + $0xc4] sm:$0xf]
  %v66 = vld [vmem:[%s1 + $0xc8] sm:$0xf]
  %v67 = vld [vmem:[%s1 + $0xcc] sm:$0xf]
  %v68 = vld [vmem:[%s1 + $0xd0] sm:$0xf]
  %v69 = vld [vmem:[%s1 + $0xd4] sm:$0xf]
  %v70 = vld [vmem:[%s1 + $0xd8] sm:$0xf]
  %v71 = vld [vmem:[%s1 + $0xdc] sm:$0xf]
  %v72 = vld [vmem:[%s1 + $0xe0] sm:$0xf]
  %v73 = vld [vmem:[%s1 + $0xe4] sm:$0xf]
  %v74 = vld [vmem:[%s1 + $0xe8] sm:$0xf]
  %v75 = vld [vmem:[%s1 + $0xec] sm:$0xf]
  %v76 = vld [vmem:[%s1 + $0xf0] sm:$0xf]
  %v77 = vld [vmem:[%s1 + $0xf4] sm:$0xf]
  %v78 = vld [vmem:[%s1 + $0xf8] sm:$0xf]
  %v79 = vld [vmem:[%s1 + $0xfc] sm:$0xf]
  %v80 = vld [vmem:[%s1 + $0x100] sm:$0xf]
  %v81 = vld [vmem:[%s1 + $0x104] sm:$0xf]
  %v82 = vld [vmem:[%s1 + $0x108] sm:$0xf]
  %v83 = vld [vmem:[%s1 + $0x10c] sm:$0xf]
  %v84 = vld [vmem:[%s1 + $0x110] sm:$0xf]
  %v85 = vld [vmem:[%s1 + $0x114] sm:$0xf]
  %v86 = vld [vmem:[%s1 + $0x118] sm:$0xf]
  %v87 = vld [vmem:[%s1 + $0x11c] sm:$0xf]
  %v88 = vld [vmem:[%s1 + $0x120] sm:$0xf]
  %v89 = vld [vmem:[%s1 + $0x124] sm:$0xf]
  %v90 = vld [vmem:[%s1 + $0x128] sm:$0xf]
  %v91 = vld [vmem:[%s1 + $0x12c] sm:$0xf]
  %v92 = vld [vmem:[%s1 + $0x130] sm:$0xf]
  %v93 = vld [vmem:[%s1 + $0x134] sm:$0xf]
  %v94 = vld [vmem:[%s1 + $0x138] sm:$0xf]
  %v95 = vld [vmem:[%s1 + $0x13c] sm:$0xf]
  %v96 = vld [vmem:[%s1 + $0x140] sm:$0xf]
  %v97 = vld [vmem:[%s1 + $0x144] sm:$0xf]
  %v98 = vld [vmem:[%s1 + $0x148] sm:$0xf]
  %v99 = vld [vmem:[%s1 + $0x14c] sm:$0xf]
  %v100 = vld [vmem:[%s1 + $0x150] sm:$0xf]
  %v101 = vld [vmem:[%s1 + $0x154] sm:$0xf]
  %v102 = vld [vmem:[%s1 + $0x158] sm:$0xf]
  %v103 = vld [vmem:[%s1 + $0x15c] sm:$0xf]
  %v104 = vld [vmem:[%s1 + $0x160] sm:$0xf]
  %v105 = vld [vmem:[%s1 + $0x164] sm:$0xf]
  %v106 = vld [vmem:[%s1 + $0x168] sm:$0xf]
  %v107 = vld [vmem:[%s1 + $0x16c] sm:$0xf]
  %v108 = vld [vmem:[%s1 + $0x170] sm:$0xf]
  %v109 = vld [vmem:[%s1 + $0x174] sm:$0xf]
  %v110 = vld [vmem:[%s1 + $0x178] sm:$0xf]
  %v111 = vld [vmem:[%s1 + $0x17c] sm:$0xf]
  %v112 = vld [vmem:[%s1 + $0x180] sm:$0xf]
  %v113 = vld [vmem:[%s1 + $0x184] sm:$0xf]
  %v114 = vld [vmem:[%s1 + $0x188] sm:$0xf]
  %v115 = vld [vmem:[%s1 + $0x18c] sm:$0xf]
  %v116 = vld [vmem:[%s1 + $0x190] sm:$0xf]
  %v117 = vld [vmem:[%s1 + $0x194] sm:$0xf]
  %v118 = vld [vmem:[%s1 + $0x198] sm:$0xf]
  %v119 = vld [vmem:[%s1 + $0x19c] sm:$0xf]
  %v120 = vld [vmem:[%s1 + $0x1a0] sm:$0xf]
  %v121 = vld [vmem:[%s1 + $0x1a4] sm:$0xf]
  %v122 = vld [vmem:[%s1 + $0x1a8] sm:$0xf]
  %v123 = vld [vmem:[%s1 + $0x1ac] sm:$0xf]
  %v124 = vld [vmem:[%s1 + $0x1b0] sm:$0xf]
  %v125 = vld [vmem:[%s1 + $0x1b4] sm:$0xf]
  %v126 = vld [vmem:[%s1 + $0x1b8] sm:$0xf]
  %v127 = vld [vmem:[%s1 + $0x1bc] sm:$0xf]
  %v128 = vld [vmem:[%s1 + $0x1c0] sm:$0xf]
  %v129 = vld [vmem:[%s1 + $0x1c4] sm:$0xf]
  %v130 = vld [vmem:[%s1 + $0x1c8] sm:$0xf]
  %v131 = vld [vmem:[%s1 + $0x1cc] sm:$0xf]
  %v132 = vld [vmem:[%s1 + $0x1d0] sm:$0xf]
  %v133 = vld [vmem:[%s1 + $0x1d4] sm:$0xf]
  %v134 = vld [vmem:[%s1 + $0x1d8] sm:$0xf]
  %v135 = vld [vmem:[%s1 + $0x1dc] sm:$0xf]
  %v136 = vld [vmem:[%s1 + $0x1e0] sm:$0xf]
  %v137 = vld [vmem:[%s1 + $0x1e4] sm:$0xf]
  %v138 = vld [vmem:[%s1 + $0x1e8] sm:$0xf]
  %v139 = vld [vmem:[%s1 + $0x1ec] sm:$0xf]
  %v140 = vld [vmem:[%s1 + $0x1f0] sm:$0xf]
  %v141 = vld [vmem:[%s1 + $0x1f4] sm:$0xf]
  %v142 = vld [vmem:[%s1 + $0x1f8] sm:$0xf]
  %v143 = vld [vmem:[%s1 + $0x1fc] sm:$0xf]
  %v148 = vunpack.c.l.b16 %v12
  %v149 = vunpack.c.h.b16 %v12
  %v150 = vunpack.c.l.b16 %v13
  %v151 = vunpack.c.h.b16 %v13
  %v152 = vunpack.c.l.b16 %v14
  %v153 = vunpack.c.h.b16 %v14
  %v154 = vunpack.c.l.b16 %v15
  %v155 = vunpack.c.h.b16 %v15
  %v156 = vpack.c.b16 %v148, %v148
  %v157 = vpack.c.b16 %v149, %v149
  %v158 = vpack.c.b16 %v150, %v150
  %v159 = vpack.c.b16 %v151, %v151
  %v160 = vpack.c.b16 %v152, %v152
  %v161 = vpack.c.b16 %v153, %v153
  %v162 = vpack.c.b16 %v154, %v154
  %v163 = vpack.c.b16 %v155, %v155
  %v300 = vunpack.c.l.b16 %v16
  %v301 = vunpack.c.l.b16 %v17
  %v302 = vunpack.c.l.b16 %v18
  %v303 = vunpack.c.l.b16 %v19
  %v304 = vunpack.c.l.b16 %v20
  %v305 = vunpack.c.l.b16 %v21
  %v306 = vunpack.c.l.b16 %v22
  %v307 = vunpack.c.l.b16 %v23
  %v308 = vunpack.c.l.b16 %v24
  %v309 = vunpack.c.l.b16 %v25
  %v310 = vunpack.c.l.b16 %v26
  %v311 = vunpack.c.l.b16 %v27
  %v312 = vunpack.c.l.b16 %v28
  %v313 = vunpack.c.l.b16 %v29
  %v314 = vunpack.c.l.b16 %v30
  %v315 = vunpack.c.l.b16 %v31
  %v316 = vunpack.c.l.b16 %v32
  %v317 = vunpack.c.l.b16 %v33
  %v318 = vunpack.c.l.b16 %v34
  %v319 = vunpack.c.l.b16 %v35
  %v320 = vunpack.c.l.b16 %v36
  %v321 = vunpack.c.l.b16 %v37
  %v322 = vunpack.c.l.b16 %v38
  %v323 = vunpack.c.l.b16 %v39
  %v324 = vunpack.c.l.b16 %v40
  %v325 = vunpack.c.l.b16 %v41
  %v326 = vunpack.c.l.b16 %v42
  %v327 = vunpack.c.l.b16 %v43
  %v328 = vunpack.c.l.b16 %v44
  %v329 = vunpack.c.l.b16 %v45
  %v330 = vunpack.c.l.b16 %v46
  %v331 = vunpack.c.l.b16 %v47
  %v332 = vunpack.c.l.b16 %v48
  %v333 = vunpack.c.l.b16 %v49
  %v334 = vunpack.c.l.b16 %v50
  %v335 = vunpack.c.l.b16 %v51
  %v336 = vunpack.c.l.b16 %v52
  %v337 = vunpack.c.l.b16 %v53
  %v338 = vunpack.c.l.b16 %v54
  %v339 = vunpack.c.l.b16 %v55
  %v340 = vunpack.c.l.b16 %v56
  %v341 = vunpack.c.l.b16 %v57
  %v342 = vunpack.c.l.b16 %v58
  %v343 = vunpack.c.l.b16 %v59
  %v344 = vunpack.c.l.b16 %v60
  %v345 = vunpack.c.l.b16 %v61
  %v346 = vunpack.c.l.b16 %v62
  %v347 = vunpack.c.l.b16 %v63
  %v348 = vunpack.c.l.b16 %v64
  %v349 = vunpack.c.l.b16 %v65
  %v350 = vunpack.c.l.b16 %v66
  %v351 = vunpack.c.l.b16 %v67
  %v352 = vunpack.c.l.b16 %v68
  %v353 = vunpack.c.l.b16 %v69
  %v354 = vunpack.c.l.b16 %v70
  %v355 = vunpack.c.l.b16 %v71
  %v356 = vunpack.c.l.b16 %v72
  %v357 = vunpack.c.l.b16 %v73
  %v358 = vunpack.c.l.b16 %v74
  %v359 = vunpack.c.l.b16 %v75
  %v360 = vunpack.c.l.b16 %v76
  %v361 = vunpack.c.l.b16 %v77
  %v362 = vunpack.c.l.b16 %v78
  %v363 = vunpack.c.l.b16 %v79
  %v364 = vunpack.c.l.b16 %v80
  %v365 = vunpack.c.l.b16 %v81
  %v366 = vunpack.c.l.b16 %v82
  %v367 = vunpack.c.l.b16 %v83
  %v368 = vunpack.c.l.b16 %v84
  %v369 = vunpack.c.l.b16 %v85
  %v370 = vunpack.c.l.b16 %v86
  %v371 = vunpack.c.l.b16 %v87
  %v372 = vunpack.c.l.b16 %v88
  %v373 = vunpack.c.l.b16 %v89
  %v374 = vunpack.c.l.b16 %v90
  %v375 = vunpack.c.l.b16 %v91
  %v376 = vunpack.c.l.b16 %v92
  %v377 = vunpack.c.l.b16 %v93
  %v378 = vunpack.c.l.b16 %v94
  %v379 = vunpack.c.l.b16 %v95
  %v380 = vunpack.c.l.b16 %v96
  %v381 = vunpack.c.l.b16 %v97
  %v382 = vunpack.c.l.b16 %v98
  %v383 = vunpack.c.l.b16 %v99
  %v384 = vunpack.c.l.b16 %v100
  %v385 = vunpack.c.l.b16 %v101
  %v386 = vunpack.c.l.b16 %v102
  %v387 = vunpack.c.l.b16 %v103
  %v388 = vunpack.c.l.b16 %v104
  %v389 = vunpack.c.l.b16 %v105
  %v390 = vunpack.c.l.b16 %v106
  %v391 = vunpack.c.l.b16 %v107
  %v392 = vunpack.c.l.b16 %v108
  %v393 = vunpack.c.l.b16 %v109
  %v394 = vunpack.c.l.b16 %v110
  %v395 = vunpack.c.l.b16 %v111
  %v396 = vunpack.c.l.b16 %v112
  %v397 = vunpack.c.l.b16 %v113
  %v398 = vunpack.c.l.b16 %v114
  %v399 = vunpack.c.l.b16 %v115
  %v400 = vunpack.c.l.b16 %v116
  %v401 = vunpack.c.l.b16 %v117
  %v402 = vunpack.c.l.b16 %v118
  %v403 = vunpack.c.l.b16 %v119
  %v404 = vunpack.c.l.b16 %v120
  %v405 = vunpack.c.l.b16 %v121
  %v406 = vunpack.c.l.b16 %v122
  %v407 = vunpack.c.l.b16 %v123
  %v408 = vunpack.c.l.b16 %v124
  %v409 = vunpack.c.l.b16 %v125
  %v410 = vunpack.c.l.b16 %v126
  %v411 = vunpack.c.l.b16 %v127
  %v412 = vunpack.c.l.b16 %v128
  %v413 = vunpack.c.l.b16 %v129
  %v414 = vunpack.c.l.b16 %v130
  %v415 = vunpack.c.l.b16 %v131
  %v416 = vunpack.c.l.b16 %v132
  %v417 = vunpack.c.l.b16 %v133
  %v418 = vunpack.c.l.b16 %v134
  %v419 = vunpack.c.l.b16 %v135
  %v420 = vunpack.c.l.b16 %v136
  %v421 = vunpack.c.l.b16 %v137
  %v422 = vunpack.c.l.b16 %v138
  %v423 = vunpack.c.l.b16 %v139
  %v424 = vunpack.c.l.b16 %v140
  %v425 = vunpack.c.l.b16 %v141
  %v426 = vunpack.c.l.b16 %v142
  %v427 = vunpack.c.l.b16 %v143
  %v428 = vpack.c.b16 %v301, %v300
  %v429 = vpack.c.b16 %v303, %v302
  %v430 = vpack.c.b16 %v305, %v304
  %v431 = vpack.c.b16 %v307, %v306
  %v432 = vpack.c.b16 %v309, %v308
  %v433 = vpack.c.b16 %v311, %v310
  %v434 = vpack.c.b16 %v313, %v312
  %v435 = vpack.c.b16 %v315, %v314
  %v436 = vpack.c.b16 %v317, %v316
  %v437 = vpack.c.b16 %v319, %v318
  %v438 = vpack.c.b16 %v321, %v320
  %v439 = vpack.c.b16 %v323, %v322
  %v440 = vpack.c.b16 %v325, %v324
  %v441 = vpack.c.b16 %v327, %v326
  %v442 = vpack.c.b16 %v329, %v328
  %v443 = vpack.c.b16 %v331, %v330
  %v444 = vpack.c.b16 %v333, %v332
  %v445 = vpack.c.b16 %v335, %v334
  %v446 = vpack.c.b16 %v337, %v336
  %v447 = vpack.c.b16 %v339, %v338
  %v448 = vpack.c.b16 %v341, %v340
  %v449 = vpack.c.b16 %v343, %v342
  %v450 = vpack.c.b16 %v345, %v344
  %v451 = vpack.c.b16 %v347, %v346
  %v452 = vpack.c.b16 %v349, %v348
  %v453 = vpack.c.b16 %v351, %v350
  %v454 = vpack.c.b16 %v353, %v352
  %v455 = vpack.c.b16 %v355, %v354
  %v456 = vpack.c.b16 %v357, %v356
  %v457 = vpack.c.b16 %v359, %v358
  %v458 = vpack.c.b16 %v361, %v360
  %v459 = vpack.c.b16 %v363, %v362
  %v460 = vpack.c.b16 %v365, %v364
  %v461 = vpack.c.b16 %v367, %v366
  %v462 = vpack.c.b16 %v369, %v368
  %v463 = vpack.c.b16 %v371, %v370
  %v464 = vpack.c.b16 %v373, %v372
  %v465 = vpack.c.b16 %v375, %v374
  %v466 = vpack.c.b16 %v377, %v376
  %v467 = vpack.c.b16 %v379, %v378
  %v468 = vpack.c.b16 %v381, %v380
  %v469 = vpack.c.b16 %v383, %v382
  %v470 = vpack.c.b16 %v385, %v384
  %v471 = vpack.c.b16 %v387, %v386
  %v472 = vpack.c.b16 %v389, %v388
  %v473 = vpack.c.b16 %v391, %v390
  %v474 = vpack.c.b16 %v393, %v392
  %v475 = vpack.c.b16 %v395, %v394
  %v476 = vpack.c.b16 %v397, %v396
  %v477 = vpack.c.b16 %v399, %v398
  %v478 = vpack.c.b16 %v401, %v400
  %v479 = vpack.c.b16 %v403, %v402
  %v480 = vpack.c.b16 %v405, %v404
  %v481 = vpack.c.b16 %v407, %v406
  %v482 = vpack.c.b16 %v409, %v408
  %v483 = vpack.c.b16 %v411, %v410
  %v484 = vpack.c.b16 %v413, %v412
  %v485 = vpack.c.b16 %v415, %v414
  %v486 = vpack.c.b16 %v417, %v416
  %v487 = vpack.c.b16 %v419, %v418
  %v488 = vpack.c.b16 %v421, %v420
  %v489 = vpack.c.b16 %v423, %v422
  %v490 = vpack.c.b16 %v425, %v424
  %v491 = vpack.c.b16 %v427, %v426
  %556 = vmatprep.subr.bf16.mxu0 0
  %557 = vmatpush1.bf16.msra.mxu0 %v428
  %558 = vmatprep.subr.bf16.mxu0 0
  %559 = vmatpush1.bf16.msra.mxu0 %v429
  %560 = vmatprep.subr.bf16.mxu0 0
  %561 = vmatpush1.bf16.msra.mxu0 %v430
  %562 = vmatprep.subr.bf16.mxu0 0
  %563 = vmatpush1.bf16.msra.mxu0 %v431
  %564 = vmatprep.subr.bf16.mxu0 0
  %565 = vmatpush1.bf16.msra.mxu0 %v432
  %566 = vmatprep.subr.bf16.mxu0 0
  %567 = vmatpush1.bf16.msra.mxu0 %v433
  %568 = vmatprep.subr.bf16.mxu0 0
  %569 = vmatpush1.bf16.msra.mxu0 %v434
  %570 = vmatprep.subr.bf16.mxu0 0
  %571 = vmatpush1.bf16.msra.mxu0 %v435
  %572 = vmatprep.subr.bf16.mxu0 0
  %573 = vmatpush1.bf16.msra.mxu0 %v436
  %574 = vmatprep.subr.bf16.mxu0 0
  %575 = vmatpush1.bf16.msra.mxu0 %v437
  %576 = vmatprep.subr.bf16.mxu0 0
  %577 = vmatpush1.bf16.msra.mxu0 %v438
  %578 = vmatprep.subr.bf16.mxu0 0
  %579 = vmatpush1.bf16.msra.mxu0 %v439
  %580 = vmatprep.subr.bf16.mxu0 0
  %581 = vmatpush1.bf16.msra.mxu0 %v440
  %582 = vmatprep.subr.bf16.mxu0 0
  %583 = vmatpush1.bf16.msra.mxu0 %v441
  %584 = vmatprep.subr.bf16.mxu0 0
  %585 = vmatpush1.bf16.msra.mxu0 %v442
  %586 = vmatprep.subr.bf16.mxu0 0
  %587 = vmatpush1.bf16.msra.mxu0 %v443
  %588 = vmatprep.mubr.bf16.mxu0 %v157
  %589 = vmatmul.mubr.bf16.gmra.mrb[0].mxu0 %v156
  %v590 = vpop.f32.mrb[0].mxu0
  %v591 = vadd.f32 0.0, %v590
  %v592 = vpop.f32.mrb[0].mxu0
  %v593 = vpop.f32.mrb[0].mxu0
  %v594 = vpop.f32.mrb[0].mxu0
  %595 = vdwg.mxu0
  %596 = vmatprep.subr.bf16.mxu0 0
  %597 = vmatpush1.bf16.msra.mxu0 %v444
  %598 = vmatprep.subr.bf16.mxu0 0
  %599 = vmatpush1.bf16.msra.mxu0 %v445
  %600 = vmatprep.subr.bf16.mxu0 0
  %601 = vmatpush1.bf16.msra.mxu0 %v446
  %602 = vmatprep.subr.bf16.mxu0 0
  %603 = vmatpush1.bf16.msra.mxu0 %v447
  %604 = vmatprep.subr.bf16.mxu0 0
  %605 = vmatpush1.bf16.msra.mxu0 %v448
  %606 = vmatprep.subr.bf16.mxu0 0
  %607 = vmatpush1.bf16.msra.mxu0 %v449
  %608 = vmatprep.subr.bf16.mxu0 0
  %609 = vmatpush1.bf16.msra.mxu0 %v450
  %610 = vmatprep.subr.bf16.mxu0 0
  %611 = vmatpush1.bf16.msra.mxu0 %v451
  %612 = vmatprep.subr.bf16.mxu0 0
  %613 = vmatpush1.bf16.msra.mxu0 %v452
  %614 = vmatprep.subr.bf16.mxu0 0
  %615 = vmatpush1.bf16.msra.mxu0 %v453
  %616 = vmatprep.subr.bf16.mxu0 0
  %617 = vmatpush1.bf16.msra.mxu0 %v454
  %618 = vmatprep.subr.bf16.mxu0 0
  %619 = vmatpush1.bf16.msra.mxu0 %v455
  %620 = vmatprep.subr.bf16.mxu0 0
  %621 = vmatpush1.bf16.msra.mxu0 %v456
  %622 = vmatprep.subr.bf16.mxu0 0
  %623 = vmatpush1.bf16.msra.mxu0 %v457
  %624 = vmatprep.subr.bf16.mxu0 0
  %625 = vmatpush1.bf16.msra.mxu0 %v458
  %626 = vmatprep.subr.bf16.mxu0 0
  %627 = vmatpush1.bf16.msra.mxu0 %v459
  %628 = vmatprep.mubr.bf16.mxu0 %v159
  %629 = vmatmul.mubr.bf16.gmra.mrb[0].mxu0 %v158
  %v630 = vpop.f32.mrb[0].mxu0
  %v631 = vadd.f32 %v591, %v630
  %v632 = vpop.f32.mrb[0].mxu0
  %v633 = vpop.f32.mrb[0].mxu0
  %v634 = vpop.f32.mrb[0].mxu0
  %635 = vdwg.mxu0
  %636 = vmatprep.subr.bf16.mxu0 0
  %637 = vmatpush1.bf16.msra.mxu0 %v460
  %638 = vmatprep.subr.bf16.mxu0 0
  %639 = vmatpush1.bf16.msra.mxu0 %v461
  %640 = vmatprep.subr.bf16.mxu0 0
  %641 = vmatpush1.bf16.msra.mxu0 %v462
  %642 = vmatprep.subr.bf16.mxu0 0
  %643 = vmatpush1.bf16.msra.mxu0 %v463
  %644 = vmatprep.subr.bf16.mxu0 0
  %645 = vmatpush1.bf16.msra.mxu0 %v464
  %646 = vmatprep.subr.bf16.mxu0 0
  %647 = vmatpush1.bf16.msra.mxu0 %v465
  %648 = vmatprep.subr.bf16.mxu0 0
  %649 = vmatpush1.bf16.msra.mxu0 %v466
  %650 = vmatprep.subr.bf16.mxu0 0
  %651 = vmatpush1.bf16.msra.mxu0 %v467
  %652 = vmatprep.subr.bf16.mxu0 0
  %653 = vmatpush1.bf16.msra.mxu0 %v468
  %654 = vmatprep.subr.bf16.mxu0 0
  %655 = vmatpush1.bf16.msra.mxu0 %v469
  %656 = vmatprep.subr.bf16.mxu0 0
  %657 = vmatpush1.bf16.msra.mxu0 %v470
  %658 = vmatprep.subr.bf16.mxu0 0
  %659 = vmatpush1.bf16.msra.mxu0 %v471
  %660 = vmatprep.subr.bf16.mxu0 0
  %661 = vmatpush1.bf16.msra.mxu0 %v472
  %662 = vmatprep.subr.bf16.mxu0 0
  %663 = vmatpush1.bf16.msra.mxu0 %v473
  %664 = vmatprep.subr.bf16.mxu0 0
  %665 = vmatpush1.bf16.msra.mxu0 %v474
  %666 = vmatprep.subr.bf16.mxu0 0
  %667 = vmatpush1.bf16.msra.mxu0 %v475
  %668 = vmatprep.mubr.bf16.mxu0 %v161
  %669 = vmatmul.mubr.bf16.gmra.mrb[0].mxu0 %v160
  %v670 = vpop.f32.mrb[0].mxu0
  %v671 = vadd.f32 %v631, %v670
  %v672 = vpop.f32.mrb[0].mxu0
  %v673 = vpop.f32.mrb[0].mxu0
  %v674 = vpop.f32.mrb[0].mxu0
  %675 = vdwg.mxu0
  %676 = vmatprep.subr.bf16.mxu0 0
  %677 = vmatpush1.bf16.msra.mxu0 %v476
  %678 = vmatprep.subr.bf16.mxu0 0
  %679 = vmatpush1.bf16.msra.mxu0 %v477
  %680 = vmatprep.subr.bf16.mxu0 0
  %681 = vmatpush1.bf16.msra.mxu0 %v478
  %682 = vmatprep.subr.bf16.mxu0 0
  %683 = vmatpush1.bf16.msra.mxu0 %v479
  %684 = vmatprep.subr.bf16.mxu0 0
  %685 = vmatpush1.bf16.msra.mxu0 %v480
  %686 = vmatprep.subr.bf16.mxu0 0
  %687 = vmatpush1.bf16.msra.mxu0 %v481
  %688 = vmatprep.subr.bf16.mxu0 0
  %689 = vmatpush1.bf16.msra.mxu0 %v482
  %690 = vmatprep.subr.bf16.mxu0 0
  %691 = vmatpush1.bf16.msra.mxu0 %v483
  %692 = vmatprep.subr.bf16.mxu0 0
  %693 = vmatpush1.bf16.msra.mxu0 %v484
  %694 = vmatprep.subr.bf16.mxu0 0
  %695 = vmatpush1.bf16.msra.mxu0 %v485
  %696 = vmatprep.subr.bf16.mxu0 0
  %697 = vmatpush1.bf16.msra.mxu0 %v486
  %698 = vmatprep.subr.bf16.mxu0 0
  %699 = vmatpush1.bf16.msra.mxu0 %v487
  %700 = vmatprep.subr.bf16.mxu0 0
  %701 = vmatpush1.bf16.msra.mxu0 %v488
  %702 = vmatprep.subr.bf16.mxu0 0
  %703 = vmatpush1.bf16.msra.mxu0 %v489
  %704 = vmatprep.subr.bf16.mxu0 0
  %705 = vmatpush1.bf16.msra.mxu0 %v490
  %706 = vmatprep.subr.bf16.mxu0 0
  %707 = vmatpush1.bf16.msra.mxu0 %v491
  %708 = vmatprep.mubr.bf16.mxu0 %v163
  %709 = vmatmul.mubr.bf16.gmra.mrb[0].mxu0 %v162
  %v710 = vpop.f32.mrb[0].mxu0
  %v711 = vadd.f32 %v671, %v710
  %v712 = vpop.f32.mrb[0].mxu0
  %v713 = vpop.f32.mrb[0].mxu0
  %v714 = vpop.f32.mrb[0].mxu0
  %715 = vdwg.mxu0
  %v716 = vmin.f32 %v711, 0.0
  %v717 = vmul.f32 %v716, 1.442695
  %v718 = vpow.pop %v717
  %v719 = vsub.f32 %v718, 1.0
  %v720 = vmul.f32 %v719, 1.6732632
  %vm721 = vcmp.gt.f32.partialorder %v711, 0.0
  %v722 = vsel %vm721, %v711, %v720
  %v723 = vmul.f32 %v722, 1.050701
  %724 = vst [vmem:[%s2] sm:$0xff] %v723
  // Predicated region
  $region10: #{d_stage2_forward.9} parent=0 // pred_check
    _
  $region11: #{d_stage2_forward.9} parent=0 // pred_check_branch
    %726 = sbr.rel (0) target = $region13
  $region12: #{d_stage2_forward.9} parent=0 // pred_region
    _
  $region13: #{d_stage2_forward.9} parent=0 // pred_fallthru
    _
  // Predicated region
  $region14: #{d_stage2_forward.9} parent=0 // pred_check
    _
  $region15: #{d_stage2_forward.9} parent=0 // pred_check_branch
    %728 = sbr.rel (0) target = $region17
  $region16: #{d_stage2_forward.9} parent=0 // pred_region
    _
  $region17: #{d_stage2_forward.9} parent=0 // pred_fallthru
    _

</llo_original>
